<compile_context>
chip_gen: v7x
topology: tpu7x:2x2x1
jax: 0.10.0
libtpu: 0.0.40
codegen_flags: <defaults>
</compile_context>

<pallas_src>
import jax
import jax.numpy as jnp
import numpy as np
from jax import lax
from jax.experimental import pallas as pl
from jax.experimental.pallas import tpu as pltpu

KERNEL = 4
EPS = 1e-5
LANE = 128
_VMEM_TILE_BUDGET = 24 * 1024 * 1024   # per-step working-set target
_VMEM_LIMIT = 48 * 1024 * 1024         # scoped VMEM limit (< v7x 64 MiB physical)


# ----------------------------- Pallas kernels -------------------------------

def _matmul_stats_kernel(w_ref, p_ref, y_ref, sum_ref, sq_ref):
    """Phase-packed conv GEMM fused with BatchNorm batch statistics.

    y_ref   : (Cp, tm)  bf16 tile of  w @ p  (f32 accumulation in-register)
    sum_ref : (Cp, 128) f32 lane-partial per-row sums for this tile
    sq_ref  : (Cp, 128) f32 lane-partial per-row sum-of-squares for this tile

    Stats are per-grid-step outputs (blocks indexed by i), so the M axis is
    'parallel' (shardable across v7x's two TensorCores).  Only VPU adds here;
    the cross-lane / cross-tile fold happens in JAX on tiny (Cp, G*128) arrays.
    """
    y = jnp.dot(w_ref[...], p_ref[...], preferred_element_type=jnp.float32)
    y_ref[...] = y.astype(y_ref.dtype)
    c = y[:, 0:128]
    s = c
    q = c * c
    for g in range(1, y.shape[1] // 128):          # static, 128-aligned slices
        c = y[:, g * 128:(g + 1) * 128]
        s = s + c
        q = q + c * c
    sum_ref[...] = s
    sq_ref[...] = q


def _matmul_tanh_kernel(w_ref, p_ref, o_ref):
    """Final layer: phase-packed conv GEMM fused with tanh (EUP)."""
    y = jnp.dot(w_ref[...], p_ref[...], preferred_element_type=jnp.float32)
    o_ref[...] = jnp.tanh(y)


def _bn_relu_kernel(y_ref, scale_ref, shift_ref, o_ref):
    """Per-row affine + ReLU; bf16 in / bf16 out, math in f32."""
    y = y_ref[...].astype(jnp.float32)
    o_ref[...] = jnp.maximum(y * scale_ref[...] + shift_ref[...], 0.0
                             ).astype(o_ref.dtype)


# ----------------------------- kernel wrappers -------------------------------

def _choose_tm(Mp, per_col_bytes, fixed_bytes=0):
    """Largest lane-aligned M tile dividing Mp that fits the VMEM budget.

    per_col_bytes counts everything that scales with tm (all buffer copies and
    in-kernel f32 temporaries); fixed_bytes the tm-independent blocks.
    """
    for tm in (8192, 4096, 2048, 1024, 512, 256, 128):
        if Mp % tm == 0 and fixed_bytes + tm * per_col_bytes <= _VMEM_TILE_BUDGET:
            return tm
    return 128


def _pad_rows16(a):
    """Pad the row (sublane) axis up to a multiple of 16 (bf16 packing)."""
    r = a.shape[0]
    rp = -(-r // 16) * 16
    if rp != r:
        a = jnp.pad(a, ((0, rp - r), (0, 0)))
    return a


def _p_spec(K, tm, n_tiles):
    """BlockSpec for the streamed im2col operand; triple-buffer when there is
    enough grid depth to pipeline (hides DMA issue latency on thin layers)."""
    if n_tiles >= 3:
        return pl.BlockSpec((K, tm), lambda i: (0, i),
                            pipeline_mode=pl.Buffered(3))
    return pl.BlockSpec((K, tm), lambda i: (0, i))


def pallas_matmul_stats(w_big, p_t):
    """y = w_big @ p_t (bf16 out) with fused per-tile lane-partial BN stats."""
    w_big = _pad_rows16(w_big)
    Cp, K = w_big.shape
    Mp = p_t.shape[1]
    per_col = 3 * K * 2 + 2 * Cp * 2 + Cp * 4        # p bufs + y bufs + f32 temp
    fixed = 2 * Cp * K * 2 + 2 * 2 * Cp * 128 * 4    # w bufs + stat bufs
    tm = _choose_tm(Mp, per_col, fixed)
    n_tiles = Mp // tm
    y, s, sq = pl.pallas_call(
        _matmul_stats_kernel,
        out_shape=(jax.ShapeDtypeStruct((Cp, Mp), jnp.bfloat16),
                   jax.ShapeDtypeStruct((Cp, n_tiles * 128), jnp.float32),
                   jax.ShapeDtypeStruct((Cp, n_tiles * 128), jnp.float32)),
        grid=(n_tiles,),
        in_specs=[pl.BlockSpec((Cp, K), lambda i: (0, 0)),
                  _p_spec(K, tm, n_tiles)],
        out_specs=(pl.BlockSpec((Cp, tm), lambda i: (0, i)),
                   pl.BlockSpec((Cp, 128), lambda i: (0, i)),
                   pl.BlockSpec((Cp, 128), lambda i: (0, i))),
        compiler_params=pltpu.CompilerParams(
            dimension_semantics=("parallel",),
            vmem_limit_bytes=_VMEM_LIMIT),
    )(w_big, p_t)
    return y, s, sq


def pallas_matmul_tanh(w_big, p_t):
    """Final layer: tanh(w_big @ p_t), f32 lane-dense output."""
    w_big = _pad_rows16(w_big)
    Cp, K = w_big.shape
    Mp = p_t.shape[1]
    per_col = 3 * K * 2 + 2 * Cp * 4 + Cp * 4
    fixed = 2 * Cp * K * 2
    tm = _choose_tm(Mp, per_col, fixed)
    n_tiles = Mp // tm
    return pl.pallas_call(
        _matmul_tanh_kernel,
        out_shape=jax.ShapeDtypeStruct((Cp, Mp), jnp.float32),
        grid=(n_tiles,),
        in_specs=[pl.BlockSpec((Cp, K), lambda i: (0, 0)),
                  _p_spec(K, tm, n_tiles)],
        out_specs=pl.BlockSpec((Cp, tm), lambda i: (0, i)),
        compiler_params=pltpu.CompilerParams(
            dimension_semantics=("parallel",),
            vmem_limit_bytes=_VMEM_LIMIT),
    )(w_big, p_t)


def pallas_bn_relu(y, scale, shift):
    """y (Cp, Mp) bf16, scale/shift (Cp, 1) f32 -> relu(y*scale+shift) bf16."""
    Cp, Mp = y.shape
    per_col = 2 * Cp * 2 + 2 * Cp * 2 + 2 * Cp * 4   # in bufs + out bufs + f32 temps
    fixed = 2 * 2 * Cp * 4                           # scale/shift bufs
    tm = _choose_tm(Mp, per_col, fixed)
    return pl.pallas_call(
        _bn_relu_kernel,
        out_shape=jax.ShapeDtypeStruct((Cp, Mp), jnp.bfloat16),
        grid=(Mp // tm,),
        in_specs=[pl.BlockSpec((Cp, tm), lambda i: (0, i)),
                  pl.BlockSpec((Cp, 1), lambda i: (0, 0)),
                  pl.BlockSpec((Cp, 1), lambda i: (0, 0))],
        out_specs=pl.BlockSpec((Cp, tm), lambda i: (0, i)),
        compiler_params=pltpu.CompilerParams(
            dimension_semantics=("parallel",),
            vmem_limit_bytes=_VMEM_LIMIT),
    )(y, scale, shift)


# -------------------------------- JAX glue -----------------------------------

# Sub-pixel tap selection for ConvTranspose2d(k=4, s=2, p=1):
#   output row p = 2u + a = 2h - 1 + i  =>  phase a uses kernel row i at input
#   offset dh = r - 1 of the 3x3 neighbourhood (same table for columns).
_PHASE_TAPS = np.zeros((2, 4, 3), np.float32)
_PHASE_TAPS[0, 1, 1] = 1.0   # a=0: kernel row 1 at dh=0
_PHASE_TAPS[0, 3, 0] = 1.0   # a=0: kernel row 3 at dh=-1
_PHASE_TAPS[1, 0, 2] = 1.0   # a=1: kernel row 0 at dh=+1
_PHASE_TAPS[1, 2, 1] = 1.0   # a=1: kernel row 2 at dh=0


def _phase_gemm_operands(x_cm, w):
    """Lower ConvTranspose2d(k=4, s=2, p=1, bias=False) to a phase-packed GEMM.

    x_cm : (Cin, N, H, W)  bf16, channel-major activation
    w    : (Cin, Cout, 4, 4) f32, PyTorch ConvTranspose2d weight layout
    Returns bf16 operands  W_big (4*Cout, Cin*9),  P (Cin*9, Mp)  and the true
    column count M = N*H*W (P's lane axis is zero-padded up to a multiple of
    128; padded columns contribute 0 to the fused BN sums).
    """
    Cin, N, H, W = x_cm.shape
    Cout = w.shape[1]

    taps = jnp.asarray(_PHASE_TAPS)
    w_big = jnp.einsum('coij,air,bjs->abocrs', w.astype(jnp.float32), taps, taps)
    w_big = w_big.reshape(4 * Cout, Cin * 9).astype(jnp.bfloat16)

    # 3x3-neighbourhood im2col of the (non-dilated) input, channel-major.
    xp = jnp.pad(x_cm, ((0, 0), (0, 0), (1, 1), (1, 1)))
    cols = [xp[:, :, r:r + H, s:s + W] for r in range(3) for s in range(3)]
    p_t = jnp.stack(cols, axis=1).reshape(Cin * 9, N * H * W)

    M = N * H * W
    Mp = -(-M // LANE) * LANE
    if Mp != M:
        p_t = jnp.pad(p_t, ((0, 0), (0, Mp - M)))
    return w_big, p_t, M


def _layer0_xla(z, w, g, b):
    """Layer 0: ConvTranspose2d(Z, C1, 4, 1, 0) on a 1x1 input + BN + ReLU.

    A few KFLOP -> plain XLA (per perf review: pallas_call overhead dominates).
    Returns the channel-major bf16 activation (C1, N, 4, 4).
    """
    z2 = z.reshape(z.shape[0], -1).astype(jnp.float32)          # (N, Z)
    y = jnp.einsum('nz,zoij->onij', z2, w)                      # (C1, N, 4, 4)
    mean = jnp.mean(y, axis=(1, 2, 3), keepdims=True)
    var = jnp.mean(jnp.square(y - mean), axis=(1, 2, 3), keepdims=True)
    g4 = g.reshape(-1, 1, 1, 1)
    b4 = b.reshape(-1, 1, 1, 1)
    y = jnp.maximum((y - mean) * lax.rsqrt(var + EPS) * g4 + b4, 0.0)
    return y.astype(jnp.bfloat16)


def generator_forward(z, params):
    """z: (N, Z_DIM, 1, 1) NCHW -> (N, IMAGE_CHANNEL, 64, 64) NCHW, f32."""
    x_cm = _layer0_xla(z, params["w0"], params["g0"], params["b0"])

    n_layers = 5
    out = None
    for li in range(1, n_layers):
        w = params[f"w{li}"]
        Cout = w.shape[1]
        _, N, H, W = x_cm.shape
        rows = 4 * Cout                       # phase-packed output rows
        w_big, p_t, M = _phase_gemm_operands(x_cm, w)

        if li < n_layers - 1:
            # conv GEMM fused with the BN batch-statistics reduction
            y, s_rows, sq_rows = pallas_matmul_stats(w_big, p_t)
            count = 4.0 * M                                     # = N*Hout*Wout
            s = s_rows[:rows].reshape(4, Cout, -1).sum(axis=(0, 2))
            sq = sq_rows[:rows].reshape(4, Cout, -1).sum(axis=(0, 2))
            mean = s / count
            # E[y^2]-E[y]^2 in f32; clamp guards tiny negative cancellation.
            var = jnp.maximum(sq / count - mean * mean, 0.0)
            gamma = params[f"g{li}"][:, 0]
            beta = params[f"b{li}"][:, 0]
            scale_c = gamma * lax.rsqrt(var + EPS)
            shift_c = beta - mean * scale_c
            Cp = y.shape[0]
            scale = jnp.pad(jnp.tile(scale_c, 4), (0, Cp - rows))[:, None]
            shift = jnp.pad(jnp.tile(shift_c, 4), (0, Cp - rows))[:, None]
            y = pallas_bn_relu(y, scale, shift)
            # phase un-shuffle -> channel-major bf16 input of the next layer
            y4 = y[:rows, :M].reshape(2, 2, Cout, N, H, W)
            x_cm = jnp.transpose(y4, (2, 3, 4, 0, 5, 1)).reshape(
                Cout, N, 2 * H, 2 * W)
        else:
            y = pallas_matmul_tanh(w_big, p_t)                   # fused tanh
            y4 = y[:rows, :M].reshape(2, 2, Cout, N, H, W)
            out = jnp.transpose(y4, (3, 2, 4, 0, 5, 1)).reshape(
                N, Cout, 2 * H, 2 * W)
    return out


# ------------------------ pure-JAX reference (f32) ---------------------------

LAYER_CFG = [(1, 0), (2, 1), (2, 1), (2, 1), (2, 1)]  # (stride, pad) per layer


def _conv_transpose_ref(x, w, stride, pad):
    k = KERNEL
    w_oihw = jnp.transpose(jnp.flip(w, (2, 3)), (1, 0, 2, 3))  # (Cout, Cin, k, k)
    return lax.conv_general_dilated(
        x, w_oihw, window_strides=(1, 1),
        padding=[(k - 1 - pad, k - 1 - pad)] * 2,
        lhs_dilation=(stride, stride),
        dimension_numbers=("NCHW", "OIHW", "NCHW"))


def generator_forward_ref(z, params):
    x = z.astype(jnp.float32)
    last = len(LAYER_CFG) - 1
    for li, (stride, pad) in enumerate(LAYER_CFG):
        y = _conv_transpose_ref(x, params[f"w{li}"], stride, pad)
        if li < last:
            mean = jnp.mean(y, axis=(0, 2, 3), keepdims=True)
            var = jnp.mean(jnp.square(y - mean), axis=(0, 2, 3), keepdims=True)
            g = params[f"g{li}"].reshape(1, -1, 1, 1)
            b = params[f"b{li}"].reshape(1, -1, 1, 1)
            y = jnp.maximum((y - mean) * lax.rsqrt(var + EPS) * g + b, 0.0)
        else:
            y = jnp.tanh(y)
        x = y
    return x


# ---------------------------------- params -----------------------------------

def init_params(key, image_channel, z_dim, g_hidden):
    lay1, lay2, lay3, lay4 = g_hidden * 32, g_hidden * 16, g_hidden * 8, g_hidden * 4
    chans = [(z_dim, lay1), (lay1, lay2), (lay2, lay3), (lay3, lay4),
             (lay4, image_channel)]
    params = {}
    for li, (cin, cout) in enumerate(chans):
        key, kw, kg, kb = jax.random.split(key, 4)
        # ConvTranspose2d weight shape: (in_channels, out_channels, kH, kW)
        params[f"w{li}"] = 0.05 * jax.random.normal(
            kw, (cin, cout, KERNEL, KERNEL), jnp.float32)
        if li < len(chans) - 1:
            params[f"g{li}"] = 1.0 + 0.1 * jax.random.normal(
                kg, (cout, 1), jnp.float32)
            params[f"b{li}"] = 0.1 * jax.random.normal(kb, (cout, 1), jnp.float32)
    return params
    # TODO(synk): BatchNorm running_mean/running_var bookkeeping (training-mode
    # side effect) is not materialized; it does not affect the forward output.


if __name__ == "__main__":
    IMAGE_CHANNEL, Z_DIM, G_HIDDEN, BATCH = 3, 8, 4, 2

    key = jax.random.PRNGKey(0)
    key, kz = jax.random.split(key)
    params = init_params(key, IMAGE_CHANNEL, Z_DIM, G_HIDDEN)
    z = jax.random.normal(kz, (BATCH, Z_DIM, 1, 1), jnp.float32)

    out = jax.block_until_ready(jax.jit(generator_forward)(z, params))
    assert out.shape == (BATCH, IMAGE_CHANNEL, 64, 64), out.shape
    assert out.dtype == jnp.float32, out.dtype

    ref = jax.block_until_ready(jax.jit(generator_forward_ref)(z, params))
    max_err = float(jnp.max(jnp.abs(out - ref)))
    assert max_err < 5e-2, max_err

    print("KERNEL_OK")
</pallas_src>

<mosaic_0001>
module attributes {stable_mosaic.version = 11 : i64} {
  func.func @_matmul_stats_kernel(%arg0: i32, %arg1: memref<256x1152xbf16, #tpu.memory_space<vmem>>, %arg2: memref<1152x128xbf16, #tpu.memory_space<vmem>>, %arg3: memref<256x128xbf16, #tpu.memory_space<vmem>>, %arg4: memref<256x128xf32, #tpu.memory_space<vmem>>, %arg5: memref<256x128xf32, #tpu.memory_space<vmem>>) attributes {dimension_semantics = [#tpu.dimension_semantics<parallel>], iteration_bounds = array<i64: 1>, scalar_prefetch = 0 : i64, scratch_operands = 0 : i64, tpu.core_type = #tpu.core_type<tc>, window_params = [{pipeline_mode = #tpu.pipeline_mode<synchronous>, transform_indices = @transform_0, window_bounds = array<i64: 256, 1152>}, {transform_indices = @transform_1, window_bounds = array<i64: 1152, 128>}, {transform_indices = @transform_2, window_bounds = array<i64: 256, 128>}, {transform_indices = @transform_3, window_bounds = array<i64: 256, 128>}, {transform_indices = @transform_4, window_bounds = array<i64: 256, 128>}]} {
    %c0 = arith.constant 0 : index
    %c0_0 = arith.constant 0 : index
    %0 = vector.load %arg1[%c0, %c0_0] : memref<256x1152xbf16, #tpu.memory_space<vmem>>, vector<256x1152xbf16>
    %c0_1 = arith.constant 0 : index
    %c0_2 = arith.constant 0 : index
    %1 = vector.load %arg2[%c0_1, %c0_2] : memref<1152x128xbf16, #tpu.memory_space<vmem>>, vector<1152x128xbf16>
    %cst = arith.constant dense<0.000000e+00> : vector<256x128xf32>
    %2 = tpu.matmul %0, %1, %cst {dimension_numbers = #tpu.dot_dimension_numbers<[1], [0], [0], [1], [0, 0, 1, 1], [], []>} : vector<256x1152xbf16>, vector<1152x128xbf16>, vector<256x128xf32> -> vector<256x128xf32>
    %3 = arith.truncf %2 : vector<256x128xf32> to vector<256x128xbf16>
    %c0_3 = arith.constant 0 : index
    %c0_4 = arith.constant 0 : index
    %4 = vector.load %arg3[%c0_3, %c0_4] : memref<256x128xbf16, #tpu.memory_space<vmem>>, vector<256x128xbf16>
    tpu.vector_store %arg3[%c0_3, %c0_4], %3 {strides = array<i32>} : memref<256x128xbf16, #tpu.memory_space<vmem>>, vector<256x128xbf16>,
    %5 = arith.mulf %2, %2 : vector<256x128xf32>
    %c0_5 = arith.constant 0 : index
    %c0_6 = arith.constant 0 : index
    %6 = vector.load %arg4[%c0_5, %c0_6] : memref<256x128xf32, #tpu.memory_space<vmem>>, vector<256x128xf32>
    tpu.vector_store %arg4[%c0_5, %c0_6], %2 {strides = array<i32>} : memref<256x128xf32, #tpu.memory_space<vmem>>, vector<256x128xf32>,
    %c0_7 = arith.constant 0 : index
    %c0_8 = arith.constant 0 : index
    %7 = vector.load %arg5[%c0_7, %c0_8] : memref<256x128xf32, #tpu.memory_space<vmem>>, vector<256x128xf32>
    tpu.vector_store %arg5[%c0_7, %c0_8], %5 {strides = array<i32>} : memref<256x128xf32, #tpu.memory_space<vmem>>, vector<256x128xf32>,
    return
  }
  func.func @transform_0(%arg0: i32) -> (i32, i32) {
    %c0_i32 = arith.constant 0 : i32
    %c0_i32_0 = arith.constant 0 : i32
    %c0_i32_1 = arith.constant 0 : i32
    return %c0_i32, %c0_i32_0 : i32, i32
  }
  func.func @transform_1(%arg0: i32) -> (i32, i32) {
    %c0_i32 = arith.constant 0 : i32
    %c0_i32_0 = arith.constant 0 : i32
    return %c0_i32, %arg0 : i32, i32
  }
  func.func @transform_2(%arg0: i32) -> (i32, i32) {
    %c0_i32 = arith.constant 0 : i32
    %c0_i32_0 = arith.constant 0 : i32
    return %c0_i32, %arg0 : i32, i32
  }
  func.func @transform_3(%arg0: i32) -> (i32, i32) {
    %c0_i32 = arith.constant 0 : i32
    %c0_i32_0 = arith.constant 0 : i32
    return %c0_i32, %arg0 : i32, i32
  }
  func.func @transform_4(%arg0: i32) -> (i32, i32) {
    %c0_i32 = arith.constant 0 : i32
    %c0_i32_0 = arith.constant 0 : i32
    return %c0_i32, %arg0 : i32, i32
  }
}

module attributes {stable_mosaic.version = 11 : i64} {
  func.func @_bn_relu_kernel(%arg0: i32, %arg1: memref<256x128xbf16, #tpu.memory_space<vmem>>, %arg2: memref<256x1xf32, #tpu.memory_space<vmem>>, %arg3: memref<256x1xf32, #tpu.memory_space<vmem>>, %arg4: memref<256x128xbf16, #tpu.memory_space<vmem>>) attributes {dimension_semantics = [#tpu.dimension_semantics<parallel>], iteration_bounds = array<i64: 1>, scalar_prefetch = 0 : i64, scratch_operands = 0 : i64, tpu.core_type = #tpu.core_type<tc>, window_params = [{transform_indices = @transform_0, window_bounds = array<i64: 256, 128>}, {pipeline_mode = #tpu.pipeline_mode<synchronous>, transform_indices = @transform_1, window_bounds = array<i64: 256, 1>}, {pipeline_mode = #tpu.pipeline_mode<synchronous>, transform_indices = @transform_2, window_bounds = array<i64: 256, 1>}, {transform_indices = @transform_3, window_bounds = array<i64: 256, 128>}]} {
    %c0 = arith.constant 0 : index
    %c0_0 = arith.constant 0 : index
    %0 = vector.load %arg1[%c0, %c0_0] : memref<256x128xbf16, #tpu.memory_space<vmem>>, vector<256x128xbf16>
    %1 = arith.extf %0 : vector<256x128xbf16> to vector<256x128xf32>
    %c0_1 = arith.constant 0 : index
    %c0_2 = arith.constant 0 : index
    %2 = vector.load %arg2[%c0_1, %c0_2] : memref<256x1xf32, #tpu.memory_space<vmem>>, vector<256x1xf32>
    %3 = vector.broadcast %2 : vector<256x1xf32> to vector<256x128xf32>
    %4 = arith.mulf %1, %3 : vector<256x128xf32>
    %c0_3 = arith.constant 0 : index
    %c0_4 = arith.constant 0 : index
    %5 = vector.load %arg3[%c0_3, %c0_4] : memref<256x1xf32, #tpu.memory_space<vmem>>, vector<256x1xf32>
    %6 = vector.broadcast %5 : vector<256x1xf32> to vector<256x128xf32>
    %7 = arith.addf %4, %6 : vector<256x128xf32>
    %cst = arith.constant 0.000000e+00 : f32
    %8 = vector.broadcast %cst : f32 to vector<256x128xf32>
    %9 = arith.maximumf %7, %8 : vector<256x128xf32>
    %10 = arith.truncf %9 : vector<256x128xf32> to vector<256x128xbf16>
    %c0_5 = arith.constant 0 : index
    %c0_6 = arith.constant 0 : index
    %11 = vector.load %arg4[%c0_5, %c0_6] : memref<256x128xbf16, #tpu.memory_space<vmem>>, vector<256x128xbf16>
    tpu.vector_store %arg4[%c0_5, %c0_6], %10 {strides = array<i32>} : memref<256x128xbf16, #tpu.memory_space<vmem>>, vector<256x128xbf16>,
    return
  }
  func.func @transform_0(%arg0: i32) -> (i32, i32) {
    %c0_i32 = arith.constant 0 : i32
    %c0_i32_0 = arith.constant 0 : i32
    return %c0_i32, %arg0 : i32, i32
  }
  func.func @transform_1(%arg0: i32) -> (i32, i32) {
    %c0_i32 = arith.constant 0 : i32
    %c0_i32_0 = arith.constant 0 : i32
    %c0_i32_1 = arith.constant 0 : i32
    return %c0_i32, %c0_i32_0 : i32, i32
  }
  func.func @transform_2(%arg0: i32) -> (i32, i32) {
    %c0_i32 = arith.constant 0 : i32
    %c0_i32_0 = arith.constant 0 : i32
    %c0_i32_1 = arith.constant 0 : i32
    return %c0_i32, %c0_i32_0 : i32, i32
  }
  func.func @transform_3(%arg0: i32) -> (i32, i32) {
    %c0_i32 = arith.constant 0 : i32
    %c0_i32_0 = arith.constant 0 : i32
    return %c0_i32, %arg0 : i32, i32
  }
}

module attributes {stable_mosaic.version = 11 : i64} {
  func.func @_matmul_stats_kernel(%arg0: i32, %arg1: memref<128x576xbf16, #tpu.memory_space<vmem>>, %arg2: memref<576x128xbf16, #tpu.memory_space<vmem>>, %arg3: memref<128x128xbf16, #tpu.memory_space<vmem>>, %arg4: memref<128x128xf32, #tpu.memory_space<vmem>>, %arg5: memref<128x128xf32, #tpu.memory_space<vmem>>) attributes {dimension_semantics = [#tpu.dimension_semantics<parallel>], iteration_bounds = array<i64: 1>, scalar_prefetch = 0 : i64, scratch_operands = 0 : i64, tpu.core_type = #tpu.core_type<tc>, window_params = [{pipeline_mode = #tpu.pipeline_mode<synchronous>, transform_indices = @transform_0, window_bounds = array<i64: 128, 576>}, {transform_indices = @transform_1, window_bounds = array<i64: 576, 128>}, {transform_indices = @transform_2, window_bounds = array<i64: 128, 128>}, {transform_indices = @transform_3, window_bounds = array<i64: 128, 128>}, {transform_indices = @transform_4, window_bounds = array<i64: 128, 128>}]} {
    %c0 = arith.constant 0 : index
    %c0_0 = arith.constant 0 : index
    %0 = vector.load %arg1[%c0, %c0_0] : memref<128x576xbf16, #tpu.memory_space<vmem>>, vector<128x576xbf16>
    %c0_1 = arith.constant 0 : index
    %c0_2 = arith.constant 0 : index
    %1 = vector.load %arg2[%c0_1, %c0_2] : memref<576x128xbf16, #tpu.memory_space<vmem>>, vector<576x128xbf16>
    %cst = arith.constant dense<0.000000e+00> : vector<128x128xf32>
    %2 = tpu.matmul %0, %1, %cst {dimension_numbers = #tpu.dot_dimension_numbers<[1], [0], [0], [1], [0, 0, 1, 1], [], []>} : vector<128x576xbf16>, vector<576x128xbf16>, vector<128x128xf32> -> vector<128x128xf32>
    %3 = arith.truncf %2 : vector<128x128xf32> to vector<128x128xbf16>
    %c0_3 = arith.constant 0 : index
    %c0_4 = arith.constant 0 : index
    %4 = vector.load %arg3[%c0_3, %c0_4] : memref<128x128xbf16, #tpu.memory_space<vmem>>, vector<128x128xbf16>
    tpu.vector_store %arg3[%c0_3, %c0_4], %3 {strides = array<i32>} : memref<128x128xbf16, #tpu.memory_space<vmem>>, vector<128x128xbf16>,
    %5 = arith.mulf %2, %2 : vector<128x128xf32>
    %c0_5 = arith.constant 0 : index
    %c0_6 = arith.constant 0 : index
    %6 = vector.load %arg4[%c0_5, %c0_6] : memref<128x128xf32, #tpu.memory_space<vmem>>, vector<128x128xf32>
    tpu.vector_store %arg4[%c0_5, %c0_6], %2 {strides = array<i32>} : memref<128x128xf32, #tpu.memory_space<vmem>>, vector<128x128xf32>,
    %c0_7 = arith.constant 0 : index
    %c0_8 = arith.constant 0 : index
    %7 = vector.load %arg5[%c0_7, %c0_8] : memref<128x128xf32, #tpu.memory_space<vmem>>, vector<128x128xf32>
    tpu.vector_store %arg5[%c0_7, %c0_8], %5 {strides = array<i32>} : memref<128x128xf32, #tpu.memory_space<vmem>>, vector<128x128xf32>,
    return
  }
  func.func @transform_0(%arg0: i32) -> (i32, i32) {
    %c0_i32 = arith.constant 0 : i32
    %c0_i32_0 = arith.constant 0 : i32
    %c0_i32_1 = arith.constant 0 : i32
    return %c0_i32, %c0_i32_0 : i32, i32
  }
  func.func @transform_1(%arg0: i32) -> (i32, i32) {
    %c0_i32 = arith.constant 0 : i32
    %c0_i32_0 = arith.constant 0 : i32
    return %c0_i32, %arg0 : i32, i32
  }
  func.func @transform_2(%arg0: i32) -> (i32, i32) {
    %c0_i32 = arith.constant 0 : i32
    %c0_i32_0 = arith.constant 0 : i32
    return %c0_i32, %arg0 : i32, i32
  }
  func.func @transform_3(%arg0: i32) -> (i32, i32) {
    %c0_i32 = arith.constant 0 : i32
    %c0_i32_0 = arith.constant 0 : i32
    return %c0_i32, %arg0 : i32, i32
  }
  func.func @transform_4(%arg0: i32) -> (i32, i32) {
    %c0_i32 = arith.constant 0 : i32
    %c0_i32_0 = arith.constant 0 : i32
    return %c0_i32, %arg0 : i32, i32
  }
}

module attributes {stable_mosaic.version = 11 : i64} {
  func.func @_bn_relu_kernel(%arg0: i32, %arg1: memref<128x128xbf16, #tpu.memory_space<vmem>>, %arg2: memref<128x1xf32, #tpu.memory_space<vmem>>, %arg3: memref<128x1xf32, #tpu.memory_space<vmem>>, %arg4: memref<128x128xbf16, #tpu.memory_space<vmem>>) attributes {dimension_semantics = [#tpu.dimension_semantics<parallel>], iteration_bounds = array<i64: 1>, scalar_prefetch = 0 : i64, scratch_operands = 0 : i64, tpu.core_type = #tpu.core_type<tc>, window_params = [{transform_indices = @transform_0, window_bounds = array<i64: 128, 128>}, {pipeline_mode = #tpu.pipeline_mode<synchronous>, transform_indices = @transform_1, window_bounds = array<i64: 128, 1>}, {pipeline_mode = #tpu.pipeline_mode<synchronous>, transform_indices = @transform_2, window_bounds = array<i64: 128, 1>}, {transform_indices = @transform_3, window_bounds = array<i64: 128, 128>}]} {
    %c0 = arith.constant 0 : index
    %c0_0 = arith.constant 0 : index
    %0 = vector.load %arg1[%c0, %c0_0] : memref<128x128xbf16, #tpu.memory_space<vmem>>, vector<128x128xbf16>
    %1 = arith.extf %0 : vector<128x128xbf16> to vector<128x128xf32>
    %c0_1 = arith.constant 0 : index
    %c0_2 = arith.constant 0 : index
    %2 = vector.load %arg2[%c0_1, %c0_2] : memref<128x1xf32, #tpu.memory_space<vmem>>, vector<128x1xf32>
    %3 = vector.broadcast %2 : vector<128x1xf32> to vector<128x128xf32>
    %4 = arith.mulf %1, %3 : vector<128x128xf32>
    %c0_3 = arith.constant 0 : index
    %c0_4 = arith.constant 0 : index
    %5 = vector.load %arg3[%c0_3, %c0_4] : memref<128x1xf32, #tpu.memory_space<vmem>>, vector<128x1xf32>
    %6 = vector.broadcast %5 : vector<128x1xf32> to vector<128x128xf32>
    %7 = arith.addf %4, %6 : vector<128x128xf32>
    %cst = arith.constant 0.000000e+00 : f32
    %8 = vector.broadcast %cst : f32 to vector<128x128xf32>
    %9 = arith.maximumf %7, %8 : vector<128x128xf32>
    %10 = arith.truncf %9 : vector<128x128xf32> to vector<128x128xbf16>
    %c0_5 = arith.constant 0 : index
    %c0_6 = arith.constant 0 : index
    %11 = vector.load %arg4[%c0_5, %c0_6] : memref<128x128xbf16, #tpu.memory_space<vmem>>, vector<128x128xbf16>
    tpu.vector_store %arg4[%c0_5, %c0_6], %10 {strides = array<i32>} : memref<128x128xbf16, #tpu.memory_space<vmem>>, vector<128x128xbf16>,
    return
  }
  func.func @transform_0(%arg0: i32) -> (i32, i32) {
    %c0_i32 = arith.constant 0 : i32
    %c0_i32_0 = arith.constant 0 : i32
    return %c0_i32, %arg0 : i32, i32
  }
  func.func @transform_1(%arg0: i32) -> (i32, i32) {
    %c0_i32 = arith.constant 0 : i32
    %c0_i32_0 = arith.constant 0 : i32
    %c0_i32_1 = arith.constant 0 : i32
    return %c0_i32, %c0_i32_0 : i32, i32
  }
  func.func @transform_2(%arg0: i32) -> (i32, i32) {
    %c0_i32 = arith.constant 0 : i32
    %c0_i32_0 = arith.constant 0 : i32
    %c0_i32_1 = arith.constant 0 : i32
    return %c0_i32, %c0_i32_0 : i32, i32
  }
  func.func @transform_3(%arg0: i32) -> (i32, i32) {
    %c0_i32 = arith.constant 0 : i32
    %c0_i32_0 = arith.constant 0 : i32
    return %c0_i32, %arg0 : i32, i32
  }
}

module attributes {stable_mosaic.version = 11 : i64} {
  func.func @_matmul_stats_kernel(%arg0: i32, %arg1: memref<64x288xbf16, #tpu.memory_space<vmem>>, %arg2: memref<288x512xbf16, #tpu.memory_space<vmem>>, %arg3: memref<64x512xbf16, #tpu.memory_space<vmem>>, %arg4: memref<64x128xf32, #tpu.memory_space<vmem>>, %arg5: memref<64x128xf32, #tpu.memory_space<vmem>>) attributes {dimension_semantics = [#tpu.dimension_semantics<parallel>], iteration_bounds = array<i64: 1>, scalar_prefetch = 0 : i64, scratch_operands = 0 : i64, tpu.core_type = #tpu.core_type<tc>, window_params = [{pipeline_mode = #tpu.pipeline_mode<synchronous>, transform_indices = @transform_0, window_bounds = array<i64: 64, 288>}, {transform_indices = @transform_1, window_bounds = array<i64: 288, 512>}, {transform_indices = @transform_2, window_bounds = array<i64: 64, 512>}, {transform_indices = @transform_3, window_bounds = array<i64: 64, 128>}, {transform_indices = @transform_4, window_bounds = array<i64: 64, 128>}]} {
    %c0 = arith.constant 0 : index
    %c0_0 = arith.constant 0 : index
    %0 = vector.load %arg1[%c0, %c0_0] : memref<64x288xbf16, #tpu.memory_space<vmem>>, vector<64x288xbf16>
    %c0_1 = arith.constant 0 : index
    %c0_2 = arith.constant 0 : index
    %1 = vector.load %arg2[%c0_1, %c0_2] : memref<288x512xbf16, #tpu.memory_space<vmem>>, vector<288x512xbf16>
    %cst = arith.constant dense<0.000000e+00> : vector<64x512xf32>
    %2 = tpu.matmul %0, %1, %cst {dimension_numbers = #tpu.dot_dimension_numbers<[1], [0], [0], [1], [0, 0, 1, 1], [], []>} : vector<64x288xbf16>, vector<288x512xbf16>, vector<64x512xf32> -> vector<64x512xf32>
    %3 = arith.truncf %2 : vector<64x512xf32> to vector<64x512xbf16>
    %c0_3 = arith.constant 0 : index
    %c0_4 = arith.constant 0 : index
    %4 = vector.load %arg3[%c0_3, %c0_4] : memref<64x512xbf16, #tpu.memory_space<vmem>>, vector<64x512xbf16>
    tpu.vector_store %arg3[%c0_3, %c0_4], %3 {strides = array<i32>} : memref<64x512xbf16, #tpu.memory_space<vmem>>, vector<64x512xbf16>,
    %5 = vector.extract_strided_slice %2 {offsets = [0, 0], sizes = [64, 128], strides = [1, 1]} : vector<64x512xf32> to vector<64x128xf32>
    %6 = arith.mulf %5, %5 : vector<64x128xf32>
    %7 = vector.extract_strided_slice %2 {offsets = [0, 128], sizes = [64, 128], strides = [1, 1]} : vector<64x512xf32> to vector<64x128xf32>
    %8 = arith.addf %5, %7 : vector<64x128xf32>
    %9 = arith.mulf %7, %7 : vector<64x128xf32>
    %10 = arith.addf %6, %9 : vector<64x128xf32>
    %11 = vector.extract_strided_slice %2 {offsets = [0, 256], sizes = [64, 128], strides = [1, 1]} : vector<64x512xf32> to vector<64x128xf32>
    %12 = arith.addf %8, %11 : vector<64x128xf32>
    %13 = arith.mulf %11, %11 : vector<64x128xf32>
    %14 = arith.addf %10, %13 : vector<64x128xf32>
    %15 = vector.extract_strided_slice %2 {offsets = [0, 384], sizes = [64, 128], strides = [1, 1]} : vector<64x512xf32> to vector<64x128xf32>
    %16 = arith.addf %12, %15 : vector<64x128xf32>
    %17 = arith.mulf %15, %15 : vector<64x128xf32>
    %18 = arith.addf %14, %17 : vector<64x128xf32>
    %c0_5 = arith.constant 0 : index
    %c0_6 = arith.constant 0 : index
    %19 = vector.load %arg4[%c0_5, %c0_6] : memref<64x128xf32, #tpu.memory_space<vmem>>, vector<64x128xf32>
    tpu.vector_store %arg4[%c0_5, %c0_6], %16 {strides = array<i32>} : memref<64x128xf32, #tpu.memory_space<vmem>>, vector<64x128xf32>,
    %c0_7 = arith.constant 0 : index
    %c0_8 = arith.constant 0 : index
    %20 = vector.load %arg5[%c0_7, %c0_8] : memref<64x128xf32, #tpu.memory_space<vmem>>, vector<64x128xf32>
    tpu.vector_store %arg5[%c0_7, %c0_8], %18 {strides = array<i32>} : memref<64x128xf32, #tpu.memory_space<vmem>>, vector<64x128xf32>,
    return
  }
  func.func @transform_0(%arg0: i32) -> (i32, i32) {
    %c0_i32 = arith.constant 0 : i32
    %c0_i32_0 = arith.constant 0 : i32
    %c0_i32_1 = arith.constant 0 : i32
    return %c0_i32, %c0_i32_0 : i32, i32
  }
  func.func @transform_1(%arg0: i32) -> (i32, i32) {
    %c0_i32 = arith.constant 0 : i32
    %c0_i32_0 = arith.constant 0 : i32
    return %c0_i32, %arg0 : i32, i32
  }
  func.func @transform_2(%arg0: i32) -> (i32, i32) {
    %c0_i32 = arith.constant 0 : i32
    %c0_i32_0 = arith.constant 0 : i32
    return %c0_i32, %arg0 : i32, i32
  }
  func.func @transform_3(%arg0: i32) -> (i32, i32) {
    %c0_i32 = arith.constant 0 : i32
    %c0_i32_0 = arith.constant 0 : i32
    return %c0_i32, %arg0 : i32, i32
  }
  func.func @transform_4(%arg0: i32) -> (i32, i32) {
    %c0_i32 = arith.constant 0 : i32
    %c0_i32_0 = arith.constant 0 : i32
    return %c0_i32, %arg0 : i32, i32
  }
}

module attributes {stable_mosaic.version = 11 : i64} {
  func.func @_bn_relu_kernel(%arg0: i32, %arg1: memref<64x512xbf16, #tpu.memory_space<vmem>>, %arg2: memref<64x1xf32, #tpu.memory_space<vmem>>, %arg3: memref<64x1xf32, #tpu.memory_space<vmem>>, %arg4: memref<64x512xbf16, #tpu.memory_space<vmem>>) attributes {dimension_semantics = [#tpu.dimension_semantics<parallel>], iteration_bounds = array<i64: 1>, scalar_prefetch = 0 : i64, scratch_operands = 0 : i64, tpu.core_type = #tpu.core_type<tc>, window_params = [{transform_indices = @transform_0, window_bounds = array<i64: 64, 512>}, {pipeline_mode = #tpu.pipeline_mode<synchronous>, transform_indices = @transform_1, window_bounds = array<i64: 64, 1>}, {pipeline_mode = #tpu.pipeline_mode<synchronous>, transform_indices = @transform_2, window_bounds = array<i64: 64, 1>}, {transform_indices = @transform_3, window_bounds = array<i64: 64, 512>}]} {
    %c0 = arith.constant 0 : index
    %c0_0 = arith.constant 0 : index
    %0 = vector.load %arg1[%c0, %c0_0] : memref<64x512xbf16, #tpu.memory_space<vmem>>, vector<64x512xbf16>
    %1 = arith.extf %0 : vector<64x512xbf16> to vector<64x512xf32>
    %c0_1 = arith.constant 0 : index
    %c0_2 = arith.constant 0 : index
    %2 = vector.load %arg2[%c0_1, %c0_2] : memref<64x1xf32, #tpu.memory_space<vmem>>, vector<64x1xf32>
    %3 = vector.broadcast %2 : vector<64x1xf32> to vector<64x512xf32>
    %4 = arith.mulf %1, %3 : vector<64x512xf32>
    %c0_3 = arith.constant 0 : index
    %c0_4 = arith.constant 0 : index
    %5 = vector.load %arg3[%c0_3, %c0_4] : memref<64x1xf32, #tpu.memory_space<vmem>>, vector<64x1xf32>
    %6 = vector.broadcast %5 : vector<64x1xf32> to vector<64x512xf32>
    %7 = arith.addf %4, %6 : vector<64x512xf32>
    %cst = arith.constant 0.000000e+00 : f32
    %8 = vector.broadcast %cst : f32 to vector<64x512xf32>
    %9 = arith.maximumf %7, %8 : vector<64x512xf32>
    %10 = arith.truncf %9 : vector<64x512xf32> to vector<64x512xbf16>
    %c0_5 = arith.constant 0 : index
    %c0_6 = arith.constant 0 : index
    %11 = vector.load %arg4[%c0_5, %c0_6] : memref<64x512xbf16, #tpu.memory_space<vmem>>, vector<64x512xbf16>
    tpu.vector_store %arg4[%c0_5, %c0_6], %10 {strides = array<i32>} : memref<64x512xbf16, #tpu.memory_space<vmem>>, vector<64x512xbf16>,
    return
  }
  func.func @transform_0(%arg0: i32) -> (i32, i32) {
    %c0_i32 = arith.constant 0 : i32
    %c0_i32_0 = arith.constant 0 : i32
    return %c0_i32, %arg0 : i32, i32
  }
  func.func @transform_1(%arg0: i32) -> (i32, i32) {
    %c0_i32 = arith.constant 0 : i32
    %c0_i32_0 = arith.constant 0 : i32
    %c0_i32_1 = arith.constant 0 : i32
    return %c0_i32, %c0_i32_0 : i32, i32
  }
  func.func @transform_2(%arg0: i32) -> (i32, i32) {
    %c0_i32 = arith.constant 0 : i32
    %c0_i32_0 = arith.constant 0 : i32
    %c0_i32_1 = arith.constant 0 : i32
    return %c0_i32, %c0_i32_0 : i32, i32
  }
  func.func @transform_3(%arg0: i32) -> (i32, i32) {
    %c0_i32 = arith.constant 0 : i32
    %c0_i32_0 = arith.constant 0 : i32
    return %c0_i32, %arg0 : i32, i32
  }
}

module attributes {stable_mosaic.version = 11 : i64} {
  func.func @_matmul_tanh_kernel(%arg0: i32, %arg1: memref<16x144xbf16, #tpu.memory_space<vmem>>, %arg2: memref<144x2048xbf16, #tpu.memory_space<vmem>>, %arg3: memref<16x2048xf32, #tpu.memory_space<vmem>>) attributes {dimension_semantics = [#tpu.dimension_semantics<parallel>], iteration_bounds = array<i64: 1>, scalar_prefetch = 0 : i64, scratch_operands = 0 : i64, tpu.core_type = #tpu.core_type<tc>, window_params = [{pipeline_mode = #tpu.pipeline_mode<synchronous>, transform_indices = @transform_0, window_bounds = array<i64: 16, 144>}, {transform_indices = @transform_1, window_bounds = array<i64: 144, 2048>}, {transform_indices = @transform_2, window_bounds = array<i64: 16, 2048>}]} {
    %c0 = arith.constant 0 : index
    %c0_0 = arith.constant 0 : index
    %0 = vector.load %arg1[%c0, %c0_0] : memref<16x144xbf16, #tpu.memory_space<vmem>>, vector<16x144xbf16>
    %c0_1 = arith.constant 0 : index
    %c0_2 = arith.constant 0 : index
    %1 = vector.load %arg2[%c0_1, %c0_2] : memref<144x2048xbf16, #tpu.memory_space<vmem>>, vector<144x2048xbf16>
    %cst = arith.constant dense<0.000000e+00> : vector<16x2048xf32>
    %2 = tpu.matmul %0, %1, %cst {dimension_numbers = #tpu.dot_dimension_numbers<[1], [0], [0], [1], [0, 0, 1, 1], [], []>} : vector<16x144xbf16>, vector<144x2048xbf16>, vector<16x2048xf32> -> vector<16x2048xf32>
    %3 = math.tanh %2 : vector<16x2048xf32>
    %c0_3 = arith.constant 0 : index
    %c0_4 = arith.constant 0 : index
    %4 = vector.load %arg3[%c0_3, %c0_4] : memref<16x2048xf32, #tpu.memory_space<vmem>>, vector<16x2048xf32>
    tpu.vector_store %arg3[%c0_3, %c0_4], %3 {strides = array<i32>} : memref<16x2048xf32, #tpu.memory_space<vmem>>, vector<16x2048xf32>,
    return
  }
  func.func @transform_0(%arg0: i32) -> (i32, i32) {
    %c0_i32 = arith.constant 0 : i32
    %c0_i32_0 = arith.constant 0 : i32
    %c0_i32_1 = arith.constant 0 : i32
    return %c0_i32, %c0_i32_0 : i32, i32
  }
  func.func @transform_1(%arg0: i32) -> (i32, i32) {
    %c0_i32 = arith.constant 0 : i32
    %c0_i32_0 = arith.constant 0 : i32
    return %c0_i32, %arg0 : i32, i32
  }
  func.func @transform_2(%arg0: i32) -> (i32, i32) {
    %c0_i32 = arith.constant 0 : i32
    %c0_i32_0 = arith.constant 0 : i32
    return %c0_i32, %arg0 : i32, i32
  }
}

</mosaic_0001>

<llo_original>
// kernel: tile.33
$region0: #{tile.33}
  #allocation0 [shape = 's32[1]{0}', space=sflag, size = 0x4, scoped, tag = 'scoped memory for tile.33']
  %s0 = inlined_call_operand.vmem [shape: f32[64], index: 0, kind: input, shape index: {}]
  %s1 = inlined_call_operand.vmem [shape: f32[4,64], index: 1, kind: output, shape index: {}]
  // Predicated region
  $region2: #{tile.33} parent=0 // pred_check
    _
  $region3: #{tile.33} parent=0 // pred_check_branch
    %3 = sbr.rel (0) target = $region5
  $region4: #{tile.33} parent=0 // pred_region
    _
  $region5: #{tile.33} parent=0 // pred_fallthru
    _
  %v4 = vld [vmem:[%s0] ss:$0 sm:$0xff]
  %5 = vst [vmem:[%s1] sm:$0xf] %v4

// kernel: generator_forward.7
$region0: #{generator_forward.7}
  #allocation0 [shape = 'u32[]', space=smem, size = 0x4, offset = 0x4, fixed_abs, tag = 'smem constant byte address 0x4 - core index']
  #allocation1 [shape = 'u32[144,128]{1,0:T(1,128)}', space=vmem, size = 0x12000, scoped, tag = 'internal scratch']
  %s0 = inlined_call_operand.vmem [shape: bf16[256,1152], index: 0, kind: input, shape index: {}]
  %s1 = inlined_call_operand.vmem [shape: bf16[1152,128], index: 1, kind: input, shape index: {}]
  %s2 = inlined_call_operand.vmem [shape: bf16[256,128], index: 2, kind: output, shape index: {0}]
  %s3 = inlined_call_operand.vmem [shape: f32[256,128], index: 3, kind: output, shape index: {1}]
  %s4 = inlined_call_operand.vmem [shape: f32[256,128], index: 4, kind: output, shape index: {2}]
  %5 = xla_tuple %s2, %s3, %s4
  %s6 = sld [smem:[#allocation0]]
  $region34: #{generator_forward.7} parent=0
    _
  %s8 = ssub.s32 1, %s6
  %s9 = scalar_select 0, %s8, %s6
  // Predicated region
  $region2: #{generator_forward.7} parent=0 // pred_check
    _
  $region3: #{generator_forward.7} parent=0 // pred_check_branch
    %11 = sbr.rel (0) target = $region5
  $region4: #{generator_forward.7} parent=0 // pred_region
    _
  $region5: #{generator_forward.7} parent=0 // pred_fallthru
    _
  // Predicated region
  $region6: #{generator_forward.7} parent=0 // pred_check
    _
  $region7: #{generator_forward.7} parent=0 // pred_check_branch
    %13 = sbr.rel (0) target = $region9
  $region8: #{generator_forward.7} parent=0 // pred_region
    _
  $region9: #{generator_forward.7} parent=0 // pred_fallthru
    _
  %v15 = vld [vmem:[%s0] sm:$0xff]
  %v16 = vld [vmem:[%s0 + $0x8] sm:$0xff]
  %v17 = vld [vmem:[%s0 + $0x10] sm:$0xff]
  %v18 = vld [vmem:[%s0 + $0x18] sm:$0xff]
  %v19 = vld [vmem:[%s0 + $0x20] sm:$0xf]
  %v20 = vld [vmem:[%s0 + $0x24] sm:$0xff]
  %v21 = vld [vmem:[%s0 + $0x2c] sm:$0xff]
  %v22 = vld [vmem:[%s0 + $0x34] sm:$0xff]
  %v23 = vld [vmem:[%s0 + $0x3c] sm:$0xff]
  %v24 = vld [vmem:[%s0 + $0x44] sm:$0xf]
  %v25 = vld [vmem:[%s0 + $0x48] sm:$0xff]
  %v26 = vld [vmem:[%s0 + $0x50] sm:$0xff]
  %v27 = vld [vmem:[%s0 + $0x58] sm:$0xff]
  %v28 = vld [vmem:[%s0 + $0x60] sm:$0xff]
  %v29 = vld [vmem:[%s0 + $0x68] sm:$0xf]
  %v30 = vld [vmem:[%s0 + $0x6c] sm:$0xff]
  %v31 = vld [vmem:[%s0 + $0x74] sm:$0xff]
  %v32 = vld [vmem:[%s0 + $0x7c] sm:$0xff]
  %v33 = vld [vmem:[%s0 + $0x84] sm:$0xff]
  %v34 = vld [vmem:[%s0 + $0x8c] sm:$0xf]
  %v35 = vld [vmem:[%s0 + $0x90] sm:$0xff]
  %v36 = vld [vmem:[%s0 + $0x98] sm:$0xff]
  %v37 = vld [vmem:[%s0 + $0xa0] sm:$0xff]
  %v38 = vld [vmem:[%s0 + $0xa8] sm:$0xff]
  %v39 = vld [vmem:[%s0 + $0xb0] sm:$0xf]
  %v40 = vld [vmem:[%s0 + $0xb4] sm:$0xff]
  %v41 = vld [vmem:[%s0 + $0xbc] sm:$0xff]
  %v42 = vld [vmem:[%s0 + $0xc4] sm:$0xff]
  %v43 = vld [vmem:[%s0 + $0xcc] sm:$0xff]
  %v44 = vld [vmem:[%s0 + $0xd4] sm:$0xf]
  %v45 = vld [vmem:[%s0 + $0xd8] sm:$0xff]
  %v46 = vld [vmem:[%s0 + $0xe0] sm:$0xff]
  %v47 = vld [vmem:[%s0 + $0xe8] sm:$0xff]
  %v48 = vld [vmem:[%s0 + $0xf0] sm:$0xff]
  %v49 = vld [vmem:[%s0 + $0xf8] sm:$0xf]
  %v50 = vld [vmem:[%s0 + $0xfc] sm:$0xff]
  %v51 = vld [vmem:[%s0 + $0x104] sm:$0xff]
  %v52 = vld [vmem:[%s0 + $0x10c] sm:$0xff]
  %v53 = vld [vmem:[%s0 + $0x114] sm:$0xff]
  %v54 = vld [vmem:[%s0 + $0x11c] sm:$0xf]
  %v55 = vld [vmem:[%s0 + $0x120] sm:$0xff]
  %v56 = vld [vmem:[%s0 + $0x128] sm:$0xff]
  %v57 = vld [vmem:[%s0 + $0x130] sm:$0xff]
  %v58 = vld [vmem:[%s0 + $0x138] sm:$0xff]
  %v59 = vld [vmem:[%s0 + $0x140] sm:$0xf]
  %v60 = vld [vmem:[%s0 + $0x144] sm:$0xff]
  %v61 = vld [vmem:[%s0 + $0x14c] sm:$0xff]
  %v62 = vld [vmem:[%s0 + $0x154] sm:$0xff]
  %v63 = vld [vmem:[%s0 + $0x15c] sm:$0xff]
  %v64 = vld [vmem:[%s0 + $0x164] sm:$0xf]
  %v65 = vld [vmem:[%s0 + $0x168] sm:$0xff]
  %v66 = vld [vmem:[%s0 + $0x170] sm:$0xff]
  %v67 = vld [vmem:[%s0 + $0x178] sm:$0xff]
  %v68 = vld [vmem:[%s0 + $0x180] sm:$0xff]
  %v69 = vld [vmem:[%s0 + $0x188] sm:$0xf]
  %v70 = vld [vmem:[%s0 + $0x18c] sm:$0xff]
  %v71 = vld [vmem:[%s0 + $0x194] sm:$0xff]
  %v72 = vld [vmem:[%s0 + $0x19c] sm:$0xff]
  %v73 = vld [vmem:[%s0 + $0x1a4] sm:$0xff]
  %v74 = vld [vmem:[%s0 + $0x1ac] sm:$0xf]
  %v75 = vld [vmem:[%s0 + $0x1b0] sm:$0xff]
  %v76 = vld [vmem:[%s0 + $0x1b8] sm:$0xff]
  %v77 = vld [vmem:[%s0 + $0x1c0] sm:$0xff]
  %v78 = vld [vmem:[%s0 + $0x1c8] sm:$0xff]
  %v79 = vld [vmem:[%s0 + $0x1d0] sm:$0xf]
  %v80 = vld [vmem:[%s0 + $0x1d4] sm:$0xff]
  %v81 = vld [vmem:[%s0 + $0x1dc] sm:$0xff]
  %v82 = vld [vmem:[%s0 + $0x1e4] sm:$0xff]
  %v83 = vld [vmem:[%s0 + $0x1ec] sm:$0xff]
  %v84 = vld [vmem:[%s0 + $0x1f4] sm:$0xf]
  %v85 = vld [vmem:[%s0 + $0x1f8] sm:$0xff]
  %v86 = vld [vmem:[%s0 + $0x200] sm:$0xff]
  %v87 = vld [vmem:[%s0 + $0x208] sm:$0xff]
  %v88 = vld [vmem:[%s0 + $0x210] sm:$0xff]
  %v89 = vld [vmem:[%s0 + $0x218] sm:$0xf]
  %v90 = vld [vmem:[%s0 + $0x21c] sm:$0xff]
  %v91 = vld [vmem:[%s0 + $0x224] sm:$0xff]
  %v92 = vld [vmem:[%s0 + $0x22c] sm:$0xff]
  %v93 = vld [vmem:[%s0 + $0x234] sm:$0xff]
  %v94 = vld [vmem:[%s0 + $0x23c] sm:$0xf]
  %v95 = vld [vmem:[%s0 + $0x240] sm:$0xff]
  %v96 = vld [vmem:[%s0 + $0x248] sm:$0xff]
  %v97 = vld [vmem:[%s0 + $0x250] sm:$0xff]
  %v98 = vld [vmem:[%s0 + $0x258] sm:$0xff]
  %v99 = vld [vmem:[%s0 + $0x260] sm:$0xf]
  %v100 = vld [vmem:[%s0 + $0x264] sm:$0xff]
  %v101 = vld [vmem:[%s0 + $0x26c] sm:$0xff]
  %v102 = vld [vmem:[%s0 + $0x274] sm:$0xff]
  %v103 = vld [vmem:[%s0 + $0x27c] sm:$0xff]
  %v104 = vld [vmem:[%s0 + $0x284] sm:$0xf]
  %v105 = vld [vmem:[%s0 + $0x288] sm:$0xff]
  %v106 = vld [vmem:[%s0 + $0x290] sm:$0xff]
  %v107 = vld [vmem:[%s0 + $0x298] sm:$0xff]
  %v108 = vld [vmem:[%s0 + $0x2a0] sm:$0xff]
  %v109 = vld [vmem:[%s0 + $0x2a8] sm:$0xf]
  %v110 = vld [vmem:[%s0 + $0x2ac] sm:$0xff]
  %v111 = vld [vmem:[%s0 + $0x2b4] sm:$0xff]
  %v112 = vld [vmem:[%s0 + $0x2bc] sm:$0xff]
  %v113 = vld [vmem:[%s0 + $0x2c4] sm:$0xff]
  %v114 = vld [vmem:[%s0 + $0x2cc] sm:$0xf]
  %v115 = vld [vmem:[%s0 + $0x2d0] sm:$0xff]
  %v116 = vld [vmem:[%s0 + $0x2d8] sm:$0xff]
  %v117 = vld [vmem:[%s0 + $0x2e0] sm:$0xff]
  %v118 = vld [vmem:[%s0 + $0x2e8] sm:$0xff]
  %v119 = vld [vmem:[%s0 + $0x2f0] sm:$0xf]
  %v120 = vld [vmem:[%s0 + $0x2f4] sm:$0xff]
  %v121 = vld [vmem:[%s0 + $0x2fc] sm:$0xff]
  %v122 = vld [vmem:[%s0 + $0x304] sm:$0xff]
  %v123 = vld [vmem:[%s0 + $0x30c] sm:$0xff]
  %v124 = vld [vmem:[%s0 + $0x314] sm:$0xf]
  %v125 = vld [vmem:[%s0 + $0x318] sm:$0xff]
  %v126 = vld [vmem:[%s0 + $0x320] sm:$0xff]
  %v127 = vld [vmem:[%s0 + $0x328] sm:$0xff]
  %v128 = vld [vmem:[%s0 + $0x330] sm:$0xff]
  %v129 = vld [vmem:[%s0 + $0x338] sm:$0xf]
  %v130 = vld [vmem:[%s0 + $0x33c] sm:$0xff]
  %v131 = vld [vmem:[%s0 + $0x344] sm:$0xff]
  %v132 = vld [vmem:[%s0 + $0x34c] sm:$0xff]
  %v133 = vld [vmem:[%s0 + $0x354] sm:$0xff]
  %v134 = vld [vmem:[%s0 + $0x35c] sm:$0xf]
  %v135 = vld [vmem:[%s0 + $0x360] sm:$0xff]
  %v136 = vld [vmem:[%s0 + $0x368] sm:$0xff]
  %v137 = vld [vmem:[%s0 + $0x370] sm:$0xff]
  %v138 = vld [vmem:[%s0 + $0x378] sm:$0xff]
  %v139 = vld [vmem:[%s0 + $0x380] sm:$0xf]
  %v140 = vld [vmem:[%s0 + $0x384] sm:$0xff]
  %v141 = vld [vmem:[%s0 + $0x38c] sm:$0xff]
  %v142 = vld [vmem:[%s0 + $0x394] sm:$0xff]
  %v143 = vld [vmem:[%s0 + $0x39c] sm:$0xff]
  %v144 = vld [vmem:[%s0 + $0x3a4] sm:$0xf]
  %v145 = vld [vmem:[%s0 + $0x3a8] sm:$0xff]
  %v146 = vld [vmem:[%s0 + $0x3b0] sm:$0xff]
  %v147 = vld [vmem:[%s0 + $0x3b8] sm:$0xff]
  %v148 = vld [vmem:[%s0 + $0x3c0] sm:$0xff]
  %v149 = vld [vmem:[%s0 + $0x3c8] sm:$0xf]
  %v150 = vld [vmem:[%s0 + $0x3cc] sm:$0xff]
  %v151 = vld [vmem:[%s0 + $0x3d4] sm:$0xff]
  %v152 = vld [vmem:[%s0 + $0x3dc] sm:$0xff]
  %v153 = vld [vmem:[%s0 + $0x3e4] sm:$0xff]
  %v154 = vld [vmem:[%s0 + $0x3ec] sm:$0xf]
  %v155 = vld [vmem:[%s0 + $0x3f0] sm:$0xff]
  %v156 = vld [vmem:[%s0 + $0x3f8] sm:$0xff]
  %v157 = vld [vmem:[%s0 + $0x400] sm:$0xff]
  %v158 = vld [vmem:[%s0 + $0x408] sm:$0xff]
  %v159 = vld [vmem:[%s0 + $0x410] sm:$0xf]
  %v160 = vld [vmem:[%s0 + $0x414] sm:$0xff]
  %v161 = vld [vmem:[%s0 + $0x41c] sm:$0xff]
  %v162 = vld [vmem:[%s0 + $0x424] sm:$0xff]
  %v163 = vld [vmem:[%s0 + $0x42c] sm:$0xff]
  %v164 = vld [vmem:[%s0 + $0x434] sm:$0xf]
  %v165 = vld [vmem:[%s0 + $0x438] sm:$0xff]
  %v166 = vld [vmem:[%s0 + $0x440] sm:$0xff]
  %v167 = vld [vmem:[%s0 + $0x448] sm:$0xff]
  %v168 = vld [vmem:[%s0 + $0x450] sm:$0xff]
  %v169 = vld [vmem:[%s0 + $0x458] sm:$0xf]
  %v170 = vld [vmem:[%s0 + $0x45c] sm:$0xff]
  %v171 = vld [vmem:[%s0 + $0x464] sm:$0xff]
  %v172 = vld [vmem:[%s0 + $0x46c] sm:$0xff]
  %v173 = vld [vmem:[%s0 + $0x474] sm:$0xff]
  %v174 = vld [vmem:[%s0 + $0x47c] sm:$0xf]
  %v175 = vld [vmem:[%s1] sm:$0xf]
  %v176 = vld [vmem:[%s1 + $0x4] sm:$0xf]
  %v177 = vld [vmem:[%s1 + $0x8] sm:$0xf]
  %v178 = vld [vmem:[%s1 + $0xc] sm:$0xf]
  %v179 = vld [vmem:[%s1 + $0x10] sm:$0xf]
  %v180 = vld [vmem:[%s1 + $0x14] sm:$0xf]
  %v181 = vld [vmem:[%s1 + $0x18] sm:$0xf]
  %v182 = vld [vmem:[%s1 + $0x1c] sm:$0xf]
  %v183 = vld [vmem:[%s1 + $0x20] sm:$0xf]
  %v184 = vld [vmem:[%s1 + $0x24] sm:$0xf]
  %v185 = vld [vmem:[%s1 + $0x28] sm:$0xf]
  %v186 = vld [vmem:[%s1 + $0x2c] sm:$0xf]
  %v187 = vld [vmem:[%s1 + $0x30] sm:$0xf]
  %v188 = vld [vmem:[%s1 + $0x34] sm:$0xf]
  %v189 = vld [vmem:[%s1 + $0x38] sm:$0xf]
  %v190 = vld [vmem:[%s1 + $0x3c] sm:$0xf]
  %v191 = vld [vmem:[%s1 + $0x40] sm:$0xf]
  %v192 = vld [vmem:[%s1 + $0x44] sm:$0xf]
  %v193 = vld [vmem:[%s1 + $0x48] sm:$0xf]
  %v194 = vld [vmem:[%s1 + $0x4c] sm:$0xf]
  %v195 = vld [vmem:[%s1 + $0x50] sm:$0xf]
  %v196 = vld [vmem:[%s1 + $0x54] sm:$0xf]
  %v197 = vld [vmem:[%s1 + $0x58] sm:$0xf]
  %v198 = vld [vmem:[%s1 + $0x5c] sm:$0xf]
  %v199 = vld [vmem:[%s1 + $0x60] sm:$0xf]
  %v200 = vld [vmem:[%s1 + $0x64] sm:$0xf]
  %v201 = vld [vmem:[%s1 + $0x68] sm:$0xf]
  %v202 = vld [vmem:[%s1 + $0x6c] sm:$0xf]
  %v203 = vld [vmem:[%s1 + $0x70] sm:$0xf]
  %v204 = vld [vmem:[%s1 + $0x74] sm:$0xf]
  %v205 = vld [vmem:[%s1 + $0x78] sm:$0xf]
  %v206 = vld [vmem:[%s1 + $0x7c] sm:$0xf]
  %v207 = vld [vmem:[%s1 + $0x80] sm:$0xf]
  %v208 = vld [vmem:[%s1 + $0x84] sm:$0xf]
  %v209 = vld [vmem:[%s1 + $0x88] sm:$0xf]
  %v210 = vld [vmem:[%s1 + $0x8c] sm:$0xf]
  %v211 = vld [vmem:[%s1 + $0x90] sm:$0xf]
  %v212 = vld [vmem:[%s1 + $0x94] sm:$0xf]
  %v213 = vld [vmem:[%s1 + $0x98] sm:$0xf]
  %v214 = vld [vmem:[%s1 + $0x9c] sm:$0xf]
  %v215 = vld [vmem:[%s1 + $0xa0] sm:$0xf]
  %v216 = vld [vmem:[%s1 + $0xa4] sm:$0xf]
  %v217 = vld [vmem:[%s1 + $0xa8] sm:$0xf]
  %v218 = vld [vmem:[%s1 + $0xac] sm:$0xf]
  %v219 = vld [vmem:[%s1 + $0xb0] sm:$0xf]
  %v220 = vld [vmem:[%s1 + $0xb4] sm:$0xf]
  %v221 = vld [vmem:[%s1 + $0xb8] sm:$0xf]
  %v222 = vld [vmem:[%s1 + $0xbc] sm:$0xf]
  %v223 = vld [vmem:[%s1 + $0xc0] sm:$0xf]
  %v224 = vld [vmem:[%s1 + $0xc4] sm:$0xf]
  %v225 = vld [vmem:[%s1 + $0xc8] sm:$0xf]
  %v226 = vld [vmem:[%s1 + $0xcc] sm:$0xf]
  %v227 = vld [vmem:[%s1 + $0xd0] sm:$0xf]
  %v228 = vld [vmem:[%s1 + $0xd4] sm:$0xf]
  %v229 = vld [vmem:[%s1 + $0xd8] sm:$0xf]
  %v230 = vld [vmem:[%s1 + $0xdc] sm:$0xf]
  %v231 = vld [vmem:[%s1 + $0xe0] sm:$0xf]
  %v232 = vld [vmem:[%s1 + $0xe4] sm:$0xf]
  %v233 = vld [vmem:[%s1 + $0xe8] sm:$0xf]
  %v234 = vld [vmem:[%s1 + $0xec] sm:$0xf]
  %v235 = vld [vmem:[%s1 + $0xf0] sm:$0xf]
  %v236 = vld [vmem:[%s1 + $0xf4] sm:$0xf]
  %v237 = vld [vmem:[%s1 + $0xf8] sm:$0xf]
  %v238 = vld [vmem:[%s1 + $0xfc] sm:$0xf]
  %v239 = vld [vmem:[%s1 + $0x100] sm:$0xf]
  %v240 = vld [vmem:[%s1 + $0x104] sm:$0xf]
  %v241 = vld [vmem:[%s1 + $0x108] sm:$0xf]
  %v242 = vld [vmem:[%s1 + $0x10c] sm:$0xf]
  %v243 = vld [vmem:[%s1 + $0x110] sm:$0xf]
  %v244 = vld [vmem:[%s1 + $0x114] sm:$0xf]
  %v245 = vld [vmem:[%s1 + $0x118] sm:$0xf]
  %v246 = vld [vmem:[%s1 + $0x11c] sm:$0xf]
  %v247 = vld [vmem:[%s1 + $0x120] sm:$0xf]
  %v248 = vld [vmem:[%s1 + $0x124] sm:$0xf]
  %v249 = vld [vmem:[%s1 + $0x128] sm:$0xf]
  %v250 = vld [vmem:[%s1 + $0x12c] sm:$0xf]
  %v251 = vld [vmem:[%s1 + $0x130] sm:$0xf]
  %v252 = vld [vmem:[%s1 + $0x134] sm:$0xf]
  %v253 = vld [vmem:[%s1 + $0x138] sm:$0xf]
  %v254 = vld [vmem:[%s1 + $0x13c] sm:$0xf]
  %v255 = vld [vmem:[%s1 + $0x140] sm:$0xf]
  %v256 = vld [vmem:[%s1 + $0x144] sm:$0xf]
  %v257 = vld [vmem:[%s1 + $0x148] sm:$0xf]
  %v258 = vld [vmem:[%s1 + $0x14c] sm:$0xf]
  %v259 = vld [vmem:[%s1 + $0x150] sm:$0xf]
  %v260 = vld [vmem:[%s1 + $0x154] sm:$0xf]
  %v261 = vld [vmem:[%s1 + $0x158] sm:$0xf]
  %v262 = vld [vmem:[%s1 + $0x15c] sm:$0xf]
  %v263 = vld [vmem:[%s1 + $0x160] sm:$0xf]
  %v264 = vld [vmem:[%s1 + $0x164] sm:$0xf]
  %v265 = vld [vmem:[%s1 + $0x168] sm:$0xf]
  %v266 = vld [vmem:[%s1 + $0x16c] sm:$0xf]
  %v267 = vld [vmem:[%s1 + $0x170] sm:$0xf]
  %v268 = vld [vmem:[%s1 + $0x174] sm:$0xf]
  %v269 = vld [vmem:[%s1 + $0x178] sm:$0xf]
  %v270 = vld [vmem:[%s1 + $0x17c] sm:$0xf]
  %v271 = vld [vmem:[%s1 + $0x180] sm:$0xf]
  %v272 = vld [vmem:[%s1 + $0x184] sm:$0xf]
  %v273 = vld [vmem:[%s1 + $0x188] sm:$0xf]
  %v274 = vld [vmem:[%s1 + $0x18c] sm:$0xf]
  %v275 = vld [vmem:[%s1 + $0x190] sm:$0xf]
  %v276 = vld [vmem:[%s1 + $0x194] sm:$0xf]
  %v277 = vld [vmem:[%s1 + $0x198] sm:$0xf]
  %v278 = vld [vmem:[%s1 + $0x19c] sm:$0xf]
  %v279 = vld [vmem:[%s1 + $0x1a0] sm:$0xf]
  %v280 = vld [vmem:[%s1 + $0x1a4] sm:$0xf]
  %v281 = vld [vmem:[%s1 + $0x1a8] sm:$0xf]
  %v282 = vld [vmem:[%s1 + $0x1ac] sm:$0xf]
  %v283 = vld [vmem:[%s1 + $0x1b0] sm:$0xf]
  %v284 = vld [vmem:[%s1 + $0x1b4] sm:$0xf]
  %v285 = vld [vmem:[%s1 + $0x1b8] sm:$0xf]
  %v286 = vld [vmem:[%s1 + $0x1bc] sm:$0xf]
  %v287 = vld [vmem:[%s1 + $0x1c0] sm:$0xf]
  %v288 = vld [vmem:[%s1 + $0x1c4] sm:$0xf]
  %v289 = vld [vmem:[%s1 + $0x1c8] sm:$0xf]
  %v290 = vld [vmem:[%s1 + $0x1cc] sm:$0xf]
  %v291 = vld [vmem:[%s1 + $0x1d0] sm:$0xf]
  %v292 = vld [vmem:[%s1 + $0x1d4] sm:$0xf]
  %v293 = vld [vmem:[%s1 + $0x1d8] sm:$0xf]
  %v294 = vld [vmem:[%s1 + $0x1dc] sm:$0xf]
  %v295 = vld [vmem:[%s1 + $0x1e0] sm:$0xf]
  %v296 = vld [vmem:[%s1 + $0x1e4] sm:$0xf]
  %v297 = vld [vmem:[%s1 + $0x1e8] sm:$0xf]
  %v298 = vld [vmem:[%s1 + $0x1ec] sm:$0xf]
  %v299 = vld [vmem:[%s1 + $0x1f0] sm:$0xf]
  %v300 = vld [vmem:[%s1 + $0x1f4] sm:$0xf]
  %v301 = vld [vmem:[%s1 + $0x1f8] sm:$0xf]
  %v302 = vld [vmem:[%s1 + $0x1fc] sm:$0xf]
  %v303 = vld [vmem:[%s1 + $0x200] sm:$0xf]
  %v304 = vld [vmem:[%s1 + $0x204] sm:$0xf]
  %v305 = vld [vmem:[%s1 + $0x208] sm:$0xf]
  %v306 = vld [vmem:[%s1 + $0x20c] sm:$0xf]
  %v307 = vld [vmem:[%s1 + $0x210] sm:$0xf]
  %v308 = vld [vmem:[%s1 + $0x214] sm:$0xf]
  %v309 = vld [vmem:[%s1 + $0x218] sm:$0xf]
  %v310 = vld [vmem:[%s1 + $0x21c] sm:$0xf]
  %v311 = vld [vmem:[%s1 + $0x220] sm:$0xf]
  %v312 = vld [vmem:[%s1 + $0x224] sm:$0xf]
  %v313 = vld [vmem:[%s1 + $0x228] sm:$0xf]
  %v314 = vld [vmem:[%s1 + $0x22c] sm:$0xf]
  %v315 = vld [vmem:[%s1 + $0x230] sm:$0xf]
  %v316 = vld [vmem:[%s1 + $0x234] sm:$0xf]
  %v317 = vld [vmem:[%s1 + $0x238] sm:$0xf]
  %v318 = vld [vmem:[%s1 + $0x23c] sm:$0xf]
  %v479 = vunpack.c.l.b16 %v15
  %v480 = vunpack.c.h.b16 %v15
  %v481 = vunpack.c.l.b16 %v16
  %v482 = vunpack.c.h.b16 %v16
  %v483 = vunpack.c.l.b16 %v17
  %v484 = vunpack.c.h.b16 %v17
  %v485 = vunpack.c.l.b16 %v18
  %v486 = vunpack.c.h.b16 %v18
  %v487 = vunpack.c.l.b16 %v19
  %v488 = vunpack.c.l.b16 %v20
  %v489 = vunpack.c.h.b16 %v20
  %v490 = vunpack.c.l.b16 %v21
  %v491 = vunpack.c.h.b16 %v21
  %v492 = vunpack.c.l.b16 %v22
  %v493 = vunpack.c.h.b16 %v22
  %v494 = vunpack.c.l.b16 %v23
  %v495 = vunpack.c.h.b16 %v23
  %v496 = vunpack.c.l.b16 %v24
  %v497 = vunpack.c.l.b16 %v25
  %v498 = vunpack.c.h.b16 %v25
  %v499 = vunpack.c.l.b16 %v26
  %v500 = vunpack.c.h.b16 %v26
  %v501 = vunpack.c.l.b16 %v27
  %v502 = vunpack.c.h.b16 %v27
  %v503 = vunpack.c.l.b16 %v28
  %v504 = vunpack.c.h.b16 %v28
  %v505 = vunpack.c.l.b16 %v29
  %v506 = vunpack.c.l.b16 %v30
  %v507 = vunpack.c.h.b16 %v30
  %v508 = vunpack.c.l.b16 %v31
  %v509 = vunpack.c.h.b16 %v31
  %v510 = vunpack.c.l.b16 %v32
  %v511 = vunpack.c.h.b16 %v32
  %v512 = vunpack.c.l.b16 %v33
  %v513 = vunpack.c.h.b16 %v33
  %v514 = vunpack.c.l.b16 %v34
  %v515 = vunpack.c.l.b16 %v35
  %v516 = vunpack.c.h.b16 %v35
  %v517 = vunpack.c.l.b16 %v36
  %v518 = vunpack.c.h.b16 %v36
  %v519 = vunpack.c.l.b16 %v37
  %v520 = vunpack.c.h.b16 %v37
  %v521 = vunpack.c.l.b16 %v38
  %v522 = vunpack.c.h.b16 %v38
  %v523 = vunpack.c.l.b16 %v39
  %v524 = vunpack.c.l.b16 %v40
  %v525 = vunpack.c.h.b16 %v40
  %v526 = vunpack.c.l.b16 %v41
  %v527 = vunpack.c.h.b16 %v41
  %v528 = vunpack.c.l.b16 %v42
  %v529 = vunpack.c.h.b16 %v42
  %v530 = vunpack.c.l.b16 %v43
  %v531 = vunpack.c.h.b16 %v43
  %v532 = vunpack.c.l.b16 %v44
  %v533 = vunpack.c.l.b16 %v45
  %v534 = vunpack.c.h.b16 %v45
  %v535 = vunpack.c.l.b16 %v46
  %v536 = vunpack.c.h.b16 %v46
  %v537 = vunpack.c.l.b16 %v47
  %v538 = vunpack.c.h.b16 %v47
  %v539 = vunpack.c.l.b16 %v48
  %v540 = vunpack.c.h.b16 %v48
  %v541 = vunpack.c.l.b16 %v49
  %v542 = vunpack.c.l.b16 %v50
  %v543 = vunpack.c.h.b16 %v50
  %v544 = vunpack.c.l.b16 %v51
  %v545 = vunpack.c.h.b16 %v51
  %v546 = vunpack.c.l.b16 %v52
  %v547 = vunpack.c.h.b16 %v52
  %v548 = vunpack.c.l.b16 %v53
  %v549 = vunpack.c.h.b16 %v53
  %v550 = vunpack.c.l.b16 %v54
  %v551 = vunpack.c.l.b16 %v55
  %v552 = vunpack.c.h.b16 %v55
  %v553 = vunpack.c.l.b16 %v56
  %v554 = vunpack.c.h.b16 %v56
  %v555 = vunpack.c.l.b16 %v57
  %v556 = vunpack.c.h.b16 %v57
  %v557 = vunpack.c.l.b16 %v58
  %v558 = vunpack.c.h.b16 %v58
  %v559 = vunpack.c.l.b16 %v59
  %v560 = vunpack.c.l.b16 %v60
  %v561 = vunpack.c.h.b16 %v60
  %v562 = vunpack.c.l.b16 %v61
  %v563 = vunpack.c.h.b16 %v61
  %v564 = vunpack.c.l.b16 %v62
  %v565 = vunpack.c.h.b16 %v62
  %v566 = vunpack.c.l.b16 %v63
  %v567 = vunpack.c.h.b16 %v63
  %v568 = vunpack.c.l.b16 %v64
  %v569 = vunpack.c.l.b16 %v65
  %v570 = vunpack.c.h.b16 %v65
  %v571 = vunpack.c.l.b16 %v66
  %v572 = vunpack.c.h.b16 %v66
  %v573 = vunpack.c.l.b16 %v67
  %v574 = vunpack.c.h.b16 %v67
  %v575 = vunpack.c.l.b16 %v68
  %v576 = vunpack.c.h.b16 %v68
  %v577 = vunpack.c.l.b16 %v69
  %v578 = vunpack.c.l.b16 %v70
  %v579 = vunpack.c.h.b16 %v70
  %v580 = vunpack.c.l.b16 %v71
  %v581 = vunpack.c.h.b16 %v71
  %v582 = vunpack.c.l.b16 %v72
  %v583 = vunpack.c.h.b16 %v72
  %v584 = vunpack.c.l.b16 %v73
  %v585 = vunpack.c.h.b16 %v73
  %v586 = vunpack.c.l.b16 %v74
  %v587 = vunpack.c.l.b16 %v75
  %v588 = vunpack.c.h.b16 %v75
  %v589 = vunpack.c.l.b16 %v76
  %v590 = vunpack.c.h.b16 %v76
  %v591 = vunpack.c.l.b16 %v77
  %v592 = vunpack.c.h.b16 %v77
  %v593 = vunpack.c.l.b16 %v78
  %v594 = vunpack.c.h.b16 %v78
  %v595 = vunpack.c.l.b16 %v79
  %v596 = vunpack.c.l.b16 %v80
  %v597 = vunpack.c.h.b16 %v80
  %v598 = vunpack.c.l.b16 %v81
  %v599 = vunpack.c.h.b16 %v81
  %v600 = vunpack.c.l.b16 %v82
  %v601 = vunpack.c.h.b16 %v82
  %v602 = vunpack.c.l.b16 %v83
  %v603 = vunpack.c.h.b16 %v83
  %v604 = vunpack.c.l.b16 %v84
  %v605 = vunpack.c.l.b16 %v85
  %v606 = vunpack.c.h.b16 %v85
  %v607 = vunpack.c.l.b16 %v86
  %v608 = vunpack.c.h.b16 %v86
  %v609 = vunpack.c.l.b16 %v87
  %v610 = vunpack.c.h.b16 %v87
  %v611 = vunpack.c.l.b16 %v88
  %v612 = vunpack.c.h.b16 %v88
  %v613 = vunpack.c.l.b16 %v89
  %v614 = vunpack.c.l.b16 %v90
  %v615 = vunpack.c.h.b16 %v90
  %v616 = vunpack.c.l.b16 %v91
  %v617 = vunpack.c.h.b16 %v91
  %v618 = vunpack.c.l.b16 %v92
  %v619 = vunpack.c.h.b16 %v92
  %v620 = vunpack.c.l.b16 %v93
  %v621 = vunpack.c.h.b16 %v93
  %v622 = vunpack.c.l.b16 %v94
  %v623 = vunpack.c.l.b16 %v95
  %v624 = vunpack.c.h.b16 %v95
  %v625 = vunpack.c.l.b16 %v96
  %v626 = vunpack.c.h.b16 %v96
  %v627 = vunpack.c.l.b16 %v97
  %v628 = vunpack.c.h.b16 %v97
  %v629 = vunpack.c.l.b16 %v98
  %v630 = vunpack.c.h.b16 %v98
  %v631 = vunpack.c.l.b16 %v99
  %v632 = vunpack.c.l.b16 %v100
  %v633 = vunpack.c.h.b16 %v100
  %v634 = vunpack.c.l.b16 %v101
  %v635 = vunpack.c.h.b16 %v101
  %v636 = vunpack.c.l.b16 %v102
  %v637 = vunpack.c.h.b16 %v102
  %v638 = vunpack.c.l.b16 %v103
  %v639 = vunpack.c.h.b16 %v103
  %v640 = vunpack.c.l.b16 %v104
  %v641 = vunpack.c.l.b16 %v105
  %v642 = vunpack.c.h.b16 %v105
  %v643 = vunpack.c.l.b16 %v106
  %v644 = vunpack.c.h.b16 %v106
  %v645 = vunpack.c.l.b16 %v107
  %v646 = vunpack.c.h.b16 %v107
  %v647 = vunpack.c.l.b16 %v108
  %v648 = vunpack.c.h.b16 %v108
  %v649 = vunpack.c.l.b16 %v109
  %v650 = vunpack.c.l.b16 %v110
  %v651 = vunpack.c.h.b16 %v110
  %v652 = vunpack.c.l.b16 %v111
  %v653 = vunpack.c.h.b16 %v111
  %v654 = vunpack.c.l.b16 %v112
  %v655 = vunpack.c.h.b16 %v112
  %v656 = vunpack.c.l.b16 %v113
  %v657 = vunpack.c.h.b16 %v113
  %v658 = vunpack.c.l.b16 %v114
  %v659 = vunpack.c.l.b16 %v115
  %v660 = vunpack.c.h.b16 %v115
  %v661 = vunpack.c.l.b16 %v116
  %v662 = vunpack.c.h.b16 %v116
  %v663 = vunpack.c.l.b16 %v117
  %v664 = vunpack.c.h.b16 %v117
  %v665 = vunpack.c.l.b16 %v118
  %v666 = vunpack.c.h.b16 %v118
  %v667 = vunpack.c.l.b16 %v119
  %v668 = vunpack.c.l.b16 %v120
  %v669 = vunpack.c.h.b16 %v120
  %v670 = vunpack.c.l.b16 %v121
  %v671 = vunpack.c.h.b16 %v121
  %v672 = vunpack.c.l.b16 %v122
  %v673 = vunpack.c.h.b16 %v122
  %v674 = vunpack.c.l.b16 %v123
  %v675 = vunpack.c.h.b16 %v123
  %v676 = vunpack.c.l.b16 %v124
  %v677 = vunpack.c.l.b16 %v125
  %v678 = vunpack.c.h.b16 %v125
  %v679 = vunpack.c.l.b16 %v126
  %v680 = vunpack.c.h.b16 %v126
  %v681 = vunpack.c.l.b16 %v127
  %v682 = vunpack.c.h.b16 %v127
  %v683 = vunpack.c.l.b16 %v128
  %v684 = vunpack.c.h.b16 %v128
  %v685 = vunpack.c.l.b16 %v129
  %v686 = vunpack.c.l.b16 %v130
  %v687 = vunpack.c.h.b16 %v130
  %v688 = vunpack.c.l.b16 %v131
  %v689 = vunpack.c.h.b16 %v131
  %v690 = vunpack.c.l.b16 %v132
  %v691 = vunpack.c.h.b16 %v132
  %v692 = vunpack.c.l.b16 %v133
  %v693 = vunpack.c.h.b16 %v133
  %v694 = vunpack.c.l.b16 %v134
  %v695 = vunpack.c.l.b16 %v135
  %v696 = vunpack.c.h.b16 %v135
  %v697 = vunpack.c.l.b16 %v136
  %v698 = vunpack.c.h.b16 %v136
  %v699 = vunpack.c.l.b16 %v137
  %v700 = vunpack.c.h.b16 %v137
  %v701 = vunpack.c.l.b16 %v138
  %v702 = vunpack.c.h.b16 %v138
  %v703 = vunpack.c.l.b16 %v139
  %v704 = vunpack.c.l.b16 %v140
  %v705 = vunpack.c.h.b16 %v140
  %v706 = vunpack.c.l.b16 %v141
  %v707 = vunpack.c.h.b16 %v141
  %v708 = vunpack.c.l.b16 %v142
  %v709 = vunpack.c.h.b16 %v142
  %v710 = vunpack.c.l.b16 %v143
  %v711 = vunpack.c.h.b16 %v143
  %v712 = vunpack.c.l.b16 %v144
  %v713 = vunpack.c.l.b16 %v145
  %v714 = vunpack.c.h.b16 %v145
  %v715 = vunpack.c.l.b16 %v146
  %v716 = vunpack.c.h.b16 %v146
  %v717 = vunpack.c.l.b16 %v147
  %v718 = vunpack.c.h.b16 %v147
  %v719 = vunpack.c.l.b16 %v148
  %v720 = vunpack.c.h.b16 %v148
  %v721 = vunpack.c.l.b16 %v149
  %v722 = vunpack.c.l.b16 %v150
  %v723 = vunpack.c.h.b16 %v150
  %v724 = vunpack.c.l.b16 %v151
  %v725 = vunpack.c.h.b16 %v151
  %v726 = vunpack.c.l.b16 %v152
  %v727 = vunpack.c.h.b16 %v152
  %v728 = vunpack.c.l.b16 %v153
  %v729 = vunpack.c.h.b16 %v153
  %v730 = vunpack.c.l.b16 %v154
  %v731 = vunpack.c.l.b16 %v155
  %v732 = vunpack.c.h.b16 %v155
  %v733 = vunpack.c.l.b16 %v156
  %v734 = vunpack.c.h.b16 %v156
  %v735 = vunpack.c.l.b16 %v157
  %v736 = vunpack.c.h.b16 %v157
  %v737 = vunpack.c.l.b16 %v158
  %v738 = vunpack.c.h.b16 %v158
  %v739 = vunpack.c.l.b16 %v159
  %v740 = vunpack.c.l.b16 %v160
  %v741 = vunpack.c.h.b16 %v160
  %v742 = vunpack.c.l.b16 %v161
  %v743 = vunpack.c.h.b16 %v161
  %v744 = vunpack.c.l.b16 %v162
  %v745 = vunpack.c.h.b16 %v162
  %v746 = vunpack.c.l.b16 %v163
  %v747 = vunpack.c.h.b16 %v163
  %v748 = vunpack.c.l.b16 %v164
  %v749 = vunpack.c.l.b16 %v165
  %v750 = vunpack.c.h.b16 %v165
  %v751 = vunpack.c.l.b16 %v166
  %v752 = vunpack.c.h.b16 %v166
  %v753 = vunpack.c.l.b16 %v167
  %v754 = vunpack.c.h.b16 %v167
  %v755 = vunpack.c.l.b16 %v168
  %v756 = vunpack.c.h.b16 %v168
  %v757 = vunpack.c.l.b16 %v169
  %v758 = vunpack.c.l.b16 %v170
  %v759 = vunpack.c.h.b16 %v170
  %v760 = vunpack.c.l.b16 %v171
  %v761 = vunpack.c.h.b16 %v171
  %v762 = vunpack.c.l.b16 %v172
  %v763 = vunpack.c.h.b16 %v172
  %v764 = vunpack.c.l.b16 %v173
  %v765 = vunpack.c.h.b16 %v173
  %v766 = vunpack.c.l.b16 %v174
  %v767 = vpack.c.b16 %v488, %v479
  %v768 = vpack.c.b16 %v489, %v480
  %v769 = vpack.c.b16 %v490, %v481
  %v770 = vpack.c.b16 %v491, %v482
  %v771 = vpack.c.b16 %v492, %v483
  %v772 = vpack.c.b16 %v493, %v484
  %v773 = vpack.c.b16 %v494, %v485
  %v774 = vpack.c.b16 %v495, %v486
  %v775 = vpack.c.b16 %v496, %v487
  %v776 = vpack.c.b16 %v506, %v497
  %v777 = vpack.c.b16 %v507, %v498
  %v778 = vpack.c.b16 %v508, %v499
  %v779 = vpack.c.b16 %v509, %v500
  %v780 = vpack.c.b16 %v510, %v501
  %v781 = vpack.c.b16 %v511, %v502
  %v782 = vpack.c.b16 %v512, %v503
  %v783 = vpack.c.b16 %v513, %v504
  %v784 = vpack.c.b16 %v514, %v505
  %v785 = vpack.c.b16 %v524, %v515
  %v786 = vpack.c.b16 %v525, %v516
  %v787 = vpack.c.b16 %v526, %v517
  %v788 = vpack.c.b16 %v527, %v518
  %v789 = vpack.c.b16 %v528, %v519
  %v790 = vpack.c.b16 %v529, %v520
  %v791 = vpack.c.b16 %v530, %v521
  %v792 = vpack.c.b16 %v531, %v522
  %v793 = vpack.c.b16 %v532, %v523
  %v794 = vpack.c.b16 %v542, %v533
  %v795 = vpack.c.b16 %v543, %v534
  %v796 = vpack.c.b16 %v544, %v535
  %v797 = vpack.c.b16 %v545, %v536
  %v798 = vpack.c.b16 %v546, %v537
  %v799 = vpack.c.b16 %v547, %v538
  %v800 = vpack.c.b16 %v548, %v539
  %v801 = vpack.c.b16 %v549, %v540
  %v802 = vpack.c.b16 %v550, %v541
  %v803 = vpack.c.b16 %v560, %v551
  %v804 = vpack.c.b16 %v561, %v552
  %v805 = vpack.c.b16 %v562, %v553
  %v806 = vpack.c.b16 %v563, %v554
  %v807 = vpack.c.b16 %v564, %v555
  %v808 = vpack.c.b16 %v565, %v556
  %v809 = vpack.c.b16 %v566, %v557
  %v810 = vpack.c.b16 %v567, %v558
  %v811 = vpack.c.b16 %v568, %v559
  %v812 = vpack.c.b16 %v578, %v569
  %v813 = vpack.c.b16 %v579, %v570
  %v814 = vpack.c.b16 %v580, %v571
  %v815 = vpack.c.b16 %v581, %v572
  %v816 = vpack.c.b16 %v582, %v573
  %v817 = vpack.c.b16 %v583, %v574
  %v818 = vpack.c.b16 %v584, %v575
  %v819 = vpack.c.b16 %v585, %v576
  %v820 = vpack.c.b16 %v586, %v577
  %v821 = vpack.c.b16 %v596, %v587
  %v822 = vpack.c.b16 %v597, %v588
  %v823 = vpack.c.b16 %v598, %v589
  %v824 = vpack.c.b16 %v599, %v590
  %v825 = vpack.c.b16 %v600, %v591
  %v826 = vpack.c.b16 %v601, %v592
  %v827 = vpack.c.b16 %v602, %v593
  %v828 = vpack.c.b16 %v603, %v594
  %v829 = vpack.c.b16 %v604, %v595
  %v830 = vpack.c.b16 %v614, %v605
  %v831 = vpack.c.b16 %v615, %v606
  %v832 = vpack.c.b16 %v616, %v607
  %v833 = vpack.c.b16 %v617, %v608
  %v834 = vpack.c.b16 %v618, %v609
  %v835 = vpack.c.b16 %v619, %v610
  %v836 = vpack.c.b16 %v620, %v611
  %v837 = vpack.c.b16 %v621, %v612
  %v838 = vpack.c.b16 %v622, %v613
  %v839 = vpack.c.b16 %v632, %v623
  %v840 = vpack.c.b16 %v633, %v624
  %v841 = vpack.c.b16 %v634, %v625
  %v842 = vpack.c.b16 %v635, %v626
  %v843 = vpack.c.b16 %v636, %v627
  %v844 = vpack.c.b16 %v637, %v628
  %v845 = vpack.c.b16 %v638, %v629
  %v846 = vpack.c.b16 %v639, %v630
  %v847 = vpack.c.b16 %v640, %v631
  %v848 = vpack.c.b16 %v650, %v641
  %v849 = vpack.c.b16 %v651, %v642
  %v850 = vpack.c.b16 %v652, %v643
  %v851 = vpack.c.b16 %v653, %v644
  %v852 = vpack.c.b16 %v654, %v645
  %v853 = vpack.c.b16 %v655, %v646
  %v854 = vpack.c.b16 %v656, %v647
  %v855 = vpack.c.b16 %v657, %v648
  %v856 = vpack.c.b16 %v658, %v649
  %v857 = vpack.c.b16 %v668, %v659
  %v858 = vpack.c.b16 %v669, %v660
  %v859 = vpack.c.b16 %v670, %v661
  %v860 = vpack.c.b16 %v671, %v662
  %v861 = vpack.c.b16 %v672, %v663
  %v862 = vpack.c.b16 %v673, %v664
  %v863 = vpack.c.b16 %v674, %v665
  %v864 = vpack.c.b16 %v675, %v666
  %v865 = vpack.c.b16 %v676, %v667
  %v866 = vpack.c.b16 %v686, %v677
  %v867 = vpack.c.b16 %v687, %v678
  %v868 = vpack.c.b16 %v688, %v679
  %v869 = vpack.c.b16 %v689, %v680
  %v870 = vpack.c.b16 %v690, %v681
  %v871 = vpack.c.b16 %v691, %v682
  %v872 = vpack.c.b16 %v692, %v683
  %v873 = vpack.c.b16 %v693, %v684
  %v874 = vpack.c.b16 %v694, %v685
  %v875 = vpack.c.b16 %v704, %v695
  %v876 = vpack.c.b16 %v705, %v696
  %v877 = vpack.c.b16 %v706, %v697
  %v878 = vpack.c.b16 %v707, %v698
  %v879 = vpack.c.b16 %v708, %v699
  %v880 = vpack.c.b16 %v709, %v700
  %v881 = vpack.c.b16 %v710, %v701
  %v882 = vpack.c.b16 %v711, %v702
  %v883 = vpack.c.b16 %v712, %v703
  %v884 = vpack.c.b16 %v722, %v713
  %v885 = vpack.c.b16 %v723, %v714
  %v886 = vpack.c.b16 %v724, %v715
  %v887 = vpack.c.b16 %v725, %v716
  %v888 = vpack.c.b16 %v726, %v717
  %v889 = vpack.c.b16 %v727, %v718
  %v890 = vpack.c.b16 %v728, %v719
  %v891 = vpack.c.b16 %v729, %v720
  %v892 = vpack.c.b16 %v730, %v721
  %v893 = vpack.c.b16 %v740, %v731
  %v894 = vpack.c.b16 %v741, %v732
  %v895 = vpack.c.b16 %v742, %v733
  %v896 = vpack.c.b16 %v743, %v734
  %v897 = vpack.c.b16 %v744, %v735
  %v898 = vpack.c.b16 %v745, %v736
  %v899 = vpack.c.b16 %v746, %v737
  %v900 = vpack.c.b16 %v747, %v738
  %v901 = vpack.c.b16 %v748, %v739
  %v902 = vpack.c.b16 %v758, %v749
  %v903 = vpack.c.b16 %v759, %v750
  %v904 = vpack.c.b16 %v760, %v751
  %v905 = vpack.c.b16 %v761, %v752
  %v906 = vpack.c.b16 %v762, %v753
  %v907 = vpack.c.b16 %v763, %v754
  %v908 = vpack.c.b16 %v764, %v755
  %v909 = vpack.c.b16 %v765, %v756
  %v910 = vpack.c.b16 %v766, %v757
  %v1199 = vunpack.c.l.b16 %v175
  %v1200 = vunpack.c.l.b16 %v176
  %v1201 = vunpack.c.l.b16 %v177
  %v1202 = vunpack.c.l.b16 %v178
  %v1203 = vunpack.c.l.b16 %v179
  %v1204 = vunpack.c.l.b16 %v180
  %v1205 = vunpack.c.l.b16 %v181
  %v1206 = vunpack.c.l.b16 %v182
  %v1207 = vunpack.c.l.b16 %v183
  %v1208 = vunpack.c.l.b16 %v184
  %v1209 = vunpack.c.l.b16 %v185
  %v1210 = vunpack.c.l.b16 %v186
  %v1211 = vunpack.c.l.b16 %v187
  %v1212 = vunpack.c.l.b16 %v188
  %v1213 = vunpack.c.l.b16 %v189
  %v1214 = vunpack.c.l.b16 %v190
  %v1215 = vunpack.c.l.b16 %v191
  %v1216 = vunpack.c.l.b16 %v192
  %v1217 = vunpack.c.l.b16 %v193
  %v1218 = vunpack.c.l.b16 %v194
  %v1219 = vunpack.c.l.b16 %v195
  %v1220 = vunpack.c.l.b16 %v196
  %v1221 = vunpack.c.l.b16 %v197
  %v1222 = vunpack.c.l.b16 %v198
  %v1223 = vunpack.c.l.b16 %v199
  %v1224 = vunpack.c.l.b16 %v200
  %v1225 = vunpack.c.l.b16 %v201
  %v1226 = vunpack.c.l.b16 %v202
  %v1227 = vunpack.c.l.b16 %v203
  %v1228 = vunpack.c.l.b16 %v204
  %v1229 = vunpack.c.l.b16 %v205
  %v1230 = vunpack.c.l.b16 %v206
  %v1231 = vunpack.c.l.b16 %v207
  %v1232 = vunpack.c.l.b16 %v208
  %v1233 = vunpack.c.l.b16 %v209
  %v1234 = vunpack.c.l.b16 %v210
  %v1235 = vunpack.c.l.b16 %v211
  %v1236 = vunpack.c.l.b16 %v212
  %v1237 = vunpack.c.l.b16 %v213
  %v1238 = vunpack.c.l.b16 %v214
  %v1239 = vunpack.c.l.b16 %v215
  %v1240 = vunpack.c.l.b16 %v216
  %v1241 = vunpack.c.l.b16 %v217
  %v1242 = vunpack.c.l.b16 %v218
  %v1243 = vunpack.c.l.b16 %v219
  %v1244 = vunpack.c.l.b16 %v220
  %v1245 = vunpack.c.l.b16 %v221
  %v1246 = vunpack.c.l.b16 %v222
  %v1247 = vunpack.c.l.b16 %v223
  %v1248 = vunpack.c.l.b16 %v224
  %v1249 = vunpack.c.l.b16 %v225
  %v1250 = vunpack.c.l.b16 %v226
  %v1251 = vunpack.c.l.b16 %v227
  %v1252 = vunpack.c.l.b16 %v228
  %v1253 = vunpack.c.l.b16 %v229
  %v1254 = vunpack.c.l.b16 %v230
  %v1255 = vunpack.c.l.b16 %v231
  %v1256 = vunpack.c.l.b16 %v232
  %v1257 = vunpack.c.l.b16 %v233
  %v1258 = vunpack.c.l.b16 %v234
  %v1259 = vunpack.c.l.b16 %v235
  %v1260 = vunpack.c.l.b16 %v236
  %v1261 = vunpack.c.l.b16 %v237
  %v1262 = vunpack.c.l.b16 %v238
  %v1263 = vunpack.c.l.b16 %v239
  %v1264 = vunpack.c.l.b16 %v240
  %v1265 = vunpack.c.l.b16 %v241
  %v1266 = vunpack.c.l.b16 %v242
  %v1267 = vunpack.c.l.b16 %v243
  %v1268 = vunpack.c.l.b16 %v244
  %v1269 = vunpack.c.l.b16 %v245
  %v1270 = vunpack.c.l.b16 %v246
  %v1271 = vunpack.c.l.b16 %v247
  %v1272 = vunpack.c.l.b16 %v248
  %v1273 = vunpack.c.l.b16 %v249
  %v1274 = vunpack.c.l.b16 %v250
  %v1275 = vunpack.c.l.b16 %v251
  %v1276 = vunpack.c.l.b16 %v252
  %v1277 = vunpack.c.l.b16 %v253
  %v1278 = vunpack.c.l.b16 %v254
  %v1279 = vunpack.c.l.b16 %v255
  %v1280 = vunpack.c.l.b16 %v256
  %v1281 = vunpack.c.l.b16 %v257
  %v1282 = vunpack.c.l.b16 %v258
  %v1283 = vunpack.c.l.b16 %v259
  %v1284 = vunpack.c.l.b16 %v260
  %v1285 = vunpack.c.l.b16 %v261
  %v1286 = vunpack.c.l.b16 %v262
  %v1287 = vunpack.c.l.b16 %v263
  %v1288 = vunpack.c.l.b16 %v264
  %v1289 = vunpack.c.l.b16 %v265
  %v1290 = vunpack.c.l.b16 %v266
  %v1291 = vunpack.c.l.b16 %v267
  %v1292 = vunpack.c.l.b16 %v268
  %v1293 = vunpack.c.l.b16 %v269
  %v1294 = vunpack.c.l.b16 %v270
  %v1295 = vunpack.c.l.b16 %v271
  %v1296 = vunpack.c.l.b16 %v272
  %v1297 = vunpack.c.l.b16 %v273
  %v1298 = vunpack.c.l.b16 %v274
  %v1299 = vunpack.c.l.b16 %v275
  %v1300 = vunpack.c.l.b16 %v276
  %v1301 = vunpack.c.l.b16 %v277
  %v1302 = vunpack.c.l.b16 %v278
  %v1303 = vunpack.c.l.b16 %v279
  %v1304 = vunpack.c.l.b16 %v280
  %v1305 = vunpack.c.l.b16 %v281
  %v1306 = vunpack.c.l.b16 %v282
  %v1307 = vunpack.c.l.b16 %v283
  %v1308 = vunpack.c.l.b16 %v284
  %v1309 = vunpack.c.l.b16 %v285
  %v1310 = vunpack.c.l.b16 %v286
  %v1311 = vunpack.c.l.b16 %v287
  %v1312 = vunpack.c.l.b16 %v288
  %v1313 = vunpack.c.l.b16 %v289
  %v1314 = vunpack.c.l.b16 %v290
  %v1315 = vunpack.c.l.b16 %v291
  %v1316 = vunpack.c.l.b16 %v292
  %v1317 = vunpack.c.l.b16 %v293
  %v1318 = vunpack.c.l.b16 %v294
  %v1319 = vunpack.c.l.b16 %v295
  %v1320 = vunpack.c.l.b16 %v296
  %v1321 = vunpack.c.l.b16 %v297
  %v1322 = vunpack.c.l.b16 %v298
  %v1323 = vunpack.c.l.b16 %v299
  %v1324 = vunpack.c.l.b16 %v300
  %v1325 = vunpack.c.l.b16 %v301
  %v1326 = vunpack.c.l.b16 %v302
  %v1327 = vunpack.c.l.b16 %v303
  %v1328 = vunpack.c.l.b16 %v304
  %v1329 = vunpack.c.l.b16 %v305
  %v1330 = vunpack.c.l.b16 %v306
  %v1331 = vunpack.c.l.b16 %v307
  %v1332 = vunpack.c.l.b16 %v308
  %v1333 = vunpack.c.l.b16 %v309
  %v1334 = vunpack.c.l.b16 %v310
  %v1335 = vunpack.c.l.b16 %v311
  %v1336 = vunpack.c.l.b16 %v312
  %v1337 = vunpack.c.l.b16 %v313
  %v1338 = vunpack.c.l.b16 %v314
  %v1339 = vunpack.c.l.b16 %v315
  %v1340 = vunpack.c.l.b16 %v316
  %v1341 = vunpack.c.l.b16 %v317
  %v1342 = vunpack.c.l.b16 %v318
  %v1343 = vpack.c.b16 %v1200, %v1199
  %v1344 = vpack.c.b16 %v1202, %v1201
  %v1345 = vpack.c.b16 %v1204, %v1203
  %v1346 = vpack.c.b16 %v1206, %v1205
  %v1347 = vpack.c.b16 %v1208, %v1207
  %v1348 = vpack.c.b16 %v1210, %v1209
  %v1349 = vpack.c.b16 %v1212, %v1211
  %v1350 = vpack.c.b16 %v1214, %v1213
  %v1351 = vpack.c.b16 %v1216, %v1215
  %v1352 = vpack.c.b16 %v1218, %v1217
  %v1353 = vpack.c.b16 %v1220, %v1219
  %v1354 = vpack.c.b16 %v1222, %v1221
  %v1355 = vpack.c.b16 %v1224, %v1223
  %v1356 = vpack.c.b16 %v1226, %v1225
  %v1357 = vpack.c.b16 %v1228, %v1227
  %v1358 = vpack.c.b16 %v1230, %v1229
  %v1359 = vpack.c.b16 %v1232, %v1231
  %v1360 = vpack.c.b16 %v1234, %v1233
  %v1361 = vpack.c.b16 %v1236, %v1235
  %v1362 = vpack.c.b16 %v1238, %v1237
  %v1363 = vpack.c.b16 %v1240, %v1239
  %v1364 = vpack.c.b16 %v1242, %v1241
  %v1365 = vpack.c.b16 %v1244, %v1243
  %v1366 = vpack.c.b16 %v1246, %v1245
  %v1367 = vpack.c.b16 %v1248, %v1247
  %v1368 = vpack.c.b16 %v1250, %v1249
  %v1369 = vpack.c.b16 %v1252, %v1251
  %v1370 = vpack.c.b16 %v1254, %v1253
  %v1371 = vpack.c.b16 %v1256, %v1255
  %v1372 = vpack.c.b16 %v1258, %v1257
  %v1373 = vpack.c.b16 %v1260, %v1259
  %v1374 = vpack.c.b16 %v1262, %v1261
  %v1375 = vpack.c.b16 %v1264, %v1263
  %v1376 = vpack.c.b16 %v1266, %v1265
  %v1377 = vpack.c.b16 %v1268, %v1267
  %v1378 = vpack.c.b16 %v1270, %v1269
  %v1379 = vpack.c.b16 %v1272, %v1271
  %v1380 = vpack.c.b16 %v1274, %v1273
  %v1381 = vpack.c.b16 %v1276, %v1275
  %v1382 = vpack.c.b16 %v1278, %v1277
  %v1383 = vpack.c.b16 %v1280, %v1279
  %v1384 = vpack.c.b16 %v1282, %v1281
  %v1385 = vpack.c.b16 %v1284, %v1283
  %v1386 = vpack.c.b16 %v1286, %v1285
  %v1387 = vpack.c.b16 %v1288, %v1287
  %v1388 = vpack.c.b16 %v1290, %v1289
  %v1389 = vpack.c.b16 %v1292, %v1291
  %v1390 = vpack.c.b16 %v1294, %v1293
  %v1391 = vpack.c.b16 %v1296, %v1295
  %v1392 = vpack.c.b16 %v1298, %v1297
  %v1393 = vpack.c.b16 %v1300, %v1299
  %v1394 = vpack.c.b16 %v1302, %v1301
  %v1395 = vpack.c.b16 %v1304, %v1303
  %v1396 = vpack.c.b16 %v1306, %v1305
  %v1397 = vpack.c.b16 %v1308, %v1307
  %v1398 = vpack.c.b16 %v1310, %v1309
  %v1399 = vpack.c.b16 %v1312, %v1311
  %v1400 = vpack.c.b16 %v1314, %v1313
  %v1401 = vpack.c.b16 %v1316, %v1315
  %v1402 = vpack.c.b16 %v1318, %v1317
  %v1403 = vpack.c.b16 %v1320, %v1319
  %v1404 = vpack.c.b16 %v1322, %v1321
  %v1405 = vpack.c.b16 %v1324, %v1323
  %v1406 = vpack.c.b16 %v1326, %v1325
  %v1407 = vpack.c.b16 %v1328, %v1327
  %v1408 = vpack.c.b16 %v1330, %v1329
  %v1409 = vpack.c.b16 %v1332, %v1331
  %v1410 = vpack.c.b16 %v1334, %v1333
  %v1411 = vpack.c.b16 %v1336, %v1335
  %v1412 = vpack.c.b16 %v1338, %v1337
  %v1413 = vpack.c.b16 %v1340, %v1339
  %v1414 = vpack.c.b16 %v1342, %v1341
  %1487 = vmatprep.subr.bf16.mxu0 0
  %1488 = vmatpush1.bf16.msra.mxu0 %v1343
  %1489 = vmatprep.subr.bf16.mxu0 0
  %1490 = vmatpush1.bf16.msra.mxu0 %v1344
  %1491 = vmatprep.subr.bf16.mxu0 0
  %1492 = vmatpush1.bf16.msra.mxu0 %v1345
  %1493 = vmatprep.subr.bf16.mxu0 0
  %1494 = vmatpush1.bf16.msra.mxu0 %v1346
  %1495 = vmatprep.subr.bf16.mxu0 0
  %1496 = vmatpush1.bf16.msra.mxu0 %v1347
  %1497 = vmatprep.subr.bf16.mxu0 0
  %1498 = vmatpush1.bf16.msra.mxu0 %v1348
  %1499 = vmatprep.subr.bf16.mxu0 0
  %1500 = vmatpush1.bf16.msra.mxu0 %v1349
  %1501 = vmatprep.subr.bf16.mxu0 0
  %1502 = vmatpush1.bf16.msra.mxu0 %v1350
  %1503 = vmatprep.subr.bf16.mxu0 0
  %1504 = vmatpush1.bf16.msra.mxu0 %v1351
  %1505 = vmatprep.subr.bf16.mxu0 0
  %1506 = vmatpush1.bf16.msra.mxu0 %v1352
  %1507 = vmatprep.subr.bf16.mxu0 0
  %1508 = vmatpush1.bf16.msra.mxu0 %v1353
  %1509 = vmatprep.subr.bf16.mxu0 0
  %1510 = vmatpush1.bf16.msra.mxu0 %v1354
  %1511 = vmatprep.subr.bf16.mxu0 0
  %1512 = vmatpush1.bf16.msra.mxu0 %v1355
  %1513 = vmatprep.subr.bf16.mxu0 0
  %1514 = vmatpush1.bf16.msra.mxu0 %v1356
  %1515 = vmatprep.subr.bf16.mxu0 0
  %1516 = vmatpush1.bf16.msra.mxu0 %v1357
  %1517 = vmatprep.subr.bf16.mxu0 0
  %1518 = vmatpush1.bf16.msra.mxu0 %v1358
  %1519 = vmatprep.mubr.bf16.mxu0 %v768
  %1520 = vmatmul.mubr.bf16.gmra.mrb[0].mxu0 %v767
  %v1521 = vpop.f32.mrb[0].mxu0
  %v1522 = vadd.f32 0.0, %v1521
  %v1523 = vpop.f32.mrb[0].mxu0
  %v1524 = vpop.f32.mrb[0].mxu0
  %v1525 = vadd.f32 0.0, %v1524
  %v1526 = vpop.f32.mrb[0].mxu0
  %1527 = vmatprep.mubr.bf16.mxu0 %v777
  %1528 = vmatmul.mubr.bf16.gmra.mrb[0].mxu0 %v776
  %v1529 = vpop.f32.mrb[0].mxu0
  %v1530 = vadd.f32 0.0, %v1529
  %v1531 = vpop.f32.mrb[0].mxu0
  %v1532 = vpop.f32.mrb[0].mxu0
  %v1533 = vadd.f32 0.0, %v1532
  %v1534 = vpop.f32.mrb[0].mxu0
  %1535 = vmatprep.mubr.bf16.mxu0 %v786
  %1536 = vmatmul.mubr.bf16.gmra.mrb[0].mxu0 %v785
  %v1537 = vpop.f32.mrb[0].mxu0
  %v1538 = vadd.f32 0.0, %v1537
  %v1539 = vpop.f32.mrb[0].mxu0
  %v1540 = vpop.f32.mrb[0].mxu0
  %v1541 = vadd.f32 0.0, %v1540
  %v1542 = vpop.f32.mrb[0].mxu0
  %1543 = vmatprep.mubr.bf16.mxu0 %v795
  %1544 = vmatmul.mubr.bf16.gmra.mrb[0].mxu0 %v794
  %v1545 = vpop.f32.mrb[0].mxu0
  %v1546 = vadd.f32 0.0, %v1545
  %v1547 = vpop.f32.mrb[0].mxu0
  %v1548 = vpop.f32.mrb[0].mxu0
  %v1549 = vadd.f32 0.0, %v1548
  %v1550 = vpop.f32.mrb[0].mxu0
  %1551 = vmatprep.mubr.bf16.mxu0 %v804
  %1552 = vmatmul.mubr.bf16.gmra.mrb[0].mxu0 %v803
  %v1553 = vpop.f32.mrb[0].mxu0
  %v1554 = vadd.f32 0.0, %v1553
  %v1555 = vpop.f32.mrb[0].mxu0
  %v1556 = vpop.f32.mrb[0].mxu0
  %v1557 = vadd.f32 0.0, %v1556
  %v1558 = vpop.f32.mrb[0].mxu0
  %1559 = vmatprep.mubr.bf16.mxu0 %v813
  %1560 = vmatmul.mubr.bf16.gmra.mrb[0].mxu0 %v812
  %v1561 = vpop.f32.mrb[0].mxu0
  %v1562 = vadd.f32 0.0, %v1561
  %v1563 = vpop.f32.mrb[0].mxu0
  %v1564 = vpop.f32.mrb[0].mxu0
  %v1565 = vadd.f32 0.0, %v1564
  %v1566 = vpop.f32.mrb[0].mxu0
  %1567 = vmatprep.mubr.bf16.mxu0 %v822
  %1568 = vmatmul.mubr.bf16.gmra.mrb[0].mxu0 %v821
  %v1569 = vpop.f32.mrb[0].mxu0
  %v1570 = vadd.f32 0.0, %v1569
  %v1571 = vpop.f32.mrb[0].mxu0
  %v1572 = vpop.f32.mrb[0].mxu0
  %v1573 = vadd.f32 0.0, %v1572
  %v1574 = vpop.f32.mrb[0].mxu0
  %1575 = vmatprep.mubr.bf16.mxu0 %v831
  %1576 = vmatmul.mubr.bf16.gmra.mrb[0].mxu0 %v830
  %v1577 = vpop.f32.mrb[0].mxu0
  %v1578 = vadd.f32 0.0, %v1577
  %v1579 = vpop.f32.mrb[0].mxu0
  %v1580 = vpop.f32.mrb[0].mxu0
  %v1581 = vadd.f32 0.0, %v1580
  %v1582 = vpop.f32.mrb[0].mxu0
  %1583 = vmatprep.mubr.bf16.mxu0 %v840
  %1584 = vmatmul.mubr.bf16.gmra.mrb[0].mxu0 %v839
  %v1585 = vpop.f32.mrb[0].mxu0
  %v1586 = vadd.f32 0.0, %v1585
  %v1587 = vpop.f32.mrb[0].mxu0
  %v1588 = vpop.f32.mrb[0].mxu0
  %v1589 = vadd.f32 0.0, %v1588
  %v1590 = vpop.f32.mrb[0].mxu0
  %1591 = vmatprep.mubr.bf16.mxu0 %v849
  %1592 = vmatmul.mubr.bf16.gmra.mrb[0].mxu0 %v848
  %v1593 = vpop.f32.mrb[0].mxu0
  %v1594 = vadd.f32 0.0, %v1593
  %v1595 = vpop.f32.mrb[0].mxu0
  %v1596 = vpop.f32.mrb[0].mxu0
  %v1597 = vadd.f32 0.0, %v1596
  %v1598 = vpop.f32.mrb[0].mxu0
  %1599 = vmatprep.mubr.bf16.mxu0 %v858
  %1600 = vmatmul.mubr.bf16.gmra.mrb[0].mxu0 %v857
  %v1601 = vpop.f32.mrb[0].mxu0
  %v1602 = vadd.f32 0.0, %v1601
  %v1603 = vpop.f32.mrb[0].mxu0
  %v1604 = vpop.f32.mrb[0].mxu0
  %v1605 = vadd.f32 0.0, %v1604
  %v1606 = vpop.f32.mrb[0].mxu0
  %1607 = vmatprep.mubr.bf16.mxu0 %v867
  %1608 = vmatmul.mubr.bf16.gmra.mrb[0].mxu0 %v866
  %v1609 = vpop.f32.mrb[0].mxu0
  %v1610 = vadd.f32 0.0, %v1609
  %v1611 = vpop.f32.mrb[0].mxu0
  %v1612 = vpop.f32.mrb[0].mxu0
  %v1613 = vadd.f32 0.0, %v1612
  %v1614 = vpop.f32.mrb[0].mxu0
  %1615 = vmatprep.mubr.bf16.mxu0 %v876
  %1616 = vmatmul.mubr.bf16.gmra.mrb[0].mxu0 %v875
  %v1617 = vpop.f32.mrb[0].mxu0
  %v1618 = vadd.f32 0.0, %v1617
  %v1619 = vpop.f32.mrb[0].mxu0
  %v1620 = vpop.f32.mrb[0].mxu0
  %v1621 = vadd.f32 0.0, %v1620
  %v1622 = vpop.f32.mrb[0].mxu0
  %1623 = vmatprep.mubr.bf16.mxu0 %v885
  %1624 = vmatmul.mubr.bf16.gmra.mrb[0].mxu0 %v884
  %v1625 = vpop.f32.mrb[0].mxu0
  %v1626 = vadd.f32 0.0, %v1625
  %v1627 = vpop.f32.mrb[0].mxu0
  %v1628 = vpop.f32.mrb[0].mxu0
  %v1629 = vadd.f32 0.0, %v1628
  %v1630 = vpop.f32.mrb[0].mxu0
  %1631 = vmatprep.mubr.bf16.mxu0 %v894
  %1632 = vmatmul.mubr.bf16.gmra.mrb[0].mxu0 %v893
  %v1633 = vpop.f32.mrb[0].mxu0
  %v1634 = vadd.f32 0.0, %v1633
  %v1635 = vpop.f32.mrb[0].mxu0
  %v1636 = vpop.f32.mrb[0].mxu0
  %v1637 = vadd.f32 0.0, %v1636
  %v1638 = vpop.f32.mrb[0].mxu0
  %1639 = vmatprep.mubr.bf16.mxu0 %v903
  %1640 = vmatmul.mubr.bf16.gmra.mrb[0].mxu0 %v902
  %v1641 = vpop.f32.mrb[0].mxu0
  %v1642 = vadd.f32 0.0, %v1641
  %v1643 = vpop.f32.mrb[0].mxu0
  %v1644 = vpop.f32.mrb[0].mxu0
  %v1645 = vadd.f32 0.0, %v1644
  %v1646 = vpop.f32.mrb[0].mxu0
  %1647 = vdwg.mxu0
  %1648 = vmatprep.subr.bf16.mxu0 0
  %1649 = vmatpush1.bf16.msra.mxu0 %v1359
  %1650 = vmatprep.subr.bf16.mxu0 0
  %1651 = vmatpush1.bf16.msra.mxu0 %v1360
  %1652 = vmatprep.subr.bf16.mxu0 0
  %1653 = vmatpush1.bf16.msra.mxu0 %v1361
  %1654 = vmatprep.subr.bf16.mxu0 0
  %1655 = vmatpush1.bf16.msra.mxu0 %v1362
  %1656 = vmatprep.subr.bf16.mxu0 0
  %1657 = vmatpush1.bf16.msra.mxu0 %v1363
  %1658 = vmatprep.subr.bf16.mxu0 0
  %1659 = vmatpush1.bf16.msra.mxu0 %v1364
  %1660 = vmatprep.subr.bf16.mxu0 0
  %1661 = vmatpush1.bf16.msra.mxu0 %v1365
  %1662 = vmatprep.subr.bf16.mxu0 0
  %1663 = vmatpush1.bf16.msra.mxu0 %v1366
  %1664 = vmatprep.subr.bf16.mxu0 0
  %1665 = vmatpush1.bf16.msra.mxu0 %v1367
  %1666 = vmatprep.subr.bf16.mxu0 0
  %1667 = vmatpush1.bf16.msra.mxu0 %v1368
  %1668 = vmatprep.subr.bf16.mxu0 0
  %1669 = vmatpush1.bf16.msra.mxu0 %v1369
  %1670 = vmatprep.subr.bf16.mxu0 0
  %1671 = vmatpush1.bf16.msra.mxu0 %v1370
  %1672 = vmatprep.subr.bf16.mxu0 0
  %1673 = vmatpush1.bf16.msra.mxu0 %v1371
  %1674 = vmatprep.subr.bf16.mxu0 0
  %1675 = vmatpush1.bf16.msra.mxu0 %v1372
  %1676 = vmatprep.subr.bf16.mxu0 0
  %1677 = vmatpush1.bf16.msra.mxu0 %v1373
  %1678 = vmatprep.subr.bf16.mxu0 0
  %1679 = vmatpush1.bf16.msra.mxu0 %v1374
  %1680 = vmatprep.mubr.bf16.mxu0 %v770
  %1681 = vmatmul.mubr.bf16.gmra.mrb[0].mxu0 %v769
  %v1682 = vpop.f32.mrb[0].mxu0
  %v1683 = vadd.f32 %v1522, %v1682
  %v1684 = vpop.f32.mrb[0].mxu0
  %v1685 = vpop.f32.mrb[0].mxu0
  %v1686 = vadd.f32 %v1525, %v1685
  %v1687 = vpop.f32.mrb[0].mxu0
  %1688 = vmatprep.mubr.bf16.mxu0 %v779
  %1689 = vmatmul.mubr.bf16.gmra.mrb[0].mxu0 %v778
  %v1690 = vpop.f32.mrb[0].mxu0
  %v1691 = vadd.f32 %v1530, %v1690
  %v1692 = vpop.f32.mrb[0].mxu0
  %v1693 = vpop.f32.mrb[0].mxu0
  %v1694 = vadd.f32 %v1533, %v1693
  %v1695 = vpop.f32.mrb[0].mxu0
  %1696 = vmatprep.mubr.bf16.mxu0 %v788
  %1697 = vmatmul.mubr.bf16.gmra.mrb[0].mxu0 %v787
  %v1698 = vpop.f32.mrb[0].mxu0
  %v1699 = vadd.f32 %v1538, %v1698
  %v1700 = vpop.f32.mrb[0].mxu0
  %v1701 = vpop.f32.mrb[0].mxu0
  %v1702 = vadd.f32 %v1541, %v1701
  %v1703 = vpop.f32.mrb[0].mxu0
  %1704 = vmatprep.mubr.bf16.mxu0 %v797
  %1705 = vmatmul.mubr.bf16.gmra.mrb[0].mxu0 %v796
  %v1706 = vpop.f32.mrb[0].mxu0
  %v1707 = vadd.f32 %v1546, %v1706
  %v1708 = vpop.f32.mrb[0].mxu0
  %v1709 = vpop.f32.mrb[0].mxu0
  %v1710 = vadd.f32 %v1549, %v1709
  %v1711 = vpop.f32.mrb[0].mxu0
  %1712 = vmatprep.mubr.bf16.mxu0 %v806
  %1713 = vmatmul.mubr.bf16.gmra.mrb[0].mxu0 %v805
  %v1714 = vpop.f32.mrb[0].mxu0
  %v1715 = vadd.f32 %v1554, %v1714
  %v1716 = vpop.f32.mrb[0].mxu0
  %v1717 = vpop.f32.mrb[0].mxu0
  %v1718 = vadd.f32 %v1557, %v1717
  %v1719 = vpop.f32.mrb[0].mxu0
  %1720 = vmatprep.mubr.bf16.mxu0 %v815
  %1721 = vmatmul.mubr.bf16.gmra.mrb[0].mxu0 %v814
  %v1722 = vpop.f32.mrb[0].mxu0
  %v1723 = vadd.f32 %v1562, %v1722
  %v1724 = vpop.f32.mrb[0].mxu0
  %v1725 = vpop.f32.mrb[0].mxu0
  %v1726 = vadd.f32 %v1565, %v1725
  %v1727 = vpop.f32.mrb[0].mxu0
  %1728 = vmatprep.mubr.bf16.mxu0 %v824
  %1729 = vmatmul.mubr.bf16.gmra.mrb[0].mxu0 %v823
  %v1730 = vpop.f32.mrb[0].mxu0
  %v1731 = vadd.f32 %v1570, %v1730
  %v1732 = vpop.f32.mrb[0].mxu0
  %v1733 = vpop.f32.mrb[0].mxu0
  %v1734 = vadd.f32 %v1573, %v1733
  %v1735 = vpop.f32.mrb[0].mxu0
  %1736 = vmatprep.mubr.bf16.mxu0 %v833
  %1737 = vmatmul.mubr.bf16.gmra.mrb[0].mxu0 %v832
  %v1738 = vpop.f32.mrb[0].mxu0
  %v1739 = vadd.f32 %v1578, %v1738
  %v1740 = vpop.f32.mrb[0].mxu0
  %v1741 = vpop.f32.mrb[0].mxu0
  %v1742 = vadd.f32 %v1581, %v1741
  %v1743 = vpop.f32.mrb[0].mxu0
  %1744 = vmatprep.mubr.bf16.mxu0 %v842
  %1745 = vmatmul.mubr.bf16.gmra.mrb[0].mxu0 %v841
  %v1746 = vpop.f32.mrb[0].mxu0
  %v1747 = vadd.f32 %v1586, %v1746
  %v1748 = vpop.f32.mrb[0].mxu0
  %v1749 = vpop.f32.mrb[0].mxu0
  %v1750 = vadd.f32 %v1589, %v1749
  %v1751 = vpop.f32.mrb[0].mxu0
  %1752 = vmatprep.mubr.bf16.mxu0 %v851
  %1753 = vmatmul.mubr.bf16.gmra.mrb[0].mxu0 %v850
  %v1754 = vpop.f32.mrb[0].mxu0
  %v1755 = vadd.f32 %v1594, %v1754
  %v1756 = vpop.f32.mrb[0].mxu0
  %v1757 = vpop.f32.mrb[0].mxu0
  %v1758 = vadd.f32 %v1597, %v1757
  %v1759 = vpop.f32.mrb[0].mxu0
  %1760 = vmatprep.mubr.bf16.mxu0 %v860
  %1761 = vmatmul.mubr.bf16.gmra.mrb[0].mxu0 %v859
  %v1762 = vpop.f32.mrb[0].mxu0
  %v1763 = vadd.f32 %v1602, %v1762
  %v1764 = vpop.f32.mrb[0].mxu0
  %v1765 = vpop.f32.mrb[0].mxu0
  %v1766 = vadd.f32 %v1605, %v1765
  %v1767 = vpop.f32.mrb[0].mxu0
  %1768 = vmatprep.mubr.bf16.mxu0 %v869
  %1769 = vmatmul.mubr.bf16.gmra.mrb[0].mxu0 %v868
  %v1770 = vpop.f32.mrb[0].mxu0
  %v1771 = vadd.f32 %v1610, %v1770
  %v1772 = vpop.f32.mrb[0].mxu0
  %v1773 = vpop.f32.mrb[0].mxu0
  %v1774 = vadd.f32 %v1613, %v1773
  %v1775 = vpop.f32.mrb[0].mxu0
  %1776 = vmatprep.mubr.bf16.mxu0 %v878
  %1777 = vmatmul.mubr.bf16.gmra.mrb[0].mxu0 %v877
  %v1778 = vpop.f32.mrb[0].mxu0
  %v1779 = vadd.f32 %v1618, %v1778
  %v1780 = vpop.f32.mrb[0].mxu0
  %v1781 = vpop.f32.mrb[0].mxu0
  %v1782 = vadd.f32 %v1621, %v1781
  %v1783 = vpop.f32.mrb[0].mxu0
  %1784 = vmatprep.mubr.bf16.mxu0 %v887
  %1785 = vmatmul.mubr.bf16.gmra.mrb[0].mxu0 %v886
  %v1786 = vpop.f32.mrb[0].mxu0
  %v1787 = vadd.f32 %v1626, %v1786
  %v1788 = vpop.f32.mrb[0].mxu0
  %v1789 = vpop.f32.mrb[0].mxu0
  %v1790 = vadd.f32 %v1629, %v1789
  %v1791 = vpop.f32.mrb[0].mxu0
  %1792 = vmatprep.mubr.bf16.mxu0 %v896
  %1793 = vmatmul.mubr.bf16.gmra.mrb[0].mxu0 %v895
  %v1794 = vpop.f32.mrb[0].mxu0
  %v1795 = vadd.f32 %v1634, %v1794
  %v1796 = vpop.f32.mrb[0].mxu0
  %v1797 = vpop.f32.mrb[0].mxu0
  %v1798 = vadd.f32 %v1637, %v1797
  %v1799 = vpop.f32.mrb[0].mxu0
  %1800 = vmatprep.mubr.bf16.mxu0 %v905
  %1801 = vmatmul.mubr.bf16.gmra.mrb[0].mxu0 %v904
  %v1802 = vpop.f32.mrb[0].mxu0
  %v1803 = vadd.f32 %v1642, %v1802
  %v1804 = vpop.f32.mrb[0].mxu0
  %v1805 = vpop.f32.mrb[0].mxu0
  %v1806 = vadd.f32 %v1645, %v1805
  %v1807 = vpop.f32.mrb[0].mxu0
  %1808 = vdwg.mxu0
  %1809 = vmatprep.subr.bf16.mxu0 0
  %1810 = vmatpush1.bf16.msra.mxu0 %v1375
  %1811 = vmatprep.subr.bf16.mxu0 0
  %1812 = vmatpush1.bf16.msra.mxu0 %v1376
  %1813 = vmatprep.subr.bf16.mxu0 0
  %1814 = vmatpush1.bf16.msra.mxu0 %v1377
  %1815 = vmatprep.subr.bf16.mxu0 0
  %1816 = vmatpush1.bf16.msra.mxu0 %v1378
  %1817 = vmatprep.subr.bf16.mxu0 0
  %1818 = vmatpush1.bf16.msra.mxu0 %v1379
  %1819 = vmatprep.subr.bf16.mxu0 0
  %1820 = vmatpush1.bf16.msra.mxu0 %v1380
  %1821 = vmatprep.subr.bf16.mxu0 0
  %1822 = vmatpush1.bf16.msra.mxu0 %v1381
  %1823 = vmatprep.subr.bf16.mxu0 0
  %1824 = vmatpush1.bf16.msra.mxu0 %v1382
  %1825 = vmatprep.subr.bf16.mxu0 0
  %1826 = vmatpush1.bf16.msra.mxu0 %v1383
  %1827 = vmatprep.subr.bf16.mxu0 0
  %1828 = vmatpush1.bf16.msra.mxu0 %v1384
  %1829 = vmatprep.subr.bf16.mxu0 0
  %1830 = vmatpush1.bf16.msra.mxu0 %v1385
  %1831 = vmatprep.subr.bf16.mxu0 0
  %1832 = vmatpush1.bf16.msra.mxu0 %v1386
  %1833 = vmatprep.subr.bf16.mxu0 0
  %1834 = vmatpush1.bf16.msra.mxu0 %v1387
  %1835 = vmatprep.subr.bf16.mxu0 0
  %1836 = vmatpush1.bf16.msra.mxu0 %v1388
  %1837 = vmatprep.subr.bf16.mxu0 0
  %1838 = vmatpush1.bf16.msra.mxu0 %v1389
  %1839 = vmatprep.subr.bf16.mxu0 0
  %1840 = vmatpush1.bf16.msra.mxu0 %v1390
  %1841 = vmatprep.mubr.bf16.mxu0 %v772
  %1842 = vmatmul.mubr.bf16.gmra.mrb[0].mxu0 %v771
  %v1843 = vpop.f32.mrb[0].mxu0
  %v1844 = vadd.f32 %v1683, %v1843
  %v1845 = vpop.f32.mrb[0].mxu0
  %v1846 = vpop.f32.mrb[0].mxu0
  %v1847 = vadd.f32 %v1686, %v1846
  %v1848 = vpop.f32.mrb[0].mxu0
  %1849 = vmatprep.mubr.bf16.mxu0 %v781
  %1850 = vmatmul.mubr.bf16.gmra.mrb[0].mxu0 %v780
  %v1851 = vpop.f32.mrb[0].mxu0
  %v1852 = vadd.f32 %v1691, %v1851
  %v1853 = vpop.f32.mrb[0].mxu0
  %v1854 = vpop.f32.mrb[0].mxu0
  %v1855 = vadd.f32 %v1694, %v1854
  %v1856 = vpop.f32.mrb[0].mxu0
  %1857 = vmatprep.mubr.bf16.mxu0 %v790
  %1858 = vmatmul.mubr.bf16.gmra.mrb[0].mxu0 %v789
  %v1859 = vpop.f32.mrb[0].mxu0
  %v1860 = vadd.f32 %v1699, %v1859
  %v1861 = vpop.f32.mrb[0].mxu0
  %v1862 = vpop.f32.mrb[0].mxu0
  %v1863 = vadd.f32 %v1702, %v1862
  %v1864 = vpop.f32.mrb[0].mxu0
  %1865 = vmatprep.mubr.bf16.mxu0 %v799
  %1866 = vmatmul.mubr.bf16.gmra.mrb[0].mxu0 %v798
  %v1867 = vpop.f32.mrb[0].mxu0
  %v1868 = vadd.f32 %v1707, %v1867
  %v1869 = vpop.f32.mrb[0].mxu0
  %v1870 = vpop.f32.mrb[0].mxu0
  %v1871 = vadd.f32 %v1710, %v1870
  %v1872 = vpop.f32.mrb[0].mxu0
  %1873 = vmatprep.mubr.bf16.mxu0 %v808
  %1874 = vmatmul.mubr.bf16.gmra.mrb[0].mxu0 %v807
  %v1875 = vpop.f32.mrb[0].mxu0
  %v1876 = vadd.f32 %v1715, %v1875
  %v1877 = vpop.f32.mrb[0].mxu0
  %v1878 = vpop.f32.mrb[0].mxu0
  %v1879 = vadd.f32 %v1718, %v1878
  %v1880 = vpop.f32.mrb[0].mxu0
  %1881 = vmatprep.mubr.bf16.mxu0 %v817
  %1882 = vmatmul.mubr.bf16.gmra.mrb[0].mxu0 %v816
  %v1883 = vpop.f32.mrb[0].mxu0
  %v1884 = vadd.f32 %v1723, %v1883
  %v1885 = vpop.f32.mrb[0].mxu0
  %v1886 = vpop.f32.mrb[0].mxu0
  %v1887 = vadd.f32 %v1726, %v1886
  %v1888 = vpop.f32.mrb[0].mxu0
  %1889 = vmatprep.mubr.bf16.mxu0 %v826
  %1890 = vmatmul.mubr.bf16.gmra.mrb[0].mxu0 %v825
  %v1891 = vpop.f32.mrb[0].mxu0
  %v1892 = vadd.f32 %v1731, %v1891
  %v1893 = vpop.f32.mrb[0].mxu0
  %v1894 = vpop.f32.mrb[0].mxu0
  %v1895 = vadd.f32 %v1734, %v1894
  %v1896 = vpop.f32.mrb[0].mxu0
  %1897 = vmatprep.mubr.bf16.mxu0 %v835
  %1898 = vmatmul.mubr.bf16.gmra.mrb[0].mxu0 %v834
  %v1899 = vpop.f32.mrb[0].mxu0
  %v1900 = vadd.f32 %v1739, %v1899
  %v1901 = vpop.f32.mrb[0].mxu0
  %v1902 = vpop.f32.mrb[0].mxu0
  %v1903 = vadd.f32 %v1742, %v1902
  %v1904 = vpop.f32.mrb[0].mxu0
  %1905 = vmatprep.mubr.bf16.mxu0 %v844
  %1906 = vmatmul.mubr.bf16.gmra.mrb[0].mxu0 %v843
  %v1907 = vpop.f32.mrb[0].mxu0
  %v1908 = vadd.f32 %v1747, %v1907
  %v1909 = vpop.f32.mrb[0].mxu0
  %v1910 = vpop.f32.mrb[0].mxu0
  %v1911 = vadd.f32 %v1750, %v1910
  %v1912 = vpop.f32.mrb[0].mxu0
  %1913 = vmatprep.mubr.bf16.mxu0 %v853
  %1914 = vmatmul.mubr.bf16.gmra.mrb[0].mxu0 %v852
  %v1915 = vpop.f32.mrb[0].mxu0
  %v1916 = vadd.f32 %v1755, %v1915
  %v1917 = vpop.f32.mrb[0].mxu0
  %v1918 = vpop.f32.mrb[0].mxu0
  %v1919 = vadd.f32 %v1758, %v1918
  %v1920 = vpop.f32.mrb[0].mxu0
  %1921 = vmatprep.mubr.bf16.mxu0 %v862
  %1922 = vmatmul.mubr.bf16.gmra.mrb[0].mxu0 %v861
  %v1923 = vpop.f32.mrb[0].mxu0
  %v1924 = vadd.f32 %v1763, %v1923
  %v1925 = vpop.f32.mrb[0].mxu0
  %v1926 = vpop.f32.mrb[0].mxu0
  %v1927 = vadd.f32 %v1766, %v1926
  %v1928 = vpop.f32.mrb[0].mxu0
  %1929 = vmatprep.mubr.bf16.mxu0 %v871
  %1930 = vmatmul.mubr.bf16.gmra.mrb[0].mxu0 %v870
  %v1931 = vpop.f32.mrb[0].mxu0
  %v1932 = vadd.f32 %v1771, %v1931
  %v1933 = vpop.f32.mrb[0].mxu0
  %v1934 = vpop.f32.mrb[0].mxu0
  %v1935 = vadd.f32 %v1774, %v1934
  %v1936 = vpop.f32.mrb[0].mxu0
  %1937 = vmatprep.mubr.bf16.mxu0 %v880
  %1938 = vmatmul.mubr.bf16.gmra.mrb[0].mxu0 %v879
  %v1939 = vpop.f32.mrb[0].mxu0
  %v1940 = vadd.f32 %v1779, %v1939
  %v1941 = vpop.f32.mrb[0].mxu0
  %v1942 = vpop.f32.mrb[0].mxu0
  %v1943 = vadd.f32 %v1782, %v1942
  %v1944 = vpop.f32.mrb[0].mxu0
  %1945 = vmatprep.mubr.bf16.mxu0 %v889
  %1946 = vmatmul.mubr.bf16.gmra.mrb[0].mxu0 %v888
  %v1947 = vpop.f32.mrb[0].mxu0
  %v1948 = vadd.f32 %v1787, %v1947
  %v1949 = vpop.f32.mrb[0].mxu0
  %v1950 = vpop.f32.mrb[0].mxu0
  %v1951 = vadd.f32 %v1790, %v1950
  %v1952 = vpop.f32.mrb[0].mxu0
  %1953 = vmatprep.mubr.bf16.mxu0 %v898
  %1954 = vmatmul.mubr.bf16.gmra.mrb[0].mxu0 %v897
  %v1955 = vpop.f32.mrb[0].mxu0
  %v1956 = vadd.f32 %v1795, %v1955
  %v1957 = vpop.f32.mrb[0].mxu0
  %v1958 = vpop.f32.mrb[0].mxu0
  %v1959 = vadd.f32 %v1798, %v1958
  %v1960 = vpop.f32.mrb[0].mxu0
  %1961 = vmatprep.mubr.bf16.mxu0 %v907
  %1962 = vmatmul.mubr.bf16.gmra.mrb[0].mxu0 %v906
  %v1963 = vpop.f32.mrb[0].mxu0
  %v1964 = vadd.f32 %v1803, %v1963
  %v1965 = vpop.f32.mrb[0].mxu0
  %v1966 = vpop.f32.mrb[0].mxu0
  %v1967 = vadd.f32 %v1806, %v1966
  %v1968 = vpop.f32.mrb[0].mxu0
  %1969 = vdwg.mxu0
  %1970 = vmatprep.subr.bf16.mxu0 0
  %1971 = vmatpush1.bf16.msra.mxu0 %v1391
  %1972 = vmatprep.subr.bf16.mxu0 0
  %1973 = vmatpush1.bf16.msra.mxu0 %v1392
  %1974 = vmatprep.subr.bf16.mxu0 0
  %1975 = vmatpush1.bf16.msra.mxu0 %v1393
  %1976 = vmatprep.subr.bf16.mxu0 0
  %1977 = vmatpush1.bf16.msra.mxu0 %v1394
  %1978 = vmatprep.subr.bf16.mxu0 0
  %1979 = vmatpush1.bf16.msra.mxu0 %v1395
  %1980 = vmatprep.subr.bf16.mxu0 0
  %1981 = vmatpush1.bf16.msra.mxu0 %v1396
  %1982 = vmatprep.subr.bf16.mxu0 0
  %1983 = vmatpush1.bf16.msra.mxu0 %v1397
  %1984 = vmatprep.subr.bf16.mxu0 0
  %1985 = vmatpush1.bf16.msra.mxu0 %v1398
  %1986 = vmatprep.subr.bf16.mxu0 0
  %1987 = vmatpush1.bf16.msra.mxu0 %v1399
  %1988 = vmatprep.subr.bf16.mxu0 0
  %1989 = vmatpush1.bf16.msra.mxu0 %v1400
  %1990 = vmatprep.subr.bf16.mxu0 0
  %1991 = vmatpush1.bf16.msra.mxu0 %v1401
  %1992 = vmatprep.subr.bf16.mxu0 0
  %1993 = vmatpush1.bf16.msra.mxu0 %v1402
  %1994 = vmatprep.subr.bf16.mxu0 0
  %1995 = vmatpush1.bf16.msra.mxu0 %v1403
  %1996 = vmatprep.subr.bf16.mxu0 0
  %1997 = vmatpush1.bf16.msra.mxu0 %v1404
  %1998 = vmatprep.subr.bf16.mxu0 0
  %1999 = vmatpush1.bf16.msra.mxu0 %v1405
  %2000 = vmatprep.subr.bf16.mxu0 0
  %2001 = vmatpush1.bf16.msra.mxu0 %v1406
  %2002 = vmatprep.mubr.bf16.mxu0 %v774
  %2003 = vmatmul.mubr.bf16.gmra.mrb[0].mxu0 %v773
  %v2004 = vpop.f32.mrb[0].mxu0
  %v2005 = vadd.f32 %v1844, %v2004
  %v2006 = vpop.f32.mrb[0].mxu0
  %v2007 = vpop.f32.mrb[0].mxu0
  %v2008 = vadd.f32 %v1847, %v2007
  %v2009 = vpop.f32.mrb[0].mxu0
  %2010 = vmatprep.mubr.bf16.mxu0 %v783
  %2011 = vmatmul.mubr.bf16.gmra.mrb[0].mxu0 %v782
  %v2012 = vpop.f32.mrb[0].mxu0
  %v2013 = vadd.f32 %v1852, %v2012
  %v2014 = vpop.f32.mrb[0].mxu0
  %v2015 = vpop.f32.mrb[0].mxu0
  %v2016 = vadd.f32 %v1855, %v2015
  %v2017 = vpop.f32.mrb[0].mxu0
  %2018 = vmatprep.mubr.bf16.mxu0 %v792
  %2019 = vmatmul.mubr.bf16.gmra.mrb[0].mxu0 %v791
  %v2020 = vpop.f32.mrb[0].mxu0
  %v2021 = vadd.f32 %v1860, %v2020
  %v2022 = vpop.f32.mrb[0].mxu0
  %v2023 = vpop.f32.mrb[0].mxu0
  %v2024 = vadd.f32 %v1863, %v2023
  %v2025 = vpop.f32.mrb[0].mxu0
  %2026 = vmatprep.mubr.bf16.mxu0 %v801
  %2027 = vmatmul.mubr.bf16.gmra.mrb[0].mxu0 %v800
  %v2028 = vpop.f32.mrb[0].mxu0
  %v2029 = vadd.f32 %v1868, %v2028
  %v2030 = vpop.f32.mrb[0].mxu0
  %v2031 = vpop.f32.mrb[0].mxu0
  %v2032 = vadd.f32 %v1871, %v2031
  %v2033 = vpop.f32.mrb[0].mxu0
  %2034 = vmatprep.mubr.bf16.mxu0 %v810
  %2035 = vmatmul.mubr.bf16.gmra.mrb[0].mxu0 %v809
  %v2036 = vpop.f32.mrb[0].mxu0
  %v2037 = vadd.f32 %v1876, %v2036
  %v2038 = vpop.f32.mrb[0].mxu0
  %v2039 = vpop.f32.mrb[0].mxu0
  %v2040 = vadd.f32 %v1879, %v2039
  %v2041 = vpop.f32.mrb[0].mxu0
  %2042 = vmatprep.mubr.bf16.mxu0 %v819
  %2043 = vmatmul.mubr.bf16.gmra.mrb[0].mxu0 %v818
  %v2044 = vpop.f32.mrb[0].mxu0
  %v2045 = vadd.f32 %v1884, %v2044
  %v2046 = vpop.f32.mrb[0].mxu0
  %v2047 = vpop.f32.mrb[0].mxu0
  %v2048 = vadd.f32 %v1887, %v2047
  %v2049 = vpop.f32.mrb[0].mxu0
  %2050 = vmatprep.mubr.bf16.mxu0 %v828
  %2051 = vmatmul.mubr.bf16.gmra.mrb[0].mxu0 %v827
  %v2052 = vpop.f32.mrb[0].mxu0
  %v2053 = vadd.f32 %v1892, %v2052
  %v2054 = vpop.f32.mrb[0].mxu0
  %v2055 = vpop.f32.mrb[0].mxu0
  %v2056 = vadd.f32 %v1895, %v2055
  %v2057 = vpop.f32.mrb[0].mxu0
  %2058 = vmatprep.mubr.bf16.mxu0 %v837
  %2059 = vmatmul.mubr.bf16.gmra.mrb[0].mxu0 %v836
  %v2060 = vpop.f32.mrb[0].mxu0
  %v2061 = vadd.f32 %v1900, %v2060
  %v2062 = vpop.f32.mrb[0].mxu0
  %v2063 = vpop.f32.mrb[0].mxu0
  %v2064 = vadd.f32 %v1903, %v2063
  %v2065 = vpop.f32.mrb[0].mxu0
  %2066 = vmatprep.mubr.bf16.mxu0 %v846
  %2067 = vmatmul.mubr.bf16.gmra.mrb[0].mxu0 %v845
  %v2068 = vpop.f32.mrb[0].mxu0
  %v2069 = vadd.f32 %v1908, %v2068
  %v2070 = vpop.f32.mrb[0].mxu0
  %v2071 = vpop.f32.mrb[0].mxu0
  %v2072 = vadd.f32 %v1911, %v2071
  %v2073 = vpop.f32.mrb[0].mxu0
  %2074 = vmatprep.mubr.bf16.mxu0 %v855
  %2075 = vmatmul.mubr.bf16.gmra.mrb[0].mxu0 %v854
  %v2076 = vpop.f32.mrb[0].mxu0
  %v2077 = vadd.f32 %v1916, %v2076
  %v2078 = vpop.f32.mrb[0].mxu0
  %v2079 = vpop.f32.mrb[0].mxu0
  %v2080 = vadd.f32 %v1919, %v2079
  %v2081 = vpop.f32.mrb[0].mxu0
  %2082 = vmatprep.mubr.bf16.mxu0 %v864
  %2083 = vmatmul.mubr.bf16.gmra.mrb[0].mxu0 %v863
  %v2084 = vpop.f32.mrb[0].mxu0
  %v2085 = vadd.f32 %v1924, %v2084
  %v2086 = vpop.f32.mrb[0].mxu0
  %v2087 = vpop.f32.mrb[0].mxu0
  %v2088 = vadd.f32 %v1927, %v2087
  %v2089 = vpop.f32.mrb[0].mxu0
  %2090 = vmatprep.mubr.bf16.mxu0 %v873
  %2091 = vmatmul.mubr.bf16.gmra.mrb[0].mxu0 %v872
  %v2092 = vpop.f32.mrb[0].mxu0
  %v2093 = vadd.f32 %v1932, %v2092
  %v2094 = vpop.f32.mrb[0].mxu0
  %v2095 = vpop.f32.mrb[0].mxu0
  %v2096 = vadd.f32 %v1935, %v2095
  %v2097 = vpop.f32.mrb[0].mxu0
  %2098 = vmatprep.mubr.bf16.mxu0 %v882
  %2099 = vmatmul.mubr.bf16.gmra.mrb[0].mxu0 %v881
  %v2100 = vpop.f32.mrb[0].mxu0
  %v2101 = vadd.f32 %v1940, %v2100
  %v2102 = vpop.f32.mrb[0].mxu0
  %v2103 = vpop.f32.mrb[0].mxu0
  %v2104 = vadd.f32 %v1943, %v2103
  %v2105 = vpop.f32.mrb[0].mxu0
  %2106 = vmatprep.mubr.bf16.mxu0 %v891
  %2107 = vmatmul.mubr.bf16.gmra.mrb[0].mxu0 %v890
  %v2108 = vpop.f32.mrb[0].mxu0
  %v2109 = vadd.f32 %v1948, %v2108
  %v2110 = vpop.f32.mrb[0].mxu0
  %v2111 = vpop.f32.mrb[0].mxu0
  %v2112 = vadd.f32 %v1951, %v2111
  %v2113 = vpop.f32.mrb[0].mxu0
  %2114 = vmatprep.mubr.bf16.mxu0 %v900
  %2115 = vmatmul.mubr.bf16.gmra.mrb[0].mxu0 %v899
  %v2116 = vpop.f32.mrb[0].mxu0
  %v2117 = vadd.f32 %v1956, %v2116
  %v2118 = vpop.f32.mrb[0].mxu0
  %v2119 = vpop.f32.mrb[0].mxu0
  %v2120 = vadd.f32 %v1959, %v2119
  %v2121 = vpop.f32.mrb[0].mxu0
  %2122 = vmatprep.mubr.bf16.mxu0 %v909
  %2123 = vmatmul.mubr.bf16.gmra.mrb[0].mxu0 %v908
  %v2124 = vpop.f32.mrb[0].mxu0
  %v2125 = vadd.f32 %v1964, %v2124
  %v2126 = vpop.f32.mrb[0].mxu0
  %v2127 = vpop.f32.mrb[0].mxu0
  %v2128 = vadd.f32 %v1967, %v2127
  %v2129 = vpop.f32.mrb[0].mxu0
  %2130 = vdwg.mxu0
  %2131 = vmatprep.subr.bf16.mxu0 0
  %2132 = vmatpush1.bf16.msra.mxu0 %v1407
  %2133 = vmatprep.subr.bf16.mxu0 0
  %2134 = vmatpush1.bf16.msra.mxu0 %v1408
  %2135 = vmatprep.subr.bf16.mxu0 0
  %2136 = vmatpush1.bf16.msra.mxu0 %v1409
  %2137 = vmatprep.subr.bf16.mxu0 0
  %2138 = vmatpush1.bf16.msra.mxu0 %v1410
  %2139 = vmatprep.subr.bf16.mxu0 0
  %2140 = vmatpush1.bf16.msra.mxu0 %v1411
  %2141 = vmatprep.subr.bf16.mxu0 0
  %2142 = vmatpush1.bf16.msra.mxu0 %v1412
  %2143 = vmatprep.subr.bf16.mxu0 0
  %2144 = vmatpush1.bf16.msra.mxu0 %v1413
  %2145 = vmatprep.subr.bf16.mxu0 0
  %2146 = vmatpush1.bf16.msra.mxu0 %v1414
  %2147 = vmatprep.subr.bf16.mxu0 0
  %2148 = vmatpush1.bf16.msra.mxu0 0
  %2149 = vmatprep.subr.bf16.mxu0 0
  %2150 = vmatpush1.bf16.msra.mxu0 0
  %2151 = vmatprep.subr.bf16.mxu0 0
  %2152 = vmatpush1.bf16.msra.mxu0 0
  %2153 = vmatprep.subr.bf16.mxu0 0
  %2154 = vmatpush1.bf16.msra.mxu0 0
  %2155 = vmatprep.subr.bf16.mxu0 0
  %2156 = vmatpush1.bf16.msra.mxu0 0
  %2157 = vmatprep.subr.bf16.mxu0 0
  %2158 = vmatpush1.bf16.msra.mxu0 0
  %2159 = vmatprep.subr.bf16.mxu0 0
  %2160 = vmatpush1.bf16.msra.mxu0 0
  %2161 = vmatprep.subr.bf16.mxu0 0
  %2162 = vmatpush1.bf16.msra.mxu0 0
  %2163 = vmatprep.mubr.bf16.mxu0 0
  %2164 = vmatmul.mubr.bf16.gmra.mrb[0].mxu0 %v775
  %v2165 = vpop.f32.mrb[0].mxu0
  %v2166 = vadd.f32 %v2005, %v2165
  %v2167 = vpop.f32.mrb[0].mxu0
  %v2168 = vpop.f32.mrb[0].mxu0
  %v2169 = vadd.f32 %v2008, %v2168
  %v2170 = vpop.f32.mrb[0].mxu0
  %2171 = vmatprep.mubr.bf16.mxu0 0
  %2172 = vmatmul.mubr.bf16.gmra.mrb[0].mxu0 %v784
  %v2173 = vpop.f32.mrb[0].mxu0
  %v2174 = vadd.f32 %v2013, %v2173
  %v2175 = vpop.f32.mrb[0].mxu0
  %v2176 = vpop.f32.mrb[0].mxu0
  %v2177 = vadd.f32 %v2016, %v2176
  %v2178 = vpop.f32.mrb[0].mxu0
  %2179 = vmatprep.mubr.bf16.mxu0 0
  %2180 = vmatmul.mubr.bf16.gmra.mrb[0].mxu0 %v793
  %v2181 = vpop.f32.mrb[0].mxu0
  %v2182 = vadd.f32 %v2021, %v2181
  %v2183 = vpop.f32.mrb[0].mxu0
  %v2184 = vpop.f32.mrb[0].mxu0
  %v2185 = vadd.f32 %v2024, %v2184
  %v2186 = vpop.f32.mrb[0].mxu0
  %2187 = vmatprep.mubr.bf16.mxu0 0
  %2188 = vmatmul.mubr.bf16.gmra.mrb[0].mxu0 %v802
  %v2189 = vpop.f32.mrb[0].mxu0
  %v2190 = vadd.f32 %v2029, %v2189
  %v2191 = vpop.f32.mrb[0].mxu0
  %v2192 = vpop.f32.mrb[0].mxu0
  %v2193 = vadd.f32 %v2032, %v2192
  %v2194 = vpop.f32.mrb[0].mxu0
  %2195 = vmatprep.mubr.bf16.mxu0 0
  %2196 = vmatmul.mubr.bf16.gmra.mrb[0].mxu0 %v811
  %v2197 = vpop.f32.mrb[0].mxu0
  %v2198 = vadd.f32 %v2037, %v2197
  %v2199 = vpop.f32.mrb[0].mxu0
  %v2200 = vpop.f32.mrb[0].mxu0
  %v2201 = vadd.f32 %v2040, %v2200
  %v2202 = vpop.f32.mrb[0].mxu0
  %2203 = vmatprep.mubr.bf16.mxu0 0
  %2204 = vmatmul.mubr.bf16.gmra.mrb[0].mxu0 %v820
  %v2205 = vpop.f32.mrb[0].mxu0
  %v2206 = vadd.f32 %v2045, %v2205
  %v2207 = vpop.f32.mrb[0].mxu0
  %v2208 = vpop.f32.mrb[0].mxu0
  %v2209 = vadd.f32 %v2048, %v2208
  %v2210 = vpop.f32.mrb[0].mxu0
  %2211 = vmatprep.mubr.bf16.mxu0 0
  %2212 = vmatmul.mubr.bf16.gmra.mrb[0].mxu0 %v829
  %v2213 = vpop.f32.mrb[0].mxu0
  %v2214 = vadd.f32 %v2053, %v2213
  %v2215 = vpop.f32.mrb[0].mxu0
  %v2216 = vpop.f32.mrb[0].mxu0
  %v2217 = vadd.f32 %v2056, %v2216
  %v2218 = vpop.f32.mrb[0].mxu0
  %2219 = vmatprep.mubr.bf16.mxu0 0
  %2220 = vmatmul.mubr.bf16.gmra.mrb[0].mxu0 %v838
  %v2221 = vpop.f32.mrb[0].mxu0
  %v2222 = vadd.f32 %v2061, %v2221
  %v2223 = vpop.f32.mrb[0].mxu0
  %v2224 = vpop.f32.mrb[0].mxu0
  %v2225 = vadd.f32 %v2064, %v2224
  %v2226 = vpop.f32.mrb[0].mxu0
  %2227 = vmatprep.mubr.bf16.mxu0 0
  %2228 = vmatmul.mubr.bf16.gmra.mrb[0].mxu0 %v847
  %v2229 = vpop.f32.mrb[0].mxu0
  %v2230 = vadd.f32 %v2069, %v2229
  %v2231 = vpop.f32.mrb[0].mxu0
  %v2232 = vpop.f32.mrb[0].mxu0
  %v2233 = vadd.f32 %v2072, %v2232
  %v2234 = vpop.f32.mrb[0].mxu0
  %2235 = vmatprep.mubr.bf16.mxu0 0
  %2236 = vmatmul.mubr.bf16.gmra.mrb[0].mxu0 %v856
  %v2237 = vpop.f32.mrb[0].mxu0
  %v2238 = vadd.f32 %v2077, %v2237
  %v2239 = vpop.f32.mrb[0].mxu0
  %v2240 = vpop.f32.mrb[0].mxu0
  %v2241 = vadd.f32 %v2080, %v2240
  %v2242 = vpop.f32.mrb[0].mxu0
  %2243 = vmatprep.mubr.bf16.mxu0 0
  %2244 = vmatmul.mubr.bf16.gmra.mrb[0].mxu0 %v865
  %v2245 = vpop.f32.mrb[0].mxu0
  %v2246 = vadd.f32 %v2085, %v2245
  %v2247 = vpop.f32.mrb[0].mxu0
  %v2248 = vpop.f32.mrb[0].mxu0
  %v2249 = vadd.f32 %v2088, %v2248
  %v2250 = vpop.f32.mrb[0].mxu0
  %2251 = vmatprep.mubr.bf16.mxu0 0
  %2252 = vmatmul.mubr.bf16.gmra.mrb[0].mxu0 %v874
  %v2253 = vpop.f32.mrb[0].mxu0
  %v2254 = vadd.f32 %v2093, %v2253
  %v2255 = vpop.f32.mrb[0].mxu0
  %v2256 = vpop.f32.mrb[0].mxu0
  %v2257 = vadd.f32 %v2096, %v2256
  %v2258 = vpop.f32.mrb[0].mxu0
  %2259 = vmatprep.mubr.bf16.mxu0 0
  %2260 = vmatmul.mubr.bf16.gmra.mrb[0].mxu0 %v883
  %v2261 = vpop.f32.mrb[0].mxu0
  %v2262 = vadd.f32 %v2101, %v2261
  %v2263 = vpop.f32.mrb[0].mxu0
  %v2264 = vpop.f32.mrb[0].mxu0
  %v2265 = vadd.f32 %v2104, %v2264
  %v2266 = vpop.f32.mrb[0].mxu0
  %2267 = vmatprep.mubr.bf16.mxu0 0
  %2268 = vmatmul.mubr.bf16.gmra.mrb[0].mxu0 %v892
  %v2269 = vpop.f32.mrb[0].mxu0
  %v2270 = vadd.f32 %v2109, %v2269
  %v2271 = vpop.f32.mrb[0].mxu0
  %v2272 = vpop.f32.mrb[0].mxu0
  %v2273 = vadd.f32 %v2112, %v2272
  %v2274 = vpop.f32.mrb[0].mxu0
  %2275 = vmatprep.mubr.bf16.mxu0 0
  %2276 = vmatmul.mubr.bf16.gmra.mrb[0].mxu0 %v901
  %v2277 = vpop.f32.mrb[0].mxu0
  %v2278 = vadd.f32 %v2117, %v2277
  %v2279 = vpop.f32.mrb[0].mxu0
  %v2280 = vpop.f32.mrb[0].mxu0
  %v2281 = vadd.f32 %v2120, %v2280
  %v2282 = vpop.f32.mrb[0].mxu0
  %2283 = vmatprep.mubr.bf16.mxu0 0
  %2284 = vmatmul.mubr.bf16.gmra.mrb[0].mxu0 %v910
  %v2285 = vpop.f32.mrb[0].mxu0
  %v2286 = vadd.f32 %v2125, %v2285
  %v2287 = vpop.f32.mrb[0].mxu0
  %v2288 = vpop.f32.mrb[0].mxu0
  %v2289 = vadd.f32 %v2128, %v2288
  %v2290 = vpop.f32.mrb[0].mxu0
  %2291 = vdwg.mxu0
  %v2292 = vpack.c.bf16 %v2169, %v2166
  %v2293 = vpack.c.bf16 %v2177, %v2174
  %v2294 = vpack.c.bf16 %v2185, %v2182
  %v2295 = vpack.c.bf16 %v2193, %v2190
  %v2296 = vpack.c.bf16 %v2201, %v2198
  %v2297 = vpack.c.bf16 %v2209, %v2206
  %v2298 = vpack.c.bf16 %v2217, %v2214
  %v2299 = vpack.c.bf16 %v2225, %v2222
  %v2300 = vpack.c.bf16 %v2233, %v2230
  %v2301 = vpack.c.bf16 %v2241, %v2238
  %v2302 = vpack.c.bf16 %v2249, %v2246
  %v2303 = vpack.c.bf16 %v2257, %v2254
  %v2304 = vpack.c.bf16 %v2265, %v2262
  %v2305 = vpack.c.bf16 %v2273, %v2270
  %v2306 = vpack.c.bf16 %v2281, %v2278
  %v2307 = vpack.c.bf16 %v2289, %v2286
  %v2324 = vunpack.c.l.b16 %v2292
  %v2325 = vunpack.c.h.b16 %v2292
  %v2326 = vunpack.c.l.b16 %v2293
  %v2327 = vunpack.c.h.b16 %v2293
  %v2328 = vunpack.c.l.b16 %v2294
  %v2329 = vunpack.c.h.b16 %v2294
  %v2330 = vunpack.c.l.b16 %v2295
  %v2331 = vunpack.c.h.b16 %v2295
  %v2332 = vunpack.c.l.b16 %v2296
  %v2333 = vunpack.c.h.b16 %v2296
  %v2334 = vunpack.c.l.b16 %v2297
  %v2335 = vunpack.c.h.b16 %v2297
  %v2336 = vunpack.c.l.b16 %v2298
  %v2337 = vunpack.c.h.b16 %v2298
  %v2338 = vunpack.c.l.b16 %v2299
  %v2339 = vunpack.c.h.b16 %v2299
  %v2340 = vunpack.c.l.b16 %v2300
  %v2341 = vunpack.c.h.b16 %v2300
  %v2342 = vunpack.c.l.b16 %v2301
  %v2343 = vunpack.c.h.b16 %v2301
  %v2344 = vunpack.c.l.b16 %v2302
  %v2345 = vunpack.c.h.b16 %v2302
  %v2346 = vunpack.c.l.b16 %v2303
  %v2347 = vunpack.c.h.b16 %v2303
  %v2348 = vunpack.c.l.b16 %v2304
  %v2349 = vunpack.c.h.b16 %v2304
  %v2350 = vunpack.c.l.b16 %v2305
  %v2351 = vunpack.c.h.b16 %v2305
  %v2352 = vunpack.c.l.b16 %v2306
  %v2353 = vunpack.c.h.b16 %v2306
  %v2354 = vunpack.c.l.b16 %v2307
  %v2355 = vunpack.c.h.b16 %v2307
  %v2356 = vpack.c.b16 %v2324, %v2324
  %v2357 = vpack.c.b16 %v2325, %v2325
  %v2358 = vpack.c.b16 %v2326, %v2326
  %v2359 = vpack.c.b16 %v2327, %v2327
  %v2360 = vpack.c.b16 %v2328, %v2328
  %v2361 = vpack.c.b16 %v2329, %v2329
  %v2362 = vpack.c.b16 %v2330, %v2330
  %v2363 = vpack.c.b16 %v2331, %v2331
  %v2364 = vpack.c.b16 %v2332, %v2332
  %v2365 = vpack.c.b16 %v2333, %v2333
  %v2366 = vpack.c.b16 %v2334, %v2334
  %v2367 = vpack.c.b16 %v2335, %v2335
  %v2368 = vpack.c.b16 %v2336, %v2336
  %v2369 = vpack.c.b16 %v2337, %v2337
  %v2370 = vpack.c.b16 %v2338, %v2338
  %v2371 = vpack.c.b16 %v2339, %v2339
  %v2372 = vpack.c.b16 %v2340, %v2340
  %v2373 = vpack.c.b16 %v2341, %v2341
  %v2374 = vpack.c.b16 %v2342, %v2342
  %v2375 = vpack.c.b16 %v2343, %v2343
  %v2376 = vpack.c.b16 %v2344, %v2344
  %v2377 = vpack.c.b16 %v2345, %v2345
  %v2378 = vpack.c.b16 %v2346, %v2346
  %v2379 = vpack.c.b16 %v2347, %v2347
  %v2380 = vpack.c.b16 %v2348, %v2348
  %v2381 = vpack.c.b16 %v2349, %v2349
  %v2382 = vpack.c.b16 %v2350, %v2350
  %v2383 = vpack.c.b16 %v2351, %v2351
  %v2384 = vpack.c.b16 %v2352, %v2352
  %v2385 = vpack.c.b16 %v2353, %v2353
  %v2386 = vpack.c.b16 %v2354, %v2354
  %v2387 = vpack.c.b16 %v2355, %v2355
  %2420 = vst [vmem:[%s2] sm:$0xf] %v2356
  %2421 = vst [vmem:[%s2 + $0x4] sm:$0xf] %v2357
  %2422 = vst [vmem:[%s2 + $0x8] sm:$0xf] %v2358
  %2423 = vst [vmem:[%s2 + $0xc] sm:$0xf] %v2359
  %2424 = vst [vmem:[%s2 + $0x10] sm:$0xf] %v2360
  %2425 = vst [vmem:[%s2 + $0x14] sm:$0xf] %v2361
  %2426 = vst [vmem:[%s2 + $0x18] sm:$0xf] %v2362
  %2427 = vst [vmem:[%s2 + $0x1c] sm:$0xf] %v2363
  %2428 = vst [vmem:[%s2 + $0x20] sm:$0xf] %v2364
  %2429 = vst [vmem:[%s2 + $0x24] sm:$0xf] %v2365
  %2430 = vst [vmem:[%s2 + $0x28] sm:$0xf] %v2366
  %2431 = vst [vmem:[%s2 + $0x2c] sm:$0xf] %v2367
  %2432 = vst [vmem:[%s2 + $0x30] sm:$0xf] %v2368
  %2433 = vst [vmem:[%s2 + $0x34] sm:$0xf] %v2369
  %2434 = vst [vmem:[%s2 + $0x38] sm:$0xf] %v2370
  %2435 = vst [vmem:[%s2 + $0x3c] sm:$0xf] %v2371
  %2436 = vst [vmem:[%s2 + $0x40] sm:$0xf] %v2372
  %2437 = vst [vmem:[%s2 + $0x44] sm:$0xf] %v2373
  %2438 = vst [vmem:[%s2 + $0x48] sm:$0xf] %v2374
  %2439 = vst [vmem:[%s2 + $0x4c] sm:$0xf] %v2375
  %2440 = vst [vmem:[%s2 + $0x50] sm:$0xf] %v2376
  %2441 = vst [vmem:[%s2 + $0x54] sm:$0xf] %v2377
  %2442 = vst [vmem:[%s2 + $0x58] sm:$0xf] %v2378
  %2443 = vst [vmem:[%s2 + $0x5c] sm:$0xf] %v2379
  %2444 = vst [vmem:[%s2 + $0x60] sm:$0xf] %v2380
  %2445 = vst [vmem:[%s2 + $0x64] sm:$0xf] %v2381
  %2446 = vst [vmem:[%s2 + $0x68] sm:$0xf] %v2382
  %2447 = vst [vmem:[%s2 + $0x6c] sm:$0xf] %v2383
  %2448 = vst [vmem:[%s2 + $0x70] sm:$0xf] %v2384
  %2449 = vst [vmem:[%s2 + $0x74] sm:$0xf] %v2385
  %2450 = vst [vmem:[%s2 + $0x78] sm:$0xf] %v2386
  %2451 = vst [vmem:[%s2 + $0x7c] sm:$0xf] %v2387
  %v2452 = vmul.f32 %v2166, %v2166
  %v2453 = vmul.f32 %v2169, %v2169
  %v2454 = vmul.f32 %v2174, %v2174
  %v2455 = vmul.f32 %v2177, %v2177
  %v2456 = vmul.f32 %v2182, %v2182
  %v2457 = vmul.f32 %v2185, %v2185
  %v2458 = vmul.f32 %v2190, %v2190
  %v2459 = vmul.f32 %v2193, %v2193
  %v2460 = vmul.f32 %v2198, %v2198
  %v2461 = vmul.f32 %v2201, %v2201
  %v2462 = vmul.f32 %v2206, %v2206
  %v2463 = vmul.f32 %v2209, %v2209
  %v2464 = vmul.f32 %v2214, %v2214
  %v2465 = vmul.f32 %v2217, %v2217
  %v2466 = vmul.f32 %v2222, %v2222
  %v2467 = vmul.f32 %v2225, %v2225
  %v2468 = vmul.f32 %v2230, %v2230
  %v2469 = vmul.f32 %v2233, %v2233
  %v2470 = vmul.f32 %v2238, %v2238
  %v2471 = vmul.f32 %v2241, %v2241
  %v2472 = vmul.f32 %v2246, %v2246
  %v2473 = vmul.f32 %v2249, %v2249
  %v2474 = vmul.f32 %v2254, %v2254
  %v2475 = vmul.f32 %v2257, %v2257
  %v2476 = vmul.f32 %v2262, %v2262
  %v2477 = vmul.f32 %v2265, %v2265
  %v2478 = vmul.f32 %v2270, %v2270
  %v2479 = vmul.f32 %v2273, %v2273
  %v2480 = vmul.f32 %v2278, %v2278
  %v2481 = vmul.f32 %v2281, %v2281
  %v2482 = vmul.f32 %v2286, %v2286
  %v2483 = vmul.f32 %v2289, %v2289
  %2484 = vst [vmem:[%s3] sm:$0xff] %v2166
  %2485 = vst [vmem:[%s3 + $0x8] sm:$0xff] %v2169
  %2486 = vst [vmem:[%s3 + $0x10] sm:$0xff] %v2174
  %2487 = vst [vmem:[%s3 + $0x18] sm:$0xff] %v2177
  %2488 = vst [vmem:[%s3 + $0x20] sm:$0xff] %v2182
  %2489 = vst [vmem:[%s3 + $0x28] sm:$0xff] %v2185
  %2490 = vst [vmem:[%s3 + $0x30] sm:$0xff] %v2190
  %2491 = vst [vmem:[%s3 + $0x38] sm:$0xff] %v2193
  %2492 = vst [vmem:[%s3 + $0x40] sm:$0xff] %v2198
  %2493 = vst [vmem:[%s3 + $0x48] sm:$0xff] %v2201
  %2494 = vst [vmem:[%s3 + $0x50] sm:$0xff] %v2206
  %2495 = vst [vmem:[%s3 + $0x58] sm:$0xff] %v2209
  %2496 = vst [vmem:[%s3 + $0x60] sm:$0xff] %v2214
  %2497 = vst [vmem:[%s3 + $0x68] sm:$0xff] %v2217
  %2498 = vst [vmem:[%s3 + $0x70] sm:$0xff] %v2222
  %2499 = vst [vmem:[%s3 + $0x78] sm:$0xff] %v2225
  %2500 = vst [vmem:[%s3 + $0x80] sm:$0xff] %v2230
  %2501 = vst [vmem:[%s3 + $0x88] sm:$0xff] %v2233
  %2502 = vst [vmem:[%s3 + $0x90] sm:$0xff] %v2238
  %2503 = vst [vmem:[%s3 + $0x98] sm:$0xff] %v2241
  %2504 = vst [vmem:[%s3 + $0xa0] sm:$0xff] %v2246
  %2505 = vst [vmem:[%s3 + $0xa8] sm:$0xff] %v2249
  %2506 = vst [vmem:[%s3 + $0xb0] sm:$0xff] %v2254
  %2507 = vst [vmem:[%s3 + $0xb8] sm:$0xff] %v2257
  %2508 = vst [vmem:[%s3 + $0xc0] sm:$0xff] %v2262
  %2509 = vst [vmem:[%s3 + $0xc8] sm:$0xff] %v2265
  %2510 = vst [vmem:[%s3 + $0xd0] sm:$0xff] %v2270
  %2511 = vst [vmem:[%s3 + $0xd8] sm:$0xff] %v2273
  %2512 = vst [vmem:[%s3 + $0xe0] sm:$0xff] %v2278
  %2513 = vst [vmem:[%s3 + $0xe8] sm:$0xff] %v2281
  %2514 = vst [vmem:[%s3 + $0xf0] sm:$0xff] %v2286
  %2515 = vst [vmem:[%s3 + $0xf8] sm:$0xff] %v2289
  %2516 = vst [vmem:[%s4] sm:$0xff] %v2452
  %2517 = vst [vmem:[%s4 + $0x8] sm:$0xff] %v2453
  %2518 = vst [vmem:[%s4 + $0x10] sm:$0xff] %v2454
  %2519 = vst [vmem:[%s4 + $0x18] sm:$0xff] %v2455
  %2520 = vst [vmem:[%s4 + $0x20] sm:$0xff] %v2456
  %2521 = vst [vmem:[%s4 + $0x28] sm:$0xff] %v2457
  %2522 = vst [vmem:[%s4 + $0x30] sm:$0xff] %v2458
  %2523 = vst [vmem:[%s4 + $0x38] sm:$0xff] %v2459
  %2524 = vst [vmem:[%s4 + $0x40] sm:$0xff] %v2460
  %2525 = vst [vmem:[%s4 + $0x48] sm:$0xff] %v2461
  %2526 = vst [vmem:[%s4 + $0x50] sm:$0xff] %v2462
  %2527 = vst [vmem:[%s4 + $0x58] sm:$0xff] %v2463
  %2528 = vst [vmem:[%s4 + $0x60] sm:$0xff] %v2464
  %2529 = vst [vmem:[%s4 + $0x68] sm:$0xff] %v2465
  %2530 = vst [vmem:[%s4 + $0x70] sm:$0xff] %v2466
  %2531 = vst [vmem:[%s4 + $0x78] sm:$0xff] %v2467
  %2532 = vst [vmem:[%s4 + $0x80] sm:$0xff] %v2468
  %2533 = vst [vmem:[%s4 + $0x88] sm:$0xff] %v2469
  %2534 = vst [vmem:[%s4 + $0x90] sm:$0xff] %v2470
  %2535 = vst [vmem:[%s4 + $0x98] sm:$0xff] %v2471
  %2536 = vst [vmem:[%s4 + $0xa0] sm:$0xff] %v2472
  %2537 = vst [vmem:[%s4 + $0xa8] sm:$0xff] %v2473
  %2538 = vst [vmem:[%s4 + $0xb0] sm:$0xff] %v2474
  %2539 = vst [vmem:[%s4 + $0xb8] sm:$0xff] %v2475
  %2540 = vst [vmem:[%s4 + $0xc0] sm:$0xff] %v2476
  %2541 = vst [vmem:[%s4 + $0xc8] sm:$0xff] %v2477
  %2542 = vst [vmem:[%s4 + $0xd0] sm:$0xff] %v2478
  %2543 = vst [vmem:[%s4 + $0xd8] sm:$0xff] %v2479
  %2544 = vst [vmem:[%s4 + $0xe0] sm:$0xff] %v2480
  %2545 = vst [vmem:[%s4 + $0xe8] sm:$0xff] %v2481
  %2546 = vst [vmem:[%s4 + $0xf0] sm:$0xff] %v2482
  %2547 = vst [vmem:[%s4 + $0xf8] sm:$0xff] %v2483
  // Predicated region
  $region10: #{generator_forward.7} parent=0 // pred_check
    _
  $region11: #{generator_forward.7} parent=0 // pred_check_branch
    %2549 = sbr.rel (0) target = $region13
  $region12: #{generator_forward.7} parent=0 // pred_region
    _
  $region13: #{generator_forward.7} parent=0 // pred_fallthru
    _
  // Predicated region
  $region14: #{generator_forward.7} parent=0 // pred_check
    _
  $region15: #{generator_forward.7} parent=0 // pred_check_branch
    %2551 = sbr.rel (0) target = $region17
  $region16: #{generator_forward.7} parent=0 // pred_region
    _
  $region17: #{generator_forward.7} parent=0 // pred_fallthru
    _
  // Predicated region
  $region18: #{generator_forward.7} parent=0 // pred_check
    _
  $region19: #{generator_forward.7} parent=0 // pred_check_branch
    %2553 = sbr.rel (0) target = $region21
  $region20: #{generator_forward.7} parent=0 // pred_region
    _
  $region21: #{generator_forward.7} parent=0 // pred_fallthru
    _
  // Predicated region
  $region22: #{generator_forward.7} parent=0 // pred_check
    _
  $region23: #{generator_forward.7} parent=0 // pred_check_branch
    %2555 = sbr.rel (0) target = $region25
  $region24: #{generator_forward.7} parent=0 // pred_region
    _
  $region25: #{generator_forward.7} parent=0 // pred_fallthru
    _
  // Predicated region
  $region26: #{generator_forward.7} parent=0 // pred_check
    _
  $region27: #{generator_forward.7} parent=0 // pred_check_branch
    %2557 = sbr.rel (0) target = $region29
  $region28: #{generator_forward.7} parent=0 // pred_region
    _
  $region29: #{generator_forward.7} parent=0 // pred_fallthru
    _
  // Predicated region
  $region30: #{generator_forward.7} parent=0 // pred_check
    _
  $region31: #{generator_forward.7} parent=0 // pred_check_branch
    %2559 = sbr.rel (0) target = $region33
  $region32: #{generator_forward.7} parent=0 // pred_region
    _
  $region33: #{generator_forward.7} parent=0 // pred_fallthru
    _

// kernel: generator_forward.8
$region0: #{generator_forward.8}
  #allocation0 [shape = 'u32[]', space=smem, size = 0x4, offset = 0x4, fixed_abs, tag = 'smem constant byte address 0x4 - core index']
  #allocation1 [shape = 'u32[144,128]{1,0:T(1,128)}', space=vmem, size = 0x12000, scoped, tag = 'internal scratch']
  %s0 = inlined_call_operand.vmem [shape: bf16[256,128], index: 0, kind: input, shape index: {}]
  %s1 = inlined_call_operand.vmem [shape: f32[256,1], index: 1, kind: input, shape index: {}]
  %s2 = inlined_call_operand.vmem [shape: f32[256,1], index: 2, kind: input, shape index: {}]
  %s3 = inlined_call_operand.vmem [shape: bf16[256,128], index: 3, kind: output, shape index: {}]
  %s4 = sld [smem:[#allocation0]]
  $region22: #{generator_forward.8} parent=0
    _
  %s6 = ssub.s32 1, %s4
  %s7 = scalar_select 0, %s6, %s4
  // Predicated region
  $region2: #{generator_forward.8} parent=0 // pred_check
    _
  $region3: #{generator_forward.8} parent=0 // pred_check_branch
    %9 = sbr.rel (0) target = $region5
  $region4: #{generator_forward.8} parent=0 // pred_region
    _
  $region5: #{generator_forward.8} parent=0 // pred_fallthru
    _
  // Predicated region
  $region6: #{generator_forward.8} parent=0 // pred_check
    _
  $region7: #{generator_forward.8} parent=0 // pred_check_branch
    %11 = sbr.rel (0) target = $region9
  $region8: #{generator_forward.8} parent=0 // pred_region
    _
  $region9: #{generator_forward.8} parent=0 // pred_fallthru
    _
  // Predicated region
  $region10: #{generator_forward.8} parent=0 // pred_check
    _
  $region11: #{generator_forward.8} parent=0 // pred_check_branch
    %13 = sbr.rel (0) target = $region13
  $region12: #{generator_forward.8} parent=0 // pred_region
    _
  $region13: #{generator_forward.8} parent=0 // pred_fallthru
    _
  %v14 = vld [vmem:[%s0] sm:$0xf]
  %v15 = vld [vmem:[%s0 + $0x4] sm:$0xf]
  %v16 = vld [vmem:[%s0 + $0x8] sm:$0xf]
  %v17 = vld [vmem:[%s0 + $0xc] sm:$0xf]
  %v18 = vld [vmem:[%s0 + $0x10] sm:$0xf]
  %v19 = vld [vmem:[%s0 + $0x14] sm:$0xf]
  %v20 = vld [vmem:[%s0 + $0x18] sm:$0xf]
  %v21 = vld [vmem:[%s0 + $0x1c] sm:$0xf]
  %v22 = vld [vmem:[%s0 + $0x20] sm:$0xf]
  %v23 = vld [vmem:[%s0 + $0x24] sm:$0xf]
  %v24 = vld [vmem:[%s0 + $0x28] sm:$0xf]
  %v25 = vld [vmem:[%s0 + $0x2c] sm:$0xf]
  %v26 = vld [vmem:[%s0 + $0x30] sm:$0xf]
  %v27 = vld [vmem:[%s0 + $0x34] sm:$0xf]
  %v28 = vld [vmem:[%s0 + $0x38] sm:$0xf]
  %v29 = vld [vmem:[%s0 + $0x3c] sm:$0xf]
  %v30 = vld [vmem:[%s0 + $0x40] sm:$0xf]
  %v31 = vld [vmem:[%s0 + $0x44] sm:$0xf]
  %v32 = vld [vmem:[%s0 + $0x48] sm:$0xf]
  %v33 = vld [vmem:[%s0 + $0x4c] sm:$0xf]
  %v34 = vld [vmem:[%s0 + $0x50] sm:$0xf]
  %v35 = vld [vmem:[%s0 + $0x54] sm:$0xf]
  %v36 = vld [vmem:[%s0 + $0x58] sm:$0xf]
  %v37 = vld [vmem:[%s0 + $0x5c] sm:$0xf]
  %v38 = vld [vmem:[%s0 + $0x60] sm:$0xf]
  %v39 = vld [vmem:[%s0 + $0x64] sm:$0xf]
  %v40 = vld [vmem:[%s0 + $0x68] sm:$0xf]
  %v41 = vld [vmem:[%s0 + $0x6c] sm:$0xf]
  %v42 = vld [vmem:[%s0 + $0x70] sm:$0xf]
  %v43 = vld [vmem:[%s0 + $0x74] sm:$0xf]
  %v44 = vld [vmem:[%s0 + $0x78] sm:$0xf]
  %v45 = vld [vmem:[%s0 + $0x7c] sm:$0xf]
  %v46 = vunpack.c.l.bf16 %v14
  %v47 = vunpack.c.l.bf16 %v15
  %v48 = vunpack.c.l.bf16 %v16
  %v49 = vunpack.c.l.bf16 %v17
  %v50 = vunpack.c.l.bf16 %v18
  %v51 = vunpack.c.l.bf16 %v19
  %v52 = vunpack.c.l.bf16 %v20
  %v53 = vunpack.c.l.bf16 %v21
  %v54 = vunpack.c.l.bf16 %v22
  %v55 = vunpack.c.l.bf16 %v23
  %v56 = vunpack.c.l.bf16 %v24
  %v57 = vunpack.c.l.bf16 %v25
  %v58 = vunpack.c.l.bf16 %v26
  %v59 = vunpack.c.l.bf16 %v27
  %v60 = vunpack.c.l.bf16 %v28
  %v61 = vunpack.c.l.bf16 %v29
  %v62 = vunpack.c.l.bf16 %v30
  %v63 = vunpack.c.l.bf16 %v31
  %v64 = vunpack.c.l.bf16 %v32
  %v65 = vunpack.c.l.bf16 %v33
  %v66 = vunpack.c.l.bf16 %v34
  %v67 = vunpack.c.l.bf16 %v35
  %v68 = vunpack.c.l.bf16 %v36
  %v69 = vunpack.c.l.bf16 %v37
  %v70 = vunpack.c.l.bf16 %v38
  %v71 = vunpack.c.l.bf16 %v39
  %v72 = vunpack.c.l.bf16 %v40
  %v73 = vunpack.c.l.bf16 %v41
  %v74 = vunpack.c.l.bf16 %v42
  %v75 = vunpack.c.l.bf16 %v43
  %v76 = vunpack.c.l.bf16 %v44
  %v77 = vunpack.c.l.bf16 %v45
  %v78 = vld [vmem:[%s1] sm:$0xff]
  %v79 = vld [vmem:[%s1 + $0x8] sm:$0xff]
  %v80 = vld [vmem:[%s1 + $0x10] sm:$0xff]
  %v81 = vld [vmem:[%s1 + $0x18] sm:$0xff]
  %v82 = vld [vmem:[%s1 + $0x20] sm:$0xff]
  %v83 = vld [vmem:[%s1 + $0x28] sm:$0xff]
  %v84 = vld [vmem:[%s1 + $0x30] sm:$0xff]
  %v85 = vld [vmem:[%s1 + $0x38] sm:$0xff]
  %v86 = vld [vmem:[%s1 + $0x40] sm:$0xff]
  %v87 = vld [vmem:[%s1 + $0x48] sm:$0xff]
  %v88 = vld [vmem:[%s1 + $0x50] sm:$0xff]
  %v89 = vld [vmem:[%s1 + $0x58] sm:$0xff]
  %v90 = vld [vmem:[%s1 + $0x60] sm:$0xff]
  %v91 = vld [vmem:[%s1 + $0x68] sm:$0xff]
  %v92 = vld [vmem:[%s1 + $0x70] sm:$0xff]
  %v93 = vld [vmem:[%s1 + $0x78] sm:$0xff]
  %v94 = vld [vmem:[%s1 + $0x80] sm:$0xff]
  %v95 = vld [vmem:[%s1 + $0x88] sm:$0xff]
  %v96 = vld [vmem:[%s1 + $0x90] sm:$0xff]
  %v97 = vld [vmem:[%s1 + $0x98] sm:$0xff]
  %v98 = vld [vmem:[%s1 + $0xa0] sm:$0xff]
  %v99 = vld [vmem:[%s1 + $0xa8] sm:$0xff]
  %v100 = vld [vmem:[%s1 + $0xb0] sm:$0xff]
  %v101 = vld [vmem:[%s1 + $0xb8] sm:$0xff]
  %v102 = vld [vmem:[%s1 + $0xc0] sm:$0xff]
  %v103 = vld [vmem:[%s1 + $0xc8] sm:$0xff]
  %v104 = vld [vmem:[%s1 + $0xd0] sm:$0xff]
  %v105 = vld [vmem:[%s1 + $0xd8] sm:$0xff]
  %v106 = vld [vmem:[%s1 + $0xe0] sm:$0xff]
  %v107 = vld [vmem:[%s1 + $0xe8] sm:$0xff]
  %v108 = vld [vmem:[%s1 + $0xf0] sm:$0xff]
  %v109 = vld [vmem:[%s1 + $0xf8] sm:$0xff]
  %111 = vset.pattern.permute.xlu0 0
  %112 = vperm.xlu0 %111, %v78
  %v113 = vpop.permute.xlu0 %112
  %116 = vset.pattern.permute.xlu0 0
  %117 = vperm.xlu0 %116, %v79
  %v118 = vpop.permute.xlu0 %117
  %121 = vset.pattern.permute.xlu0 0
  %122 = vperm.xlu0 %121, %v80
  %v123 = vpop.permute.xlu0 %122
  %126 = vset.pattern.permute.xlu0 0
  %127 = vperm.xlu0 %126, %v81
  %v128 = vpop.permute.xlu0 %127
  %131 = vset.pattern.permute.xlu0 0
  %132 = vperm.xlu0 %131, %v82
  %v133 = vpop.permute.xlu0 %132
  %136 = vset.pattern.permute.xlu0 0
  %137 = vperm.xlu0 %136, %v83
  %v138 = vpop.permute.xlu0 %137
  %141 = vset.pattern.permute.xlu0 0
  %142 = vperm.xlu0 %141, %v84
  %v143 = vpop.permute.xlu0 %142
  %146 = vset.pattern.permute.xlu0 0
  %147 = vperm.xlu0 %146, %v85
  %v148 = vpop.permute.xlu0 %147
  %151 = vset.pattern.permute.xlu0 0
  %152 = vperm.xlu0 %151, %v86
  %v153 = vpop.permute.xlu0 %152
  %156 = vset.pattern.permute.xlu0 0
  %157 = vperm.xlu0 %156, %v87
  %v158 = vpop.permute.xlu0 %157
  %161 = vset.pattern.permute.xlu0 0
  %162 = vperm.xlu0 %161, %v88
  %v163 = vpop.permute.xlu0 %162
  %166 = vset.pattern.permute.xlu0 0
  %167 = vperm.xlu0 %166, %v89
  %v168 = vpop.permute.xlu0 %167
  %171 = vset.pattern.permute.xlu0 0
  %172 = vperm.xlu0 %171, %v90
  %v173 = vpop.permute.xlu0 %172
  %176 = vset.pattern.permute.xlu0 0
  %177 = vperm.xlu0 %176, %v91
  %v178 = vpop.permute.xlu0 %177
  %181 = vset.pattern.permute.xlu0 0
  %182 = vperm.xlu0 %181, %v92
  %v183 = vpop.permute.xlu0 %182
  %186 = vset.pattern.permute.xlu0 0
  %187 = vperm.xlu0 %186, %v93
  %v188 = vpop.permute.xlu0 %187
  %191 = vset.pattern.permute.xlu0 0
  %192 = vperm.xlu0 %191, %v94
  %v193 = vpop.permute.xlu0 %192
  %196 = vset.pattern.permute.xlu0 0
  %197 = vperm.xlu0 %196, %v95
  %v198 = vpop.permute.xlu0 %197
  %201 = vset.pattern.permute.xlu0 0
  %202 = vperm.xlu0 %201, %v96
  %v203 = vpop.permute.xlu0 %202
  %206 = vset.pattern.permute.xlu0 0
  %207 = vperm.xlu0 %206, %v97
  %v208 = vpop.permute.xlu0 %207
  %211 = vset.pattern.permute.xlu0 0
  %212 = vperm.xlu0 %211, %v98
  %v213 = vpop.permute.xlu0 %212
  %216 = vset.pattern.permute.xlu0 0
  %217 = vperm.xlu0 %216, %v99
  %v218 = vpop.permute.xlu0 %217
  %221 = vset.pattern.permute.xlu0 0
  %222 = vperm.xlu0 %221, %v100
  %v223 = vpop.permute.xlu0 %222
  %226 = vset.pattern.permute.xlu0 0
  %227 = vperm.xlu0 %226, %v101
  %v228 = vpop.permute.xlu0 %227
  %231 = vset.pattern.permute.xlu0 0
  %232 = vperm.xlu0 %231, %v102
  %v233 = vpop.permute.xlu0 %232
  %236 = vset.pattern.permute.xlu0 0
  %237 = vperm.xlu0 %236, %v103
  %v238 = vpop.permute.xlu0 %237
  %241 = vset.pattern.permute.xlu0 0
  %242 = vperm.xlu0 %241, %v104
  %v243 = vpop.permute.xlu0 %242
  %246 = vset.pattern.permute.xlu0 0
  %247 = vperm.xlu0 %246, %v105
  %v248 = vpop.permute.xlu0 %247
  %251 = vset.pattern.permute.xlu0 0
  %252 = vperm.xlu0 %251, %v106
  %v253 = vpop.permute.xlu0 %252
  %256 = vset.pattern.permute.xlu0 0
  %257 = vperm.xlu0 %256, %v107
  %v258 = vpop.permute.xlu0 %257
  %261 = vset.pattern.permute.xlu0 0
  %262 = vperm.xlu0 %261, %v108
  %v263 = vpop.permute.xlu0 %262
  %266 = vset.pattern.permute.xlu0 0
  %267 = vperm.xlu0 %266, %v109
  %v268 = vpop.permute.xlu0 %267
  %v270 = vmul.f32 %v46, %v113
  %v271 = vmul.f32 %v47, %v118
  %v272 = vmul.f32 %v48, %v123
  %v273 = vmul.f32 %v49, %v128
  %v274 = vmul.f32 %v50, %v133
  %v275 = vmul.f32 %v51, %v138
  %v276 = vmul.f32 %v52, %v143
  %v277 = vmul.f32 %v53, %v148
  %v278 = vmul.f32 %v54, %v153
  %v279 = vmul.f32 %v55, %v158
  %v280 = vmul.f32 %v56, %v163
  %v281 = vmul.f32 %v57, %v168
  %v282 = vmul.f32 %v58, %v173
  %v283 = vmul.f32 %v59, %v178
  %v284 = vmul.f32 %v60, %v183
  %v285 = vmul.f32 %v61, %v188
  %v286 = vmul.f32 %v62, %v193
  %v287 = vmul.f32 %v63, %v198
  %v288 = vmul.f32 %v64, %v203
  %v289 = vmul.f32 %v65, %v208
  %v290 = vmul.f32 %v66, %v213
  %v291 = vmul.f32 %v67, %v218
  %v292 = vmul.f32 %v68, %v223
  %v293 = vmul.f32 %v69, %v228
  %v294 = vmul.f32 %v70, %v233
  %v295 = vmul.f32 %v71, %v238
  %v296 = vmul.f32 %v72, %v243
  %v297 = vmul.f32 %v73, %v248
  %v298 = vmul.f32 %v74, %v253
  %v299 = vmul.f32 %v75, %v258
  %v300 = vmul.f32 %v76, %v263
  %v301 = vmul.f32 %v77, %v268
  %v302 = vld [vmem:[%s2] sm:$0xff]
  %v303 = vld [vmem:[%s2 + $0x8] sm:$0xff]
  %v304 = vld [vmem:[%s2 + $0x10] sm:$0xff]
  %v305 = vld [vmem:[%s2 + $0x18] sm:$0xff]
  %v306 = vld [vmem:[%s2 + $0x20] sm:$0xff]
  %v307 = vld [vmem:[%s2 + $0x28] sm:$0xff]
  %v308 = vld [vmem:[%s2 + $0x30] sm:$0xff]
  %v309 = vld [vmem:[%s2 + $0x38] sm:$0xff]
  %v310 = vld [vmem:[%s2 + $0x40] sm:$0xff]
  %v311 = vld [vmem:[%s2 + $0x48] sm:$0xff]
  %v312 = vld [vmem:[%s2 + $0x50] sm:$0xff]
  %v313 = vld [vmem:[%s2 + $0x58] sm:$0xff]
  %v314 = vld [vmem:[%s2 + $0x60] sm:$0xff]
  %v315 = vld [vmem:[%s2 + $0x68] sm:$0xff]
  %v316 = vld [vmem:[%s2 + $0x70] sm:$0xff]
  %v317 = vld [vmem:[%s2 + $0x78] sm:$0xff]
  %v318 = vld [vmem:[%s2 + $0x80] sm:$0xff]
  %v319 = vld [vmem:[%s2 + $0x88] sm:$0xff]
  %v320 = vld [vmem:[%s2 + $0x90] sm:$0xff]
  %v321 = vld [vmem:[%s2 + $0x98] sm:$0xff]
  %v322 = vld [vmem:[%s2 + $0xa0] sm:$0xff]
  %v323 = vld [vmem:[%s2 + $0xa8] sm:$0xff]
  %v324 = vld [vmem:[%s2 + $0xb0] sm:$0xff]
  %v325 = vld [vmem:[%s2 + $0xb8] sm:$0xff]
  %v326 = vld [vmem:[%s2 + $0xc0] sm:$0xff]
  %v327 = vld [vmem:[%s2 + $0xc8] sm:$0xff]
  %v328 = vld [vmem:[%s2 + $0xd0] sm:$0xff]
  %v329 = vld [vmem:[%s2 + $0xd8] sm:$0xff]
  %v330 = vld [vmem:[%s2 + $0xe0] sm:$0xff]
  %v331 = vld [vmem:[%s2 + $0xe8] sm:$0xff]
  %v332 = vld [vmem:[%s2 + $0xf0] sm:$0xff]
  %v333 = vld [vmem:[%s2 + $0xf8] sm:$0xff]
  %335 = vset.pattern.permute.xlu0 0
  %336 = vperm.xlu0 %335, %v302
  %v337 = vpop.permute.xlu0 %336
  %340 = vset.pattern.permute.xlu0 0
  %341 = vperm.xlu0 %340, %v303
  %v342 = vpop.permute.xlu0 %341
  %345 = vset.pattern.permute.xlu0 0
  %346 = vperm.xlu0 %345, %v304
  %v347 = vpop.permute.xlu0 %346
  %350 = vset.pattern.permute.xlu0 0
  %351 = vperm.xlu0 %350, %v305
  %v352 = vpop.permute.xlu0 %351
  %355 = vset.pattern.permute.xlu0 0
  %356 = vperm.xlu0 %355, %v306
  %v357 = vpop.permute.xlu0 %356
  %360 = vset.pattern.permute.xlu0 0
  %361 = vperm.xlu0 %360, %v307
  %v362 = vpop.permute.xlu0 %361
  %365 = vset.pattern.permute.xlu0 0
  %366 = vperm.xlu0 %365, %v308
  %v367 = vpop.permute.xlu0 %366
  %370 = vset.pattern.permute.xlu0 0
  %371 = vperm.xlu0 %370, %v309
  %v372 = vpop.permute.xlu0 %371
  %375 = vset.pattern.permute.xlu0 0
  %376 = vperm.xlu0 %375, %v310
  %v377 = vpop.permute.xlu0 %376
  %380 = vset.pattern.permute.xlu0 0
  %381 = vperm.xlu0 %380, %v311
  %v382 = vpop.permute.xlu0 %381
  %385 = vset.pattern.permute.xlu0 0
  %386 = vperm.xlu0 %385, %v312
  %v387 = vpop.permute.xlu0 %386
  %390 = vset.pattern.permute.xlu0 0
  %391 = vperm.xlu0 %390, %v313
  %v392 = vpop.permute.xlu0 %391
  %395 = vset.pattern.permute.xlu0 0
  %396 = vperm.xlu0 %395, %v314
  %v397 = vpop.permute.xlu0 %396
  %400 = vset.pattern.permute.xlu0 0
  %401 = vperm.xlu0 %400, %v315
  %v402 = vpop.permute.xlu0 %401
  %405 = vset.pattern.permute.xlu0 0
  %406 = vperm.xlu0 %405, %v316
  %v407 = vpop.permute.xlu0 %406
  %410 = vset.pattern.permute.xlu0 0
  %411 = vperm.xlu0 %410, %v317
  %v412 = vpop.permute.xlu0 %411
  %415 = vset.pattern.permute.xlu0 0
  %416 = vperm.xlu0 %415, %v318
  %v417 = vpop.permute.xlu0 %416
  %420 = vset.pattern.permute.xlu0 0
  %421 = vperm.xlu0 %420, %v319
  %v422 = vpop.permute.xlu0 %421
  %425 = vset.pattern.permute.xlu0 0
  %426 = vperm.xlu0 %425, %v320
  %v427 = vpop.permute.xlu0 %426
  %430 = vset.pattern.permute.xlu0 0
  %431 = vperm.xlu0 %430, %v321
  %v432 = vpop.permute.xlu0 %431
  %435 = vset.pattern.permute.xlu0 0
  %436 = vperm.xlu0 %435, %v322
  %v437 = vpop.permute.xlu0 %436
  %440 = vset.pattern.permute.xlu0 0
  %441 = vperm.xlu0 %440, %v323
  %v442 = vpop.permute.xlu0 %441
  %445 = vset.pattern.permute.xlu0 0
  %446 = vperm.xlu0 %445, %v324
  %v447 = vpop.permute.xlu0 %446
  %450 = vset.pattern.permute.xlu0 0
  %451 = vperm.xlu0 %450, %v325
  %v452 = vpop.permute.xlu0 %451
  %455 = vset.pattern.permute.xlu0 0
  %456 = vperm.xlu0 %455, %v326
  %v457 = vpop.permute.xlu0 %456
  %460 = vset.pattern.permute.xlu0 0
  %461 = vperm.xlu0 %460, %v327
  %v462 = vpop.permute.xlu0 %461
  %465 = vset.pattern.permute.xlu0 0
  %466 = vperm.xlu0 %465, %v328
  %v467 = vpop.permute.xlu0 %466
  %470 = vset.pattern.permute.xlu0 0
  %471 = vperm.xlu0 %470, %v329
  %v472 = vpop.permute.xlu0 %471
  %475 = vset.pattern.permute.xlu0 0
  %476 = vperm.xlu0 %475, %v330
  %v477 = vpop.permute.xlu0 %476
  %480 = vset.pattern.permute.xlu0 0
  %481 = vperm.xlu0 %480, %v331
  %v482 = vpop.permute.xlu0 %481
  %485 = vset.pattern.permute.xlu0 0
  %486 = vperm.xlu0 %485, %v332
  %v487 = vpop.permute.xlu0 %486
  %490 = vset.pattern.permute.xlu0 0
  %491 = vperm.xlu0 %490, %v333
  %v492 = vpop.permute.xlu0 %491
  %v494 = vadd.f32 %v270, %v337
  %v495 = vadd.f32 %v271, %v342
  %v496 = vadd.f32 %v272, %v347
  %v497 = vadd.f32 %v273, %v352
  %v498 = vadd.f32 %v274, %v357
  %v499 = vadd.f32 %v275, %v362
  %v500 = vadd.f32 %v276, %v367
  %v501 = vadd.f32 %v277, %v372
  %v502 = vadd.f32 %v278, %v377
  %v503 = vadd.f32 %v279, %v382
  %v504 = vadd.f32 %v280, %v387
  %v505 = vadd.f32 %v281, %v392
  %v506 = vadd.f32 %v282, %v397
  %v507 = vadd.f32 %v283, %v402
  %v508 = vadd.f32 %v284, %v407
  %v509 = vadd.f32 %v285, %v412
  %v510 = vadd.f32 %v286, %v417
  %v511 = vadd.f32 %v287, %v422
  %v512 = vadd.f32 %v288, %v427
  %v513 = vadd.f32 %v289, %v432
  %v514 = vadd.f32 %v290, %v437
  %v515 = vadd.f32 %v291, %v442
  %v516 = vadd.f32 %v292, %v447
  %v517 = vadd.f32 %v293, %v452
  %v518 = vadd.f32 %v294, %v457
  %v519 = vadd.f32 %v295, %v462
  %v520 = vadd.f32 %v296, %v467
  %v521 = vadd.f32 %v297, %v472
  %v522 = vadd.f32 %v298, %v477
  %v523 = vadd.f32 %v299, %v482
  %v524 = vadd.f32 %v300, %v487
  %v525 = vadd.f32 %v301, %v492
  %v526 = vmax.f32 %v494, 0.0
  %v527 = vmax.f32 %v495, 0.0
  %v528 = vmax.f32 %v496, 0.0
  %v529 = vmax.f32 %v497, 0.0
  %v530 = vmax.f32 %v498, 0.0
  %v531 = vmax.f32 %v499, 0.0
  %v532 = vmax.f32 %v500, 0.0
  %v533 = vmax.f32 %v501, 0.0
  %v534 = vmax.f32 %v502, 0.0
  %v535 = vmax.f32 %v503, 0.0
  %v536 = vmax.f32 %v504, 0.0
  %v537 = vmax.f32 %v505, 0.0
  %v538 = vmax.f32 %v506, 0.0
  %v539 = vmax.f32 %v507, 0.0
  %v540 = vmax.f32 %v508, 0.0
  %v541 = vmax.f32 %v509, 0.0
  %v542 = vmax.f32 %v510, 0.0
  %v543 = vmax.f32 %v511, 0.0
  %v544 = vmax.f32 %v512, 0.0
  %v545 = vmax.f32 %v513, 0.0
  %v546 = vmax.f32 %v514, 0.0
  %v547 = vmax.f32 %v515, 0.0
  %v548 = vmax.f32 %v516, 0.0
  %v549 = vmax.f32 %v517, 0.0
  %v550 = vmax.f32 %v518, 0.0
  %v551 = vmax.f32 %v519, 0.0
  %v552 = vmax.f32 %v520, 0.0
  %v553 = vmax.f32 %v521, 0.0
  %v554 = vmax.f32 %v522, 0.0
  %v555 = vmax.f32 %v523, 0.0
  %v556 = vmax.f32 %v524, 0.0
  %v557 = vmax.f32 %v525, 0.0
  %v558 = vpack.c.bf16 %v527, %v526
  %v559 = vpack.c.bf16 %v529, %v528
  %v560 = vpack.c.bf16 %v531, %v530
  %v561 = vpack.c.bf16 %v533, %v532
  %v562 = vpack.c.bf16 %v535, %v534
  %v563 = vpack.c.bf16 %v537, %v536
  %v564 = vpack.c.bf16 %v539, %v538
  %v565 = vpack.c.bf16 %v541, %v540
  %v566 = vpack.c.bf16 %v543, %v542
  %v567 = vpack.c.bf16 %v545, %v544
  %v568 = vpack.c.bf16 %v547, %v546
  %v569 = vpack.c.bf16 %v549, %v548
  %v570 = vpack.c.bf16 %v551, %v550
  %v571 = vpack.c.bf16 %v553, %v552
  %v572 = vpack.c.bf16 %v555, %v554
  %v573 = vpack.c.bf16 %v557, %v556
  %v590 = vunpack.c.l.b16 %v558
  %v591 = vunpack.c.h.b16 %v558
  %v592 = vunpack.c.l.b16 %v559
  %v593 = vunpack.c.h.b16 %v559
  %v594 = vunpack.c.l.b16 %v560
  %v595 = vunpack.c.h.b16 %v560
  %v596 = vunpack.c.l.b16 %v561
  %v597 = vunpack.c.h.b16 %v561
  %v598 = vunpack.c.l.b16 %v562
  %v599 = vunpack.c.h.b16 %v562
  %v600 = vunpack.c.l.b16 %v563
  %v601 = vunpack.c.h.b16 %v563
  %v602 = vunpack.c.l.b16 %v564
  %v603 = vunpack.c.h.b16 %v564
  %v604 = vunpack.c.l.b16 %v565
  %v605 = vunpack.c.h.b16 %v565
  %v606 = vunpack.c.l.b16 %v566
  %v607 = vunpack.c.h.b16 %v566
  %v608 = vunpack.c.l.b16 %v567
  %v609 = vunpack.c.h.b16 %v567
  %v610 = vunpack.c.l.b16 %v568
  %v611 = vunpack.c.h.b16 %v568
  %v612 = vunpack.c.l.b16 %v569
  %v613 = vunpack.c.h.b16 %v569
  %v614 = vunpack.c.l.b16 %v570
  %v615 = vunpack.c.h.b16 %v570
  %v616 = vunpack.c.l.b16 %v571
  %v617 = vunpack.c.h.b16 %v571
  %v618 = vunpack.c.l.b16 %v572
  %v619 = vunpack.c.h.b16 %v572
  %v620 = vunpack.c.l.b16 %v573
  %v621 = vunpack.c.h.b16 %v573
  %v622 = vpack.c.b16 %v590, %v590
  %v623 = vpack.c.b16 %v591, %v591
  %v624 = vpack.c.b16 %v592, %v592
  %v625 = vpack.c.b16 %v593, %v593
  %v626 = vpack.c.b16 %v594, %v594
  %v627 = vpack.c.b16 %v595, %v595
  %v628 = vpack.c.b16 %v596, %v596
  %v629 = vpack.c.b16 %v597, %v597
  %v630 = vpack.c.b16 %v598, %v598
  %v631 = vpack.c.b16 %v599, %v599
  %v632 = vpack.c.b16 %v600, %v600
  %v633 = vpack.c.b16 %v601, %v601
  %v634 = vpack.c.b16 %v602, %v602
  %v635 = vpack.c.b16 %v603, %v603
  %v636 = vpack.c.b16 %v604, %v604
  %v637 = vpack.c.b16 %v605, %v605
  %v638 = vpack.c.b16 %v606, %v606
  %v639 = vpack.c.b16 %v607, %v607
  %v640 = vpack.c.b16 %v608, %v608
  %v641 = vpack.c.b16 %v609, %v609
  %v642 = vpack.c.b16 %v610, %v610
  %v643 = vpack.c.b16 %v611, %v611
  %v644 = vpack.c.b16 %v612, %v612
  %v645 = vpack.c.b16 %v613, %v613
  %v646 = vpack.c.b16 %v614, %v614
  %v647 = vpack.c.b16 %v615, %v615
  %v648 = vpack.c.b16 %v616, %v616
  %v649 = vpack.c.b16 %v617, %v617
  %v650 = vpack.c.b16 %v618, %v618
  %v651 = vpack.c.b16 %v619, %v619
  %v652 = vpack.c.b16 %v620, %v620
  %v653 = vpack.c.b16 %v621, %v621
  %686 = vst [vmem:[%s3] sm:$0xf] %v622
  %687 = vst [vmem:[%s3 + $0x4] sm:$0xf] %v623
  %688 = vst [vmem:[%s3 + $0x8] sm:$0xf] %v624
  %689 = vst [vmem:[%s3 + $0xc] sm:$0xf] %v625
  %690 = vst [vmem:[%s3 + $0x10] sm:$0xf] %v626
  %691 = vst [vmem:[%s3 + $0x14] sm:$0xf] %v627
  %692 = vst [vmem:[%s3 + $0x18] sm:$0xf] %v628
  %693 = vst [vmem:[%s3 + $0x1c] sm:$0xf] %v629
  %694 = vst [vmem:[%s3 + $0x20] sm:$0xf] %v630
  %695 = vst [vmem:[%s3 + $0x24] sm:$0xf] %v631
  %696 = vst [vmem:[%s3 + $0x28] sm:$0xf] %v632
  %697 = vst [vmem:[%s3 + $0x2c] sm:$0xf] %v633
  %698 = vst [vmem:[%s3 + $0x30] sm:$0xf] %v634
  %699 = vst [vmem:[%s3 + $0x34] sm:$0xf] %v635
  %700 = vst [vmem:[%s3 + $0x38] sm:$0xf] %v636
  %701 = vst [vmem:[%s3 + $0x3c] sm:$0xf] %v637
  %702 = vst [vmem:[%s3 + $0x40] sm:$0xf] %v638
  %703 = vst [vmem:[%s3 + $0x44] sm:$0xf] %v639
  %704 = vst [vmem:[%s3 + $0x48] sm:$0xf] %v640
  %705 = vst [vmem:[%s3 + $0x4c] sm:$0xf] %v641
  %706 = vst [vmem:[%s3 + $0x50] sm:$0xf] %v642
  %707 = vst [vmem:[%s3 + $0x54] sm:$0xf] %v643
  %708 = vst [vmem:[%s3 + $0x58] sm:$0xf] %v644
  %709 = vst [vmem:[%s3 + $0x5c] sm:$0xf] %v645
  %710 = vst [vmem:[%s3 + $0x60] sm:$0xf] %v646
  %711 = vst [vmem:[%s3 + $0x64] sm:$0xf] %v647
  %712 = vst [vmem:[%s3 + $0x68] sm:$0xf] %v648
  %713 = vst [vmem:[%s3 + $0x6c] sm:$0xf] %v649
  %714 = vst [vmem:[%s3 + $0x70] sm:$0xf] %v650
  %715 = vst [vmem:[%s3 + $0x74] sm:$0xf] %v651
  %716 = vst [vmem:[%s3 + $0x78] sm:$0xf] %v652
  %717 = vst [vmem:[%s3 + $0x7c] sm:$0xf] %v653
  // Predicated region
  $region14: #{generator_forward.8} parent=0 // pred_check
    _
  $region15: #{generator_forward.8} parent=0 // pred_check_branch
    %719 = sbr.rel (0) target = $region17
  $region16: #{generator_forward.8} parent=0 // pred_region
    _
  $region17: #{generator_forward.8} parent=0 // pred_fallthru
    _
  // Predicated region
  $region18: #{generator_forward.8} parent=0 // pred_check
    _
  $region19: #{generator_forward.8} parent=0 // pred_check_branch
    %721 = sbr.rel (0) target = $region21
  $region20: #{generator_forward.8} parent=0 // pred_region
    _
  $region21: #{generator_forward.8} parent=0 // pred_fallthru
    _

// kernel: generator_forward.9
$region0: #{generator_forward.9}
  #allocation0 [shape = 'u32[]', space=smem, size = 0x4, offset = 0x4, fixed_abs, tag = 'smem constant byte address 0x4 - core index']
  #allocation1 [shape = 'u32[144,128]{1,0:T(1,128)}', space=vmem, size = 0x12000, scoped, tag = 'internal scratch']
  %s0 = inlined_call_operand.vmem [shape: bf16[128,576], index: 0, kind: input, shape index: {}]
  %s1 = inlined_call_operand.vmem [shape: bf16[576,128], index: 1, kind: input, shape index: {}]
  %s2 = inlined_call_operand.vmem [shape: bf16[128,128], index: 2, kind: output, shape index: {0}]
  %s3 = inlined_call_operand.vmem [shape: f32[128,128], index: 3, kind: output, shape index: {1}]
  %s4 = inlined_call_operand.vmem [shape: f32[128,128], index: 4, kind: output, shape index: {2}]
  %5 = xla_tuple %s2, %s3, %s4
  %s6 = sld [smem:[#allocation0]]
  $region34: #{generator_forward.9} parent=0
    _
  %s8 = ssub.s32 1, %s6
  %s9 = scalar_select 0, %s8, %s6
  // Predicated region
  $region2: #{generator_forward.9} parent=0 // pred_check
    _
  $region3: #{generator_forward.9} parent=0 // pred_check_branch
    %11 = sbr.rel (0) target = $region5
  $region4: #{generator_forward.9} parent=0 // pred_region
    _
  $region5: #{generator_forward.9} parent=0 // pred_fallthru
    _
  // Predicated region
  $region6: #{generator_forward.9} parent=0 // pred_check
    _
  $region7: #{generator_forward.9} parent=0 // pred_check_branch
    %13 = sbr.rel (0) target = $region9
  $region8: #{generator_forward.9} parent=0 // pred_region
    _
  $region9: #{generator_forward.9} parent=0 // pred_fallthru
    _
  %v15 = vld [vmem:[%s0] sm:$0xff]
  %v16 = vld [vmem:[%s0 + $0x8] sm:$0xff]
  %v17 = vld [vmem:[%s0 + $0x10] sm:$0xf]
  %v18 = vld [vmem:[%s0 + $0x14] sm:$0xff]
  %v19 = vld [vmem:[%s0 + $0x1c] sm:$0xff]
  %v20 = vld [vmem:[%s0 + $0x24] sm:$0xf]
  %v21 = vld [vmem:[%s0 + $0x28] sm:$0xff]
  %v22 = vld [vmem:[%s0 + $0x30] sm:$0xff]
  %v23 = vld [vmem:[%s0 + $0x38] sm:$0xf]
  %v24 = vld [vmem:[%s0 + $0x3c] sm:$0xff]
  %v25 = vld [vmem:[%s0 + $0x44] sm:$0xff]
  %v26 = vld [vmem:[%s0 + $0x4c] sm:$0xf]
  %v27 = vld [vmem:[%s0 + $0x50] sm:$0xff]
  %v28 = vld [vmem:[%s0 + $0x58] sm:$0xff]
  %v29 = vld [vmem:[%s0 + $0x60] sm:$0xf]
  %v30 = vld [vmem:[%s0 + $0x64] sm:$0xff]
  %v31 = vld [vmem:[%s0 + $0x6c] sm:$0xff]
  %v32 = vld [vmem:[%s0 + $0x74] sm:$0xf]
  %v33 = vld [vmem:[%s0 + $0x78] sm:$0xff]
  %v34 = vld [vmem:[%s0 + $0x80] sm:$0xff]
  %v35 = vld [vmem:[%s0 + $0x88] sm:$0xf]
  %v36 = vld [vmem:[%s0 + $0x8c] sm:$0xff]
  %v37 = vld [vmem:[%s0 + $0x94] sm:$0xff]
  %v38 = vld [vmem:[%s0 + $0x9c] sm:$0xf]
  %v39 = vld [vmem:[%s0 + $0xa0] sm:$0xff]
  %v40 = vld [vmem:[%s0 + $0xa8] sm:$0xff]
  %v41 = vld [vmem:[%s0 + $0xb0] sm:$0xf]
  %v42 = vld [vmem:[%s0 + $0xb4] sm:$0xff]
  %v43 = vld [vmem:[%s0 + $0xbc] sm:$0xff]
  %v44 = vld [vmem:[%s0 + $0xc4] sm:$0xf]
  %v45 = vld [vmem:[%s0 + $0xc8] sm:$0xff]
  %v46 = vld [vmem:[%s0 + $0xd0] sm:$0xff]
  %v47 = vld [vmem:[%s0 + $0xd8] sm:$0xf]
  %v48 = vld [vmem:[%s0 + $0xdc] sm:$0xff]
  %v49 = vld [vmem:[%s0 + $0xe4] sm:$0xff]
  %v50 = vld [vmem:[%s0 + $0xec] sm:$0xf]
  %v51 = vld [vmem:[%s0 + $0xf0] sm:$0xff]
  %v52 = vld [vmem:[%s0 + $0xf8] sm:$0xff]
  %v53 = vld [vmem:[%s0 + $0x100] sm:$0xf]
  %v54 = vld [vmem:[%s0 + $0x104] sm:$0xff]
  %v55 = vld [vmem:[%s0 + $0x10c] sm:$0xff]
  %v56 = vld [vmem:[%s0 + $0x114] sm:$0xf]
  %v57 = vld [vmem:[%s0 + $0x118] sm:$0xff]
  %v58 = vld [vmem:[%s0 + $0x120] sm:$0xff]
  %v59 = vld [vmem:[%s0 + $0x128] sm:$0xf]
  %v60 = vld [vmem:[%s0 + $0x12c] sm:$0xff]
  %v61 = vld [vmem:[%s0 + $0x134] sm:$0xff]
  %v62 = vld [vmem:[%s0 + $0x13c] sm:$0xf]
  %v63 = vld [vmem:[%s1] sm:$0xf]
  %v64 = vld [vmem:[%s1 + $0x4] sm:$0xf]
  %v65 = vld [vmem:[%s1 + $0x8] sm:$0xf]
  %v66 = vld [vmem:[%s1 + $0xc] sm:$0xf]
  %v67 = vld [vmem:[%s1 + $0x10] sm:$0xf]
  %v68 = vld [vmem:[%s1 + $0x14] sm:$0xf]
  %v69 = vld [vmem:[%s1 + $0x18] sm:$0xf]
  %v70 = vld [vmem:[%s1 + $0x1c] sm:$0xf]
  %v71 = vld [vmem:[%s1 + $0x20] sm:$0xf]
  %v72 = vld [vmem:[%s1 + $0x24] sm:$0xf]
  %v73 = vld [vmem:[%s1 + $0x28] sm:$0xf]
  %v74 = vld [vmem:[%s1 + $0x2c] sm:$0xf]
  %v75 = vld [vmem:[%s1 + $0x30] sm:$0xf]
  %v76 = vld [vmem:[%s1 + $0x34] sm:$0xf]
  %v77 = vld [vmem:[%s1 + $0x38] sm:$0xf]
  %v78 = vld [vmem:[%s1 + $0x3c] sm:$0xf]
  %v79 = vld [vmem:[%s1 + $0x40] sm:$0xf]
  %v80 = vld [vmem:[%s1 + $0x44] sm:$0xf]
  %v81 = vld [vmem:[%s1 + $0x48] sm:$0xf]
  %v82 = vld [vmem:[%s1 + $0x4c] sm:$0xf]
  %v83 = vld [vmem:[%s1 + $0x50] sm:$0xf]
  %v84 = vld [vmem:[%s1 + $0x54] sm:$0xf]
  %v85 = vld [vmem:[%s1 + $0x58] sm:$0xf]
  %v86 = vld [vmem:[%s1 + $0x5c] sm:$0xf]
  %v87 = vld [vmem:[%s1 + $0x60] sm:$0xf]
  %v88 = vld [vmem:[%s1 + $0x64] sm:$0xf]
  %v89 = vld [vmem:[%s1 + $0x68] sm:$0xf]
  %v90 = vld [vmem:[%s1 + $0x6c] sm:$0xf]
  %v91 = vld [vmem:[%s1 + $0x70] sm:$0xf]
  %v92 = vld [vmem:[%s1 + $0x74] sm:$0xf]
  %v93 = vld [vmem:[%s1 + $0x78] sm:$0xf]
  %v94 = vld [vmem:[%s1 + $0x7c] sm:$0xf]
  %v95 = vld [vmem:[%s1 + $0x80] sm:$0xf]
  %v96 = vld [vmem:[%s1 + $0x84] sm:$0xf]
  %v97 = vld [vmem:[%s1 + $0x88] sm:$0xf]
  %v98 = vld [vmem:[%s1 + $0x8c] sm:$0xf]
  %v99 = vld [vmem:[%s1 + $0x90] sm:$0xf]
  %v100 = vld [vmem:[%s1 + $0x94] sm:$0xf]
  %v101 = vld [vmem:[%s1 + $0x98] sm:$0xf]
  %v102 = vld [vmem:[%s1 + $0x9c] sm:$0xf]
  %v103 = vld [vmem:[%s1 + $0xa0] sm:$0xf]
  %v104 = vld [vmem:[%s1 + $0xa4] sm:$0xf]
  %v105 = vld [vmem:[%s1 + $0xa8] sm:$0xf]
  %v106 = vld [vmem:[%s1 + $0xac] sm:$0xf]
  %v107 = vld [vmem:[%s1 + $0xb0] sm:$0xf]
  %v108 = vld [vmem:[%s1 + $0xb4] sm:$0xf]
  %v109 = vld [vmem:[%s1 + $0xb8] sm:$0xf]
  %v110 = vld [vmem:[%s1 + $0xbc] sm:$0xf]
  %v111 = vld [vmem:[%s1 + $0xc0] sm:$0xf]
  %v112 = vld [vmem:[%s1 + $0xc4] sm:$0xf]
  %v113 = vld [vmem:[%s1 + $0xc8] sm:$0xf]
  %v114 = vld [vmem:[%s1 + $0xcc] sm:$0xf]
  %v115 = vld [vmem:[%s1 + $0xd0] sm:$0xf]
  %v116 = vld [vmem:[%s1 + $0xd4] sm:$0xf]
  %v117 = vld [vmem:[%s1 + $0xd8] sm:$0xf]
  %v118 = vld [vmem:[%s1 + $0xdc] sm:$0xf]
  %v119 = vld [vmem:[%s1 + $0xe0] sm:$0xf]
  %v120 = vld [vmem:[%s1 + $0xe4] sm:$0xf]
  %v121 = vld [vmem:[%s1 + $0xe8] sm:$0xf]
  %v122 = vld [vmem:[%s1 + $0xec] sm:$0xf]
  %v123 = vld [vmem:[%s1 + $0xf0] sm:$0xf]
  %v124 = vld [vmem:[%s1 + $0xf4] sm:$0xf]
  %v125 = vld [vmem:[%s1 + $0xf8] sm:$0xf]
  %v126 = vld [vmem:[%s1 + $0xfc] sm:$0xf]
  %v127 = vld [vmem:[%s1 + $0x100] sm:$0xf]
  %v128 = vld [vmem:[%s1 + $0x104] sm:$0xf]
  %v129 = vld [vmem:[%s1 + $0x108] sm:$0xf]
  %v130 = vld [vmem:[%s1 + $0x10c] sm:$0xf]
  %v131 = vld [vmem:[%s1 + $0x110] sm:$0xf]
  %v132 = vld [vmem:[%s1 + $0x114] sm:$0xf]
  %v133 = vld [vmem:[%s1 + $0x118] sm:$0xf]
  %v134 = vld [vmem:[%s1 + $0x11c] sm:$0xf]
  %v183 = vunpack.c.l.b16 %v15
  %v184 = vunpack.c.h.b16 %v15
  %v185 = vunpack.c.l.b16 %v16
  %v186 = vunpack.c.h.b16 %v16
  %v187 = vunpack.c.l.b16 %v17
  %v188 = vunpack.c.l.b16 %v18
  %v189 = vunpack.c.h.b16 %v18
  %v190 = vunpack.c.l.b16 %v19
  %v191 = vunpack.c.h.b16 %v19
  %v192 = vunpack.c.l.b16 %v20
  %v193 = vunpack.c.l.b16 %v21
  %v194 = vunpack.c.h.b16 %v21
  %v195 = vunpack.c.l.b16 %v22
  %v196 = vunpack.c.h.b16 %v22
  %v197 = vunpack.c.l.b16 %v23
  %v198 = vunpack.c.l.b16 %v24
  %v199 = vunpack.c.h.b16 %v24
  %v200 = vunpack.c.l.b16 %v25
  %v201 = vunpack.c.h.b16 %v25
  %v202 = vunpack.c.l.b16 %v26
  %v203 = vunpack.c.l.b16 %v27
  %v204 = vunpack.c.h.b16 %v27
  %v205 = vunpack.c.l.b16 %v28
  %v206 = vunpack.c.h.b16 %v28
  %v207 = vunpack.c.l.b16 %v29
  %v208 = vunpack.c.l.b16 %v30
  %v209 = vunpack.c.h.b16 %v30
  %v210 = vunpack.c.l.b16 %v31
  %v211 = vunpack.c.h.b16 %v31
  %v212 = vunpack.c.l.b16 %v32
  %v213 = vunpack.c.l.b16 %v33
  %v214 = vunpack.c.h.b16 %v33
  %v215 = vunpack.c.l.b16 %v34
  %v216 = vunpack.c.h.b16 %v34
  %v217 = vunpack.c.l.b16 %v35
  %v218 = vunpack.c.l.b16 %v36
  %v219 = vunpack.c.h.b16 %v36
  %v220 = vunpack.c.l.b16 %v37
  %v221 = vunpack.c.h.b16 %v37
  %v222 = vunpack.c.l.b16 %v38
  %v223 = vunpack.c.l.b16 %v39
  %v224 = vunpack.c.h.b16 %v39
  %v225 = vunpack.c.l.b16 %v40
  %v226 = vunpack.c.h.b16 %v40
  %v227 = vunpack.c.l.b16 %v41
  %v228 = vunpack.c.l.b16 %v42
  %v229 = vunpack.c.h.b16 %v42
  %v230 = vunpack.c.l.b16 %v43
  %v231 = vunpack.c.h.b16 %v43
  %v232 = vunpack.c.l.b16 %v44
  %v233 = vunpack.c.l.b16 %v45
  %v234 = vunpack.c.h.b16 %v45
  %v235 = vunpack.c.l.b16 %v46
  %v236 = vunpack.c.h.b16 %v46
  %v237 = vunpack.c.l.b16 %v47
  %v238 = vunpack.c.l.b16 %v48
  %v239 = vunpack.c.h.b16 %v48
  %v240 = vunpack.c.l.b16 %v49
  %v241 = vunpack.c.h.b16 %v49
  %v242 = vunpack.c.l.b16 %v50
  %v243 = vunpack.c.l.b16 %v51
  %v244 = vunpack.c.h.b16 %v51
  %v245 = vunpack.c.l.b16 %v52
  %v246 = vunpack.c.h.b16 %v52
  %v247 = vunpack.c.l.b16 %v53
  %v248 = vunpack.c.l.b16 %v54
  %v249 = vunpack.c.h.b16 %v54
  %v250 = vunpack.c.l.b16 %v55
  %v251 = vunpack.c.h.b16 %v55
  %v252 = vunpack.c.l.b16 %v56
  %v253 = vunpack.c.l.b16 %v57
  %v254 = vunpack.c.h.b16 %v57
  %v255 = vunpack.c.l.b16 %v58
  %v256 = vunpack.c.h.b16 %v58
  %v257 = vunpack.c.l.b16 %v59
  %v258 = vunpack.c.l.b16 %v60
  %v259 = vunpack.c.h.b16 %v60
  %v260 = vunpack.c.l.b16 %v61
  %v261 = vunpack.c.h.b16 %v61
  %v262 = vunpack.c.l.b16 %v62
  %v263 = vpack.c.b16 %v188, %v183
  %v264 = vpack.c.b16 %v189, %v184
  %v265 = vpack.c.b16 %v190, %v185
  %v266 = vpack.c.b16 %v191, %v186
  %v267 = vpack.c.b16 %v192, %v187
  %v268 = vpack.c.b16 %v198, %v193
  %v269 = vpack.c.b16 %v199, %v194
  %v270 = vpack.c.b16 %v200, %v195
  %v271 = vpack.c.b16 %v201, %v196
  %v272 = vpack.c.b16 %v202, %v197
  %v273 = vpack.c.b16 %v208, %v203
  %v274 = vpack.c.b16 %v209, %v204
  %v275 = vpack.c.b16 %v210, %v205
  %v276 = vpack.c.b16 %v211, %v206
  %v277 = vpack.c.b16 %v212, %v207
  %v278 = vpack.c.b16 %v218, %v213
  %v279 = vpack.c.b16 %v219, %v214
  %v280 = vpack.c.b16 %v220, %v215
  %v281 = vpack.c.b16 %v221, %v216
  %v282 = vpack.c.b16 %v222, %v217
  %v283 = vpack.c.b16 %v228, %v223
  %v284 = vpack.c.b16 %v229, %v224
  %v285 = vpack.c.b16 %v230, %v225
  %v286 = vpack.c.b16 %v231, %v226
  %v287 = vpack.c.b16 %v232, %v227
  %v288 = vpack.c.b16 %v238, %v233
  %v289 = vpack.c.b16 %v239, %v234
  %v290 = vpack.c.b16 %v240, %v235
  %v291 = vpack.c.b16 %v241, %v236
  %v292 = vpack.c.b16 %v242, %v237
  %v293 = vpack.c.b16 %v248, %v243
  %v294 = vpack.c.b16 %v249, %v244
  %v295 = vpack.c.b16 %v250, %v245
  %v296 = vpack.c.b16 %v251, %v246
  %v297 = vpack.c.b16 %v252, %v247
  %v298 = vpack.c.b16 %v258, %v253
  %v299 = vpack.c.b16 %v259, %v254
  %v300 = vpack.c.b16 %v260, %v255
  %v301 = vpack.c.b16 %v261, %v256
  %v302 = vpack.c.b16 %v262, %v257
  %v407 = vunpack.c.l.b16 %v63
  %v408 = vunpack.c.l.b16 %v64
  %v409 = vunpack.c.l.b16 %v65
  %v410 = vunpack.c.l.b16 %v66
  %v411 = vunpack.c.l.b16 %v67
  %v412 = vunpack.c.l.b16 %v68
  %v413 = vunpack.c.l.b16 %v69
  %v414 = vunpack.c.l.b16 %v70
  %v415 = vunpack.c.l.b16 %v71
  %v416 = vunpack.c.l.b16 %v72
  %v417 = vunpack.c.l.b16 %v73
  %v418 = vunpack.c.l.b16 %v74
  %v419 = vunpack.c.l.b16 %v75
  %v420 = vunpack.c.l.b16 %v76
  %v421 = vunpack.c.l.b16 %v77
  %v422 = vunpack.c.l.b16 %v78
  %v423 = vunpack.c.l.b16 %v79
  %v424 = vunpack.c.l.b16 %v80
  %v425 = vunpack.c.l.b16 %v81
  %v426 = vunpack.c.l.b16 %v82
  %v427 = vunpack.c.l.b16 %v83
  %v428 = vunpack.c.l.b16 %v84
  %v429 = vunpack.c.l.b16 %v85
  %v430 = vunpack.c.l.b16 %v86
  %v431 = vunpack.c.l.b16 %v87
  %v432 = vunpack.c.l.b16 %v88
  %v433 = vunpack.c.l.b16 %v89
  %v434 = vunpack.c.l.b16 %v90
  %v435 = vunpack.c.l.b16 %v91
  %v436 = vunpack.c.l.b16 %v92
  %v437 = vunpack.c.l.b16 %v93
  %v438 = vunpack.c.l.b16 %v94
  %v439 = vunpack.c.l.b16 %v95
  %v440 = vunpack.c.l.b16 %v96
  %v441 = vunpack.c.l.b16 %v97
  %v442 = vunpack.c.l.b16 %v98
  %v443 = vunpack.c.l.b16 %v99
  %v444 = vunpack.c.l.b16 %v100
  %v445 = vunpack.c.l.b16 %v101
  %v446 = vunpack.c.l.b16 %v102
  %v447 = vunpack.c.l.b16 %v103
  %v448 = vunpack.c.l.b16 %v104
  %v449 = vunpack.c.l.b16 %v105
  %v450 = vunpack.c.l.b16 %v106
  %v451 = vunpack.c.l.b16 %v107
  %v452 = vunpack.c.l.b16 %v108
  %v453 = vunpack.c.l.b16 %v109
  %v454 = vunpack.c.l.b16 %v110
  %v455 = vunpack.c.l.b16 %v111
  %v456 = vunpack.c.l.b16 %v112
  %v457 = vunpack.c.l.b16 %v113
  %v458 = vunpack.c.l.b16 %v114
  %v459 = vunpack.c.l.b16 %v115
  %v460 = vunpack.c.l.b16 %v116
  %v461 = vunpack.c.l.b16 %v117
  %v462 = vunpack.c.l.b16 %v118
  %v463 = vunpack.c.l.b16 %v119
  %v464 = vunpack.c.l.b16 %v120
  %v465 = vunpack.c.l.b16 %v121
  %v466 = vunpack.c.l.b16 %v122
  %v467 = vunpack.c.l.b16 %v123
  %v468 = vunpack.c.l.b16 %v124
  %v469 = vunpack.c.l.b16 %v125
  %v470 = vunpack.c.l.b16 %v126
  %v471 = vunpack.c.l.b16 %v127
  %v472 = vunpack.c.l.b16 %v128
  %v473 = vunpack.c.l.b16 %v129
  %v474 = vunpack.c.l.b16 %v130
  %v475 = vunpack.c.l.b16 %v131
  %v476 = vunpack.c.l.b16 %v132
  %v477 = vunpack.c.l.b16 %v133
  %v478 = vunpack.c.l.b16 %v134
  %v479 = vpack.c.b16 %v408, %v407
  %v480 = vpack.c.b16 %v410, %v409
  %v481 = vpack.c.b16 %v412, %v411
  %v482 = vpack.c.b16 %v414, %v413
  %v483 = vpack.c.b16 %v416, %v415
  %v484 = vpack.c.b16 %v418, %v417
  %v485 = vpack.c.b16 %v420, %v419
  %v486 = vpack.c.b16 %v422, %v421
  %v487 = vpack.c.b16 %v424, %v423
  %v488 = vpack.c.b16 %v426, %v425
  %v489 = vpack.c.b16 %v428, %v427
  %v490 = vpack.c.b16 %v430, %v429
  %v491 = vpack.c.b16 %v432, %v431
  %v492 = vpack.c.b16 %v434, %v433
  %v493 = vpack.c.b16 %v436, %v435
  %v494 = vpack.c.b16 %v438, %v437
  %v495 = vpack.c.b16 %v440, %v439
  %v496 = vpack.c.b16 %v442, %v441
  %v497 = vpack.c.b16 %v444, %v443
  %v498 = vpack.c.b16 %v446, %v445
  %v499 = vpack.c.b16 %v448, %v447
  %v500 = vpack.c.b16 %v450, %v449
  %v501 = vpack.c.b16 %v452, %v451
  %v502 = vpack.c.b16 %v454, %v453
  %v503 = vpack.c.b16 %v456, %v455
  %v504 = vpack.c.b16 %v458, %v457
  %v505 = vpack.c.b16 %v460, %v459
  %v506 = vpack.c.b16 %v462, %v461
  %v507 = vpack.c.b16 %v464, %v463
  %v508 = vpack.c.b16 %v466, %v465
  %v509 = vpack.c.b16 %v468, %v467
  %v510 = vpack.c.b16 %v470, %v469
  %v511 = vpack.c.b16 %v472, %v471
  %v512 = vpack.c.b16 %v474, %v473
  %v513 = vpack.c.b16 %v476, %v475
  %v514 = vpack.c.b16 %v478, %v477
  %vm551 = vcmask 523264
  %v553 = vsel %vm551, %v267, 0
  %v556 = vsel %vm551, %v272, 0
  %v559 = vsel %vm551, %v277, 0
  %v562 = vsel %vm551, %v282, 0
  %v565 = vsel %vm551, %v287, 0
  %v568 = vsel %vm551, %v292, 0
  %v571 = vsel %vm551, %v297, 0
  %v574 = vsel %vm551, %v302, 0
  %576 = vmatprep.subr.bf16.mxu0 0
  %577 = vmatpush1.bf16.msra.mxu0 %v479
  %578 = vmatprep.subr.bf16.mxu0 0
  %579 = vmatpush1.bf16.msra.mxu0 %v480
  %580 = vmatprep.subr.bf16.mxu0 0
  %581 = vmatpush1.bf16.msra.mxu0 %v481
  %582 = vmatprep.subr.bf16.mxu0 0
  %583 = vmatpush1.bf16.msra.mxu0 %v482
  %584 = vmatprep.subr.bf16.mxu0 0
  %585 = vmatpush1.bf16.msra.mxu0 %v483
  %586 = vmatprep.subr.bf16.mxu0 0
  %587 = vmatpush1.bf16.msra.mxu0 %v484
  %588 = vmatprep.subr.bf16.mxu0 0
  %589 = vmatpush1.bf16.msra.mxu0 %v485
  %590 = vmatprep.subr.bf16.mxu0 0
  %591 = vmatpush1.bf16.msra.mxu0 %v486
  %592 = vmatprep.subr.bf16.mxu0 0
  %593 = vmatpush1.bf16.msra.mxu0 %v487
  %594 = vmatprep.subr.bf16.mxu0 0
  %595 = vmatpush1.bf16.msra.mxu0 %v488
  %596 = vmatprep.subr.bf16.mxu0 0
  %597 = vmatpush1.bf16.msra.mxu0 %v489
  %598 = vmatprep.subr.bf16.mxu0 0
  %599 = vmatpush1.bf16.msra.mxu0 %v490
  %600 = vmatprep.subr.bf16.mxu0 0
  %601 = vmatpush1.bf16.msra.mxu0 %v491
  %602 = vmatprep.subr.bf16.mxu0 0
  %603 = vmatpush1.bf16.msra.mxu0 %v492
  %604 = vmatprep.subr.bf16.mxu0 0
  %605 = vmatpush1.bf16.msra.mxu0 %v493
  %606 = vmatprep.subr.bf16.mxu0 0
  %607 = vmatpush1.bf16.msra.mxu0 %v494
  %608 = vmatprep.mubr.bf16.mxu0 %v264
  %609 = vmatmul.mubr.bf16.gmra.mrb[0].mxu0 %v263
  %v610 = vpop.f32.mrb[0].mxu0
  %v611 = vadd.f32 0.0, %v610
  %v612 = vpop.f32.mrb[0].mxu0
  %v613 = vpop.f32.mrb[0].mxu0
  %v614 = vadd.f32 0.0, %v613
  %v615 = vpop.f32.mrb[0].mxu0
  %616 = vmatprep.mubr.bf16.mxu0 %v269
  %617 = vmatmul.mubr.bf16.gmra.mrb[0].mxu0 %v268
  %v618 = vpop.f32.mrb[0].mxu0
  %v619 = vadd.f32 0.0, %v618
  %v620 = vpop.f32.mrb[0].mxu0
  %v621 = vpop.f32.mrb[0].mxu0
  %v622 = vadd.f32 0.0, %v621
  %v623 = vpop.f32.mrb[0].mxu0
  %624 = vmatprep.mubr.bf16.mxu0 %v274
  %625 = vmatmul.mubr.bf16.gmra.mrb[0].mxu0 %v273
  %v626 = vpop.f32.mrb[0].mxu0
  %v627 = vadd.f32 0.0, %v626
  %v628 = vpop.f32.mrb[0].mxu0
  %v629 = vpop.f32.mrb[0].mxu0
  %v630 = vadd.f32 0.0, %v629
  %v631 = vpop.f32.mrb[0].mxu0
  %632 = vmatprep.mubr.bf16.mxu0 %v279
  %633 = vmatmul.mubr.bf16.gmra.mrb[0].mxu0 %v278
  %v634 = vpop.f32.mrb[0].mxu0
  %v635 = vadd.f32 0.0, %v634
  %v636 = vpop.f32.mrb[0].mxu0
  %v637 = vpop.f32.mrb[0].mxu0
  %v638 = vadd.f32 0.0, %v637
  %v639 = vpop.f32.mrb[0].mxu0
  %640 = vmatprep.mubr.bf16.mxu0 %v284
  %641 = vmatmul.mubr.bf16.gmra.mrb[0].mxu0 %v283
  %v642 = vpop.f32.mrb[0].mxu0
  %v643 = vadd.f32 0.0, %v642
  %v644 = vpop.f32.mrb[0].mxu0
  %v645 = vpop.f32.mrb[0].mxu0
  %v646 = vadd.f32 0.0, %v645
  %v647 = vpop.f32.mrb[0].mxu0
  %648 = vmatprep.mubr.bf16.mxu0 %v289
  %649 = vmatmul.mubr.bf16.gmra.mrb[0].mxu0 %v288
  %v650 = vpop.f32.mrb[0].mxu0
  %v651 = vadd.f32 0.0, %v650
  %v652 = vpop.f32.mrb[0].mxu0
  %v653 = vpop.f32.mrb[0].mxu0
  %v654 = vadd.f32 0.0, %v653
  %v655 = vpop.f32.mrb[0].mxu0
  %656 = vmatprep.mubr.bf16.mxu0 %v294
  %657 = vmatmul.mubr.bf16.gmra.mrb[0].mxu0 %v293
  %v658 = vpop.f32.mrb[0].mxu0
  %v659 = vadd.f32 0.0, %v658
  %v660 = vpop.f32.mrb[0].mxu0
  %v661 = vpop.f32.mrb[0].mxu0
  %v662 = vadd.f32 0.0, %v661
  %v663 = vpop.f32.mrb[0].mxu0
  %664 = vmatprep.mubr.bf16.mxu0 %v299
  %665 = vmatmul.mubr.bf16.gmra.mrb[0].mxu0 %v298
  %v666 = vpop.f32.mrb[0].mxu0
  %v667 = vadd.f32 0.0, %v666
  %v668 = vpop.f32.mrb[0].mxu0
  %v669 = vpop.f32.mrb[0].mxu0
  %v670 = vadd.f32 0.0, %v669
  %v671 = vpop.f32.mrb[0].mxu0
  %672 = vdwg.mxu0
  %673 = vmatprep.subr.bf16.mxu0 0
  %674 = vmatpush1.bf16.msra.mxu0 %v495
  %675 = vmatprep.subr.bf16.mxu0 0
  %676 = vmatpush1.bf16.msra.mxu0 %v496
  %677 = vmatprep.subr.bf16.mxu0 0
  %678 = vmatpush1.bf16.msra.mxu0 %v497
  %679 = vmatprep.subr.bf16.mxu0 0
  %680 = vmatpush1.bf16.msra.mxu0 %v498
  %681 = vmatprep.subr.bf16.mxu0 0
  %682 = vmatpush1.bf16.msra.mxu0 %v499
  %683 = vmatprep.subr.bf16.mxu0 0
  %684 = vmatpush1.bf16.msra.mxu0 %v500
  %685 = vmatprep.subr.bf16.mxu0 0
  %686 = vmatpush1.bf16.msra.mxu0 %v501
  %687 = vmatprep.subr.bf16.mxu0 0
  %688 = vmatpush1.bf16.msra.mxu0 %v502
  %689 = vmatprep.subr.bf16.mxu0 0
  %690 = vmatpush1.bf16.msra.mxu0 %v503
  %691 = vmatprep.subr.bf16.mxu0 0
  %692 = vmatpush1.bf16.msra.mxu0 %v504
  %693 = vmatprep.subr.bf16.mxu0 0
  %694 = vmatpush1.bf16.msra.mxu0 %v505
  %695 = vmatprep.subr.bf16.mxu0 0
  %696 = vmatpush1.bf16.msra.mxu0 %v506
  %697 = vmatprep.subr.bf16.mxu0 0
  %698 = vmatpush1.bf16.msra.mxu0 %v507
  %699 = vmatprep.subr.bf16.mxu0 0
  %700 = vmatpush1.bf16.msra.mxu0 %v508
  %701 = vmatprep.subr.bf16.mxu0 0
  %702 = vmatpush1.bf16.msra.mxu0 %v509
  %703 = vmatprep.subr.bf16.mxu0 0
  %704 = vmatpush1.bf16.msra.mxu0 %v510
  %705 = vmatprep.mubr.bf16.mxu0 %v266
  %706 = vmatmul.mubr.bf16.gmra.mrb[0].mxu0 %v265
  %v707 = vpop.f32.mrb[0].mxu0
  %v708 = vadd.f32 %v611, %v707
  %v709 = vpop.f32.mrb[0].mxu0
  %v710 = vpop.f32.mrb[0].mxu0
  %v711 = vadd.f32 %v614, %v710
  %v712 = vpop.f32.mrb[0].mxu0
  %713 = vmatprep.mubr.bf16.mxu0 %v271
  %714 = vmatmul.mubr.bf16.gmra.mrb[0].mxu0 %v270
  %v715 = vpop.f32.mrb[0].mxu0
  %v716 = vadd.f32 %v619, %v715
  %v717 = vpop.f32.mrb[0].mxu0
  %v718 = vpop.f32.mrb[0].mxu0
  %v719 = vadd.f32 %v622, %v718
  %v720 = vpop.f32.mrb[0].mxu0
  %721 = vmatprep.mubr.bf16.mxu0 %v276
  %722 = vmatmul.mubr.bf16.gmra.mrb[0].mxu0 %v275
  %v723 = vpop.f32.mrb[0].mxu0
  %v724 = vadd.f32 %v627, %v723
  %v725 = vpop.f32.mrb[0].mxu0
  %v726 = vpop.f32.mrb[0].mxu0
  %v727 = vadd.f32 %v630, %v726
  %v728 = vpop.f32.mrb[0].mxu0
  %729 = vmatprep.mubr.bf16.mxu0 %v281
  %730 = vmatmul.mubr.bf16.gmra.mrb[0].mxu0 %v280
  %v731 = vpop.f32.mrb[0].mxu0
  %v732 = vadd.f32 %v635, %v731
  %v733 = vpop.f32.mrb[0].mxu0
  %v734 = vpop.f32.mrb[0].mxu0
  %v735 = vadd.f32 %v638, %v734
  %v736 = vpop.f32.mrb[0].mxu0
  %737 = vmatprep.mubr.bf16.mxu0 %v286
  %738 = vmatmul.mubr.bf16.gmra.mrb[0].mxu0 %v285
  %v739 = vpop.f32.mrb[0].mxu0
  %v740 = vadd.f32 %v643, %v739
  %v741 = vpop.f32.mrb[0].mxu0
  %v742 = vpop.f32.mrb[0].mxu0
  %v743 = vadd.f32 %v646, %v742
  %v744 = vpop.f32.mrb[0].mxu0
  %745 = vmatprep.mubr.bf16.mxu0 %v291
  %746 = vmatmul.mubr.bf16.gmra.mrb[0].mxu0 %v290
  %v747 = vpop.f32.mrb[0].mxu0
  %v748 = vadd.f32 %v651, %v747
  %v749 = vpop.f32.mrb[0].mxu0
  %v750 = vpop.f32.mrb[0].mxu0
  %v751 = vadd.f32 %v654, %v750
  %v752 = vpop.f32.mrb[0].mxu0
  %753 = vmatprep.mubr.bf16.mxu0 %v296
  %754 = vmatmul.mubr.bf16.gmra.mrb[0].mxu0 %v295
  %v755 = vpop.f32.mrb[0].mxu0
  %v756 = vadd.f32 %v659, %v755
  %v757 = vpop.f32.mrb[0].mxu0
  %v758 = vpop.f32.mrb[0].mxu0
  %v759 = vadd.f32 %v662, %v758
  %v760 = vpop.f32.mrb[0].mxu0
  %761 = vmatprep.mubr.bf16.mxu0 %v301
  %762 = vmatmul.mubr.bf16.gmra.mrb[0].mxu0 %v300
  %v763 = vpop.f32.mrb[0].mxu0
  %v764 = vadd.f32 %v667, %v763
  %v765 = vpop.f32.mrb[0].mxu0
  %v766 = vpop.f32.mrb[0].mxu0
  %v767 = vadd.f32 %v670, %v766
  %v768 = vpop.f32.mrb[0].mxu0
  %769 = vdwg.mxu0
  %770 = vmatprep.subr.bf16.mxu0 0
  %771 = vmatpush1.bf16.msra.mxu0 %v511
  %772 = vmatprep.subr.bf16.mxu0 0
  %773 = vmatpush1.bf16.msra.mxu0 %v512
  %774 = vmatprep.subr.bf16.mxu0 0
  %775 = vmatpush1.bf16.msra.mxu0 %v513
  %776 = vmatprep.subr.bf16.mxu0 0
  %777 = vmatpush1.bf16.msra.mxu0 %v514
  %778 = vmatprep.subr.bf16.mxu0 0
  %779 = vmatpush1.bf16.msra.mxu0 0
  %780 = vmatprep.subr.bf16.mxu0 0
  %781 = vmatpush1.bf16.msra.mxu0 0
  %782 = vmatprep.subr.bf16.mxu0 0
  %783 = vmatpush1.bf16.msra.mxu0 0
  %784 = vmatprep.subr.bf16.mxu0 0
  %785 = vmatpush1.bf16.msra.mxu0 0
  %786 = vmatprep.subr.bf16.mxu0 0
  %787 = vmatpush1.bf16.msra.mxu0 0
  %788 = vmatprep.subr.bf16.mxu0 0
  %789 = vmatpush1.bf16.msra.mxu0 0
  %790 = vmatprep.subr.bf16.mxu0 0
  %791 = vmatpush1.bf16.msra.mxu0 0
  %792 = vmatprep.subr.bf16.mxu0 0
  %793 = vmatpush1.bf16.msra.mxu0 0
  %794 = vmatprep.subr.bf16.mxu0 0
  %795 = vmatpush1.bf16.msra.mxu0 0
  %796 = vmatprep.subr.bf16.mxu0 0
  %797 = vmatpush1.bf16.msra.mxu0 0
  %798 = vmatprep.subr.bf16.mxu0 0
  %799 = vmatpush1.bf16.msra.mxu0 0
  %800 = vmatprep.subr.bf16.mxu0 0
  %801 = vmatpush1.bf16.msra.mxu0 0
  %802 = vmatprep.mubr.bf16.mxu0 0
  %803 = vmatmul.mubr.bf16.gmra.mrb[0].mxu0 %v553
  %v804 = vpop.f32.mrb[0].mxu0
  %v805 = vadd.f32 %v708, %v804
  %v806 = vpop.f32.mrb[0].mxu0
  %v807 = vpop.f32.mrb[0].mxu0
  %v808 = vadd.f32 %v711, %v807
  %v809 = vpop.f32.mrb[0].mxu0
  %810 = vmatprep.mubr.bf16.mxu0 0
  %811 = vmatmul.mubr.bf16.gmra.mrb[0].mxu0 %v556
  %v812 = vpop.f32.mrb[0].mxu0
  %v813 = vadd.f32 %v716, %v812
  %v814 = vpop.f32.mrb[0].mxu0
  %v815 = vpop.f32.mrb[0].mxu0
  %v816 = vadd.f32 %v719, %v815
  %v817 = vpop.f32.mrb[0].mxu0
  %818 = vmatprep.mubr.bf16.mxu0 0
  %819 = vmatmul.mubr.bf16.gmra.mrb[0].mxu0 %v559
  %v820 = vpop.f32.mrb[0].mxu0
  %v821 = vadd.f32 %v724, %v820
  %v822 = vpop.f32.mrb[0].mxu0
  %v823 = vpop.f32.mrb[0].mxu0
  %v824 = vadd.f32 %v727, %v823
  %v825 = vpop.f32.mrb[0].mxu0
  %826 = vmatprep.mubr.bf16.mxu0 0
  %827 = vmatmul.mubr.bf16.gmra.mrb[0].mxu0 %v562
  %v828 = vpop.f32.mrb[0].mxu0
  %v829 = vadd.f32 %v732, %v828
  %v830 = vpop.f32.mrb[0].mxu0
  %v831 = vpop.f32.mrb[0].mxu0
  %v832 = vadd.f32 %v735, %v831
  %v833 = vpop.f32.mrb[0].mxu0
  %834 = vmatprep.mubr.bf16.mxu0 0
  %835 = vmatmul.mubr.bf16.gmra.mrb[0].mxu0 %v565
  %v836 = vpop.f32.mrb[0].mxu0
  %v837 = vadd.f32 %v740, %v836
  %v838 = vpop.f32.mrb[0].mxu0
  %v839 = vpop.f32.mrb[0].mxu0
  %v840 = vadd.f32 %v743, %v839
  %v841 = vpop.f32.mrb[0].mxu0
  %842 = vmatprep.mubr.bf16.mxu0 0
  %843 = vmatmul.mubr.bf16.gmra.mrb[0].mxu0 %v568
  %v844 = vpop.f32.mrb[0].mxu0
  %v845 = vadd.f32 %v748, %v844
  %v846 = vpop.f32.mrb[0].mxu0
  %v847 = vpop.f32.mrb[0].mxu0
  %v848 = vadd.f32 %v751, %v847
  %v849 = vpop.f32.mrb[0].mxu0
  %850 = vmatprep.mubr.bf16.mxu0 0
  %851 = vmatmul.mubr.bf16.gmra.mrb[0].mxu0 %v571
  %v852 = vpop.f32.mrb[0].mxu0
  %v853 = vadd.f32 %v756, %v852
  %v854 = vpop.f32.mrb[0].mxu0
  %v855 = vpop.f32.mrb[0].mxu0
  %v856 = vadd.f32 %v759, %v855
  %v857 = vpop.f32.mrb[0].mxu0
  %858 = vmatprep.mubr.bf16.mxu0 0
  %859 = vmatmul.mubr.bf16.gmra.mrb[0].mxu0 %v574
  %v860 = vpop.f32.mrb[0].mxu0
  %v861 = vadd.f32 %v764, %v860
  %v862 = vpop.f32.mrb[0].mxu0
  %v863 = vpop.f32.mrb[0].mxu0
  %v864 = vadd.f32 %v767, %v863
  %v865 = vpop.f32.mrb[0].mxu0
  %866 = vdwg.mxu0
  %v867 = vpack.c.bf16 %v808, %v805
  %v868 = vpack.c.bf16 %v816, %v813
  %v869 = vpack.c.bf16 %v824, %v821
  %v870 = vpack.c.bf16 %v832, %v829
  %v871 = vpack.c.bf16 %v840, %v837
  %v872 = vpack.c.bf16 %v848, %v845
  %v873 = vpack.c.bf16 %v856, %v853
  %v874 = vpack.c.bf16 %v864, %v861
  %v883 = vunpack.c.l.b16 %v867
  %v884 = vunpack.c.h.b16 %v867
  %v885 = vunpack.c.l.b16 %v868
  %v886 = vunpack.c.h.b16 %v868
  %v887 = vunpack.c.l.b16 %v869
  %v888 = vunpack.c.h.b16 %v869
  %v889 = vunpack.c.l.b16 %v870
  %v890 = vunpack.c.h.b16 %v870
  %v891 = vunpack.c.l.b16 %v871
  %v892 = vunpack.c.h.b16 %v871
  %v893 = vunpack.c.l.b16 %v872
  %v894 = vunpack.c.h.b16 %v872
  %v895 = vunpack.c.l.b16 %v873
  %v896 = vunpack.c.h.b16 %v873
  %v897 = vunpack.c.l.b16 %v874
  %v898 = vunpack.c.h.b16 %v874
  %v899 = vpack.c.b16 %v883, %v883
  %v900 = vpack.c.b16 %v884, %v884
  %v901 = vpack.c.b16 %v885, %v885
  %v902 = vpack.c.b16 %v886, %v886
  %v903 = vpack.c.b16 %v887, %v887
  %v904 = vpack.c.b16 %v888, %v888
  %v905 = vpack.c.b16 %v889, %v889
  %v906 = vpack.c.b16 %v890, %v890
  %v907 = vpack.c.b16 %v891, %v891
  %v908 = vpack.c.b16 %v892, %v892
  %v909 = vpack.c.b16 %v893, %v893
  %v910 = vpack.c.b16 %v894, %v894
  %v911 = vpack.c.b16 %v895, %v895
  %v912 = vpack.c.b16 %v896, %v896
  %v913 = vpack.c.b16 %v897, %v897
  %v914 = vpack.c.b16 %v898, %v898
  %931 = vst [vmem:[%s2] sm:$0xf] %v899
  %932 = vst [vmem:[%s2 + $0x4] sm:$0xf] %v900
  %933 = vst [vmem:[%s2 + $0x8] sm:$0xf] %v901
  %934 = vst [vmem:[%s2 + $0xc] sm:$0xf] %v902
  %935 = vst [vmem:[%s2 + $0x10] sm:$0xf] %v903
  %936 = vst [vmem:[%s2 + $0x14] sm:$0xf] %v904
  %937 = vst [vmem:[%s2 + $0x18] sm:$0xf] %v905
  %938 = vst [vmem:[%s2 + $0x1c] sm:$0xf] %v906
  %939 = vst [vmem:[%s2 + $0x20] sm:$0xf] %v907
  %940 = vst [vmem:[%s2 + $0x24] sm:$0xf] %v908
  %941 = vst [vmem:[%s2 + $0x28] sm:$0xf] %v909
  %942 = vst [vmem:[%s2 + $0x2c] sm:$0xf] %v910
  %943 = vst [vmem:[%s2 + $0x30] sm:$0xf] %v911
  %944 = vst [vmem:[%s2 + $0x34] sm:$0xf] %v912
  %945 = vst [vmem:[%s2 + $0x38] sm:$0xf] %v913
  %946 = vst [vmem:[%s2 + $0x3c] sm:$0xf] %v914
  %v947 = vmul.f32 %v805, %v805
  %v948 = vmul.f32 %v808, %v808
  %v949 = vmul.f32 %v813, %v813
  %v950 = vmul.f32 %v816, %v816
  %v951 = vmul.f32 %v821, %v821
  %v952 = vmul.f32 %v824, %v824
  %v953 = vmul.f32 %v829, %v829
  %v954 = vmul.f32 %v832, %v832
  %v955 = vmul.f32 %v837, %v837
  %v956 = vmul.f32 %v840, %v840
  %v957 = vmul.f32 %v845, %v845
  %v958 = vmul.f32 %v848, %v848
  %v959 = vmul.f32 %v853, %v853
  %v960 = vmul.f32 %v856, %v856
  %v961 = vmul.f32 %v861, %v861
  %v962 = vmul.f32 %v864, %v864
  %963 = vst [vmem:[%s3] sm:$0xff] %v805
  %964 = vst [vmem:[%s3 + $0x8] sm:$0xff] %v808
  %965 = vst [vmem:[%s3 + $0x10] sm:$0xff] %v813
  %966 = vst [vmem:[%s3 + $0x18] sm:$0xff] %v816
  %967 = vst [vmem:[%s3 + $0x20] sm:$0xff] %v821
  %968 = vst [vmem:[%s3 + $0x28] sm:$0xff] %v824
  %969 = vst [vmem:[%s3 + $0x30] sm:$0xff] %v829
  %970 = vst [vmem:[%s3 + $0x38] sm:$0xff] %v832
  %971 = vst [vmem:[%s3 + $0x40] sm:$0xff] %v837
  %972 = vst [vmem:[%s3 + $0x48] sm:$0xff] %v840
  %973 = vst [vmem:[%s3 + $0x50] sm:$0xff] %v845
  %974 = vst [vmem:[%s3 + $0x58] sm:$0xff] %v848
  %975 = vst [vmem:[%s3 + $0x60] sm:$0xff] %v853
  %976 = vst [vmem:[%s3 + $0x68] sm:$0xff] %v856
  %977 = vst [vmem:[%s3 + $0x70] sm:$0xff] %v861
  %978 = vst [vmem:[%s3 + $0x78] sm:$0xff] %v864
  %979 = vst [vmem:[%s4] sm:$0xff] %v947
  %980 = vst [vmem:[%s4 + $0x8] sm:$0xff] %v948
  %981 = vst [vmem:[%s4 + $0x10] sm:$0xff] %v949
  %982 = vst [vmem:[%s4 + $0x18] sm:$0xff] %v950
  %983 = vst [vmem:[%s4 + $0x20] sm:$0xff] %v951
  %984 = vst [vmem:[%s4 + $0x28] sm:$0xff] %v952
  %985 = vst [vmem:[%s4 + $0x30] sm:$0xff] %v953
  %986 = vst [vmem:[%s4 + $0x38] sm:$0xff] %v954
  %987 = vst [vmem:[%s4 + $0x40] sm:$0xff] %v955
  %988 = vst [vmem:[%s4 + $0x48] sm:$0xff] %v956
  %989 = vst [vmem:[%s4 + $0x50] sm:$0xff] %v957
  %990 = vst [vmem:[%s4 + $0x58] sm:$0xff] %v958
  %991 = vst [vmem:[%s4 + $0x60] sm:$0xff] %v959
  %992 = vst [vmem:[%s4 + $0x68] sm:$0xff] %v960
  %993 = vst [vmem:[%s4 + $0x70] sm:$0xff] %v961
  %994 = vst [vmem:[%s4 + $0x78] sm:$0xff] %v962
  // Predicated region
  $region10: #{generator_forward.9} parent=0 // pred_check
    _
  $region11: #{generator_forward.9} parent=0 // pred_check_branch
    %996 = sbr.rel (0) target = $region13
  $region12: #{generator_forward.9} parent=0 // pred_region
    _
  $region13: #{generator_forward.9} parent=0 // pred_fallthru
    _
  // Predicated region
  $region14: #{generator_forward.9} parent=0 // pred_check
    _
  $region15: #{generator_forward.9} parent=0 // pred_check_branch
    %998 = sbr.rel (0) target = $region17
  $region16: #{generator_forward.9} parent=0 // pred_region
    _
  $region17: #{generator_forward.9} parent=0 // pred_fallthru
    _
  // Predicated region
  $region18: #{generator_forward.9} parent=0 // pred_check
    _
  $region19: #{generator_forward.9} parent=0 // pred_check_branch
    %1000 = sbr.rel (0) target = $region21
  $region20: #{generator_forward.9} parent=0 // pred_region
    _
  $region21: #{generator_forward.9} parent=0 // pred_fallthru
    _
  // Predicated region
  $region22: #{generator_forward.9} parent=0 // pred_check
    _
  $region23: #{generator_forward.9} parent=0 // pred_check_branch
    %1002 = sbr.rel (0) target = $region25
  $region24: #{generator_forward.9} parent=0 // pred_region
    _
  $region25: #{generator_forward.9} parent=0 // pred_fallthru
    _
  // Predicated region
  $region26: #{generator_forward.9} parent=0 // pred_check
    _
  $region27: #{generator_forward.9} parent=0 // pred_check_branch
    %1004 = sbr.rel (0) target = $region29
  $region28: #{generator_forward.9} parent=0 // pred_region
    _
  $region29: #{generator_forward.9} parent=0 // pred_fallthru
    _
  // Predicated region
  $region30: #{generator_forward.9} parent=0 // pred_check
    _
  $region31: #{generator_forward.9} parent=0 // pred_check_branch
    %1006 = sbr.rel (0) target = $region33
  $region32: #{generator_forward.9} parent=0 // pred_region
    _
  $region33: #{generator_forward.9} parent=0 // pred_fallthru
    _

// kernel: tile.43
$region0: #{tile.43}
  #allocation0 [shape = 's32[1]{0}', space=sflag, size = 0x4, scoped, tag = 'scoped memory for tile.43']
  %s0 = inlined_call_operand.vmem [shape: f32[32], index: 0, kind: input, shape index: {}]
  %s1 = inlined_call_operand.vmem [shape: f32[4,32], index: 1, kind: output, shape index: {}]
  // Predicated region
  $region2: #{tile.43} parent=0 // pred_check
    _
  $region3: #{tile.43} parent=0 // pred_check_branch
    %3 = sbr.rel (0) target = $region5
  $region4: #{tile.43} parent=0 // pred_region
    _
  $region5: #{tile.43} parent=0 // pred_fallthru
    _
  %v4 = vld [vmem:[%s0] ss:$0 sm:$0xff]
  %5 = vst [vmem:[%s1] sm:$0xf] %v4

// kernel: generator_forward.10
$region0: #{generator_forward.10}
  #allocation0 [shape = 'u32[]', space=smem, size = 0x4, offset = 0x4, fixed_abs, tag = 'smem constant byte address 0x4 - core index']
  #allocation1 [shape = 'u32[144,128]{1,0:T(1,128)}', space=vmem, size = 0x12000, scoped, tag = 'internal scratch']
  %s0 = inlined_call_operand.vmem [shape: bf16[128,128], index: 0, kind: input, shape index: {}]
  %s1 = inlined_call_operand.vmem [shape: f32[128,1], index: 1, kind: input, shape index: {}]
  %s2 = inlined_call_operand.vmem [shape: f32[128,1], index: 2, kind: input, shape index: {}]
  %s3 = inlined_call_operand.vmem [shape: bf16[128,128], index: 3, kind: output, shape index: {}]
  %s4 = sld [smem:[#allocation0]]
  $region22: #{generator_forward.10} parent=0
    _
  %s6 = ssub.s32 1, %s4
  %s7 = scalar_select 0, %s6, %s4
  // Predicated region
  $region2: #{generator_forward.10} parent=0 // pred_check
    _
  $region3: #{generator_forward.10} parent=0 // pred_check_branch
    %9 = sbr.rel (0) target = $region5
  $region4: #{generator_forward.10} parent=0 // pred_region
    _
  $region5: #{generator_forward.10} parent=0 // pred_fallthru
    _
  // Predicated region
  $region6: #{generator_forward.10} parent=0 // pred_check
    _
  $region7: #{generator_forward.10} parent=0 // pred_check_branch
    %11 = sbr.rel (0) target = $region9
  $region8: #{generator_forward.10} parent=0 // pred_region
    _
  $region9: #{generator_forward.10} parent=0 // pred_fallthru
    _
  // Predicated region
  $region10: #{generator_forward.10} parent=0 // pred_check
    _
  $region11: #{generator_forward.10} parent=0 // pred_check_branch
    %13 = sbr.rel (0) target = $region13
  $region12: #{generator_forward.10} parent=0 // pred_region
    _
  $region13: #{generator_forward.10} parent=0 // pred_fallthru
    _
  %v14 = vld [vmem:[%s0] sm:$0xf]
  %v15 = vld [vmem:[%s0 + $0x4] sm:$0xf]
  %v16 = vld [vmem:[%s0 + $0x8] sm:$0xf]
  %v17 = vld [vmem:[%s0 + $0xc] sm:$0xf]
  %v18 = vld [vmem:[%s0 + $0x10] sm:$0xf]
  %v19 = vld [vmem:[%s0 + $0x14] sm:$0xf]
  %v20 = vld [vmem:[%s0 + $0x18] sm:$0xf]
  %v21 = vld [vmem:[%s0 + $0x1c] sm:$0xf]
  %v22 = vld [vmem:[%s0 + $0x20] sm:$0xf]
  %v23 = vld [vmem:[%s0 + $0x24] sm:$0xf]
  %v24 = vld [vmem:[%s0 + $0x28] sm:$0xf]
  %v25 = vld [vmem:[%s0 + $0x2c] sm:$0xf]
  %v26 = vld [vmem:[%s0 + $0x30] sm:$0xf]
  %v27 = vld [vmem:[%s0 + $0x34] sm:$0xf]
  %v28 = vld [vmem:[%s0 + $0x38] sm:$0xf]
  %v29 = vld [vmem:[%s0 + $0x3c] sm:$0xf]
  %v30 = vunpack.c.l.bf16 %v14
  %v31 = vunpack.c.l.bf16 %v15
  %v32 = vunpack.c.l.bf16 %v16
  %v33 = vunpack.c.l.bf16 %v17
  %v34 = vunpack.c.l.bf16 %v18
  %v35 = vunpack.c.l.bf16 %v19
  %v36 = vunpack.c.l.bf16 %v20
  %v37 = vunpack.c.l.bf16 %v21
  %v38 = vunpack.c.l.bf16 %v22
  %v39 = vunpack.c.l.bf16 %v23
  %v40 = vunpack.c.l.bf16 %v24
  %v41 = vunpack.c.l.bf16 %v25
  %v42 = vunpack.c.l.bf16 %v26
  %v43 = vunpack.c.l.bf16 %v27
  %v44 = vunpack.c.l.bf16 %v28
  %v45 = vunpack.c.l.bf16 %v29
  %v46 = vld [vmem:[%s1] sm:$0xff]
  %v47 = vld [vmem:[%s1 + $0x8] sm:$0xff]
  %v48 = vld [vmem:[%s1 + $0x10] sm:$0xff]
  %v49 = vld [vmem:[%s1 + $0x18] sm:$0xff]
  %v50 = vld [vmem:[%s1 + $0x20] sm:$0xff]
  %v51 = vld [vmem:[%s1 + $0x28] sm:$0xff]
  %v52 = vld [vmem:[%s1 + $0x30] sm:$0xff]
  %v53 = vld [vmem:[%s1 + $0x38] sm:$0xff]
  %v54 = vld [vmem:[%s1 + $0x40] sm:$0xff]
  %v55 = vld [vmem:[%s1 + $0x48] sm:$0xff]
  %v56 = vld [vmem:[%s1 + $0x50] sm:$0xff]
  %v57 = vld [vmem:[%s1 + $0x58] sm:$0xff]
  %v58 = vld [vmem:[%s1 + $0x60] sm:$0xff]
  %v59 = vld [vmem:[%s1 + $0x68] sm:$0xff]
  %v60 = vld [vmem:[%s1 + $0x70] sm:$0xff]
  %v61 = vld [vmem:[%s1 + $0x78] sm:$0xff]
  %63 = vset.pattern.permute.xlu0 0
  %64 = vperm.xlu0 %63, %v46
  %v65 = vpop.permute.xlu0 %64
  %68 = vset.pattern.permute.xlu0 0
  %69 = vperm.xlu0 %68, %v47
  %v70 = vpop.permute.xlu0 %69
  %73 = vset.pattern.permute.xlu0 0
  %74 = vperm.xlu0 %73, %v48
  %v75 = vpop.permute.xlu0 %74
  %78 = vset.pattern.permute.xlu0 0
  %79 = vperm.xlu0 %78, %v49
  %v80 = vpop.permute.xlu0 %79
  %83 = vset.pattern.permute.xlu0 0
  %84 = vperm.xlu0 %83, %v50
  %v85 = vpop.permute.xlu0 %84
  %88 = vset.pattern.permute.xlu0 0
  %89 = vperm.xlu0 %88, %v51
  %v90 = vpop.permute.xlu0 %89
  %93 = vset.pattern.permute.xlu0 0
  %94 = vperm.xlu0 %93, %v52
  %v95 = vpop.permute.xlu0 %94
  %98 = vset.pattern.permute.xlu0 0
  %99 = vperm.xlu0 %98, %v53
  %v100 = vpop.permute.xlu0 %99
  %103 = vset.pattern.permute.xlu0 0
  %104 = vperm.xlu0 %103, %v54
  %v105 = vpop.permute.xlu0 %104
  %108 = vset.pattern.permute.xlu0 0
  %109 = vperm.xlu0 %108, %v55
  %v110 = vpop.permute.xlu0 %109
  %113 = vset.pattern.permute.xlu0 0
  %114 = vperm.xlu0 %113, %v56
  %v115 = vpop.permute.xlu0 %114
  %118 = vset.pattern.permute.xlu0 0
  %119 = vperm.xlu0 %118, %v57
  %v120 = vpop.permute.xlu0 %119
  %123 = vset.pattern.permute.xlu0 0
  %124 = vperm.xlu0 %123, %v58
  %v125 = vpop.permute.xlu0 %124
  %128 = vset.pattern.permute.xlu0 0
  %129 = vperm.xlu0 %128, %v59
  %v130 = vpop.permute.xlu0 %129
  %133 = vset.pattern.permute.xlu0 0
  %134 = vperm.xlu0 %133, %v60
  %v135 = vpop.permute.xlu0 %134
  %138 = vset.pattern.permute.xlu0 0
  %139 = vperm.xlu0 %138, %v61
  %v140 = vpop.permute.xlu0 %139
  %v142 = vmul.f32 %v30, %v65
  %v143 = vmul.f32 %v31, %v70
  %v144 = vmul.f32 %v32, %v75
  %v145 = vmul.f32 %v33, %v80
  %v146 = vmul.f32 %v34, %v85
  %v147 = vmul.f32 %v35, %v90
  %v148 = vmul.f32 %v36, %v95
  %v149 = vmul.f32 %v37, %v100
  %v150 = vmul.f32 %v38, %v105
  %v151 = vmul.f32 %v39, %v110
  %v152 = vmul.f32 %v40, %v115
  %v153 = vmul.f32 %v41, %v120
  %v154 = vmul.f32 %v42, %v125
  %v155 = vmul.f32 %v43, %v130
  %v156 = vmul.f32 %v44, %v135
  %v157 = vmul.f32 %v45, %v140
  %v158 = vld [vmem:[%s2] sm:$0xff]
  %v159 = vld [vmem:[%s2 + $0x8] sm:$0xff]
  %v160 = vld [vmem:[%s2 + $0x10] sm:$0xff]
  %v161 = vld [vmem:[%s2 + $0x18] sm:$0xff]
  %v162 = vld [vmem:[%s2 + $0x20] sm:$0xff]
  %v163 = vld [vmem:[%s2 + $0x28] sm:$0xff]
  %v164 = vld [vmem:[%s2 + $0x30] sm:$0xff]
  %v165 = vld [vmem:[%s2 + $0x38] sm:$0xff]
  %v166 = vld [vmem:[%s2 + $0x40] sm:$0xff]
  %v167 = vld [vmem:[%s2 + $0x48] sm:$0xff]
  %v168 = vld [vmem:[%s2 + $0x50] sm:$0xff]
  %v169 = vld [vmem:[%s2 + $0x58] sm:$0xff]
  %v170 = vld [vmem:[%s2 + $0x60] sm:$0xff]
  %v171 = vld [vmem:[%s2 + $0x68] sm:$0xff]
  %v172 = vld [vmem:[%s2 + $0x70] sm:$0xff]
  %v173 = vld [vmem:[%s2 + $0x78] sm:$0xff]
  %175 = vset.pattern.permute.xlu0 0
  %176 = vperm.xlu0 %175, %v158
  %v177 = vpop.permute.xlu0 %176
  %180 = vset.pattern.permute.xlu0 0
  %181 = vperm.xlu0 %180, %v159
  %v182 = vpop.permute.xlu0 %181
  %185 = vset.pattern.permute.xlu0 0
  %186 = vperm.xlu0 %185, %v160
  %v187 = vpop.permute.xlu0 %186
  %190 = vset.pattern.permute.xlu0 0
  %191 = vperm.xlu0 %190, %v161
  %v192 = vpop.permute.xlu0 %191
  %195 = vset.pattern.permute.xlu0 0
  %196 = vperm.xlu0 %195, %v162
  %v197 = vpop.permute.xlu0 %196
  %200 = vset.pattern.permute.xlu0 0
  %201 = vperm.xlu0 %200, %v163
  %v202 = vpop.permute.xlu0 %201
  %205 = vset.pattern.permute.xlu0 0
  %206 = vperm.xlu0 %205, %v164
  %v207 = vpop.permute.xlu0 %206
  %210 = vset.pattern.permute.xlu0 0
  %211 = vperm.xlu0 %210, %v165
  %v212 = vpop.permute.xlu0 %211
  %215 = vset.pattern.permute.xlu0 0
  %216 = vperm.xlu0 %215, %v166
  %v217 = vpop.permute.xlu0 %216
  %220 = vset.pattern.permute.xlu0 0
  %221 = vperm.xlu0 %220, %v167
  %v222 = vpop.permute.xlu0 %221
  %225 = vset.pattern.permute.xlu0 0
  %226 = vperm.xlu0 %225, %v168
  %v227 = vpop.permute.xlu0 %226
  %230 = vset.pattern.permute.xlu0 0
  %231 = vperm.xlu0 %230, %v169
  %v232 = vpop.permute.xlu0 %231
  %235 = vset.pattern.permute.xlu0 0
  %236 = vperm.xlu0 %235, %v170
  %v237 = vpop.permute.xlu0 %236
  %240 = vset.pattern.permute.xlu0 0
  %241 = vperm.xlu0 %240, %v171
  %v242 = vpop.permute.xlu0 %241
  %245 = vset.pattern.permute.xlu0 0
  %246 = vperm.xlu0 %245, %v172
  %v247 = vpop.permute.xlu0 %246
  %250 = vset.pattern.permute.xlu0 0
  %251 = vperm.xlu0 %250, %v173
  %v252 = vpop.permute.xlu0 %251
  %v254 = vadd.f32 %v142, %v177
  %v255 = vadd.f32 %v143, %v182
  %v256 = vadd.f32 %v144, %v187
  %v257 = vadd.f32 %v145, %v192
  %v258 = vadd.f32 %v146, %v197
  %v259 = vadd.f32 %v147, %v202
  %v260 = vadd.f32 %v148, %v207
  %v261 = vadd.f32 %v149, %v212
  %v262 = vadd.f32 %v150, %v217
  %v263 = vadd.f32 %v151, %v222
  %v264 = vadd.f32 %v152, %v227
  %v265 = vadd.f32 %v153, %v232
  %v266 = vadd.f32 %v154, %v237
  %v267 = vadd.f32 %v155, %v242
  %v268 = vadd.f32 %v156, %v247
  %v269 = vadd.f32 %v157, %v252
  %v270 = vmax.f32 %v254, 0.0
  %v271 = vmax.f32 %v255, 0.0
  %v272 = vmax.f32 %v256, 0.0
  %v273 = vmax.f32 %v257, 0.0
  %v274 = vmax.f32 %v258, 0.0
  %v275 = vmax.f32 %v259, 0.0
  %v276 = vmax.f32 %v260, 0.0
  %v277 = vmax.f32 %v261, 0.0
  %v278 = vmax.f32 %v262, 0.0
  %v279 = vmax.f32 %v263, 0.0
  %v280 = vmax.f32 %v264, 0.0
  %v281 = vmax.f32 %v265, 0.0
  %v282 = vmax.f32 %v266, 0.0
  %v283 = vmax.f32 %v267, 0.0
  %v284 = vmax.f32 %v268, 0.0
  %v285 = vmax.f32 %v269, 0.0
  %v286 = vpack.c.bf16 %v271, %v270
  %v287 = vpack.c.bf16 %v273, %v272
  %v288 = vpack.c.bf16 %v275, %v274
  %v289 = vpack.c.bf16 %v277, %v276
  %v290 = vpack.c.bf16 %v279, %v278
  %v291 = vpack.c.bf16 %v281, %v280
  %v292 = vpack.c.bf16 %v283, %v282
  %v293 = vpack.c.bf16 %v285, %v284
  %v302 = vunpack.c.l.b16 %v286
  %v303 = vunpack.c.h.b16 %v286
  %v304 = vunpack.c.l.b16 %v287
  %v305 = vunpack.c.h.b16 %v287
  %v306 = vunpack.c.l.b16 %v288
  %v307 = vunpack.c.h.b16 %v288
  %v308 = vunpack.c.l.b16 %v289
  %v309 = vunpack.c.h.b16 %v289
  %v310 = vunpack.c.l.b16 %v290
  %v311 = vunpack.c.h.b16 %v290
  %v312 = vunpack.c.l.b16 %v291
  %v313 = vunpack.c.h.b16 %v291
  %v314 = vunpack.c.l.b16 %v292
  %v315 = vunpack.c.h.b16 %v292
  %v316 = vunpack.c.l.b16 %v293
  %v317 = vunpack.c.h.b16 %v293
  %v318 = vpack.c.b16 %v302, %v302
  %v319 = vpack.c.b16 %v303, %v303
  %v320 = vpack.c.b16 %v304, %v304
  %v321 = vpack.c.b16 %v305, %v305
  %v322 = vpack.c.b16 %v306, %v306
  %v323 = vpack.c.b16 %v307, %v307
  %v324 = vpack.c.b16 %v308, %v308
  %v325 = vpack.c.b16 %v309, %v309
  %v326 = vpack.c.b16 %v310, %v310
  %v327 = vpack.c.b16 %v311, %v311
  %v328 = vpack.c.b16 %v312, %v312
  %v329 = vpack.c.b16 %v313, %v313
  %v330 = vpack.c.b16 %v314, %v314
  %v331 = vpack.c.b16 %v315, %v315
  %v332 = vpack.c.b16 %v316, %v316
  %v333 = vpack.c.b16 %v317, %v317
  %350 = vst [vmem:[%s3] sm:$0xf] %v318
  %351 = vst [vmem:[%s3 + $0x4] sm:$0xf] %v319
  %352 = vst [vmem:[%s3 + $0x8] sm:$0xf] %v320
  %353 = vst [vmem:[%s3 + $0xc] sm:$0xf] %v321
  %354 = vst [vmem:[%s3 + $0x10] sm:$0xf] %v322
  %355 = vst [vmem:[%s3 + $0x14] sm:$0xf] %v323
  %356 = vst [vmem:[%s3 + $0x18] sm:$0xf] %v324
  %357 = vst [vmem:[%s3 + $0x1c] sm:$0xf] %v325
  %358 = vst [vmem:[%s3 + $0x20] sm:$0xf] %v326
  %359 = vst [vmem:[%s3 + $0x24] sm:$0xf] %v327
  %360 = vst [vmem:[%s3 + $0x28] sm:$0xf] %v328
  %361 = vst [vmem:[%s3 + $0x2c] sm:$0xf] %v329
  %362 = vst [vmem:[%s3 + $0x30] sm:$0xf] %v330
  %363 = vst [vmem:[%s3 + $0x34] sm:$0xf] %v331
  %364 = vst [vmem:[%s3 + $0x38] sm:$0xf] %v332
  %365 = vst [vmem:[%s3 + $0x3c] sm:$0xf] %v333
  // Predicated region
  $region14: #{generator_forward.10} parent=0 // pred_check
    _
  $region15: #{generator_forward.10} parent=0 // pred_check_branch
    %367 = sbr.rel (0) target = $region17
  $region16: #{generator_forward.10} parent=0 // pred_region
    _
  $region17: #{generator_forward.10} parent=0 // pred_fallthru
    _
  // Predicated region
  $region18: #{generator_forward.10} parent=0 // pred_check
    _
  $region19: #{generator_forward.10} parent=0 // pred_check_branch
    %369 = sbr.rel (0) target = $region21
  $region20: #{generator_forward.10} parent=0 // pred_region
    _
  $region21: #{generator_forward.10} parent=0 // pred_fallthru
    _

// kernel: generator_forward.11
$region0: #{generator_forward.11}
  #allocation0 [shape = 'u32[]', space=smem, size = 0x4, offset = 0x4, fixed_abs, tag = 'smem constant byte address 0x4 - core index']
  #allocation1 [shape = 'u32[144,128]{1,0:T(1,128)}', space=vmem, size = 0x12000, scoped, tag = 'internal scratch']
  %s0 = inlined_call_operand.vmem [shape: bf16[64,288], index: 0, kind: input, shape index: {}]
  %s1 = inlined_call_operand.vmem [shape: bf16[288,512], index: 1, kind: input, shape index: {}]
  %s2 = inlined_call_operand.vmem [shape: bf16[64,512], index: 2, kind: output, shape index: {0}]
  %s3 = inlined_call_operand.vmem [shape: f32[64,128], index: 3, kind: output, shape index: {1}]
  %s4 = inlined_call_operand.vmem [shape: f32[64,128], index: 4, kind: output, shape index: {2}]
  %5 = xla_tuple %s2, %s3, %s4
  %s6 = sld [smem:[#allocation0]]
  $region34: #{generator_forward.11} parent=0
    _
  %s8 = ssub.s32 1, %s6
  %s9 = scalar_select 0, %s8, %s6
  // Predicated region
  $region2: #{generator_forward.11} parent=0 // pred_check
    _
  $region3: #{generator_forward.11} parent=0 // pred_check_branch
    %11 = sbr.rel (0) target = $region5
  $region4: #{generator_forward.11} parent=0 // pred_region
    _
  $region5: #{generator_forward.11} parent=0 // pred_fallthru
    _
  // Predicated region
  $region6: #{generator_forward.11} parent=0 // pred_check
    _
  $region7: #{generator_forward.11} parent=0 // pred_check_branch
    %13 = sbr.rel (0) target = $region9
  $region8: #{generator_forward.11} parent=0 // pred_region
    _
  $region9: #{generator_forward.11} parent=0 // pred_fallthru
    _
  %v15 = vld [vmem:[%s0] sm:$0xff]
  %v16 = vld [vmem:[%s0 + $0x8] sm:$0xf]
  %v17 = vld [vmem:[%s0 + $0xc] sm:$0xff]
  %v18 = vld [vmem:[%s0 + $0x14] sm:$0xf]
  %v19 = vld [vmem:[%s0 + $0x18] sm:$0xff]
  %v20 = vld [vmem:[%s0 + $0x20] sm:$0xf]
  %v21 = vld [vmem:[%s0 + $0x24] sm:$0xff]
  %v22 = vld [vmem:[%s0 + $0x2c] sm:$0xf]
  %v23 = vld [vmem:[%s0 + $0x30] sm:$0xff]
  %v24 = vld [vmem:[%s0 + $0x38] sm:$0xf]
  %v25 = vld [vmem:[%s0 + $0x3c] sm:$0xff]
  %v26 = vld [vmem:[%s0 + $0x44] sm:$0xf]
  %v27 = vld [vmem:[%s0 + $0x48] sm:$0xff]
  %v28 = vld [vmem:[%s0 + $0x50] sm:$0xf]
  %v29 = vld [vmem:[%s0 + $0x54] sm:$0xff]
  %v30 = vld [vmem:[%s0 + $0x5c] sm:$0xf]
  %v31 = vld [vmem:[%s1] sm:$0xff]
  %v32 = vld [vmem:[%s1 + $0x8] sm:$0xff]
  %v33 = vld [vmem:[%s1 + $0x10] sm:$0xff]
  %v34 = vld [vmem:[%s1 + $0x18] sm:$0xff]
  %v35 = vld [vmem:[%s1 + $0x20] sm:$0xff]
  %v36 = vld [vmem:[%s1 + $0x28] sm:$0xff]
  %v37 = vld [vmem:[%s1 + $0x30] sm:$0xff]
  %v38 = vld [vmem:[%s1 + $0x38] sm:$0xff]
  %v39 = vld [vmem:[%s1 + $0x40] sm:$0xff]
  %v40 = vld [vmem:[%s1 + $0x48] sm:$0xff]
  %v41 = vld [vmem:[%s1 + $0x50] sm:$0xff]
  %v42 = vld [vmem:[%s1 + $0x58] sm:$0xff]
  %v43 = vld [vmem:[%s1 + $0x60] sm:$0xff]
  %v44 = vld [vmem:[%s1 + $0x68] sm:$0xff]
  %v45 = vld [vmem:[%s1 + $0x70] sm:$0xff]
  %v46 = vld [vmem:[%s1 + $0x78] sm:$0xff]
  %v47 = vld [vmem:[%s1 + $0x80] sm:$0xff]
  %v48 = vld [vmem:[%s1 + $0x88] sm:$0xff]
  %v49 = vld [vmem:[%s1 + $0x90] sm:$0xff]
  %v50 = vld [vmem:[%s1 + $0x98] sm:$0xff]
  %v51 = vld [vmem:[%s1 + $0xa0] sm:$0xff]
  %v52 = vld [vmem:[%s1 + $0xa8] sm:$0xff]
  %v53 = vld [vmem:[%s1 + $0xb0] sm:$0xff]
  %v54 = vld [vmem:[%s1 + $0xb8] sm:$0xff]
  %v55 = vld [vmem:[%s1 + $0xc0] sm:$0xff]
  %v56 = vld [vmem:[%s1 + $0xc8] sm:$0xff]
  %v57 = vld [vmem:[%s1 + $0xd0] sm:$0xff]
  %v58 = vld [vmem:[%s1 + $0xd8] sm:$0xff]
  %v59 = vld [vmem:[%s1 + $0xe0] sm:$0xff]
  %v60 = vld [vmem:[%s1 + $0xe8] sm:$0xff]
  %v61 = vld [vmem:[%s1 + $0xf0] sm:$0xff]
  %v62 = vld [vmem:[%s1 + $0xf8] sm:$0xff]
  %v63 = vld [vmem:[%s1 + $0x100] sm:$0xff]
  %v64 = vld [vmem:[%s1 + $0x108] sm:$0xff]
  %v65 = vld [vmem:[%s1 + $0x110] sm:$0xff]
  %v66 = vld [vmem:[%s1 + $0x118] sm:$0xff]
  %v67 = vld [vmem:[%s1 + $0x120] sm:$0xff]
  %v68 = vld [vmem:[%s1 + $0x128] sm:$0xff]
  %v69 = vld [vmem:[%s1 + $0x130] sm:$0xff]
  %v70 = vld [vmem:[%s1 + $0x138] sm:$0xff]
  %v71 = vld [vmem:[%s1 + $0x140] sm:$0xff]
  %v72 = vld [vmem:[%s1 + $0x148] sm:$0xff]
  %v73 = vld [vmem:[%s1 + $0x150] sm:$0xff]
  %v74 = vld [vmem:[%s1 + $0x158] sm:$0xff]
  %v75 = vld [vmem:[%s1 + $0x160] sm:$0xff]
  %v76 = vld [vmem:[%s1 + $0x168] sm:$0xff]
  %v77 = vld [vmem:[%s1 + $0x170] sm:$0xff]
  %v78 = vld [vmem:[%s1 + $0x178] sm:$0xff]
  %v79 = vld [vmem:[%s1 + $0x180] sm:$0xff]
  %v80 = vld [vmem:[%s1 + $0x188] sm:$0xff]
  %v81 = vld [vmem:[%s1 + $0x190] sm:$0xff]
  %v82 = vld [vmem:[%s1 + $0x198] sm:$0xff]
  %v83 = vld [vmem:[%s1 + $0x1a0] sm:$0xff]
  %v84 = vld [vmem:[%s1 + $0x1a8] sm:$0xff]
  %v85 = vld [vmem:[%s1 + $0x1b0] sm:$0xff]
  %v86 = vld [vmem:[%s1 + $0x1b8] sm:$0xff]
  %v87 = vld [vmem:[%s1 + $0x1c0] sm:$0xff]
  %v88 = vld [vmem:[%s1 + $0x1c8] sm:$0xff]
  %v89 = vld [vmem:[%s1 + $0x1d0] sm:$0xff]
  %v90 = vld [vmem:[%s1 + $0x1d8] sm:$0xff]
  %v91 = vld [vmem:[%s1 + $0x1e0] sm:$0xff]
  %v92 = vld [vmem:[%s1 + $0x1e8] sm:$0xff]
  %v93 = vld [vmem:[%s1 + $0x1f0] sm:$0xff]
  %v94 = vld [vmem:[%s1 + $0x1f8] sm:$0xff]
  %v95 = vld [vmem:[%s1 + $0x200] sm:$0xff]
  %v96 = vld [vmem:[%s1 + $0x208] sm:$0xff]
  %v97 = vld [vmem:[%s1 + $0x210] sm:$0xff]
  %v98 = vld [vmem:[%s1 + $0x218] sm:$0xff]
  %v99 = vld [vmem:[%s1 + $0x220] sm:$0xff]
  %v100 = vld [vmem:[%s1 + $0x228] sm:$0xff]
  %v101 = vld [vmem:[%s1 + $0x230] sm:$0xff]
  %v102 = vld [vmem:[%s1 + $0x238] sm:$0xff]
  %v119 = vunpack.c.l.b16 %v15
  %v120 = vunpack.c.h.b16 %v15
  %v121 = vunpack.c.l.b16 %v16
  %v122 = vunpack.c.l.b16 %v17
  %v123 = vunpack.c.h.b16 %v17
  %v124 = vunpack.c.l.b16 %v18
  %v125 = vunpack.c.l.b16 %v19
  %v126 = vunpack.c.h.b16 %v19
  %v127 = vunpack.c.l.b16 %v20
  %v128 = vunpack.c.l.b16 %v21
  %v129 = vunpack.c.h.b16 %v21
  %v130 = vunpack.c.l.b16 %v22
  %v131 = vunpack.c.l.b16 %v23
  %v132 = vunpack.c.h.b16 %v23
  %v133 = vunpack.c.l.b16 %v24
  %v134 = vunpack.c.l.b16 %v25
  %v135 = vunpack.c.h.b16 %v25
  %v136 = vunpack.c.l.b16 %v26
  %v137 = vunpack.c.l.b16 %v27
  %v138 = vunpack.c.h.b16 %v27
  %v139 = vunpack.c.l.b16 %v28
  %v140 = vunpack.c.l.b16 %v29
  %v141 = vunpack.c.h.b16 %v29
  %v142 = vunpack.c.l.b16 %v30
  %v143 = vpack.c.b16 %v122, %v119
  %v144 = vpack.c.b16 %v123, %v120
  %v145 = vpack.c.b16 %v124, %v121
  %v146 = vpack.c.b16 %v128, %v125
  %v147 = vpack.c.b16 %v129, %v126
  %v148 = vpack.c.b16 %v130, %v127
  %v149 = vpack.c.b16 %v134, %v131
  %v150 = vpack.c.b16 %v135, %v132
  %v151 = vpack.c.b16 %v136, %v133
  %v152 = vpack.c.b16 %v140, %v137
  %v153 = vpack.c.b16 %v141, %v138
  %v154 = vpack.c.b16 %v142, %v139
  %v235 = vunpack.c.l.b16 %v31
  %v236 = vunpack.c.h.b16 %v31
  %v237 = vunpack.c.l.b16 %v32
  %v238 = vunpack.c.h.b16 %v32
  %v239 = vunpack.c.l.b16 %v33
  %v240 = vunpack.c.h.b16 %v33
  %v241 = vunpack.c.l.b16 %v34
  %v242 = vunpack.c.h.b16 %v34
  %v243 = vunpack.c.l.b16 %v35
  %v244 = vunpack.c.h.b16 %v35
  %v245 = vunpack.c.l.b16 %v36
  %v246 = vunpack.c.h.b16 %v36
  %v247 = vunpack.c.l.b16 %v37
  %v248 = vunpack.c.h.b16 %v37
  %v249 = vunpack.c.l.b16 %v38
  %v250 = vunpack.c.h.b16 %v38
  %v251 = vunpack.c.l.b16 %v39
  %v252 = vunpack.c.h.b16 %v39
  %v253 = vunpack.c.l.b16 %v40
  %v254 = vunpack.c.h.b16 %v40
  %v255 = vunpack.c.l.b16 %v41
  %v256 = vunpack.c.h.b16 %v41
  %v257 = vunpack.c.l.b16 %v42
  %v258 = vunpack.c.h.b16 %v42
  %v259 = vunpack.c.l.b16 %v43
  %v260 = vunpack.c.h.b16 %v43
  %v261 = vunpack.c.l.b16 %v44
  %v262 = vunpack.c.h.b16 %v44
  %v263 = vunpack.c.l.b16 %v45
  %v264 = vunpack.c.h.b16 %v45
  %v265 = vunpack.c.l.b16 %v46
  %v266 = vunpack.c.h.b16 %v46
  %v267 = vunpack.c.l.b16 %v47
  %v268 = vunpack.c.h.b16 %v47
  %v269 = vunpack.c.l.b16 %v48
  %v270 = vunpack.c.h.b16 %v48
  %v271 = vunpack.c.l.b16 %v49
  %v272 = vunpack.c.h.b16 %v49
  %v273 = vunpack.c.l.b16 %v50
  %v274 = vunpack.c.h.b16 %v50
  %v275 = vunpack.c.l.b16 %v51
  %v276 = vunpack.c.h.b16 %v51
  %v277 = vunpack.c.l.b16 %v52
  %v278 = vunpack.c.h.b16 %v52
  %v279 = vunpack.c.l.b16 %v53
  %v280 = vunpack.c.h.b16 %v53
  %v281 = vunpack.c.l.b16 %v54
  %v282 = vunpack.c.h.b16 %v54
  %v283 = vunpack.c.l.b16 %v55
  %v284 = vunpack.c.h.b16 %v55
  %v285 = vunpack.c.l.b16 %v56
  %v286 = vunpack.c.h.b16 %v56
  %v287 = vunpack.c.l.b16 %v57
  %v288 = vunpack.c.h.b16 %v57
  %v289 = vunpack.c.l.b16 %v58
  %v290 = vunpack.c.h.b16 %v58
  %v291 = vunpack.c.l.b16 %v59
  %v292 = vunpack.c.h.b16 %v59
  %v293 = vunpack.c.l.b16 %v60
  %v294 = vunpack.c.h.b16 %v60
  %v295 = vunpack.c.l.b16 %v61
  %v296 = vunpack.c.h.b16 %v61
  %v297 = vunpack.c.l.b16 %v62
  %v298 = vunpack.c.h.b16 %v62
  %v299 = vunpack.c.l.b16 %v63
  %v300 = vunpack.c.h.b16 %v63
  %v301 = vunpack.c.l.b16 %v64
  %v302 = vunpack.c.h.b16 %v64
  %v303 = vunpack.c.l.b16 %v65
  %v304 = vunpack.c.h.b16 %v65
  %v305 = vunpack.c.l.b16 %v66
  %v306 = vunpack.c.h.b16 %v66
  %v307 = vunpack.c.l.b16 %v67
  %v308 = vunpack.c.h.b16 %v67
  %v309 = vunpack.c.l.b16 %v68
  %v310 = vunpack.c.h.b16 %v68
  %v311 = vunpack.c.l.b16 %v69
  %v312 = vunpack.c.h.b16 %v69
  %v313 = vunpack.c.l.b16 %v70
  %v314 = vunpack.c.h.b16 %v70
  %v315 = vunpack.c.l.b16 %v71
  %v316 = vunpack.c.h.b16 %v71
  %v317 = vunpack.c.l.b16 %v72
  %v318 = vunpack.c.h.b16 %v72
  %v319 = vunpack.c.l.b16 %v73
  %v320 = vunpack.c.h.b16 %v73
  %v321 = vunpack.c.l.b16 %v74
  %v322 = vunpack.c.h.b16 %v74
  %v323 = vunpack.c.l.b16 %v75
  %v324 = vunpack.c.h.b16 %v75
  %v325 = vunpack.c.l.b16 %v76
  %v326 = vunpack.c.h.b16 %v76
  %v327 = vunpack.c.l.b16 %v77
  %v328 = vunpack.c.h.b16 %v77
  %v329 = vunpack.c.l.b16 %v78
  %v330 = vunpack.c.h.b16 %v78
  %v331 = vunpack.c.l.b16 %v79
  %v332 = vunpack.c.h.b16 %v79
  %v333 = vunpack.c.l.b16 %v80
  %v334 = vunpack.c.h.b16 %v80
  %v335 = vunpack.c.l.b16 %v81
  %v336 = vunpack.c.h.b16 %v81
  %v337 = vunpack.c.l.b16 %v82
  %v338 = vunpack.c.h.b16 %v82
  %v339 = vunpack.c.l.b16 %v83
  %v340 = vunpack.c.h.b16 %v83
  %v341 = vunpack.c.l.b16 %v84
  %v342 = vunpack.c.h.b16 %v84
  %v343 = vunpack.c.l.b16 %v85
  %v344 = vunpack.c.h.b16 %v85
  %v345 = vunpack.c.l.b16 %v86
  %v346 = vunpack.c.h.b16 %v86
  %v347 = vunpack.c.l.b16 %v87
  %v348 = vunpack.c.h.b16 %v87
  %v349 = vunpack.c.l.b16 %v88
  %v350 = vunpack.c.h.b16 %v88
  %v351 = vunpack.c.l.b16 %v89
  %v352 = vunpack.c.h.b16 %v89
  %v353 = vunpack.c.l.b16 %v90
  %v354 = vunpack.c.h.b16 %v90
  %v355 = vunpack.c.l.b16 %v91
  %v356 = vunpack.c.h.b16 %v91
  %v357 = vunpack.c.l.b16 %v92
  %v358 = vunpack.c.h.b16 %v92
  %v359 = vunpack.c.l.b16 %v93
  %v360 = vunpack.c.h.b16 %v93
  %v361 = vunpack.c.l.b16 %v94
  %v362 = vunpack.c.h.b16 %v94
  %v363 = vunpack.c.l.b16 %v95
  %v364 = vunpack.c.h.b16 %v95
  %v365 = vunpack.c.l.b16 %v96
  %v366 = vunpack.c.h.b16 %v96
  %v367 = vunpack.c.l.b16 %v97
  %v368 = vunpack.c.h.b16 %v97
  %v369 = vunpack.c.l.b16 %v98
  %v370 = vunpack.c.h.b16 %v98
  %v371 = vunpack.c.l.b16 %v99
  %v372 = vunpack.c.h.b16 %v99
  %v373 = vunpack.c.l.b16 %v100
  %v374 = vunpack.c.h.b16 %v100
  %v375 = vunpack.c.l.b16 %v101
  %v376 = vunpack.c.h.b16 %v101
  %v377 = vunpack.c.l.b16 %v102
  %v378 = vunpack.c.h.b16 %v102
  %v379 = vpack.c.b16 %v239, %v235
  %v380 = vpack.c.b16 %v240, %v236
  %v381 = vpack.c.b16 %v241, %v237
  %v382 = vpack.c.b16 %v242, %v238
  %v383 = vpack.c.b16 %v247, %v243
  %v384 = vpack.c.b16 %v248, %v244
  %v385 = vpack.c.b16 %v249, %v245
  %v386 = vpack.c.b16 %v250, %v246
  %v387 = vpack.c.b16 %v255, %v251
  %v388 = vpack.c.b16 %v256, %v252
  %v389 = vpack.c.b16 %v257, %v253
  %v390 = vpack.c.b16 %v258, %v254
  %v391 = vpack.c.b16 %v263, %v259
  %v392 = vpack.c.b16 %v264, %v260
  %v393 = vpack.c.b16 %v265, %v261
  %v394 = vpack.c.b16 %v266, %v262
  %v395 = vpack.c.b16 %v271, %v267
  %v396 = vpack.c.b16 %v272, %v268
  %v397 = vpack.c.b16 %v273, %v269
  %v398 = vpack.c.b16 %v274, %v270
  %v399 = vpack.c.b16 %v279, %v275
  %v400 = vpack.c.b16 %v280, %v276
  %v401 = vpack.c.b16 %v281, %v277
  %v402 = vpack.c.b16 %v282, %v278
  %v403 = vpack.c.b16 %v287, %v283
  %v404 = vpack.c.b16 %v288, %v284
  %v405 = vpack.c.b16 %v289, %v285
  %v406 = vpack.c.b16 %v290, %v286
  %v407 = vpack.c.b16 %v295, %v291
  %v408 = vpack.c.b16 %v296, %v292
  %v409 = vpack.c.b16 %v297, %v293
  %v410 = vpack.c.b16 %v298, %v294
  %v411 = vpack.c.b16 %v303, %v299
  %v412 = vpack.c.b16 %v304, %v300
  %v413 = vpack.c.b16 %v305, %v301
  %v414 = vpack.c.b16 %v306, %v302
  %v415 = vpack.c.b16 %v311, %v307
  %v416 = vpack.c.b16 %v312, %v308
  %v417 = vpack.c.b16 %v313, %v309
  %v418 = vpack.c.b16 %v314, %v310
  %v419 = vpack.c.b16 %v319, %v315
  %v420 = vpack.c.b16 %v320, %v316
  %v421 = vpack.c.b16 %v321, %v317
  %v422 = vpack.c.b16 %v322, %v318
  %v423 = vpack.c.b16 %v327, %v323
  %v424 = vpack.c.b16 %v328, %v324
  %v425 = vpack.c.b16 %v329, %v325
  %v426 = vpack.c.b16 %v330, %v326
  %v427 = vpack.c.b16 %v335, %v331
  %v428 = vpack.c.b16 %v336, %v332
  %v429 = vpack.c.b16 %v337, %v333
  %v430 = vpack.c.b16 %v338, %v334
  %v431 = vpack.c.b16 %v343, %v339
  %v432 = vpack.c.b16 %v344, %v340
  %v433 = vpack.c.b16 %v345, %v341
  %v434 = vpack.c.b16 %v346, %v342
  %v435 = vpack.c.b16 %v351, %v347
  %v436 = vpack.c.b16 %v352, %v348
  %v437 = vpack.c.b16 %v353, %v349
  %v438 = vpack.c.b16 %v354, %v350
  %v439 = vpack.c.b16 %v359, %v355
  %v440 = vpack.c.b16 %v360, %v356
  %v441 = vpack.c.b16 %v361, %v357
  %v442 = vpack.c.b16 %v362, %v358
  %v443 = vpack.c.b16 %v367, %v363
  %v444 = vpack.c.b16 %v368, %v364
  %v445 = vpack.c.b16 %v369, %v365
  %v446 = vpack.c.b16 %v370, %v366
  %v447 = vpack.c.b16 %v375, %v371
  %v448 = vpack.c.b16 %v376, %v372
  %v449 = vpack.c.b16 %v377, %v373
  %v450 = vpack.c.b16 %v378, %v374
  %vm523 = vcmask 261120
  %v525 = vsel %vm523, %v145, 0
  %v528 = vsel %vm523, %v148, 0
  %v531 = vsel %vm523, %v151, 0
  %v534 = vsel %vm523, %v154, 0
  %536 = vmatprep.subr.bf16.mxu0 %v380
  %537 = vmatpush1.bf16.msra.mxu0 %v379
  %538 = vmatprep.subr.bf16.mxu0 %v384
  %539 = vmatpush1.bf16.msra.mxu0 %v383
  %540 = vmatprep.subr.bf16.mxu0 %v388
  %541 = vmatpush1.bf16.msra.mxu0 %v387
  %542 = vmatprep.subr.bf16.mxu0 %v392
  %543 = vmatpush1.bf16.msra.mxu0 %v391
  %544 = vmatprep.subr.bf16.mxu0 %v396
  %545 = vmatpush1.bf16.msra.mxu0 %v395
  %546 = vmatprep.subr.bf16.mxu0 %v400
  %547 = vmatpush1.bf16.msra.mxu0 %v399
  %548 = vmatprep.subr.bf16.mxu0 %v404
  %549 = vmatpush1.bf16.msra.mxu0 %v403
  %550 = vmatprep.subr.bf16.mxu0 %v408
  %551 = vmatpush1.bf16.msra.mxu0 %v407
  %552 = vmatprep.subr.bf16.mxu0 %v412
  %553 = vmatpush1.bf16.msra.mxu0 %v411
  %554 = vmatprep.subr.bf16.mxu0 %v416
  %555 = vmatpush1.bf16.msra.mxu0 %v415
  %556 = vmatprep.subr.bf16.mxu0 %v420
  %557 = vmatpush1.bf16.msra.mxu0 %v419
  %558 = vmatprep.subr.bf16.mxu0 %v424
  %559 = vmatpush1.bf16.msra.mxu0 %v423
  %560 = vmatprep.subr.bf16.mxu0 %v428
  %561 = vmatpush1.bf16.msra.mxu0 %v427
  %562 = vmatprep.subr.bf16.mxu0 %v432
  %563 = vmatpush1.bf16.msra.mxu0 %v431
  %564 = vmatprep.subr.bf16.mxu0 %v436
  %565 = vmatpush1.bf16.msra.mxu0 %v435
  %566 = vmatprep.subr.bf16.mxu0 %v440
  %567 = vmatpush1.bf16.msra.mxu0 %v439
  %568 = vmatprep.mubr.bf16.mxu0 %v144
  %569 = vmatmul.mubr.bf16.gmra.mrb[0].mxu0 %v143
  %v570 = vpop.f32.mrb[0].mxu0
  %v571 = vadd.f32 0.0, %v570
  %v572 = vpop.f32.mrb[0].mxu0
  %v573 = vadd.f32 0.0, %v572
  %v574 = vpop.f32.mrb[0].mxu0
  %v575 = vadd.f32 0.0, %v574
  %v576 = vpop.f32.mrb[0].mxu0
  %v577 = vadd.f32 0.0, %v576
  %578 = vmatprep.mubr.bf16.mxu0 %v147
  %579 = vmatmul.mubr.bf16.gmra.mrb[0].mxu0 %v146
  %v580 = vpop.f32.mrb[0].mxu0
  %v581 = vadd.f32 0.0, %v580
  %v582 = vpop.f32.mrb[0].mxu0
  %v583 = vadd.f32 0.0, %v582
  %v584 = vpop.f32.mrb[0].mxu0
  %v585 = vadd.f32 0.0, %v584
  %v586 = vpop.f32.mrb[0].mxu0
  %v587 = vadd.f32 0.0, %v586
  %588 = vmatprep.mubr.bf16.mxu0 %v150
  %589 = vmatmul.mubr.bf16.gmra.mrb[0].mxu0 %v149
  %v590 = vpop.f32.mrb[0].mxu0
  %v591 = vadd.f32 0.0, %v590
  %v592 = vpop.f32.mrb[0].mxu0
  %v593 = vadd.f32 0.0, %v592
  %v594 = vpop.f32.mrb[0].mxu0
  %v595 = vadd.f32 0.0, %v594
  %v596 = vpop.f32.mrb[0].mxu0
  %v597 = vadd.f32 0.0, %v596
  %598 = vmatprep.mubr.bf16.mxu0 %v153
  %599 = vmatmul.mubr.bf16.gmra.mrb[0].mxu0 %v152
  %v600 = vpop.f32.mrb[0].mxu0
  %v601 = vadd.f32 0.0, %v600
  %v602 = vpop.f32.mrb[0].mxu0
  %v603 = vadd.f32 0.0, %v602
  %v604 = vpop.f32.mrb[0].mxu0
  %v605 = vadd.f32 0.0, %v604
  %v606 = vpop.f32.mrb[0].mxu0
  %v607 = vadd.f32 0.0, %v606
  %608 = vdwg.mxu0
  %609 = vmatprep.subr.bf16.mxu0 %v444
  %610 = vmatpush1.bf16.msra.mxu0 %v443
  %611 = vmatprep.subr.bf16.mxu0 %v448
  %612 = vmatpush1.bf16.msra.mxu0 %v447
  %613 = vmatprep.subr.bf16.mxu0 0
  %614 = vmatpush1.bf16.msra.mxu0 0
  %615 = vmatprep.subr.bf16.mxu0 0
  %616 = vmatpush1.bf16.msra.mxu0 0
  %617 = vmatprep.subr.bf16.mxu0 0
  %618 = vmatpush1.bf16.msra.mxu0 0
  %619 = vmatprep.subr.bf16.mxu0 0
  %620 = vmatpush1.bf16.msra.mxu0 0
  %621 = vmatprep.subr.bf16.mxu0 0
  %622 = vmatpush1.bf16.msra.mxu0 0
  %623 = vmatprep.subr.bf16.mxu0 0
  %624 = vmatpush1.bf16.msra.mxu0 0
  %625 = vmatprep.subr.bf16.mxu0 0
  %626 = vmatpush1.bf16.msra.mxu0 0
  %627 = vmatprep.subr.bf16.mxu0 0
  %628 = vmatpush1.bf16.msra.mxu0 0
  %629 = vmatprep.subr.bf16.mxu0 0
  %630 = vmatpush1.bf16.msra.mxu0 0
  %631 = vmatprep.subr.bf16.mxu0 0
  %632 = vmatpush1.bf16.msra.mxu0 0
  %633 = vmatprep.subr.bf16.mxu0 0
  %634 = vmatpush1.bf16.msra.mxu0 0
  %635 = vmatprep.subr.bf16.mxu0 0
  %636 = vmatpush1.bf16.msra.mxu0 0
  %637 = vmatprep.subr.bf16.mxu0 0
  %638 = vmatpush1.bf16.msra.mxu0 0
  %639 = vmatprep.subr.bf16.mxu0 0
  %640 = vmatpush1.bf16.msra.mxu0 0
  %641 = vmatprep.mubr.bf16.mxu0 0
  %642 = vmatmul.mubr.bf16.gmra.mrb[0].mxu0 %v525
  %v643 = vpop.f32.mrb[0].mxu0
  %v644 = vadd.f32 %v571, %v643
  %v645 = vpop.f32.mrb[0].mxu0
  %v646 = vadd.f32 %v573, %v645
  %v647 = vpop.f32.mrb[0].mxu0
  %v648 = vadd.f32 %v575, %v647
  %v649 = vpop.f32.mrb[0].mxu0
  %v650 = vadd.f32 %v577, %v649
  %651 = vmatprep.mubr.bf16.mxu0 0
  %652 = vmatmul.mubr.bf16.gmra.mrb[0].mxu0 %v528
  %v653 = vpop.f32.mrb[0].mxu0
  %v654 = vadd.f32 %v581, %v653
  %v655 = vpop.f32.mrb[0].mxu0
  %v656 = vadd.f32 %v583, %v655
  %v657 = vpop.f32.mrb[0].mxu0
  %v658 = vadd.f32 %v585, %v657
  %v659 = vpop.f32.mrb[0].mxu0
  %v660 = vadd.f32 %v587, %v659
  %661 = vmatprep.mubr.bf16.mxu0 0
  %662 = vmatmul.mubr.bf16.gmra.mrb[0].mxu0 %v531
  %v663 = vpop.f32.mrb[0].mxu0
  %v664 = vadd.f32 %v591, %v663
  %v665 = vpop.f32.mrb[0].mxu0
  %v666 = vadd.f32 %v593, %v665
  %v667 = vpop.f32.mrb[0].mxu0
  %v668 = vadd.f32 %v595, %v667
  %v669 = vpop.f32.mrb[0].mxu0
  %v670 = vadd.f32 %v597, %v669
  %671 = vmatprep.mubr.bf16.mxu0 0
  %672 = vmatmul.mubr.bf16.gmra.mrb[0].mxu0 %v534
  %v673 = vpop.f32.mrb[0].mxu0
  %v674 = vadd.f32 %v601, %v673
  %v675 = vpop.f32.mrb[0].mxu0
  %v676 = vadd.f32 %v603, %v675
  %v677 = vpop.f32.mrb[0].mxu0
  %v678 = vadd.f32 %v605, %v677
  %v679 = vpop.f32.mrb[0].mxu0
  %v680 = vadd.f32 %v607, %v679
  %681 = vdwg.mxu0
  %682 = vmatprep.subr.bf16.mxu0 %v382
  %683 = vmatpush1.bf16.msra.mxu0 %v381
  %684 = vmatprep.subr.bf16.mxu0 %v386
  %685 = vmatpush1.bf16.msra.mxu0 %v385
  %686 = vmatprep.subr.bf16.mxu0 %v390
  %687 = vmatpush1.bf16.msra.mxu0 %v389
  %688 = vmatprep.subr.bf16.mxu0 %v394
  %689 = vmatpush1.bf16.msra.mxu0 %v393
  %690 = vmatprep.subr.bf16.mxu0 %v398
  %691 = vmatpush1.bf16.msra.mxu0 %v397
  %692 = vmatprep.subr.bf16.mxu0 %v402
  %693 = vmatpush1.bf16.msra.mxu0 %v401
  %694 = vmatprep.subr.bf16.mxu0 %v406
  %695 = vmatpush1.bf16.msra.mxu0 %v405
  %696 = vmatprep.subr.bf16.mxu0 %v410
  %697 = vmatpush1.bf16.msra.mxu0 %v409
  %698 = vmatprep.subr.bf16.mxu0 %v414
  %699 = vmatpush1.bf16.msra.mxu0 %v413
  %700 = vmatprep.subr.bf16.mxu0 %v418
  %701 = vmatpush1.bf16.msra.mxu0 %v417
  %702 = vmatprep.subr.bf16.mxu0 %v422
  %703 = vmatpush1.bf16.msra.mxu0 %v421
  %704 = vmatprep.subr.bf16.mxu0 %v426
  %705 = vmatpush1.bf16.msra.mxu0 %v425
  %706 = vmatprep.subr.bf16.mxu0 %v430
  %707 = vmatpush1.bf16.msra.mxu0 %v429
  %708 = vmatprep.subr.bf16.mxu0 %v434
  %709 = vmatpush1.bf16.msra.mxu0 %v433
  %710 = vmatprep.subr.bf16.mxu0 %v438
  %711 = vmatpush1.bf16.msra.mxu0 %v437
  %712 = vmatprep.subr.bf16.mxu0 %v442
  %713 = vmatpush1.bf16.msra.mxu0 %v441
  %714 = vmatprep.mubr.bf16.mxu0 %v144
  %715 = vmatmul.mubr.bf16.gmra.mrb[0].mxu0 %v143
  %v716 = vpop.f32.mrb[0].mxu0
  %v717 = vadd.f32 0.0, %v716
  %v718 = vpop.f32.mrb[0].mxu0
  %v719 = vadd.f32 0.0, %v718
  %v720 = vpop.f32.mrb[0].mxu0
  %v721 = vadd.f32 0.0, %v720
  %v722 = vpop.f32.mrb[0].mxu0
  %v723 = vadd.f32 0.0, %v722
  %724 = vmatprep.mubr.bf16.mxu0 %v147
  %725 = vmatmul.mubr.bf16.gmra.mrb[0].mxu0 %v146
  %v726 = vpop.f32.mrb[0].mxu0
  %v727 = vadd.f32 0.0, %v726
  %v728 = vpop.f32.mrb[0].mxu0
  %v729 = vadd.f32 0.0, %v728
  %v730 = vpop.f32.mrb[0].mxu0
  %v731 = vadd.f32 0.0, %v730
  %v732 = vpop.f32.mrb[0].mxu0
  %v733 = vadd.f32 0.0, %v732
  %734 = vmatprep.mubr.bf16.mxu0 %v150
  %735 = vmatmul.mubr.bf16.gmra.mrb[0].mxu0 %v149
  %v736 = vpop.f32.mrb[0].mxu0
  %v737 = vadd.f32 0.0, %v736
  %v738 = vpop.f32.mrb[0].mxu0
  %v739 = vadd.f32 0.0, %v738
  %v740 = vpop.f32.mrb[0].mxu0
  %v741 = vadd.f32 0.0, %v740
  %v742 = vpop.f32.mrb[0].mxu0
  %v743 = vadd.f32 0.0, %v742
  %744 = vmatprep.mubr.bf16.mxu0 %v153
  %745 = vmatmul.mubr.bf16.gmra.mrb[0].mxu0 %v152
  %v746 = vpop.f32.mrb[0].mxu0
  %v747 = vadd.f32 0.0, %v746
  %v748 = vpop.f32.mrb[0].mxu0
  %v749 = vadd.f32 0.0, %v748
  %v750 = vpop.f32.mrb[0].mxu0
  %v751 = vadd.f32 0.0, %v750
  %v752 = vpop.f32.mrb[0].mxu0
  %v753 = vadd.f32 0.0, %v752
  %754 = vdwg.mxu0
  %755 = vmatprep.subr.bf16.mxu0 %v446
  %756 = vmatpush1.bf16.msra.mxu0 %v445
  %757 = vmatprep.subr.bf16.mxu0 %v450
  %758 = vmatpush1.bf16.msra.mxu0 %v449
  %759 = vmatprep.subr.bf16.mxu0 0
  %760 = vmatpush1.bf16.msra.mxu0 0
  %761 = vmatprep.subr.bf16.mxu0 0
  %762 = vmatpush1.bf16.msra.mxu0 0
  %763 = vmatprep.subr.bf16.mxu0 0
  %764 = vmatpush1.bf16.msra.mxu0 0
  %765 = vmatprep.subr.bf16.mxu0 0
  %766 = vmatpush1.bf16.msra.mxu0 0
  %767 = vmatprep.subr.bf16.mxu0 0
  %768 = vmatpush1.bf16.msra.mxu0 0
  %769 = vmatprep.subr.bf16.mxu0 0
  %770 = vmatpush1.bf16.msra.mxu0 0
  %771 = vmatprep.subr.bf16.mxu0 0
  %772 = vmatpush1.bf16.msra.mxu0 0
  %773 = vmatprep.subr.bf16.mxu0 0
  %774 = vmatpush1.bf16.msra.mxu0 0
  %775 = vmatprep.subr.bf16.mxu0 0
  %776 = vmatpush1.bf16.msra.mxu0 0
  %777 = vmatprep.subr.bf16.mxu0 0
  %778 = vmatpush1.bf16.msra.mxu0 0
  %779 = vmatprep.subr.bf16.mxu0 0
  %780 = vmatpush1.bf16.msra.mxu0 0
  %781 = vmatprep.subr.bf16.mxu0 0
  %782 = vmatpush1.bf16.msra.mxu0 0
  %783 = vmatprep.subr.bf16.mxu0 0
  %784 = vmatpush1.bf16.msra.mxu0 0
  %785 = vmatprep.subr.bf16.mxu0 0
  %786 = vmatpush1.bf16.msra.mxu0 0
  %787 = vmatprep.mubr.bf16.mxu0 0
  %788 = vmatmul.mubr.bf16.gmra.mrb[0].mxu0 %v525
  %v789 = vpop.f32.mrb[0].mxu0
  %v790 = vadd.f32 %v717, %v789
  %v791 = vpop.f32.mrb[0].mxu0
  %v792 = vadd.f32 %v719, %v791
  %v793 = vpop.f32.mrb[0].mxu0
  %v794 = vadd.f32 %v721, %v793
  %v795 = vpop.f32.mrb[0].mxu0
  %v796 = vadd.f32 %v723, %v795
  %797 = vmatprep.mubr.bf16.mxu0 0
  %798 = vmatmul.mubr.bf16.gmra.mrb[0].mxu0 %v528
  %v799 = vpop.f32.mrb[0].mxu0
  %v800 = vadd.f32 %v727, %v799
  %v801 = vpop.f32.mrb[0].mxu0
  %v802 = vadd.f32 %v729, %v801
  %v803 = vpop.f32.mrb[0].mxu0
  %v804 = vadd.f32 %v731, %v803
  %v805 = vpop.f32.mrb[0].mxu0
  %v806 = vadd.f32 %v733, %v805
  %807 = vmatprep.mubr.bf16.mxu0 0
  %808 = vmatmul.mubr.bf16.gmra.mrb[0].mxu0 %v531
  %v809 = vpop.f32.mrb[0].mxu0
  %v810 = vadd.f32 %v737, %v809
  %v811 = vpop.f32.mrb[0].mxu0
  %v812 = vadd.f32 %v739, %v811
  %v813 = vpop.f32.mrb[0].mxu0
  %v814 = vadd.f32 %v741, %v813
  %v815 = vpop.f32.mrb[0].mxu0
  %v816 = vadd.f32 %v743, %v815
  %817 = vmatprep.mubr.bf16.mxu0 0
  %818 = vmatmul.mubr.bf16.gmra.mrb[0].mxu0 %v534
  %v819 = vpop.f32.mrb[0].mxu0
  %v820 = vadd.f32 %v747, %v819
  %v821 = vpop.f32.mrb[0].mxu0
  %v822 = vadd.f32 %v749, %v821
  %v823 = vpop.f32.mrb[0].mxu0
  %v824 = vadd.f32 %v751, %v823
  %v825 = vpop.f32.mrb[0].mxu0
  %v826 = vadd.f32 %v753, %v825
  %827 = vdwg.mxu0
  %v828 = vpack.c.bf16 %v648, %v644
  %v829 = vpack.c.bf16 %v650, %v646
  %v830 = vpack.c.bf16 %v794, %v790
  %v831 = vpack.c.bf16 %v796, %v792
  %v832 = vpack.c.bf16 %v658, %v654
  %v833 = vpack.c.bf16 %v660, %v656
  %v834 = vpack.c.bf16 %v804, %v800
  %v835 = vpack.c.bf16 %v806, %v802
  %v836 = vpack.c.bf16 %v668, %v664
  %v837 = vpack.c.bf16 %v670, %v666
  %v838 = vpack.c.bf16 %v814, %v810
  %v839 = vpack.c.bf16 %v816, %v812
  %v840 = vpack.c.bf16 %v678, %v674
  %v841 = vpack.c.bf16 %v680, %v676
  %v842 = vpack.c.bf16 %v824, %v820
  %v843 = vpack.c.bf16 %v826, %v822
  %v860 = vunpack.c.l.b16 %v828
  %v861 = vunpack.c.l.b16 %v829
  %v862 = vunpack.c.l.b16 %v830
  %v863 = vunpack.c.l.b16 %v831
  %v864 = vunpack.c.h.b16 %v828
  %v865 = vunpack.c.h.b16 %v829
  %v866 = vunpack.c.h.b16 %v830
  %v867 = vunpack.c.h.b16 %v831
  %v868 = vunpack.c.l.b16 %v832
  %v869 = vunpack.c.l.b16 %v833
  %v870 = vunpack.c.l.b16 %v834
  %v871 = vunpack.c.l.b16 %v835
  %v872 = vunpack.c.h.b16 %v832
  %v873 = vunpack.c.h.b16 %v833
  %v874 = vunpack.c.h.b16 %v834
  %v875 = vunpack.c.h.b16 %v835
  %v876 = vunpack.c.l.b16 %v836
  %v877 = vunpack.c.l.b16 %v837
  %v878 = vunpack.c.l.b16 %v838
  %v879 = vunpack.c.l.b16 %v839
  %v880 = vunpack.c.h.b16 %v836
  %v881 = vunpack.c.h.b16 %v837
  %v882 = vunpack.c.h.b16 %v838
  %v883 = vunpack.c.h.b16 %v839
  %v884 = vunpack.c.l.b16 %v840
  %v885 = vunpack.c.l.b16 %v841
  %v886 = vunpack.c.l.b16 %v842
  %v887 = vunpack.c.l.b16 %v843
  %v888 = vunpack.c.h.b16 %v840
  %v889 = vunpack.c.h.b16 %v841
  %v890 = vunpack.c.h.b16 %v842
  %v891 = vunpack.c.h.b16 %v843
  %v892 = vpack.c.b16 %v861, %v860
  %v893 = vpack.c.b16 %v863, %v862
  %v894 = vpack.c.b16 %v865, %v864
  %v895 = vpack.c.b16 %v867, %v866
  %v896 = vpack.c.b16 %v869, %v868
  %v897 = vpack.c.b16 %v871, %v870
  %v898 = vpack.c.b16 %v873, %v872
  %v899 = vpack.c.b16 %v875, %v874
  %v900 = vpack.c.b16 %v877, %v876
  %v901 = vpack.c.b16 %v879, %v878
  %v902 = vpack.c.b16 %v881, %v880
  %v903 = vpack.c.b16 %v883, %v882
  %v904 = vpack.c.b16 %v885, %v884
  %v905 = vpack.c.b16 %v887, %v886
  %v906 = vpack.c.b16 %v889, %v888
  %v907 = vpack.c.b16 %v891, %v890
  %924 = vst [vmem:[%s2] sm:$0xff] %v892
  %925 = vst [vmem:[%s2 + $0x8] sm:$0xff] %v893
  %926 = vst [vmem:[%s2 + $0x10] sm:$0xff] %v894
  %927 = vst [vmem:[%s2 + $0x18] sm:$0xff] %v895
  %928 = vst [vmem:[%s2 + $0x20] sm:$0xff] %v896
  %929 = vst [vmem:[%s2 + $0x28] sm:$0xff] %v897
  %930 = vst [vmem:[%s2 + $0x30] sm:$0xff] %v898
  %931 = vst [vmem:[%s2 + $0x38] sm:$0xff] %v899
  %932 = vst [vmem:[%s2 + $0x40] sm:$0xff] %v900
  %933 = vst [vmem:[%s2 + $0x48] sm:$0xff] %v901
  %934 = vst [vmem:[%s2 + $0x50] sm:$0xff] %v902
  %935 = vst [vmem:[%s2 + $0x58] sm:$0xff] %v903
  %936 = vst [vmem:[%s2 + $0x60] sm:$0xff] %v904
  %937 = vst [vmem:[%s2 + $0x68] sm:$0xff] %v905
  %938 = vst [vmem:[%s2 + $0x70] sm:$0xff] %v906
  %939 = vst [vmem:[%s2 + $0x78] sm:$0xff] %v907
  %v940 = vmul.f32 %v644, %v644
  %v941 = vmul.f32 %v648, %v648
  %v942 = vmul.f32 %v654, %v654
  %v943 = vmul.f32 %v658, %v658
  %v944 = vmul.f32 %v664, %v664
  %v945 = vmul.f32 %v668, %v668
  %v946 = vmul.f32 %v674, %v674
  %v947 = vmul.f32 %v678, %v678
  %v948 = vadd.f32 %v644, %v646
  %v949 = vadd.f32 %v648, %v650
  %v950 = vadd.f32 %v654, %v656
  %v951 = vadd.f32 %v658, %v660
  %v952 = vadd.f32 %v664, %v666
  %v953 = vadd.f32 %v668, %v670
  %v954 = vadd.f32 %v674, %v676
  %v955 = vadd.f32 %v678, %v680
  %v956 = vmul.f32 %v646, %v646
  %v957 = vmul.f32 %v650, %v650
  %v958 = vmul.f32 %v656, %v656
  %v959 = vmul.f32 %v660, %v660
  %v960 = vmul.f32 %v666, %v666
  %v961 = vmul.f32 %v670, %v670
  %v962 = vmul.f32 %v676, %v676
  %v963 = vmul.f32 %v680, %v680
  %v964 = vadd.f32 %v940, %v956
  %v965 = vadd.f32 %v941, %v957
  %v966 = vadd.f32 %v942, %v958
  %v967 = vadd.f32 %v943, %v959
  %v968 = vadd.f32 %v944, %v960
  %v969 = vadd.f32 %v945, %v961
  %v970 = vadd.f32 %v946, %v962
  %v971 = vadd.f32 %v947, %v963
  %v972 = vadd.f32 %v948, %v790
  %v973 = vadd.f32 %v949, %v794
  %v974 = vadd.f32 %v950, %v800
  %v975 = vadd.f32 %v951, %v804
  %v976 = vadd.f32 %v952, %v810
  %v977 = vadd.f32 %v953, %v814
  %v978 = vadd.f32 %v954, %v820
  %v979 = vadd.f32 %v955, %v824
  %v980 = vmul.f32 %v790, %v790
  %v981 = vmul.f32 %v794, %v794
  %v982 = vmul.f32 %v800, %v800
  %v983 = vmul.f32 %v804, %v804
  %v984 = vmul.f32 %v810, %v810
  %v985 = vmul.f32 %v814, %v814
  %v986 = vmul.f32 %v820, %v820
  %v987 = vmul.f32 %v824, %v824
  %v988 = vadd.f32 %v964, %v980
  %v989 = vadd.f32 %v965, %v981
  %v990 = vadd.f32 %v966, %v982
  %v991 = vadd.f32 %v967, %v983
  %v992 = vadd.f32 %v968, %v984
  %v993 = vadd.f32 %v969, %v985
  %v994 = vadd.f32 %v970, %v986
  %v995 = vadd.f32 %v971, %v987
  %v996 = vadd.f32 %v972, %v792
  %v997 = vadd.f32 %v973, %v796
  %v998 = vadd.f32 %v974, %v802
  %v999 = vadd.f32 %v975, %v806
  %v1000 = vadd.f32 %v976, %v812
  %v1001 = vadd.f32 %v977, %v816
  %v1002 = vadd.f32 %v978, %v822
  %v1003 = vadd.f32 %v979, %v826
  %v1004 = vmul.f32 %v792, %v792
  %v1005 = vmul.f32 %v796, %v796
  %v1006 = vmul.f32 %v802, %v802
  %v1007 = vmul.f32 %v806, %v806
  %v1008 = vmul.f32 %v812, %v812
  %v1009 = vmul.f32 %v816, %v816
  %v1010 = vmul.f32 %v822, %v822
  %v1011 = vmul.f32 %v826, %v826
  %v1012 = vadd.f32 %v988, %v1004
  %v1013 = vadd.f32 %v989, %v1005
  %v1014 = vadd.f32 %v990, %v1006
  %v1015 = vadd.f32 %v991, %v1007
  %v1016 = vadd.f32 %v992, %v1008
  %v1017 = vadd.f32 %v993, %v1009
  %v1018 = vadd.f32 %v994, %v1010
  %v1019 = vadd.f32 %v995, %v1011
  %1020 = vst [vmem:[%s3] sm:$0xff] %v996
  %1021 = vst [vmem:[%s3 + $0x8] sm:$0xff] %v997
  %1022 = vst [vmem:[%s3 + $0x10] sm:$0xff] %v998
  %1023 = vst [vmem:[%s3 + $0x18] sm:$0xff] %v999
  %1024 = vst [vmem:[%s3 + $0x20] sm:$0xff] %v1000
  %1025 = vst [vmem:[%s3 + $0x28] sm:$0xff] %v1001
  %1026 = vst [vmem:[%s3 + $0x30] sm:$0xff] %v1002
  %1027 = vst [vmem:[%s3 + $0x38] sm:$0xff] %v1003
  %1028 = vst [vmem:[%s4] sm:$0xff] %v1012
  %1029 = vst [vmem:[%s4 + $0x8] sm:$0xff] %v1013
  %1030 = vst [vmem:[%s4 + $0x10] sm:$0xff] %v1014
  %1031 = vst [vmem:[%s4 + $0x18] sm:$0xff] %v1015
  %1032 = vst [vmem:[%s4 + $0x20] sm:$0xff] %v1016
  %1033 = vst [vmem:[%s4 + $0x28] sm:$0xff] %v1017
  %1034 = vst [vmem:[%s4 + $0x30] sm:$0xff] %v1018
  %1035 = vst [vmem:[%s4 + $0x38] sm:$0xff] %v1019
  // Predicated region
  $region10: #{generator_forward.11} parent=0 // pred_check
    _
  $region11: #{generator_forward.11} parent=0 // pred_check_branch
    %1037 = sbr.rel (0) target = $region13
  $region12: #{generator_forward.11} parent=0 // pred_region
    _
  $region13: #{generator_forward.11} parent=0 // pred_fallthru
    _
  // Predicated region
  $region14: #{generator_forward.11} parent=0 // pred_check
    _
  $region15: #{generator_forward.11} parent=0 // pred_check_branch
    %1039 = sbr.rel (0) target = $region17
  $region16: #{generator_forward.11} parent=0 // pred_region
    _
  $region17: #{generator_forward.11} parent=0 // pred_fallthru
    _
  // Predicated region
  $region18: #{generator_forward.11} parent=0 // pred_check
    _
  $region19: #{generator_forward.11} parent=0 // pred_check_branch
    %1041 = sbr.rel (0) target = $region21
  $region20: #{generator_forward.11} parent=0 // pred_region
    _
  $region21: #{generator_forward.11} parent=0 // pred_fallthru
    _
  // Predicated region
  $region22: #{generator_forward.11} parent=0 // pred_check
    _
  $region23: #{generator_forward.11} parent=0 // pred_check_branch
    %1043 = sbr.rel (0) target = $region25
  $region24: #{generator_forward.11} parent=0 // pred_region
    _
  $region25: #{generator_forward.11} parent=0 // pred_fallthru
    _
  // Predicated region
  $region26: #{generator_forward.11} parent=0 // pred_check
    _
  $region27: #{generator_forward.11} parent=0 // pred_check_branch
    %1045 = sbr.rel (0) target = $region29
  $region28: #{generator_forward.11} parent=0 // pred_region
    _
  $region29: #{generator_forward.11} parent=0 // pred_fallthru
    _
  // Predicated region
  $region30: #{generator_forward.11} parent=0 // pred_check
    _
  $region31: #{generator_forward.11} parent=0 // pred_check_branch
    %1047 = sbr.rel (0) target = $region33
  $region32: #{generator_forward.11} parent=0 // pred_region
    _
  $region33: #{generator_forward.11} parent=0 // pred_fallthru
    _

// kernel: tile.53
$region0: #{tile.53}
  #allocation0 [shape = 's32[1]{0}', space=sflag, size = 0x4, scoped, tag = 'scoped memory for tile.53']
  %s0 = inlined_call_operand.vmem [shape: f32[16], index: 0, kind: input, shape index: {}]
  %s1 = inlined_call_operand.vmem [shape: f32[4,16], index: 1, kind: output, shape index: {}]
  // Predicated region
  $region2: #{tile.53} parent=0 // pred_check
    _
  $region3: #{tile.53} parent=0 // pred_check_branch
    %3 = sbr.rel (0) target = $region5
  $region4: #{tile.53} parent=0 // pred_region
    _
  $region5: #{tile.53} parent=0 // pred_fallthru
    _
  %v4 = vld [vmem:[%s0] ss:$0 sm:$0xff]
  %5 = vst [vmem:[%s1] sm:$0xf] %v4

// kernel: generator_forward.12
$region0: #{generator_forward.12}
  #allocation0 [shape = 'u32[]', space=smem, size = 0x4, offset = 0x4, fixed_abs, tag = 'smem constant byte address 0x4 - core index']
  #allocation1 [shape = 'u32[144,128]{1,0:T(1,128)}', space=vmem, size = 0x12000, scoped, tag = 'internal scratch']
  %s0 = inlined_call_operand.vmem [shape: bf16[64,512], index: 0, kind: input, shape index: {}]
  %s1 = inlined_call_operand.vmem [shape: f32[64,1], index: 1, kind: input, shape index: {}]
  %s2 = inlined_call_operand.vmem [shape: f32[64,1], index: 2, kind: input, shape index: {}]
  %s3 = inlined_call_operand.vmem [shape: bf16[64,512], index: 3, kind: output, shape index: {}]
  %s4 = sld [smem:[#allocation0]]
  $region22: #{generator_forward.12} parent=0
    _
  %s6 = ssub.s32 1, %s4
  %s7 = scalar_select 0, %s6, %s4
  // Predicated region
  $region2: #{generator_forward.12} parent=0 // pred_check
    _
  $region3: #{generator_forward.12} parent=0 // pred_check_branch
    %9 = sbr.rel (0) target = $region5
  $region4: #{generator_forward.12} parent=0 // pred_region
    _
  $region5: #{generator_forward.12} parent=0 // pred_fallthru
    _
  // Predicated region
  $region6: #{generator_forward.12} parent=0 // pred_check
    _
  $region7: #{generator_forward.12} parent=0 // pred_check_branch
    %11 = sbr.rel (0) target = $region9
  $region8: #{generator_forward.12} parent=0 // pred_region
    _
  $region9: #{generator_forward.12} parent=0 // pred_fallthru
    _
  // Predicated region
  $region10: #{generator_forward.12} parent=0 // pred_check
    _
  $region11: #{generator_forward.12} parent=0 // pred_check_branch
    %13 = sbr.rel (0) target = $region13
  $region12: #{generator_forward.12} parent=0 // pred_region
    _
  $region13: #{generator_forward.12} parent=0 // pred_fallthru
    _
  %v14 = vld [vmem:[%s0] sm:$0xff]
  %v15 = vld [vmem:[%s0 + $0x8] sm:$0xff]
  %v16 = vld [vmem:[%s0 + $0x10] sm:$0xff]
  %v17 = vld [vmem:[%s0 + $0x18] sm:$0xff]
  %v18 = vld [vmem:[%s0 + $0x20] sm:$0xff]
  %v19 = vld [vmem:[%s0 + $0x28] sm:$0xff]
  %v20 = vld [vmem:[%s0 + $0x30] sm:$0xff]
  %v21 = vld [vmem:[%s0 + $0x38] sm:$0xff]
  %v22 = vld [vmem:[%s0 + $0x40] sm:$0xff]
  %v23 = vld [vmem:[%s0 + $0x48] sm:$0xff]
  %v24 = vld [vmem:[%s0 + $0x50] sm:$0xff]
  %v25 = vld [vmem:[%s0 + $0x58] sm:$0xff]
  %v26 = vld [vmem:[%s0 + $0x60] sm:$0xff]
  %v27 = vld [vmem:[%s0 + $0x68] sm:$0xff]
  %v28 = vld [vmem:[%s0 + $0x70] sm:$0xff]
  %v29 = vld [vmem:[%s0 + $0x78] sm:$0xff]
  %v30 = vunpack.c.l.bf16 %v14
  %v31 = vunpack.c.h.bf16 %v14
  %v32 = vunpack.c.l.bf16 %v15
  %v33 = vunpack.c.h.bf16 %v15
  %v34 = vunpack.c.l.bf16 %v16
  %v35 = vunpack.c.h.bf16 %v16
  %v36 = vunpack.c.l.bf16 %v17
  %v37 = vunpack.c.h.bf16 %v17
  %v38 = vunpack.c.l.bf16 %v18
  %v39 = vunpack.c.h.bf16 %v18
  %v40 = vunpack.c.l.bf16 %v19
  %v41 = vunpack.c.h.bf16 %v19
  %v42 = vunpack.c.l.bf16 %v20
  %v43 = vunpack.c.h.bf16 %v20
  %v44 = vunpack.c.l.bf16 %v21
  %v45 = vunpack.c.h.bf16 %v21
  %v46 = vunpack.c.l.bf16 %v22
  %v47 = vunpack.c.h.bf16 %v22
  %v48 = vunpack.c.l.bf16 %v23
  %v49 = vunpack.c.h.bf16 %v23
  %v50 = vunpack.c.l.bf16 %v24
  %v51 = vunpack.c.h.bf16 %v24
  %v52 = vunpack.c.l.bf16 %v25
  %v53 = vunpack.c.h.bf16 %v25
  %v54 = vunpack.c.l.bf16 %v26
  %v55 = vunpack.c.h.bf16 %v26
  %v56 = vunpack.c.l.bf16 %v27
  %v57 = vunpack.c.h.bf16 %v27
  %v58 = vunpack.c.l.bf16 %v28
  %v59 = vunpack.c.h.bf16 %v28
  %v60 = vunpack.c.l.bf16 %v29
  %v61 = vunpack.c.h.bf16 %v29
  %v62 = vld [vmem:[%s1] sm:$0xff]
  %v63 = vld [vmem:[%s1 + $0x8] sm:$0xff]
  %v64 = vld [vmem:[%s1 + $0x10] sm:$0xff]
  %v65 = vld [vmem:[%s1 + $0x18] sm:$0xff]
  %v66 = vld [vmem:[%s1 + $0x20] sm:$0xff]
  %v67 = vld [vmem:[%s1 + $0x28] sm:$0xff]
  %v68 = vld [vmem:[%s1 + $0x30] sm:$0xff]
  %v69 = vld [vmem:[%s1 + $0x38] sm:$0xff]
  %71 = vset.pattern.permute.xlu0 0
  %72 = vperm.xlu0 %71, %v62
  %v73 = vpop.permute.xlu0 %72
  %76 = vset.pattern.permute.xlu0 0
  %77 = vperm.xlu0 %76, %v63
  %v78 = vpop.permute.xlu0 %77
  %81 = vset.pattern.permute.xlu0 0
  %82 = vperm.xlu0 %81, %v64
  %v83 = vpop.permute.xlu0 %82
  %86 = vset.pattern.permute.xlu0 0
  %87 = vperm.xlu0 %86, %v65
  %v88 = vpop.permute.xlu0 %87
  %91 = vset.pattern.permute.xlu0 0
  %92 = vperm.xlu0 %91, %v66
  %v93 = vpop.permute.xlu0 %92
  %96 = vset.pattern.permute.xlu0 0
  %97 = vperm.xlu0 %96, %v67
  %v98 = vpop.permute.xlu0 %97
  %101 = vset.pattern.permute.xlu0 0
  %102 = vperm.xlu0 %101, %v68
  %v103 = vpop.permute.xlu0 %102
  %106 = vset.pattern.permute.xlu0 0
  %107 = vperm.xlu0 %106, %v69
  %v108 = vpop.permute.xlu0 %107
  %v110 = vmul.f32 %v30, %v73
  %v111 = vmul.f32 %v31, %v73
  %v112 = vmul.f32 %v32, %v73
  %v113 = vmul.f32 %v33, %v73
  %v114 = vmul.f32 %v34, %v78
  %v115 = vmul.f32 %v35, %v78
  %v116 = vmul.f32 %v36, %v78
  %v117 = vmul.f32 %v37, %v78
  %v118 = vmul.f32 %v38, %v83
  %v119 = vmul.f32 %v39, %v83
  %v120 = vmul.f32 %v40, %v83
  %v121 = vmul.f32 %v41, %v83
  %v122 = vmul.f32 %v42, %v88
  %v123 = vmul.f32 %v43, %v88
  %v124 = vmul.f32 %v44, %v88
  %v125 = vmul.f32 %v45, %v88
  %v126 = vmul.f32 %v46, %v93
  %v127 = vmul.f32 %v47, %v93
  %v128 = vmul.f32 %v48, %v93
  %v129 = vmul.f32 %v49, %v93
  %v130 = vmul.f32 %v50, %v98
  %v131 = vmul.f32 %v51, %v98
  %v132 = vmul.f32 %v52, %v98
  %v133 = vmul.f32 %v53, %v98
  %v134 = vmul.f32 %v54, %v103
  %v135 = vmul.f32 %v55, %v103
  %v136 = vmul.f32 %v56, %v103
  %v137 = vmul.f32 %v57, %v103
  %v138 = vmul.f32 %v58, %v108
  %v139 = vmul.f32 %v59, %v108
  %v140 = vmul.f32 %v60, %v108
  %v141 = vmul.f32 %v61, %v108
  %v142 = vld [vmem:[%s2] sm:$0xff]
  %v143 = vld [vmem:[%s2 + $0x8] sm:$0xff]
  %v144 = vld [vmem:[%s2 + $0x10] sm:$0xff]
  %v145 = vld [vmem:[%s2 + $0x18] sm:$0xff]
  %v146 = vld [vmem:[%s2 + $0x20] sm:$0xff]
  %v147 = vld [vmem:[%s2 + $0x28] sm:$0xff]
  %v148 = vld [vmem:[%s2 + $0x30] sm:$0xff]
  %v149 = vld [vmem:[%s2 + $0x38] sm:$0xff]
  %151 = vset.pattern.permute.xlu0 0
  %152 = vperm.xlu0 %151, %v142
  %v153 = vpop.permute.xlu0 %152
  %156 = vset.pattern.permute.xlu0 0
  %157 = vperm.xlu0 %156, %v143
  %v158 = vpop.permute.xlu0 %157
  %161 = vset.pattern.permute.xlu0 0
  %162 = vperm.xlu0 %161, %v144
  %v163 = vpop.permute.xlu0 %162
  %166 = vset.pattern.permute.xlu0 0
  %167 = vperm.xlu0 %166, %v145
  %v168 = vpop.permute.xlu0 %167
  %171 = vset.pattern.permute.xlu0 0
  %172 = vperm.xlu0 %171, %v146
  %v173 = vpop.permute.xlu0 %172
  %176 = vset.pattern.permute.xlu0 0
  %177 = vperm.xlu0 %176, %v147
  %v178 = vpop.permute.xlu0 %177
  %181 = vset.pattern.permute.xlu0 0
  %182 = vperm.xlu0 %181, %v148
  %v183 = vpop.permute.xlu0 %182
  %186 = vset.pattern.permute.xlu0 0
  %187 = vperm.xlu0 %186, %v149
  %v188 = vpop.permute.xlu0 %187
  %v190 = vadd.f32 %v110, %v153
  %v191 = vadd.f32 %v111, %v153
  %v192 = vadd.f32 %v112, %v153
  %v193 = vadd.f32 %v113, %v153
  %v194 = vadd.f32 %v114, %v158
  %v195 = vadd.f32 %v115, %v158
  %v196 = vadd.f32 %v116, %v158
  %v197 = vadd.f32 %v117, %v158
  %v198 = vadd.f32 %v118, %v163
  %v199 = vadd.f32 %v119, %v163
  %v200 = vadd.f32 %v120, %v163
  %v201 = vadd.f32 %v121, %v163
  %v202 = vadd.f32 %v122, %v168
  %v203 = vadd.f32 %v123, %v168
  %v204 = vadd.f32 %v124, %v168
  %v205 = vadd.f32 %v125, %v168
  %v206 = vadd.f32 %v126, %v173
  %v207 = vadd.f32 %v127, %v173
  %v208 = vadd.f32 %v128, %v173
  %v209 = vadd.f32 %v129, %v173
  %v210 = vadd.f32 %v130, %v178
  %v211 = vadd.f32 %v131, %v178
  %v212 = vadd.f32 %v132, %v178
  %v213 = vadd.f32 %v133, %v178
  %v214 = vadd.f32 %v134, %v183
  %v215 = vadd.f32 %v135, %v183
  %v216 = vadd.f32 %v136, %v183
  %v217 = vadd.f32 %v137, %v183
  %v218 = vadd.f32 %v138, %v188
  %v219 = vadd.f32 %v139, %v188
  %v220 = vadd.f32 %v140, %v188
  %v221 = vadd.f32 %v141, %v188
  %v222 = vmax.f32 %v190, 0.0
  %v223 = vmax.f32 %v191, 0.0
  %v224 = vmax.f32 %v192, 0.0
  %v225 = vmax.f32 %v193, 0.0
  %v226 = vmax.f32 %v194, 0.0
  %v227 = vmax.f32 %v195, 0.0
  %v228 = vmax.f32 %v196, 0.0
  %v229 = vmax.f32 %v197, 0.0
  %v230 = vmax.f32 %v198, 0.0
  %v231 = vmax.f32 %v199, 0.0
  %v232 = vmax.f32 %v200, 0.0
  %v233 = vmax.f32 %v201, 0.0
  %v234 = vmax.f32 %v202, 0.0
  %v235 = vmax.f32 %v203, 0.0
  %v236 = vmax.f32 %v204, 0.0
  %v237 = vmax.f32 %v205, 0.0
  %v238 = vmax.f32 %v206, 0.0
  %v239 = vmax.f32 %v207, 0.0
  %v240 = vmax.f32 %v208, 0.0
  %v241 = vmax.f32 %v209, 0.0
  %v242 = vmax.f32 %v210, 0.0
  %v243 = vmax.f32 %v211, 0.0
  %v244 = vmax.f32 %v212, 0.0
  %v245 = vmax.f32 %v213, 0.0
  %v246 = vmax.f32 %v214, 0.0
  %v247 = vmax.f32 %v215, 0.0
  %v248 = vmax.f32 %v216, 0.0
  %v249 = vmax.f32 %v217, 0.0
  %v250 = vmax.f32 %v218, 0.0
  %v251 = vmax.f32 %v219, 0.0
  %v252 = vmax.f32 %v220, 0.0
  %v253 = vmax.f32 %v221, 0.0
  %v254 = vpack.c.bf16 %v226, %v222
  %v255 = vpack.c.bf16 %v227, %v223
  %v256 = vpack.c.bf16 %v228, %v224
  %v257 = vpack.c.bf16 %v229, %v225
  %v258 = vpack.c.bf16 %v234, %v230
  %v259 = vpack.c.bf16 %v235, %v231
  %v260 = vpack.c.bf16 %v236, %v232
  %v261 = vpack.c.bf16 %v237, %v233
  %v262 = vpack.c.bf16 %v242, %v238
  %v263 = vpack.c.bf16 %v243, %v239
  %v264 = vpack.c.bf16 %v244, %v240
  %v265 = vpack.c.bf16 %v245, %v241
  %v266 = vpack.c.bf16 %v250, %v246
  %v267 = vpack.c.bf16 %v251, %v247
  %v268 = vpack.c.bf16 %v252, %v248
  %v269 = vpack.c.bf16 %v253, %v249
  %v286 = vunpack.c.l.b16 %v254
  %v287 = vunpack.c.l.b16 %v255
  %v288 = vunpack.c.l.b16 %v256
  %v289 = vunpack.c.l.b16 %v257
  %v290 = vunpack.c.h.b16 %v254
  %v291 = vunpack.c.h.b16 %v255
  %v292 = vunpack.c.h.b16 %v256
  %v293 = vunpack.c.h.b16 %v257
  %v294 = vunpack.c.l.b16 %v258
  %v295 = vunpack.c.l.b16 %v259
  %v296 = vunpack.c.l.b16 %v260
  %v297 = vunpack.c.l.b16 %v261
  %v298 = vunpack.c.h.b16 %v258
  %v299 = vunpack.c.h.b16 %v259
  %v300 = vunpack.c.h.b16 %v260
  %v301 = vunpack.c.h.b16 %v261
  %v302 = vunpack.c.l.b16 %v262
  %v303 = vunpack.c.l.b16 %v263
  %v304 = vunpack.c.l.b16 %v264
  %v305 = vunpack.c.l.b16 %v265
  %v306 = vunpack.c.h.b16 %v262
  %v307 = vunpack.c.h.b16 %v263
  %v308 = vunpack.c.h.b16 %v264
  %v309 = vunpack.c.h.b16 %v265
  %v310 = vunpack.c.l.b16 %v266
  %v311 = vunpack.c.l.b16 %v267
  %v312 = vunpack.c.l.b16 %v268
  %v313 = vunpack.c.l.b16 %v269
  %v314 = vunpack.c.h.b16 %v266
  %v315 = vunpack.c.h.b16 %v267
  %v316 = vunpack.c.h.b16 %v268
  %v317 = vunpack.c.h.b16 %v269
  %v318 = vpack.c.b16 %v287, %v286
  %v319 = vpack.c.b16 %v289, %v288
  %v320 = vpack.c.b16 %v291, %v290
  %v321 = vpack.c.b16 %v293, %v292
  %v322 = vpack.c.b16 %v295, %v294
  %v323 = vpack.c.b16 %v297, %v296
  %v324 = vpack.c.b16 %v299, %v298
  %v325 = vpack.c.b16 %v301, %v300
  %v326 = vpack.c.b16 %v303, %v302
  %v327 = vpack.c.b16 %v305, %v304
  %v328 = vpack.c.b16 %v307, %v306
  %v329 = vpack.c.b16 %v309, %v308
  %v330 = vpack.c.b16 %v311, %v310
  %v331 = vpack.c.b16 %v313, %v312
  %v332 = vpack.c.b16 %v315, %v314
  %v333 = vpack.c.b16 %v317, %v316
  %350 = vst [vmem:[%s3] sm:$0xff] %v318
  %351 = vst [vmem:[%s3 + $0x8] sm:$0xff] %v319
  %352 = vst [vmem:[%s3 + $0x10] sm:$0xff] %v320
  %353 = vst [vmem:[%s3 + $0x18] sm:$0xff] %v321
  %354 = vst [vmem:[%s3 + $0x20] sm:$0xff] %v322
  %355 = vst [vmem:[%s3 + $0x28] sm:$0xff] %v323
  %356 = vst [vmem:[%s3 + $0x30] sm:$0xff] %v324
  %357 = vst [vmem:[%s3 + $0x38] sm:$0xff] %v325
  %358 = vst [vmem:[%s3 + $0x40] sm:$0xff] %v326
  %359 = vst [vmem:[%s3 + $0x48] sm:$0xff] %v327
  %360 = vst [vmem:[%s3 + $0x50] sm:$0xff] %v328
  %361 = vst [vmem:[%s3 + $0x58] sm:$0xff] %v329
  %362 = vst [vmem:[%s3 + $0x60] sm:$0xff] %v330
  %363 = vst [vmem:[%s3 + $0x68] sm:$0xff] %v331
  %364 = vst [vmem:[%s3 + $0x70] sm:$0xff] %v332
  %365 = vst [vmem:[%s3 + $0x78] sm:$0xff] %v333
  // Predicated region
  $region14: #{generator_forward.12} parent=0 // pred_check
    _
  $region15: #{generator_forward.12} parent=0 // pred_check_branch
    %367 = sbr.rel (0) target = $region17
  $region16: #{generator_forward.12} parent=0 // pred_region
    _
  $region17: #{generator_forward.12} parent=0 // pred_fallthru
    _
  // Predicated region
  $region18: #{generator_forward.12} parent=0 // pred_check
    _
  $region19: #{generator_forward.12} parent=0 // pred_check_branch
    %369 = sbr.rel (0) target = $region21
  $region20: #{generator_forward.12} parent=0 // pred_region
    _
  $region21: #{generator_forward.12} parent=0 // pred_fallthru
    _

// kernel: generator_forward.13
$region0: #{generator_forward.13}
  #allocation0 [shape = 'u32[]', space=smem, size = 0x4, offset = 0x4, fixed_abs, tag = 'smem constant byte address 0x4 - core index']
  #allocation1 [shape = 'u32[144,128]{1,0:T(1,128)}', space=vmem, size = 0x12000, scoped, tag = 'internal scratch']
  %s0 = inlined_call_operand.vmem [shape: bf16[16,144], index: 0, kind: input, shape index: {}]
  %s1 = inlined_call_operand.vmem [shape: bf16[144,2048], index: 1, kind: input, shape index: {}]
  %s2 = inlined_call_operand.vmem [shape: f32[16,2048], index: 2, kind: output, shape index: {}]
  %s3 = sld [smem:[#allocation0]]
  $region18: #{generator_forward.13} parent=0
    _
  %s5 = ssub.s32 1, %s3
  %s6 = scalar_select 0, %s5, %s3
  // Predicated region
  $region2: #{generator_forward.13} parent=0 // pred_check
    _
  $region3: #{generator_forward.13} parent=0 // pred_check_branch
    %8 = sbr.rel (0) target = $region5
  $region4: #{generator_forward.13} parent=0 // pred_region
    _
  $region5: #{generator_forward.13} parent=0 // pred_fallthru
    _
  // Predicated region
  $region6: #{generator_forward.13} parent=0 // pred_check
    _
  $region7: #{generator_forward.13} parent=0 // pred_check_branch
    %10 = sbr.rel (0) target = $region9
  $region8: #{generator_forward.13} parent=0 // pred_region
    _
  $region9: #{generator_forward.13} parent=0 // pred_fallthru
    _
  %v12 = vld [vmem:[%s0] sm:$0xff]
  %v13 = vld [vmem:[%s0 + $0x8] sm:$0xff]
  %v14 = vld [vmem:[%s1] sm:$0xff]
  %v15 = vld [vmem:[%s1 + $0x8] sm:$0xff]
  %v16 = vld [vmem:[%s1 + $0x10] sm:$0xff]
  %v17 = vld [vmem:[%s1 + $0x18] sm:$0xff]
  %v18 = vld [vmem:[%s1 + $0x20] sm:$0xff]
  %v19 = vld [vmem:[%s1 + $0x28] sm:$0xff]
  %v20 = vld [vmem:[%s1 + $0x30] sm:$0xff]
  %v21 = vld [vmem:[%s1 + $0x38] sm:$0xff]
  %v22 = vld [vmem:[%s1 + $0x40] sm:$0xff]
  %v23 = vld [vmem:[%s1 + $0x48] sm:$0xff]
  %v24 = vld [vmem:[%s1 + $0x50] sm:$0xff]
  %v25 = vld [vmem:[%s1 + $0x58] sm:$0xff]
  %v26 = vld [vmem:[%s1 + $0x60] sm:$0xff]
  %v27 = vld [vmem:[%s1 + $0x68] sm:$0xff]
  %v28 = vld [vmem:[%s1 + $0x70] sm:$0xff]
  %v29 = vld [vmem:[%s1 + $0x78] sm:$0xff]
  %v30 = vld [vmem:[%s1 + $0x80] sm:$0xff]
  %v31 = vld [vmem:[%s1 + $0x88] sm:$0xff]
  %v32 = vld [vmem:[%s1 + $0x90] sm:$0xff]
  %v33 = vld [vmem:[%s1 + $0x98] sm:$0xff]
  %v34 = vld [vmem:[%s1 + $0xa0] sm:$0xff]
  %v35 = vld [vmem:[%s1 + $0xa8] sm:$0xff]
  %v36 = vld [vmem:[%s1 + $0xb0] sm:$0xff]
  %v37 = vld [vmem:[%s1 + $0xb8] sm:$0xff]
  %v38 = vld [vmem:[%s1 + $0xc0] sm:$0xff]
  %v39 = vld [vmem:[%s1 + $0xc8] sm:$0xff]
  %v40 = vld [vmem:[%s1 + $0xd0] sm:$0xff]
  %v41 = vld [vmem:[%s1 + $0xd8] sm:$0xff]
  %v42 = vld [vmem:[%s1 + $0xe0] sm:$0xff]
  %v43 = vld [vmem:[%s1 + $0xe8] sm:$0xff]
  %v44 = vld [vmem:[%s1 + $0xf0] sm:$0xff]
  %v45 = vld [vmem:[%s1 + $0xf8] sm:$0xff]
  %v46 = vld [vmem:[%s1 + $0x100] sm:$0xff]
  %v47 = vld [vmem:[%s1 + $0x108] sm:$0xff]
  %v48 = vld [vmem:[%s1 + $0x110] sm:$0xff]
  %v49 = vld [vmem:[%s1 + $0x118] sm:$0xff]
  %v50 = vld [vmem:[%s1 + $0x120] sm:$0xff]
  %v51 = vld [vmem:[%s1 + $0x128] sm:$0xff]
  %v52 = vld [vmem:[%s1 + $0x130] sm:$0xff]
  %v53 = vld [vmem:[%s1 + $0x138] sm:$0xff]
  %v54 = vld [vmem:[%s1 + $0x140] sm:$0xff]
  %v55 = vld [vmem:[%s1 + $0x148] sm:$0xff]
  %v56 = vld [vmem:[%s1 + $0x150] sm:$0xff]
  %v57 = vld [vmem:[%s1 + $0x158] sm:$0xff]
  %v58 = vld [vmem:[%s1 + $0x160] sm:$0xff]
  %v59 = vld [vmem:[%s1 + $0x168] sm:$0xff]
  %v60 = vld [vmem:[%s1 + $0x170] sm:$0xff]
  %v61 = vld [vmem:[%s1 + $0x178] sm:$0xff]
  %v62 = vld [vmem:[%s1 + $0x180] sm:$0xff]
  %v63 = vld [vmem:[%s1 + $0x188] sm:$0xff]
  %v64 = vld [vmem:[%s1 + $0x190] sm:$0xff]
  %v65 = vld [vmem:[%s1 + $0x198] sm:$0xff]
  %v66 = vld [vmem:[%s1 + $0x1a0] sm:$0xff]
  %v67 = vld [vmem:[%s1 + $0x1a8] sm:$0xff]
  %v68 = vld [vmem:[%s1 + $0x1b0] sm:$0xff]
  %v69 = vld [vmem:[%s1 + $0x1b8] sm:$0xff]
  %v70 = vld [vmem:[%s1 + $0x1c0] sm:$0xff]
  %v71 = vld [vmem:[%s1 + $0x1c8] sm:$0xff]
  %v72 = vld [vmem:[%s1 + $0x1d0] sm:$0xff]
  %v73 = vld [vmem:[%s1 + $0x1d8] sm:$0xff]
  %v74 = vld [vmem:[%s1 + $0x1e0] sm:$0xff]
  %v75 = vld [vmem:[%s1 + $0x1e8] sm:$0xff]
  %v76 = vld [vmem:[%s1 + $0x1f0] sm:$0xff]
  %v77 = vld [vmem:[%s1 + $0x1f8] sm:$0xff]
  %v78 = vld [vmem:[%s1 + $0x200] sm:$0xff]
  %v79 = vld [vmem:[%s1 + $0x208] sm:$0xff]
  %v80 = vld [vmem:[%s1 + $0x210] sm:$0xff]
  %v81 = vld [vmem:[%s1 + $0x218] sm:$0xff]
  %v82 = vld [vmem:[%s1 + $0x220] sm:$0xff]
  %v83 = vld [vmem:[%s1 + $0x228] sm:$0xff]
  %v84 = vld [vmem:[%s1 + $0x230] sm:$0xff]
  %v85 = vld [vmem:[%s1 + $0x238] sm:$0xff]
  %v86 = vld [vmem:[%s1 + $0x240] sm:$0xff]
  %v87 = vld [vmem:[%s1 + $0x248] sm:$0xff]
  %v88 = vld [vmem:[%s1 + $0x250] sm:$0xff]
  %v89 = vld [vmem:[%s1 + $0x258] sm:$0xff]
  %v90 = vld [vmem:[%s1 + $0x260] sm:$0xff]
  %v91 = vld [vmem:[%s1 + $0x268] sm:$0xff]
  %v92 = vld [vmem:[%s1 + $0x270] sm:$0xff]
  %v93 = vld [vmem:[%s1 + $0x278] sm:$0xff]
  %v94 = vld [vmem:[%s1 + $0x280] sm:$0xff]
  %v95 = vld [vmem:[%s1 + $0x288] sm:$0xff]
  %v96 = vld [vmem:[%s1 + $0x290] sm:$0xff]
  %v97 = vld [vmem:[%s1 + $0x298] sm:$0xff]
  %v98 = vld [vmem:[%s1 + $0x2a0] sm:$0xff]
  %v99 = vld [vmem:[%s1 + $0x2a8] sm:$0xff]
  %v100 = vld [vmem:[%s1 + $0x2b0] sm:$0xff]
  %v101 = vld [vmem:[%s1 + $0x2b8] sm:$0xff]
  %v102 = vld [vmem:[%s1 + $0x2c0] sm:$0xff]
  %v103 = vld [vmem:[%s1 + $0x2c8] sm:$0xff]
  %v104 = vld [vmem:[%s1 + $0x2d0] sm:$0xff]
  %v105 = vld [vmem:[%s1 + $0x2d8] sm:$0xff]
  %v106 = vld [vmem:[%s1 + $0x2e0] sm:$0xff]
  %v107 = vld [vmem:[%s1 + $0x2e8] sm:$0xff]
  %v108 = vld [vmem:[%s1 + $0x2f0] sm:$0xff]
  %v109 = vld [vmem:[%s1 + $0x2f8] sm:$0xff]
  %v110 = vld [vmem:[%s1 + $0x300] sm:$0xff]
  %v111 = vld [vmem:[%s1 + $0x308] sm:$0xff]
  %v112 = vld [vmem:[%s1 + $0x310] sm:$0xff]
  %v113 = vld [vmem:[%s1 + $0x318] sm:$0xff]
  %v114 = vld [vmem:[%s1 + $0x320] sm:$0xff]
  %v115 = vld [vmem:[%s1 + $0x328] sm:$0xff]
  %v116 = vld [vmem:[%s1 + $0x330] sm:$0xff]
  %v117 = vld [vmem:[%s1 + $0x338] sm:$0xff]
  %v118 = vld [vmem:[%s1 + $0x340] sm:$0xff]
  %v119 = vld [vmem:[%s1 + $0x348] sm:$0xff]
  %v120 = vld [vmem:[%s1 + $0x350] sm:$0xff]
  %v121 = vld [vmem:[%s1 + $0x358] sm:$0xff]
  %v122 = vld [vmem:[%s1 + $0x360] sm:$0xff]
  %v123 = vld [vmem:[%s1 + $0x368] sm:$0xff]
  %v124 = vld [vmem:[%s1 + $0x370] sm:$0xff]
  %v125 = vld [vmem:[%s1 + $0x378] sm:$0xff]
  %v126 = vld [vmem:[%s1 + $0x380] sm:$0xff]
  %v127 = vld [vmem:[%s1 + $0x388] sm:$0xff]
  %v128 = vld [vmem:[%s1 + $0x390] sm:$0xff]
  %v129 = vld [vmem:[%s1 + $0x398] sm:$0xff]
  %v130 = vld [vmem:[%s1 + $0x3a0] sm:$0xff]
  %v131 = vld [vmem:[%s1 + $0x3a8] sm:$0xff]
  %v132 = vld [vmem:[%s1 + $0x3b0] sm:$0xff]
  %v133 = vld [vmem:[%s1 + $0x3b8] sm:$0xff]
  %v134 = vld [vmem:[%s1 + $0x3c0] sm:$0xff]
  %v135 = vld [vmem:[%s1 + $0x3c8] sm:$0xff]
  %v136 = vld [vmem:[%s1 + $0x3d0] sm:$0xff]
  %v137 = vld [vmem:[%s1 + $0x3d8] sm:$0xff]
  %v138 = vld [vmem:[%s1 + $0x3e0] sm:$0xff]
  %v139 = vld [vmem:[%s1 + $0x3e8] sm:$0xff]
  %v140 = vld [vmem:[%s1 + $0x3f0] sm:$0xff]
  %v141 = vld [vmem:[%s1 + $0x3f8] sm:$0xff]
  %v142 = vld [vmem:[%s1 + $0x400] sm:$0xff]
  %v143 = vld [vmem:[%s1 + $0x408] sm:$0xff]
  %v144 = vld [vmem:[%s1 + $0x410] sm:$0xff]
  %v145 = vld [vmem:[%s1 + $0x418] sm:$0xff]
  %v146 = vld [vmem:[%s1 + $0x420] sm:$0xff]
  %v147 = vld [vmem:[%s1 + $0x428] sm:$0xff]
  %v148 = vld [vmem:[%s1 + $0x430] sm:$0xff]
  %v149 = vld [vmem:[%s1 + $0x438] sm:$0xff]
  %v150 = vld [vmem:[%s1 + $0x440] sm:$0xff]
  %v151 = vld [vmem:[%s1 + $0x448] sm:$0xff]
  %v152 = vld [vmem:[%s1 + $0x450] sm:$0xff]
  %v153 = vld [vmem:[%s1 + $0x458] sm:$0xff]
  %v154 = vld [vmem:[%s1 + $0x460] sm:$0xff]
  %v155 = vld [vmem:[%s1 + $0x468] sm:$0xff]
  %v156 = vld [vmem:[%s1 + $0x470] sm:$0xff]
  %v157 = vld [vmem:[%s1 + $0x478] sm:$0xff]
  %v160 = vunpack.c.l.b16 %v12
  %v161 = vunpack.c.h.b16 %v12
  %v162 = vunpack.c.l.b16 %v13
  %v163 = vunpack.c.h.b16 %v13
  %v164 = vpack.c.b16 %v162, %v160
  %v165 = vpack.c.b16 %v163, %v161
  %v311 = vunpack.c.l.b16 %v14
  %v312 = vunpack.c.h.b16 %v14
  %v313 = vunpack.c.l.b16 %v15
  %v314 = vunpack.c.h.b16 %v15
  %v315 = vunpack.c.l.b16 %v16
  %v316 = vunpack.c.h.b16 %v16
  %v317 = vunpack.c.l.b16 %v17
  %v318 = vunpack.c.h.b16 %v17
  %v319 = vunpack.c.l.b16 %v18
  %v320 = vunpack.c.h.b16 %v18
  %v321 = vunpack.c.l.b16 %v19
  %v322 = vunpack.c.h.b16 %v19
  %v323 = vunpack.c.l.b16 %v20
  %v324 = vunpack.c.h.b16 %v20
  %v325 = vunpack.c.l.b16 %v21
  %v326 = vunpack.c.h.b16 %v21
  %v327 = vunpack.c.l.b16 %v22
  %v328 = vunpack.c.h.b16 %v22
  %v329 = vunpack.c.l.b16 %v23
  %v330 = vunpack.c.h.b16 %v23
  %v331 = vunpack.c.l.b16 %v24
  %v332 = vunpack.c.h.b16 %v24
  %v333 = vunpack.c.l.b16 %v25
  %v334 = vunpack.c.h.b16 %v25
  %v335 = vunpack.c.l.b16 %v26
  %v336 = vunpack.c.h.b16 %v26
  %v337 = vunpack.c.l.b16 %v27
  %v338 = vunpack.c.h.b16 %v27
  %v339 = vunpack.c.l.b16 %v28
  %v340 = vunpack.c.h.b16 %v28
  %v341 = vunpack.c.l.b16 %v29
  %v342 = vunpack.c.h.b16 %v29
  %v343 = vunpack.c.l.b16 %v30
  %v344 = vunpack.c.h.b16 %v30
  %v345 = vunpack.c.l.b16 %v31
  %v346 = vunpack.c.h.b16 %v31
  %v347 = vunpack.c.l.b16 %v32
  %v348 = vunpack.c.h.b16 %v32
  %v349 = vunpack.c.l.b16 %v33
  %v350 = vunpack.c.h.b16 %v33
  %v351 = vunpack.c.l.b16 %v34
  %v352 = vunpack.c.h.b16 %v34
  %v353 = vunpack.c.l.b16 %v35
  %v354 = vunpack.c.h.b16 %v35
  %v355 = vunpack.c.l.b16 %v36
  %v356 = vunpack.c.h.b16 %v36
  %v357 = vunpack.c.l.b16 %v37
  %v358 = vunpack.c.h.b16 %v37
  %v359 = vunpack.c.l.b16 %v38
  %v360 = vunpack.c.h.b16 %v38
  %v361 = vunpack.c.l.b16 %v39
  %v362 = vunpack.c.h.b16 %v39
  %v363 = vunpack.c.l.b16 %v40
  %v364 = vunpack.c.h.b16 %v40
  %v365 = vunpack.c.l.b16 %v41
  %v366 = vunpack.c.h.b16 %v41
  %v367 = vunpack.c.l.b16 %v42
  %v368 = vunpack.c.h.b16 %v42
  %v369 = vunpack.c.l.b16 %v43
  %v370 = vunpack.c.h.b16 %v43
  %v371 = vunpack.c.l.b16 %v44
  %v372 = vunpack.c.h.b16 %v44
  %v373 = vunpack.c.l.b16 %v45
  %v374 = vunpack.c.h.b16 %v45
  %v375 = vunpack.c.l.b16 %v46
  %v376 = vunpack.c.h.b16 %v46
  %v377 = vunpack.c.l.b16 %v47
  %v378 = vunpack.c.h.b16 %v47
  %v379 = vunpack.c.l.b16 %v48
  %v380 = vunpack.c.h.b16 %v48
  %v381 = vunpack.c.l.b16 %v49
  %v382 = vunpack.c.h.b16 %v49
  %v383 = vunpack.c.l.b16 %v50
  %v384 = vunpack.c.h.b16 %v50
  %v385 = vunpack.c.l.b16 %v51
  %v386 = vunpack.c.h.b16 %v51
  %v387 = vunpack.c.l.b16 %v52
  %v388 = vunpack.c.h.b16 %v52
  %v389 = vunpack.c.l.b16 %v53
  %v390 = vunpack.c.h.b16 %v53
  %v391 = vunpack.c.l.b16 %v54
  %v392 = vunpack.c.h.b16 %v54
  %v393 = vunpack.c.l.b16 %v55
  %v394 = vunpack.c.h.b16 %v55
  %v395 = vunpack.c.l.b16 %v56
  %v396 = vunpack.c.h.b16 %v56
  %v397 = vunpack.c.l.b16 %v57
  %v398 = vunpack.c.h.b16 %v57
  %v399 = vunpack.c.l.b16 %v58
  %v400 = vunpack.c.h.b16 %v58
  %v401 = vunpack.c.l.b16 %v59
  %v402 = vunpack.c.h.b16 %v59
  %v403 = vunpack.c.l.b16 %v60
  %v404 = vunpack.c.h.b16 %v60
  %v405 = vunpack.c.l.b16 %v61
  %v406 = vunpack.c.h.b16 %v61
  %v407 = vunpack.c.l.b16 %v62
  %v408 = vunpack.c.h.b16 %v62
  %v409 = vunpack.c.l.b16 %v63
  %v410 = vunpack.c.h.b16 %v63
  %v411 = vunpack.c.l.b16 %v64
  %v412 = vunpack.c.h.b16 %v64
  %v413 = vunpack.c.l.b16 %v65
  %v414 = vunpack.c.h.b16 %v65
  %v415 = vunpack.c.l.b16 %v66
  %v416 = vunpack.c.h.b16 %v66
  %v417 = vunpack.c.l.b16 %v67
  %v418 = vunpack.c.h.b16 %v67
  %v419 = vunpack.c.l.b16 %v68
  %v420 = vunpack.c.h.b16 %v68
  %v421 = vunpack.c.l.b16 %v69
  %v422 = vunpack.c.h.b16 %v69
  %v423 = vunpack.c.l.b16 %v70
  %v424 = vunpack.c.h.b16 %v70
  %v425 = vunpack.c.l.b16 %v71
  %v426 = vunpack.c.h.b16 %v71
  %v427 = vunpack.c.l.b16 %v72
  %v428 = vunpack.c.h.b16 %v72
  %v429 = vunpack.c.l.b16 %v73
  %v430 = vunpack.c.h.b16 %v73
  %v431 = vunpack.c.l.b16 %v74
  %v432 = vunpack.c.h.b16 %v74
  %v433 = vunpack.c.l.b16 %v75
  %v434 = vunpack.c.h.b16 %v75
  %v435 = vunpack.c.l.b16 %v76
  %v436 = vunpack.c.h.b16 %v76
  %v437 = vunpack.c.l.b16 %v77
  %v438 = vunpack.c.h.b16 %v77
  %v439 = vunpack.c.l.b16 %v78
  %v440 = vunpack.c.h.b16 %v78
  %v441 = vunpack.c.l.b16 %v79
  %v442 = vunpack.c.h.b16 %v79
  %v443 = vunpack.c.l.b16 %v80
  %v444 = vunpack.c.h.b16 %v80
  %v445 = vunpack.c.l.b16 %v81
  %v446 = vunpack.c.h.b16 %v81
  %v447 = vunpack.c.l.b16 %v82
  %v448 = vunpack.c.h.b16 %v82
  %v449 = vunpack.c.l.b16 %v83
  %v450 = vunpack.c.h.b16 %v83
  %v451 = vunpack.c.l.b16 %v84
  %v452 = vunpack.c.h.b16 %v84
  %v453 = vunpack.c.l.b16 %v85
  %v454 = vunpack.c.h.b16 %v85
  %v455 = vunpack.c.l.b16 %v86
  %v456 = vunpack.c.h.b16 %v86
  %v457 = vunpack.c.l.b16 %v87
  %v458 = vunpack.c.h.b16 %v87
  %v459 = vunpack.c.l.b16 %v88
  %v460 = vunpack.c.h.b16 %v88
  %v461 = vunpack.c.l.b16 %v89
  %v462 = vunpack.c.h.b16 %v89
  %v463 = vunpack.c.l.b16 %v90
  %v464 = vunpack.c.h.b16 %v90
  %v465 = vunpack.c.l.b16 %v91
  %v466 = vunpack.c.h.b16 %v91
  %v467 = vunpack.c.l.b16 %v92
  %v468 = vunpack.c.h.b16 %v92
  %v469 = vunpack.c.l.b16 %v93
  %v470 = vunpack.c.h.b16 %v93
  %v471 = vunpack.c.l.b16 %v94
  %v472 = vunpack.c.h.b16 %v94
  %v473 = vunpack.c.l.b16 %v95
  %v474 = vunpack.c.h.b16 %v95
  %v475 = vunpack.c.l.b16 %v96
  %v476 = vunpack.c.h.b16 %v96
  %v477 = vunpack.c.l.b16 %v97
  %v478 = vunpack.c.h.b16 %v97
  %v479 = vunpack.c.l.b16 %v98
  %v480 = vunpack.c.h.b16 %v98
  %v481 = vunpack.c.l.b16 %v99
  %v482 = vunpack.c.h.b16 %v99
  %v483 = vunpack.c.l.b16 %v100
  %v484 = vunpack.c.h.b16 %v100
  %v485 = vunpack.c.l.b16 %v101
  %v486 = vunpack.c.h.b16 %v101
  %v487 = vunpack.c.l.b16 %v102
  %v488 = vunpack.c.h.b16 %v102
  %v489 = vunpack.c.l.b16 %v103
  %v490 = vunpack.c.h.b16 %v103
  %v491 = vunpack.c.l.b16 %v104
  %v492 = vunpack.c.h.b16 %v104
  %v493 = vunpack.c.l.b16 %v105
  %v494 = vunpack.c.h.b16 %v105
  %v495 = vunpack.c.l.b16 %v106
  %v496 = vunpack.c.h.b16 %v106
  %v497 = vunpack.c.l.b16 %v107
  %v498 = vunpack.c.h.b16 %v107
  %v499 = vunpack.c.l.b16 %v108
  %v500 = vunpack.c.h.b16 %v108
  %v501 = vunpack.c.l.b16 %v109
  %v502 = vunpack.c.h.b16 %v109
  %v503 = vunpack.c.l.b16 %v110
  %v504 = vunpack.c.h.b16 %v110
  %v505 = vunpack.c.l.b16 %v111
  %v506 = vunpack.c.h.b16 %v111
  %v507 = vunpack.c.l.b16 %v112
  %v508 = vunpack.c.h.b16 %v112
  %v509 = vunpack.c.l.b16 %v113
  %v510 = vunpack.c.h.b16 %v113
  %v511 = vunpack.c.l.b16 %v114
  %v512 = vunpack.c.h.b16 %v114
  %v513 = vunpack.c.l.b16 %v115
  %v514 = vunpack.c.h.b16 %v115
  %v515 = vunpack.c.l.b16 %v116
  %v516 = vunpack.c.h.b16 %v116
  %v517 = vunpack.c.l.b16 %v117
  %v518 = vunpack.c.h.b16 %v117
  %v519 = vunpack.c.l.b16 %v118
  %v520 = vunpack.c.h.b16 %v118
  %v521 = vunpack.c.l.b16 %v119
  %v522 = vunpack.c.h.b16 %v119
  %v523 = vunpack.c.l.b16 %v120
  %v524 = vunpack.c.h.b16 %v120
  %v525 = vunpack.c.l.b16 %v121
  %v526 = vunpack.c.h.b16 %v121
  %v527 = vunpack.c.l.b16 %v122
  %v528 = vunpack.c.h.b16 %v122
  %v529 = vunpack.c.l.b16 %v123
  %v530 = vunpack.c.h.b16 %v123
  %v531 = vunpack.c.l.b16 %v124
  %v532 = vunpack.c.h.b16 %v124
  %v533 = vunpack.c.l.b16 %v125
  %v534 = vunpack.c.h.b16 %v125
  %v535 = vunpack.c.l.b16 %v126
  %v536 = vunpack.c.h.b16 %v126
  %v537 = vunpack.c.l.b16 %v127
  %v538 = vunpack.c.h.b16 %v127
  %v539 = vunpack.c.l.b16 %v128
  %v540 = vunpack.c.h.b16 %v128
  %v541 = vunpack.c.l.b16 %v129
  %v542 = vunpack.c.h.b16 %v129
  %v543 = vunpack.c.l.b16 %v130
  %v544 = vunpack.c.h.b16 %v130
  %v545 = vunpack.c.l.b16 %v131
  %v546 = vunpack.c.h.b16 %v131
  %v547 = vunpack.c.l.b16 %v132
  %v548 = vunpack.c.h.b16 %v132
  %v549 = vunpack.c.l.b16 %v133
  %v550 = vunpack.c.h.b16 %v133
  %v551 = vunpack.c.l.b16 %v134
  %v552 = vunpack.c.h.b16 %v134
  %v553 = vunpack.c.l.b16 %v135
  %v554 = vunpack.c.h.b16 %v135
  %v555 = vunpack.c.l.b16 %v136
  %v556 = vunpack.c.h.b16 %v136
  %v557 = vunpack.c.l.b16 %v137
  %v558 = vunpack.c.h.b16 %v137
  %v559 = vunpack.c.l.b16 %v138
  %v560 = vunpack.c.h.b16 %v138
  %v561 = vunpack.c.l.b16 %v139
  %v562 = vunpack.c.h.b16 %v139
  %v563 = vunpack.c.l.b16 %v140
  %v564 = vunpack.c.h.b16 %v140
  %v565 = vunpack.c.l.b16 %v141
  %v566 = vunpack.c.h.b16 %v141
  %v567 = vunpack.c.l.b16 %v142
  %v568 = vunpack.c.h.b16 %v142
  %v569 = vunpack.c.l.b16 %v143
  %v570 = vunpack.c.h.b16 %v143
  %v571 = vunpack.c.l.b16 %v144
  %v572 = vunpack.c.h.b16 %v144
  %v573 = vunpack.c.l.b16 %v145
  %v574 = vunpack.c.h.b16 %v145
  %v575 = vunpack.c.l.b16 %v146
  %v576 = vunpack.c.h.b16 %v146
  %v577 = vunpack.c.l.b16 %v147
  %v578 = vunpack.c.h.b16 %v147
  %v579 = vunpack.c.l.b16 %v148
  %v580 = vunpack.c.h.b16 %v148
  %v581 = vunpack.c.l.b16 %v149
  %v582 = vunpack.c.h.b16 %v149
  %v583 = vunpack.c.l.b16 %v150
  %v584 = vunpack.c.h.b16 %v150
  %v585 = vunpack.c.l.b16 %v151
  %v586 = vunpack.c.h.b16 %v151
  %v587 = vunpack.c.l.b16 %v152
  %v588 = vunpack.c.h.b16 %v152
  %v589 = vunpack.c.l.b16 %v153
  %v590 = vunpack.c.h.b16 %v153
  %v591 = vunpack.c.l.b16 %v154
  %v592 = vunpack.c.h.b16 %v154
  %v593 = vunpack.c.l.b16 %v155
  %v594 = vunpack.c.h.b16 %v155
  %v595 = vunpack.c.l.b16 %v156
  %v596 = vunpack.c.h.b16 %v156
  %v597 = vunpack.c.l.b16 %v157
  %v598 = vunpack.c.h.b16 %v157
  %v599 = vpack.c.b16 %v327, %v311
  %v600 = vpack.c.b16 %v328, %v312
  %v601 = vpack.c.b16 %v329, %v313
  %v602 = vpack.c.b16 %v330, %v314
  %v603 = vpack.c.b16 %v331, %v315
  %v604 = vpack.c.b16 %v332, %v316
  %v605 = vpack.c.b16 %v333, %v317
  %v606 = vpack.c.b16 %v334, %v318
  %v607 = vpack.c.b16 %v335, %v319
  %v608 = vpack.c.b16 %v336, %v320
  %v609 = vpack.c.b16 %v337, %v321
  %v610 = vpack.c.b16 %v338, %v322
  %v611 = vpack.c.b16 %v339, %v323
  %v612 = vpack.c.b16 %v340, %v324
  %v613 = vpack.c.b16 %v341, %v325
  %v614 = vpack.c.b16 %v342, %v326
  %v615 = vpack.c.b16 %v359, %v343
  %v616 = vpack.c.b16 %v360, %v344
  %v617 = vpack.c.b16 %v361, %v345
  %v618 = vpack.c.b16 %v362, %v346
  %v619 = vpack.c.b16 %v363, %v347
  %v620 = vpack.c.b16 %v364, %v348
  %v621 = vpack.c.b16 %v365, %v349
  %v622 = vpack.c.b16 %v366, %v350
  %v623 = vpack.c.b16 %v367, %v351
  %v624 = vpack.c.b16 %v368, %v352
  %v625 = vpack.c.b16 %v369, %v353
  %v626 = vpack.c.b16 %v370, %v354
  %v627 = vpack.c.b16 %v371, %v355
  %v628 = vpack.c.b16 %v372, %v356
  %v629 = vpack.c.b16 %v373, %v357
  %v630 = vpack.c.b16 %v374, %v358
  %v631 = vpack.c.b16 %v391, %v375
  %v632 = vpack.c.b16 %v392, %v376
  %v633 = vpack.c.b16 %v393, %v377
  %v634 = vpack.c.b16 %v394, %v378
  %v635 = vpack.c.b16 %v395, %v379
  %v636 = vpack.c.b16 %v396, %v380
  %v637 = vpack.c.b16 %v397, %v381
  %v638 = vpack.c.b16 %v398, %v382
  %v639 = vpack.c.b16 %v399, %v383
  %v640 = vpack.c.b16 %v400, %v384
  %v641 = vpack.c.b16 %v401, %v385
  %v642 = vpack.c.b16 %v402, %v386
  %v643 = vpack.c.b16 %v403, %v387
  %v644 = vpack.c.b16 %v404, %v388
  %v645 = vpack.c.b16 %v405, %v389
  %v646 = vpack.c.b16 %v406, %v390
  %v647 = vpack.c.b16 %v423, %v407
  %v648 = vpack.c.b16 %v424, %v408
  %v649 = vpack.c.b16 %v425, %v409
  %v650 = vpack.c.b16 %v426, %v410
  %v651 = vpack.c.b16 %v427, %v411
  %v652 = vpack.c.b16 %v428, %v412
  %v653 = vpack.c.b16 %v429, %v413
  %v654 = vpack.c.b16 %v430, %v414
  %v655 = vpack.c.b16 %v431, %v415
  %v656 = vpack.c.b16 %v432, %v416
  %v657 = vpack.c.b16 %v433, %v417
  %v658 = vpack.c.b16 %v434, %v418
  %v659 = vpack.c.b16 %v435, %v419
  %v660 = vpack.c.b16 %v436, %v420
  %v661 = vpack.c.b16 %v437, %v421
  %v662 = vpack.c.b16 %v438, %v422
  %v663 = vpack.c.b16 %v455, %v439
  %v664 = vpack.c.b16 %v456, %v440
  %v665 = vpack.c.b16 %v457, %v441
  %v666 = vpack.c.b16 %v458, %v442
  %v667 = vpack.c.b16 %v459, %v443
  %v668 = vpack.c.b16 %v460, %v444
  %v669 = vpack.c.b16 %v461, %v445
  %v670 = vpack.c.b16 %v462, %v446
  %v671 = vpack.c.b16 %v463, %v447
  %v672 = vpack.c.b16 %v464, %v448
  %v673 = vpack.c.b16 %v465, %v449
  %v674 = vpack.c.b16 %v466, %v450
  %v675 = vpack.c.b16 %v467, %v451
  %v676 = vpack.c.b16 %v468, %v452
  %v677 = vpack.c.b16 %v469, %v453
  %v678 = vpack.c.b16 %v470, %v454
  %v679 = vpack.c.b16 %v487, %v471
  %v680 = vpack.c.b16 %v488, %v472
  %v681 = vpack.c.b16 %v489, %v473
  %v682 = vpack.c.b16 %v490, %v474
  %v683 = vpack.c.b16 %v491, %v475
  %v684 = vpack.c.b16 %v492, %v476
  %v685 = vpack.c.b16 %v493, %v477
  %v686 = vpack.c.b16 %v494, %v478
  %v687 = vpack.c.b16 %v495, %v479
  %v688 = vpack.c.b16 %v496, %v480
  %v689 = vpack.c.b16 %v497, %v481
  %v690 = vpack.c.b16 %v498, %v482
  %v691 = vpack.c.b16 %v499, %v483
  %v692 = vpack.c.b16 %v500, %v484
  %v693 = vpack.c.b16 %v501, %v485
  %v694 = vpack.c.b16 %v502, %v486
  %v695 = vpack.c.b16 %v519, %v503
  %v696 = vpack.c.b16 %v520, %v504
  %v697 = vpack.c.b16 %v521, %v505
  %v698 = vpack.c.b16 %v522, %v506
  %v699 = vpack.c.b16 %v523, %v507
  %v700 = vpack.c.b16 %v524, %v508
  %v701 = vpack.c.b16 %v525, %v509
  %v702 = vpack.c.b16 %v526, %v510
  %v703 = vpack.c.b16 %v527, %v511
  %v704 = vpack.c.b16 %v528, %v512
  %v705 = vpack.c.b16 %v529, %v513
  %v706 = vpack.c.b16 %v530, %v514
  %v707 = vpack.c.b16 %v531, %v515
  %v708 = vpack.c.b16 %v532, %v516
  %v709 = vpack.c.b16 %v533, %v517
  %v710 = vpack.c.b16 %v534, %v518
  %v711 = vpack.c.b16 %v551, %v535
  %v712 = vpack.c.b16 %v552, %v536
  %v713 = vpack.c.b16 %v553, %v537
  %v714 = vpack.c.b16 %v554, %v538
  %v715 = vpack.c.b16 %v555, %v539
  %v716 = vpack.c.b16 %v556, %v540
  %v717 = vpack.c.b16 %v557, %v541
  %v718 = vpack.c.b16 %v558, %v542
  %v719 = vpack.c.b16 %v559, %v543
  %v720 = vpack.c.b16 %v560, %v544
  %v721 = vpack.c.b16 %v561, %v545
  %v722 = vpack.c.b16 %v562, %v546
  %v723 = vpack.c.b16 %v563, %v547
  %v724 = vpack.c.b16 %v564, %v548
  %v725 = vpack.c.b16 %v565, %v549
  %v726 = vpack.c.b16 %v566, %v550
  %v727 = vpack.c.b16 %v583, %v567
  %v728 = vpack.c.b16 %v584, %v568
  %v729 = vpack.c.b16 %v585, %v569
  %v730 = vpack.c.b16 %v586, %v570
  %v731 = vpack.c.b16 %v587, %v571
  %v732 = vpack.c.b16 %v588, %v572
  %v733 = vpack.c.b16 %v589, %v573
  %v734 = vpack.c.b16 %v590, %v574
  %v735 = vpack.c.b16 %v591, %v575
  %v736 = vpack.c.b16 %v592, %v576
  %v737 = vpack.c.b16 %v593, %v577
  %v738 = vpack.c.b16 %v594, %v578
  %v739 = vpack.c.b16 %v595, %v579
  %v740 = vpack.c.b16 %v596, %v580
  %v741 = vpack.c.b16 %v597, %v581
  %v742 = vpack.c.b16 %v598, %v582
  %vm887 = vcmask 130048
  %v889 = vsel %vm887, %v165, 0
  %891 = vmatprep.subr.bf16.mxu0 %v600
  %892 = vmatpush1.bf16.msra.mxu0 %v599
  %893 = vmatprep.subr.bf16.mxu0 %v616
  %894 = vmatpush1.bf16.msra.mxu0 %v615
  %895 = vmatprep.subr.bf16.mxu0 %v632
  %896 = vmatpush1.bf16.msra.mxu0 %v631
  %897 = vmatprep.subr.bf16.mxu0 %v648
  %898 = vmatpush1.bf16.msra.mxu0 %v647
  %899 = vmatprep.subr.bf16.mxu0 %v664
  %900 = vmatpush1.bf16.msra.mxu0 %v663
  %901 = vmatprep.subr.bf16.mxu0 %v680
  %902 = vmatpush1.bf16.msra.mxu0 %v679
  %903 = vmatprep.subr.bf16.mxu0 %v696
  %904 = vmatpush1.bf16.msra.mxu0 %v695
  %905 = vmatprep.subr.bf16.mxu0 %v712
  %906 = vmatpush1.bf16.msra.mxu0 %v711
  %907 = vmatprep.subr.bf16.mxu0 %v728
  %908 = vmatpush1.bf16.msra.mxu0 %v727
  %909 = vmatprep.subr.bf16.mxu0 0
  %910 = vmatpush1.bf16.msra.mxu0 0
  %911 = vmatprep.subr.bf16.mxu0 0
  %912 = vmatpush1.bf16.msra.mxu0 0
  %913 = vmatprep.subr.bf16.mxu0 0
  %914 = vmatpush1.bf16.msra.mxu0 0
  %915 = vmatprep.subr.bf16.mxu0 0
  %916 = vmatpush1.bf16.msra.mxu0 0
  %917 = vmatprep.subr.bf16.mxu0 0
  %918 = vmatpush1.bf16.msra.mxu0 0
  %919 = vmatprep.subr.bf16.mxu0 0
  %920 = vmatpush1.bf16.msra.mxu0 0
  %921 = vmatprep.subr.bf16.mxu0 0
  %922 = vmatpush1.bf16.msra.mxu0 0
  %923 = vmatprep.mubr.bf16.mxu0 %v889
  %924 = vmatmul.mubr.bf16.gmra.mrb[0].mxu0 %v164
  %v925 = vpop.f32.mrb[0].mxu0
  %v926 = vadd.f32 0.0, %v925
  %v927 = vpop.f32.mrb[0].mxu0
  %v928 = vadd.f32 0.0, %v927
  %v929 = vpop.f32.mrb[0].mxu0
  %v930 = vadd.f32 0.0, %v929
  %v931 = vpop.f32.mrb[0].mxu0
  %v932 = vadd.f32 0.0, %v931
  %933 = vdwg.mxu0
  %934 = vmatprep.subr.bf16.mxu0 %v602
  %935 = vmatpush1.bf16.msra.mxu0 %v601
  %936 = vmatprep.subr.bf16.mxu0 %v618
  %937 = vmatpush1.bf16.msra.mxu0 %v617
  %938 = vmatprep.subr.bf16.mxu0 %v634
  %939 = vmatpush1.bf16.msra.mxu0 %v633
  %940 = vmatprep.subr.bf16.mxu0 %v650
  %941 = vmatpush1.bf16.msra.mxu0 %v649
  %942 = vmatprep.subr.bf16.mxu0 %v666
  %943 = vmatpush1.bf16.msra.mxu0 %v665
  %944 = vmatprep.subr.bf16.mxu0 %v682
  %945 = vmatpush1.bf16.msra.mxu0 %v681
  %946 = vmatprep.subr.bf16.mxu0 %v698
  %947 = vmatpush1.bf16.msra.mxu0 %v697
  %948 = vmatprep.subr.bf16.mxu0 %v714
  %949 = vmatpush1.bf16.msra.mxu0 %v713
  %950 = vmatprep.subr.bf16.mxu0 %v730
  %951 = vmatpush1.bf16.msra.mxu0 %v729
  %952 = vmatprep.subr.bf16.mxu0 0
  %953 = vmatpush1.bf16.msra.mxu0 0
  %954 = vmatprep.subr.bf16.mxu0 0
  %955 = vmatpush1.bf16.msra.mxu0 0
  %956 = vmatprep.subr.bf16.mxu0 0
  %957 = vmatpush1.bf16.msra.mxu0 0
  %958 = vmatprep.subr.bf16.mxu0 0
  %959 = vmatpush1.bf16.msra.mxu0 0
  %960 = vmatprep.subr.bf16.mxu0 0
  %961 = vmatpush1.bf16.msra.mxu0 0
  %962 = vmatprep.subr.bf16.mxu0 0
  %963 = vmatpush1.bf16.msra.mxu0 0
  %964 = vmatprep.subr.bf16.mxu0 0
  %965 = vmatpush1.bf16.msra.mxu0 0
  %966 = vmatprep.mubr.bf16.mxu0 %v889
  %967 = vmatmul.mubr.bf16.gmra.mrb[0].mxu0 %v164
  %v968 = vpop.f32.mrb[0].mxu0
  %v969 = vadd.f32 0.0, %v968
  %v970 = vpop.f32.mrb[0].mxu0
  %v971 = vadd.f32 0.0, %v970
  %v972 = vpop.f32.mrb[0].mxu0
  %v973 = vadd.f32 0.0, %v972
  %v974 = vpop.f32.mrb[0].mxu0
  %v975 = vadd.f32 0.0, %v974
  %976 = vdwg.mxu0
  %977 = vmatprep.subr.bf16.mxu0 %v604
  %978 = vmatpush1.bf16.msra.mxu0 %v603
  %979 = vmatprep.subr.bf16.mxu0 %v620
  %980 = vmatpush1.bf16.msra.mxu0 %v619
  %981 = vmatprep.subr.bf16.mxu0 %v636
  %982 = vmatpush1.bf16.msra.mxu0 %v635
  %983 = vmatprep.subr.bf16.mxu0 %v652
  %984 = vmatpush1.bf16.msra.mxu0 %v651
  %985 = vmatprep.subr.bf16.mxu0 %v668
  %986 = vmatpush1.bf16.msra.mxu0 %v667
  %987 = vmatprep.subr.bf16.mxu0 %v684
  %988 = vmatpush1.bf16.msra.mxu0 %v683
  %989 = vmatprep.subr.bf16.mxu0 %v700
  %990 = vmatpush1.bf16.msra.mxu0 %v699
  %991 = vmatprep.subr.bf16.mxu0 %v716
  %992 = vmatpush1.bf16.msra.mxu0 %v715
  %993 = vmatprep.subr.bf16.mxu0 %v732
  %994 = vmatpush1.bf16.msra.mxu0 %v731
  %995 = vmatprep.subr.bf16.mxu0 0
  %996 = vmatpush1.bf16.msra.mxu0 0
  %997 = vmatprep.subr.bf16.mxu0 0
  %998 = vmatpush1.bf16.msra.mxu0 0
  %999 = vmatprep.subr.bf16.mxu0 0
  %1000 = vmatpush1.bf16.msra.mxu0 0
  %1001 = vmatprep.subr.bf16.mxu0 0
  %1002 = vmatpush1.bf16.msra.mxu0 0
  %1003 = vmatprep.subr.bf16.mxu0 0
  %1004 = vmatpush1.bf16.msra.mxu0 0
  %1005 = vmatprep.subr.bf16.mxu0 0
  %1006 = vmatpush1.bf16.msra.mxu0 0
  %1007 = vmatprep.subr.bf16.mxu0 0
  %1008 = vmatpush1.bf16.msra.mxu0 0
  %1009 = vmatprep.mubr.bf16.mxu0 %v889
  %1010 = vmatmul.mubr.bf16.gmra.mrb[0].mxu0 %v164
  %v1011 = vpop.f32.mrb[0].mxu0
  %v1012 = vadd.f32 0.0, %v1011
  %v1013 = vpop.f32.mrb[0].mxu0
  %v1014 = vadd.f32 0.0, %v1013
  %v1015 = vpop.f32.mrb[0].mxu0
  %v1016 = vadd.f32 0.0, %v1015
  %v1017 = vpop.f32.mrb[0].mxu0
  %v1018 = vadd.f32 0.0, %v1017
  %1019 = vdwg.mxu0
  %1020 = vmatprep.subr.bf16.mxu0 %v606
  %1021 = vmatpush1.bf16.msra.mxu0 %v605
  %1022 = vmatprep.subr.bf16.mxu0 %v622
  %1023 = vmatpush1.bf16.msra.mxu0 %v621
  %1024 = vmatprep.subr.bf16.mxu0 %v638
  %1025 = vmatpush1.bf16.msra.mxu0 %v637
  %1026 = vmatprep.subr.bf16.mxu0 %v654
  %1027 = vmatpush1.bf16.msra.mxu0 %v653
  %1028 = vmatprep.subr.bf16.mxu0 %v670
  %1029 = vmatpush1.bf16.msra.mxu0 %v669
  %1030 = vmatprep.subr.bf16.mxu0 %v686
  %1031 = vmatpush1.bf16.msra.mxu0 %v685
  %1032 = vmatprep.subr.bf16.mxu0 %v702
  %1033 = vmatpush1.bf16.msra.mxu0 %v701
  %1034 = vmatprep.subr.bf16.mxu0 %v718
  %1035 = vmatpush1.bf16.msra.mxu0 %v717
  %1036 = vmatprep.subr.bf16.mxu0 %v734
  %1037 = vmatpush1.bf16.msra.mxu0 %v733
  %1038 = vmatprep.subr.bf16.mxu0 0
  %1039 = vmatpush1.bf16.msra.mxu0 0
  %1040 = vmatprep.subr.bf16.mxu0 0
  %1041 = vmatpush1.bf16.msra.mxu0 0
  %1042 = vmatprep.subr.bf16.mxu0 0
  %1043 = vmatpush1.bf16.msra.mxu0 0
  %1044 = vmatprep.subr.bf16.mxu0 0
  %1045 = vmatpush1.bf16.msra.mxu0 0
  %1046 = vmatprep.subr.bf16.mxu0 0
  %1047 = vmatpush1.bf16.msra.mxu0 0
  %1048 = vmatprep.subr.bf16.mxu0 0
  %1049 = vmatpush1.bf16.msra.mxu0 0
  %1050 = vmatprep.subr.bf16.mxu0 0
  %1051 = vmatpush1.bf16.msra.mxu0 0
  %1052 = vmatprep.mubr.bf16.mxu0 %v889
  %1053 = vmatmul.mubr.bf16.gmra.mrb[0].mxu0 %v164
  %v1054 = vpop.f32.mrb[0].mxu0
  %v1055 = vadd.f32 0.0, %v1054
  %v1056 = vpop.f32.mrb[0].mxu0
  %v1057 = vadd.f32 0.0, %v1056
  %v1058 = vpop.f32.mrb[0].mxu0
  %v1059 = vadd.f32 0.0, %v1058
  %v1060 = vpop.f32.mrb[0].mxu0
  %v1061 = vadd.f32 0.0, %v1060
  %1062 = vdwg.mxu0
  %1063 = vmatprep.subr.bf16.mxu0 %v608
  %1064 = vmatpush1.bf16.msra.mxu0 %v607
  %1065 = vmatprep.subr.bf16.mxu0 %v624
  %1066 = vmatpush1.bf16.msra.mxu0 %v623
  %1067 = vmatprep.subr.bf16.mxu0 %v640
  %1068 = vmatpush1.bf16.msra.mxu0 %v639
  %1069 = vmatprep.subr.bf16.mxu0 %v656
  %1070 = vmatpush1.bf16.msra.mxu0 %v655
  %1071 = vmatprep.subr.bf16.mxu0 %v672
  %1072 = vmatpush1.bf16.msra.mxu0 %v671
  %1073 = vmatprep.subr.bf16.mxu0 %v688
  %1074 = vmatpush1.bf16.msra.mxu0 %v687
  %1075 = vmatprep.subr.bf16.mxu0 %v704
  %1076 = vmatpush1.bf16.msra.mxu0 %v703
  %1077 = vmatprep.subr.bf16.mxu0 %v720
  %1078 = vmatpush1.bf16.msra.mxu0 %v719
  %1079 = vmatprep.subr.bf16.mxu0 %v736
  %1080 = vmatpush1.bf16.msra.mxu0 %v735
  %1081 = vmatprep.subr.bf16.mxu0 0
  %1082 = vmatpush1.bf16.msra.mxu0 0
  %1083 = vmatprep.subr.bf16.mxu0 0
  %1084 = vmatpush1.bf16.msra.mxu0 0
  %1085 = vmatprep.subr.bf16.mxu0 0
  %1086 = vmatpush1.bf16.msra.mxu0 0
  %1087 = vmatprep.subr.bf16.mxu0 0
  %1088 = vmatpush1.bf16.msra.mxu0 0
  %1089 = vmatprep.subr.bf16.mxu0 0
  %1090 = vmatpush1.bf16.msra.mxu0 0
  %1091 = vmatprep.subr.bf16.mxu0 0
  %1092 = vmatpush1.bf16.msra.mxu0 0
  %1093 = vmatprep.subr.bf16.mxu0 0
  %1094 = vmatpush1.bf16.msra.mxu0 0
  %1095 = vmatprep.mubr.bf16.mxu0 %v889
  %1096 = vmatmul.mubr.bf16.gmra.mrb[0].mxu0 %v164
  %v1097 = vpop.f32.mrb[0].mxu0
  %v1098 = vadd.f32 0.0, %v1097
  %v1099 = vpop.f32.mrb[0].mxu0
  %v1100 = vadd.f32 0.0, %v1099
  %v1101 = vpop.f32.mrb[0].mxu0
  %v1102 = vadd.f32 0.0, %v1101
  %v1103 = vpop.f32.mrb[0].mxu0
  %v1104 = vadd.f32 0.0, %v1103
  %1105 = vdwg.mxu0
  %1106 = vmatprep.subr.bf16.mxu0 %v610
  %1107 = vmatpush1.bf16.msra.mxu0 %v609
  %1108 = vmatprep.subr.bf16.mxu0 %v626
  %1109 = vmatpush1.bf16.msra.mxu0 %v625
  %1110 = vmatprep.subr.bf16.mxu0 %v642
  %1111 = vmatpush1.bf16.msra.mxu0 %v641
  %1112 = vmatprep.subr.bf16.mxu0 %v658
  %1113 = vmatpush1.bf16.msra.mxu0 %v657
  %1114 = vmatprep.subr.bf16.mxu0 %v674
  %1115 = vmatpush1.bf16.msra.mxu0 %v673
  %1116 = vmatprep.subr.bf16.mxu0 %v690
  %1117 = vmatpush1.bf16.msra.mxu0 %v689
  %1118 = vmatprep.subr.bf16.mxu0 %v706
  %1119 = vmatpush1.bf16.msra.mxu0 %v705
  %1120 = vmatprep.subr.bf16.mxu0 %v722
  %1121 = vmatpush1.bf16.msra.mxu0 %v721
  %1122 = vmatprep.subr.bf16.mxu0 %v738
  %1123 = vmatpush1.bf16.msra.mxu0 %v737
  %1124 = vmatprep.subr.bf16.mxu0 0
  %1125 = vmatpush1.bf16.msra.mxu0 0
  %1126 = vmatprep.subr.bf16.mxu0 0
  %1127 = vmatpush1.bf16.msra.mxu0 0
  %1128 = vmatprep.subr.bf16.mxu0 0
  %1129 = vmatpush1.bf16.msra.mxu0 0
  %1130 = vmatprep.subr.bf16.mxu0 0
  %1131 = vmatpush1.bf16.msra.mxu0 0
  %1132 = vmatprep.subr.bf16.mxu0 0
  %1133 = vmatpush1.bf16.msra.mxu0 0
  %1134 = vmatprep.subr.bf16.mxu0 0
  %1135 = vmatpush1.bf16.msra.mxu0 0
  %1136 = vmatprep.subr.bf16.mxu0 0
  %1137 = vmatpush1.bf16.msra.mxu0 0
  %1138 = vmatprep.mubr.bf16.mxu0 %v889
  %1139 = vmatmul.mubr.bf16.gmra.mrb[0].mxu0 %v164
  %v1140 = vpop.f32.mrb[0].mxu0
  %v1141 = vadd.f32 0.0, %v1140
  %v1142 = vpop.f32.mrb[0].mxu0
  %v1143 = vadd.f32 0.0, %v1142
  %v1144 = vpop.f32.mrb[0].mxu0
  %v1145 = vadd.f32 0.0, %v1144
  %v1146 = vpop.f32.mrb[0].mxu0
  %v1147 = vadd.f32 0.0, %v1146
  %1148 = vdwg.mxu0
  %1149 = vmatprep.subr.bf16.mxu0 %v612
  %1150 = vmatpush1.bf16.msra.mxu0 %v611
  %1151 = vmatprep.subr.bf16.mxu0 %v628
  %1152 = vmatpush1.bf16.msra.mxu0 %v627
  %1153 = vmatprep.subr.bf16.mxu0 %v644
  %1154 = vmatpush1.bf16.msra.mxu0 %v643
  %1155 = vmatprep.subr.bf16.mxu0 %v660
  %1156 = vmatpush1.bf16.msra.mxu0 %v659
  %1157 = vmatprep.subr.bf16.mxu0 %v676
  %1158 = vmatpush1.bf16.msra.mxu0 %v675
  %1159 = vmatprep.subr.bf16.mxu0 %v692
  %1160 = vmatpush1.bf16.msra.mxu0 %v691
  %1161 = vmatprep.subr.bf16.mxu0 %v708
  %1162 = vmatpush1.bf16.msra.mxu0 %v707
  %1163 = vmatprep.subr.bf16.mxu0 %v724
  %1164 = vmatpush1.bf16.msra.mxu0 %v723
  %1165 = vmatprep.subr.bf16.mxu0 %v740
  %1166 = vmatpush1.bf16.msra.mxu0 %v739
  %1167 = vmatprep.subr.bf16.mxu0 0
  %1168 = vmatpush1.bf16.msra.mxu0 0
  %1169 = vmatprep.subr.bf16.mxu0 0
  %1170 = vmatpush1.bf16.msra.mxu0 0
  %1171 = vmatprep.subr.bf16.mxu0 0
  %1172 = vmatpush1.bf16.msra.mxu0 0
  %1173 = vmatprep.subr.bf16.mxu0 0
  %1174 = vmatpush1.bf16.msra.mxu0 0
  %1175 = vmatprep.subr.bf16.mxu0 0
  %1176 = vmatpush1.bf16.msra.mxu0 0
  %1177 = vmatprep.subr.bf16.mxu0 0
  %1178 = vmatpush1.bf16.msra.mxu0 0
  %1179 = vmatprep.subr.bf16.mxu0 0
  %1180 = vmatpush1.bf16.msra.mxu0 0
  %1181 = vmatprep.mubr.bf16.mxu0 %v889
  %1182 = vmatmul.mubr.bf16.gmra.mrb[0].mxu0 %v164
  %v1183 = vpop.f32.mrb[0].mxu0
  %v1184 = vadd.f32 0.0, %v1183
  %v1185 = vpop.f32.mrb[0].mxu0
  %v1186 = vadd.f32 0.0, %v1185
  %v1187 = vpop.f32.mrb[0].mxu0
  %v1188 = vadd.f32 0.0, %v1187
  %v1189 = vpop.f32.mrb[0].mxu0
  %v1190 = vadd.f32 0.0, %v1189
  %1191 = vdwg.mxu0
  %1192 = vmatprep.subr.bf16.mxu0 %v614
  %1193 = vmatpush1.bf16.msra.mxu0 %v613
  %1194 = vmatprep.subr.bf16.mxu0 %v630
  %1195 = vmatpush1.bf16.msra.mxu0 %v629
  %1196 = vmatprep.subr.bf16.mxu0 %v646
  %1197 = vmatpush1.bf16.msra.mxu0 %v645
  %1198 = vmatprep.subr.bf16.mxu0 %v662
  %1199 = vmatpush1.bf16.msra.mxu0 %v661
  %1200 = vmatprep.subr.bf16.mxu0 %v678
  %1201 = vmatpush1.bf16.msra.mxu0 %v677
  %1202 = vmatprep.subr.bf16.mxu0 %v694
  %1203 = vmatpush1.bf16.msra.mxu0 %v693
  %1204 = vmatprep.subr.bf16.mxu0 %v710
  %1205 = vmatpush1.bf16.msra.mxu0 %v709
  %1206 = vmatprep.subr.bf16.mxu0 %v726
  %1207 = vmatpush1.bf16.msra.mxu0 %v725
  %1208 = vmatprep.subr.bf16.mxu0 %v742
  %1209 = vmatpush1.bf16.msra.mxu0 %v741
  %1210 = vmatprep.subr.bf16.mxu0 0
  %1211 = vmatpush1.bf16.msra.mxu0 0
  %1212 = vmatprep.subr.bf16.mxu0 0
  %1213 = vmatpush1.bf16.msra.mxu0 0
  %1214 = vmatprep.subr.bf16.mxu0 0
  %1215 = vmatpush1.bf16.msra.mxu0 0
  %1216 = vmatprep.subr.bf16.mxu0 0
  %1217 = vmatpush1.bf16.msra.mxu0 0
  %1218 = vmatprep.subr.bf16.mxu0 0
  %1219 = vmatpush1.bf16.msra.mxu0 0
  %1220 = vmatprep.subr.bf16.mxu0 0
  %1221 = vmatpush1.bf16.msra.mxu0 0
  %1222 = vmatprep.subr.bf16.mxu0 0
  %1223 = vmatpush1.bf16.msra.mxu0 0
  %1224 = vmatprep.mubr.bf16.mxu0 %v889
  %1225 = vmatmul.mubr.bf16.gmra.mrb[0].mxu0 %v164
  %v1226 = vpop.f32.mrb[0].mxu0
  %v1227 = vadd.f32 0.0, %v1226
  %v1228 = vpop.f32.mrb[0].mxu0
  %v1229 = vadd.f32 0.0, %v1228
  %v1230 = vpop.f32.mrb[0].mxu0
  %v1231 = vadd.f32 0.0, %v1230
  %v1232 = vpop.f32.mrb[0].mxu0
  %v1233 = vadd.f32 0.0, %v1232
  %1234 = vdwg.mxu0
  %v1235 = vtanh.pop %v926
  %v1236 = vtanh.pop %v928
  %v1237 = vtanh.pop %v969
  %v1238 = vtanh.pop %v971
  %v1239 = vtanh.pop %v1012
  %v1240 = vtanh.pop %v1014
  %v1241 = vtanh.pop %v1055
  %v1242 = vtanh.pop %v1057
  %v1243 = vtanh.pop %v1098
  %v1244 = vtanh.pop %v1100
  %v1245 = vtanh.pop %v1141
  %v1246 = vtanh.pop %v1143
  %v1247 = vtanh.pop %v1184
  %v1248 = vtanh.pop %v1186
  %v1249 = vtanh.pop %v1227
  %v1250 = vtanh.pop %v1229
  %v1251 = vtanh.pop %v930
  %v1252 = vtanh.pop %v932
  %v1253 = vtanh.pop %v973
  %v1254 = vtanh.pop %v975
  %v1255 = vtanh.pop %v1016
  %v1256 = vtanh.pop %v1018
  %v1257 = vtanh.pop %v1059
  %v1258 = vtanh.pop %v1061
  %v1259 = vtanh.pop %v1102
  %v1260 = vtanh.pop %v1104
  %v1261 = vtanh.pop %v1145
  %v1262 = vtanh.pop %v1147
  %v1263 = vtanh.pop %v1188
  %v1264 = vtanh.pop %v1190
  %v1265 = vtanh.pop %v1231
  %v1266 = vtanh.pop %v1233
  %1267 = vst [vmem:[%s2] sm:$0xff] %v1235
  %1268 = vst [vmem:[%s2 + $0x8] sm:$0xff] %v1236
  %1269 = vst [vmem:[%s2 + $0x10] sm:$0xff] %v1237
  %1270 = vst [vmem:[%s2 + $0x18] sm:$0xff] %v1238
  %1271 = vst [vmem:[%s2 + $0x20] sm:$0xff] %v1239
  %1272 = vst [vmem:[%s2 + $0x28] sm:$0xff] %v1240
  %1273 = vst [vmem:[%s2 + $0x30] sm:$0xff] %v1241
  %1274 = vst [vmem:[%s2 + $0x38] sm:$0xff] %v1242
  %1275 = vst [vmem:[%s2 + $0x40] sm:$0xff] %v1243
  %1276 = vst [vmem:[%s2 + $0x48] sm:$0xff] %v1244
  %1277 = vst [vmem:[%s2 + $0x50] sm:$0xff] %v1245
  %1278 = vst [vmem:[%s2 + $0x58] sm:$0xff] %v1246
  %1279 = vst [vmem:[%s2 + $0x60] sm:$0xff] %v1247
  %1280 = vst [vmem:[%s2 + $0x68] sm:$0xff] %v1248
  %1281 = vst [vmem:[%s2 + $0x70] sm:$0xff] %v1249
  %1282 = vst [vmem:[%s2 + $0x78] sm:$0xff] %v1250
  %1283 = vst [vmem:[%s2 + $0x80] sm:$0xff] %v1251
  %1284 = vst [vmem:[%s2 + $0x88] sm:$0xff] %v1252
  %1285 = vst [vmem:[%s2 + $0x90] sm:$0xff] %v1253
  %1286 = vst [vmem:[%s2 + $0x98] sm:$0xff] %v1254
  %1287 = vst [vmem:[%s2 + $0xa0] sm:$0xff] %v1255
  %1288 = vst [vmem:[%s2 + $0xa8] sm:$0xff] %v1256
  %1289 = vst [vmem:[%s2 + $0xb0] sm:$0xff] %v1257
  %1290 = vst [vmem:[%s2 + $0xb8] sm:$0xff] %v1258
  %1291 = vst [vmem:[%s2 + $0xc0] sm:$0xff] %v1259
  %1292 = vst [vmem:[%s2 + $0xc8] sm:$0xff] %v1260
  %1293 = vst [vmem:[%s2 + $0xd0] sm:$0xff] %v1261
  %1294 = vst [vmem:[%s2 + $0xd8] sm:$0xff] %v1262
  %1295 = vst [vmem:[%s2 + $0xe0] sm:$0xff] %v1263
  %1296 = vst [vmem:[%s2 + $0xe8] sm:$0xff] %v1264
  %1297 = vst [vmem:[%s2 + $0xf0] sm:$0xff] %v1265
  %1298 = vst [vmem:[%s2 + $0xf8] sm:$0xff] %v1266
  // Predicated region
  $region10: #{generator_forward.13} parent=0 // pred_check
    _
  $region11: #{generator_forward.13} parent=0 // pred_check_branch
    %1300 = sbr.rel (0) target = $region13
  $region12: #{generator_forward.13} parent=0 // pred_region
    _
  $region13: #{generator_forward.13} parent=0 // pred_fallthru
    _
  // Predicated region
  $region14: #{generator_forward.13} parent=0 // pred_check
    _
  $region15: #{generator_forward.13} parent=0 // pred_check_branch
    %1302 = sbr.rel (0) target = $region17
  $region16: #{generator_forward.13} parent=0 // pred_region
    _
  $region17: #{generator_forward.13} parent=0 // pred_fallthru
    _

</llo_original>
